<compile_context>
chip_gen: v7x
topology: tpu7x:2x2x1
jax: 0.10.0
libtpu: 0.0.40
codegen_flags: <defaults>
</compile_context>

<pallas_src>
import functools
import math

import jax
import jax.numpy as jnp
from jax.experimental import pallas as pl
from jax.experimental.pallas import tpu as pltpu

_LN_EPS = 1e-5
_GELU_C = 0.7978845608028654      # sqrt(2/pi), matches torch.sqrt(tensor(2.0/pi))
_NEG_BIG = -1e30                  # finite "-inf": avoids exp(-inf - (-inf)) NaN risk


def _layer_norm_f32(x_f32, scale_ref, shift_ref):
    """Biased-variance LayerNorm (torch var(unbiased=False), eps=1e-5), math in f32."""
    mean = jnp.mean(x_f32, axis=-1, keepdims=True)
    var = jnp.mean((x_f32 - mean) ** 2, axis=-1, keepdims=True)
    xn = (x_f32 - mean) * jax.lax.rsqrt(var + _LN_EPS)
    return xn * scale_ref[...].astype(jnp.float32) + shift_ref[...].astype(jnp.float32)


# --------------------------- Kernel A: LN1 + causal MHA ---------------------------

def _attn_flash_kernel(xq_ref, xkv_ref, ln1_s_ref, ln1_b_ref,
                       wq_ref, wk_ref, wv_ref, wo_ref, bo_ref,
                       o_ref,
                       q_scr, m_scr, l_scr, acc_scr,
                       *, n_heads, approx_recip):
    tq, E = xq_ref.shape
    tkv = xkv_ref.shape[0]
    hd = E // n_heads
    op_dtype = wq_ref.dtype
    scale = 1.0 / math.sqrt(hd)

    qi = pl.program_id(1)
    ki = pl.program_id(2)
    nk = pl.num_programs(2)
    q_start = qi * tq
    kv_start = ki * tkv

    @pl.when(ki == 0)
    def _init():
        xq_f = xq_ref[...].astype(jnp.float32)
        xn_q = _layer_norm_f32(xq_f, ln1_s_ref, ln1_b_ref).astype(op_dtype)
        # Head-major Q projection: each dot contracts over K = E (lane-dense).
        # TODO(synk): switch the head loop to lax.fori_loop for large n_heads
        #             (bounds vreg live ranges); unrolled is fine for small H.
        for h in range(n_heads):
            q_scr[h] = jnp.dot(xn_q, wq_ref[h], preferred_element_type=jnp.float32)
        m_scr[...] = jnp.full(m_scr.shape, _NEG_BIG, dtype=m_scr.dtype)
        l_scr[...] = jnp.zeros(l_scr.shape, dtype=l_scr.dtype)
        acc_scr[...] = jnp.zeros(acc_scr.shape, dtype=acc_scr.dtype)

    # Skip kv tiles that lie entirely above the causal diagonal.
    @pl.when(kv_start < q_start + tq)
    def _compute():
        xkv_f = xkv_ref[...].astype(jnp.float32)
        xn_kv = _layer_norm_f32(xkv_f, ln1_s_ref, ln1_b_ref).astype(op_dtype)

        # Per-tile causal mask from grid offsets (shared across heads).
        rows = q_start + jax.lax.broadcasted_iota(jnp.int32, (tq, tkv), 0)
        cols = kv_start + jax.lax.broadcasted_iota(jnp.int32, (tq, tkv), 1)
        masked = cols > rows

        for h in range(n_heads):
            k_h = jnp.dot(xn_kv, wk_ref[h], preferred_element_type=jnp.float32)
            v_h = jnp.dot(xn_kv, wv_ref[h], preferred_element_type=jnp.float32)
            q_h = q_scr[h].astype(op_dtype)

            s = jnp.einsum('qd,kd->qk', q_h, k_h.astype(op_dtype),
                           preferred_element_type=jnp.float32) * scale
            s = jnp.where(masked, _NEG_BIG, s)

            m_prev = m_scr[h]                                         # (tq, 1)
            m_new = jnp.maximum(m_prev, jnp.max(s, axis=-1, keepdims=True))
            alpha = jnp.exp(m_prev - m_new)
            p = jnp.exp(s - m_new)
            l_scr[h] = alpha * l_scr[h] + jnp.sum(p, axis=-1, keepdims=True)
            acc_scr[h] = alpha * acc_scr[h] + jnp.dot(
                p.astype(op_dtype), v_h.astype(op_dtype),
                preferred_element_type=jnp.float32)
            m_scr[h] = m_new

    @pl.when(ki == nk - 1)
    def _finalize():
        # Normalize each head, assemble the lane-dense (tq, E) context, and do a
        # SINGLE K=E output-projection matmul (instead of n_heads K=hd matmuls).
        parts = []
        for h in range(n_heads):
            inv_l = pl.reciprocal(l_scr[h], approx=approx_recip)
            parts.append(acc_scr[h] * inv_l)
        ctx = jnp.concatenate(parts, axis=-1)                         # (tq, E)
        out = jnp.dot(ctx.astype(op_dtype), wo_ref[...],
                      preferred_element_type=jnp.float32)
        out = out + bo_ref[...].astype(jnp.float32)
        # dropout == identity (eval mode); fused residual add.
        out = out + xq_ref[...].astype(jnp.float32)
        o_ref[...] = out.astype(o_ref.dtype)


# --------------------------- Kernel B: LN2 + FFN ---------------------------

def _ffn_block_kernel(x_ref, ln2_s_ref, ln2_b_ref,
                      w1_ref, b1_ref, w2_ref, b2_ref, o_ref):
    """Row tile: o = x + (gelu_tanh(LN2(x) @ W1 + b1) @ W2 + b2)."""
    op_dtype = w1_ref.dtype
    xf = x_ref[...].astype(jnp.float32)
    xn = _layer_norm_f32(xf, ln2_s_ref, ln2_b_ref).astype(op_dtype)

    h = jnp.dot(xn, w1_ref[...], preferred_element_type=jnp.float32)
    h = h + b1_ref[...].astype(jnp.float32)
    g = 0.5 * h * (1.0 + jnp.tanh(_GELU_C * (h + 0.044715 * (h * h * h))))
    y = jnp.dot(g.astype(op_dtype), w2_ref[...], preferred_element_type=jnp.float32)
    y = y + b2_ref[...].astype(jnp.float32)

    # dropout == identity (eval mode); fused residual add.
    o_ref[...] = (y + xf).astype(o_ref.dtype)
    # TODO(synk): for very large hidden dims (v7x: 64 MiB VMEM) add a hidden-axis
    #             reduction grid dimension with an f32 accumulator instead of
    #             keeping W1/W2 fully resident.


# --------------------------- tiling / VMEM helpers ---------------------------

def _sublane_multiple(dtype):
    return {1: 32, 2: 16}.get(jnp.dtype(dtype).itemsize, 8)


def _pick_tile(extent, dtype, target):
    """Largest sublane-aligned divisor of `extent` that is <= target and gives >= 2
    grid steps; falls back to the full extent (always legal as a block dim)."""
    step = _sublane_multiple(dtype)
    best = None
    t = step
    while t <= min(target, extent):
        if extent % t == 0 and (extent // t) >= 2:
            best = t
        t += step
    return best if best is not None else extent


def _pick_row_tile(m, hidden, dtype, target=512, act_budget=8 << 20):
    # Cap tm so the (tm, hidden) f32 hidden activation stays inside a modest VMEM
    # budget (matters most on v7x where per-core VMEM is 64 MiB).
    cap = max(_sublane_multiple(dtype), min(target, act_budget // max(4 * hidden, 1)))
    return _pick_tile(m, dtype, cap)


def _vmem_limit_bytes(estimate):
    # Explicit scoped-VMEM request: generous floor (v5e default is only 16 MiB),
    # capped at 64 MiB so the same request is legal on v7x (64 MiB physical VMEM).
    return int(min(max(2 * int(estimate), 32 << 20), 64 << 20))


def _maybe_buffered(block_shape, index_map, *, single_buffer):
    if single_buffer:
        # Single-buffered residency for constant-index weight blocks (halves VMEM).
        return pl.BlockSpec(block_shape, index_map, pipeline_mode=pl.Buffered(1))
    return pl.BlockSpec(block_shape, index_map)


def _try_single_buffered(call_fn):
    """Use pl.Buffered(1) weight specs when the installed Pallas supports it."""
    try:
        return call_fn(True)
    except Exception:
        return call_fn(False)


# --------------------------- pallas_call wrappers ---------------------------

def _attention_call(x, ln1_s, ln1_b, wq_hm, wk_hm, wv_hm, wo, bo, *,
                    n_heads, tq, tkv, approx_recip, single_buffer_weights):
    B, S, E = x.shape
    H = n_heads
    hd = E // H
    itemsize = jnp.dtype(x.dtype).itemsize
    w_itemsize = jnp.dtype(wq_hm.dtype).itemsize
    wspec = functools.partial(_maybe_buffered, single_buffer=single_buffer_weights)

    weights_bytes = (wq_hm.size + wk_hm.size + wv_hm.size + wo.size) * w_itemsize
    tiles_bytes = 2 * (2 * tq * E + tkv * E) * itemsize
    scratch_bytes = 4 * H * tq * 128 * 4
    interm_bytes = 8 * H * tq * max(tkv, 128) * 4
    vmem_limit = _vmem_limit_bytes(
        weights_bytes * (1 if single_buffer_weights else 2)
        + tiles_bytes + scratch_bytes + interm_bytes)

    cost = pl.CostEstimate(
        flops=int(B * ((2 + 4 * (S // tq) + 2) * S * E * E + 4 * S * S * E)),
        transcendentals=int(B * H * S * S),
        bytes_accessed=int(2 * B * S * E * itemsize + weights_bytes),
    )

    kernel = functools.partial(_attn_flash_kernel, n_heads=H, approx_recip=approx_recip)
    return pl.pallas_call(
        kernel,
        out_shape=jax.ShapeDtypeStruct((B, S, E), x.dtype),
        grid_spec=pltpu.PrefetchScalarGridSpec(
            num_scalar_prefetch=0,
            grid=(B, S // tq, S // tkv),
            in_specs=[
                pl.BlockSpec((None, tq, E), lambda b, qi, ki: (b, qi, 0)),   # x (q rows)
                pl.BlockSpec((None, tkv, E), lambda b, qi, ki: (b, ki, 0)),  # x (kv rows)
                pl.BlockSpec((1, E), lambda b, qi, ki: (0, 0)),              # ln1 scale
                pl.BlockSpec((1, E), lambda b, qi, ki: (0, 0)),              # ln1 shift
                wspec((H, E, hd), lambda b, qi, ki: (0, 0, 0)),              # Wq head-major
                wspec((H, E, hd), lambda b, qi, ki: (0, 0, 0)),              # Wk head-major
                wspec((H, E, hd), lambda b, qi, ki: (0, 0, 0)),              # Wv head-major
                wspec((E, E), lambda b, qi, ki: (0, 0)),                     # Wo
                pl.BlockSpec((1, E), lambda b, qi, ki: (0, 0)),              # bo
            ],
            out_specs=pl.BlockSpec((None, tq, E), lambda b, qi, ki: (b, qi, 0)),
            scratch_shapes=[
                pltpu.VMEM((H, tq, hd), jnp.float32),   # Q (head-major)
                pltpu.VMEM((H, tq, 1), jnp.float32),    # running max
                pltpu.VMEM((H, tq, 1), jnp.float32),    # running sum
                pltpu.VMEM((H, tq, hd), jnp.float32),   # running context
            ],
        ),
        compiler_params=pltpu.CompilerParams(
            dimension_semantics=("parallel", "parallel", "arbitrary"),
            vmem_limit_bytes=vmem_limit),
        cost_estimate=cost,
    )(x, x, ln1_s, ln1_b, wq_hm, wk_hm, wv_hm, wo, bo)


def _ffn_call(x2d, ln2_s, ln2_b, w1, b1, w2, b2, *, tm, single_buffer_weights):
    M, E = x2d.shape
    hidden = w1.shape[1]
    itemsize = jnp.dtype(x2d.dtype).itemsize
    w_itemsize = jnp.dtype(w1.dtype).itemsize
    wspec = functools.partial(_maybe_buffered, single_buffer=single_buffer_weights)

    weights_bytes = (w1.size + w2.size) * w_itemsize
    tiles_bytes = 2 * (2 * tm * E) * itemsize
    interm_bytes = 4 * tm * hidden * 4
    vmem_limit = _vmem_limit_bytes(
        weights_bytes * (1 if single_buffer_weights else 2) + tiles_bytes + interm_bytes)

    cost = pl.CostEstimate(
        flops=int(2 * 2 * M * E * hidden),
        transcendentals=int(M * hidden),
        bytes_accessed=int(2 * M * E * itemsize + weights_bytes),
    )

    return pl.pallas_call(
        _ffn_block_kernel,
        out_shape=jax.ShapeDtypeStruct((M, E), x2d.dtype),
        grid_spec=pltpu.PrefetchScalarGridSpec(
            num_scalar_prefetch=0,
            grid=(pl.cdiv(M, tm),),
            in_specs=[
                pl.BlockSpec((tm, E), lambda i: (i, 0)),          # x row tile
                pl.BlockSpec((1, E), lambda i: (0, 0)),           # ln2 scale
                pl.BlockSpec((1, E), lambda i: (0, 0)),           # ln2 shift
                wspec((E, hidden), lambda i: (0, 0)),             # W1 (resident)
                pl.BlockSpec((1, hidden), lambda i: (0, 0)),      # b1
                wspec((hidden, E), lambda i: (0, 0)),             # W2 (resident)
                pl.BlockSpec((1, E), lambda i: (0, 0)),           # b2
            ],
            out_specs=pl.BlockSpec((tm, E), lambda i: (i, 0)),    # lane-dense stores
        ),
        compiler_params=pltpu.CompilerParams(
            dimension_semantics=("parallel",),
            vmem_limit_bytes=vmem_limit),
        cost_estimate=cost,
    )(x2d, ln2_s, ln2_b, w1, b1, w2, b2)


def transformer_block(x, params, *, n_heads, q_tile=None, kv_tile=None,
                      row_tile=None, mxu_dtype=None):
    """x: (B, S, E); weights use (in_features, out_features) layout. Returns (B, S, E).

    mxu_dtype: optional lower-precision dtype (e.g. jnp.bfloat16) for MXU operands;
    accumulation stays f32 (recommended on v6e/v7x when numerics allow)."""
    B, S, E = x.shape
    hd = E // n_heads
    hidden = params["w1"].shape[1]

    wdt = mxu_dtype if mxu_dtype is not None else params["wq"].dtype
    approx_recip = jnp.dtype(wdt).itemsize < 4

    # One-time relayout to head-major (H, E, hd): every projection matmul keeps K = E.
    def head_major(w):
        return w.reshape(E, n_heads, hd).transpose(1, 0, 2).astype(wdt)

    wq_hm = head_major(params["wq"])
    wk_hm = head_major(params["wk"])
    wv_hm = head_major(params["wv"])
    wo = params["wo"].astype(wdt)
    w1 = params["w1"].astype(wdt)
    w2 = params["w2"].astype(wdt)

    tq = q_tile if q_tile is not None else _pick_tile(S, x.dtype, 128)
    tkv = kv_tile if kv_tile is not None else _pick_tile(S, x.dtype, 256)
    assert S % tq == 0 and S % tkv == 0, "q_tile/kv_tile must divide the sequence length"

    # ----- Kernel A: LN1 + causal MHA + out-proj + residual -----
    res2 = _try_single_buffered(lambda sb: _attention_call(
        x, params["ln1_scale"], params["ln1_shift"],
        wq_hm, wk_hm, wv_hm, wo, params["bo"],
        n_heads=n_heads, tq=tq, tkv=tkv, approx_recip=approx_recip,
        single_buffer_weights=sb))

    # ----- Kernel B: LN2 + FFN + residual -----
    M = B * S
    tm = row_tile if row_tile is not None else _pick_row_tile(M, hidden, x.dtype)
    x2d = res2.reshape(M, E)
    # TODO(synk): optionally fuse LN2+FFN as an epilogue of Kernel A when W1/W2 fit
    #             alongside the attention weights (saves an HBM round trip of activations).
    out2d = _try_single_buffered(lambda sb: _ffn_call(
        x2d, params["ln2_scale"], params["ln2_shift"],
        w1, params["b1"], w2, params["b2"],
        tm=tm, single_buffer_weights=sb))
    return out2d.reshape(B, S, E)


# --------------------------- pure-JAX reference ---------------------------

def _ref_transformer_block(x, params, n_heads):
    """Reference matching the PyTorch TransformerBlock (eval mode)."""
    def ln(v, scale, shift):
        mean = v.mean(axis=-1, keepdims=True)
        var = ((v - mean) ** 2).mean(axis=-1, keepdims=True)
        return scale * (v - mean) / jnp.sqrt(var + _LN_EPS) + shift

    B, S, E = x.shape
    hd = E // n_heads

    xn = ln(x, params["ln1_scale"][0], params["ln1_shift"][0])
    q = xn @ params["wq"]
    k = xn @ params["wk"]
    v = xn @ params["wv"]
    q = q.reshape(B, S, n_heads, hd).transpose(0, 2, 1, 3)
    k = k.reshape(B, S, n_heads, hd).transpose(0, 2, 1, 3)
    v = v.reshape(B, S, n_heads, hd).transpose(0, 2, 1, 3)
    scores = q @ jnp.swapaxes(k, -1, -2)
    mask = jnp.triu(jnp.ones((S, S), dtype=bool), k=1)
    scores = jnp.where(mask, -jnp.inf, scores)
    w = jax.nn.softmax(scores / jnp.sqrt(jnp.float32(hd)), axis=-1)
    ctx = (w @ v).transpose(0, 2, 1, 3).reshape(B, S, E)
    attn = ctx @ params["wo"] + params["bo"][0]
    x = x + attn

    xn2 = ln(x, params["ln2_scale"][0], params["ln2_shift"][0])
    h = xn2 @ params["w1"] + params["b1"][0]
    g = 0.5 * h * (1.0 + jnp.tanh(jnp.sqrt(2.0 / jnp.pi) * (h + 0.044715 * h ** 3)))
    y = g @ params["w2"] + params["b2"][0]
    return x + y


if __name__ == "__main__":
    cfg = {"emb_dim": 128, "context_length": 64, "n_heads": 4,
           "drop_rate": 0.0, "qkv_bias": False}
    batch = 2
    seq = cfg["context_length"]
    emb = cfg["emb_dim"]
    hidden = 4 * emb
    n_heads = cfg["n_heads"]

    key = jax.random.PRNGKey(0)
    ks = jax.random.split(key, 14)
    dt = jnp.float32

    x = jax.random.normal(ks[0], (batch, seq, emb), dtype=dt)
    s_e = 1.0 / jnp.sqrt(jnp.float32(emb))
    s_h = 1.0 / jnp.sqrt(jnp.float32(hidden))
    # Weights stored as (in_features, out_features), i.e. transposed vs nn.Linear.
    params = {
        "ln1_scale": 1.0 + 0.1 * jax.random.normal(ks[1], (1, emb), dt),
        "ln1_shift": 0.1 * jax.random.normal(ks[2], (1, emb), dt),
        "wq": jax.random.normal(ks[3], (emb, emb), dt) * s_e,
        "wk": jax.random.normal(ks[4], (emb, emb), dt) * s_e,
        "wv": jax.random.normal(ks[5], (emb, emb), dt) * s_e,
        "wo": jax.random.normal(ks[6], (emb, emb), dt) * s_e,
        "bo": 0.01 * jax.random.normal(ks[7], (1, emb), dt),
        "ln2_scale": 1.0 + 0.1 * jax.random.normal(ks[8], (1, emb), dt),
        "ln2_shift": 0.1 * jax.random.normal(ks[9], (1, emb), dt),
        "w1": jax.random.normal(ks[10], (emb, hidden), dt) * s_e,
        "b1": 0.01 * jax.random.normal(ks[11], (1, hidden), dt),
        "w2": jax.random.normal(ks[12], (hidden, emb), dt) * s_h,
        "b2": 0.01 * jax.random.normal(ks[13], (1, emb), dt),
    }

    y_ref = _ref_transformer_block(x, params, n_heads)

    # f32 path; small q/kv tiles to exercise the flash grid + causal tile skipping.
    y = transformer_block(x, params, n_heads=n_heads, q_tile=32, kv_tile=32)
    y = jax.block_until_ready(y)
    assert y.shape == (batch, seq, emb)
    max_err = float(jnp.max(jnp.abs(y - y_ref)))
    assert jnp.allclose(y, y_ref, atol=2e-3, rtol=2e-3), (
        f"f32 mismatch vs reference (max abs err {max_err})")

    # bf16 MXU-operand path (v6e/v7x recommendation), f32 accumulation, default tiles.
    y16 = transformer_block(x, params, n_heads=n_heads, mxu_dtype=jnp.bfloat16)
    y16 = jax.block_until_ready(y16)
    max_err16 = float(jnp.max(jnp.abs(y16 - y_ref)))
    assert jnp.allclose(y16, y_ref, atol=5e-2, rtol=5e-2), (
        f"bf16-operand mismatch vs reference (max abs err {max_err16})")

    print("KERNEL_OK")
</pallas_src>

<mosaic_0001>
module attributes {stable_mosaic.version = 11 : i64} {
  func.func @_attn_flash_kernel(%arg0: i32, %arg1: i32, %arg2: i32, %arg3: memref<1x32x128xf32, #tpu.memory_space<vmem>>, %arg4: memref<1x32x128xf32, #tpu.memory_space<vmem>>, %arg5: memref<1x128xf32, #tpu.memory_space<vmem>>, %arg6: memref<1x128xf32, #tpu.memory_space<vmem>>, %arg7: memref<4x128x32xf32, #tpu.memory_space<vmem>>, %arg8: memref<4x128x32xf32, #tpu.memory_space<vmem>>, %arg9: memref<4x128x32xf32, #tpu.memory_space<vmem>>, %arg10: memref<128x128xf32, #tpu.memory_space<vmem>>, %arg11: memref<1x128xf32, #tpu.memory_space<vmem>>, %arg12: memref<1x32x128xf32, #tpu.memory_space<vmem>>, %arg13: memref<4x32x32xf32, #tpu.memory_space<vmem>>, %arg14: memref<4x32x1xf32, #tpu.memory_space<vmem>>, %arg15: memref<4x32x1xf32, #tpu.memory_space<vmem>>, %arg16: memref<4x32x32xf32, #tpu.memory_space<vmem>>) attributes {dimension_semantics = [#tpu.dimension_semantics<parallel>, #tpu.dimension_semantics<parallel>, #tpu.dimension_semantics<arbitrary>], iteration_bounds = array<i64: 2, 2, 2>, scalar_prefetch = 0 : i64, scratch_operands = 4 : i64, tpu.core_type = #tpu.core_type<tc>, window_params = [{transform_indices = @transform_0, window_bounds = array<i64: 1, 32, 128>}, {transform_indices = @transform_1, window_bounds = array<i64: 1, 32, 128>}, {pipeline_mode = #tpu.pipeline_mode<synchronous>, transform_indices = @transform_2, window_bounds = array<i64: 1, 128>}, {pipeline_mode = #tpu.pipeline_mode<synchronous>, transform_indices = @transform_3, window_bounds = array<i64: 1, 128>}, {pipeline_mode = #tpu.pipeline_mode<synchronous>, transform_indices = @transform_4, window_bounds = array<i64: 4, 128, 32>}, {pipeline_mode = #tpu.pipeline_mode<synchronous>, transform_indices = @transform_5, window_bounds = array<i64: 4, 128, 32>}, {pipeline_mode = #tpu.pipeline_mode<synchronous>, transform_indices = @transform_6, window_bounds = array<i64: 4, 128, 32>}, {pipeline_mode = #tpu.pipeline_mode<synchronous>, transform_indices = @transform_7, window_bounds = array<i64: 128, 128>}, {pipeline_mode = #tpu.pipeline_mode<synchronous>, transform_indices = @transform_8, window_bounds = array<i64: 1, 128>}, {transform_indices = @transform_9, window_bounds = array<i64: 1, 32, 128>}]} {
    %c32_i32 = arith.constant 32 : i32
    %0 = arith.muli %arg1, %c32_i32 : i32
    %c32_i32_0 = arith.constant 32 : i32
    %1 = arith.muli %arg2, %c32_i32_0 : i32
    %c0_i32 = arith.constant 0 : i32
    %2 = arith.cmpi eq, %arg2, %c0_i32 : i32
    %3 = arith.extui %2 : i1 to i32
    %c0_i32_1 = arith.constant 0 : i32
    %4 = arith.cmpi ne, %3, %c0_i32_1 : i32
    scf.if %4 {
      %c0 = arith.constant 0 : index
      %c0_5 = arith.constant 0 : index
      %c0_6 = arith.constant 0 : index
      %12 = vector.load %arg3[%c0, %c0_5, %c0_6] : memref<1x32x128xf32, #tpu.memory_space<vmem>>, vector<1x32x128xf32>
      %13 = vector.shape_cast %12 : vector<1x32x128xf32> to vector<32x128xf32>
      %cst = arith.constant dense<0.000000e+00> : vector<32xf32>
      %14 = vector.multi_reduction <add>, %13, %cst [1] : vector<32x128xf32> to vector<32xf32>
      %15 = vector.shape_cast %14 : vector<32xf32> to vector<32x1xf32>
      %cst_7 = arith.constant 1.280000e+02 : f32
      %16 = vector.broadcast %cst_7 : f32 to vector<32x1xf32>
      %17 = arith.divf %15, %16 : vector<32x1xf32>
      %18 = vector.broadcast %17 : vector<32x1xf32> to vector<32x128xf32>
      %19 = arith.subf %13, %18 : vector<32x128xf32>
      %20 = arith.mulf %19, %19 : vector<32x128xf32>
      %cst_8 = arith.constant dense<0.000000e+00> : vector<32xf32>
      %21 = vector.multi_reduction <add>, %20, %cst_8 [1] : vector<32x128xf32> to vector<32xf32>
      %22 = vector.shape_cast %21 : vector<32xf32> to vector<32x1xf32>
      %cst_9 = arith.constant 1.280000e+02 : f32
      %23 = vector.broadcast %cst_9 : f32 to vector<32x1xf32>
      %24 = arith.divf %22, %23 : vector<32x1xf32>
      %25 = vector.broadcast %17 : vector<32x1xf32> to vector<32x128xf32>
      %26 = arith.subf %13, %25 : vector<32x128xf32>
      %cst_10 = arith.constant 9.99999974E-6 : f32
      %27 = vector.broadcast %cst_10 : f32 to vector<32x1xf32>
      %28 = arith.addf %24, %27 : vector<32x1xf32>
      %29 = math.rsqrt %28 : vector<32x1xf32>
      %30 = vector.broadcast %29 : vector<32x1xf32> to vector<32x128xf32>
      %31 = arith.mulf %26, %30 : vector<32x128xf32>
      %c0_11 = arith.constant 0 : index
      %c0_12 = arith.constant 0 : index
      %32 = vector.load %arg5[%c0_11, %c0_12] : memref<1x128xf32, #tpu.memory_space<vmem>>, vector<1x128xf32>
      %33 = vector.broadcast %32 : vector<1x128xf32> to vector<32x128xf32>
      %34 = arith.mulf %31, %33 : vector<32x128xf32>
      %c0_13 = arith.constant 0 : index
      %c0_14 = arith.constant 0 : index
      %35 = vector.load %arg6[%c0_13, %c0_14] : memref<1x128xf32, #tpu.memory_space<vmem>>, vector<1x128xf32>
      %36 = vector.broadcast %35 : vector<1x128xf32> to vector<32x128xf32>
      %37 = arith.addf %34, %36 : vector<32x128xf32>
      %c0_15 = arith.constant 0 : index
      %c0_16 = arith.constant 0 : index
      %c0_17 = arith.constant 0 : index
      %38 = vector.load %arg7[%c0_15, %c0_16, %c0_17] : memref<4x128x32xf32, #tpu.memory_space<vmem>>, vector<1x128x32xf32>
      %39 = vector.shape_cast %38 : vector<1x128x32xf32> to vector<128x32xf32>
      %cst_18 = arith.constant dense<0.000000e+00> : vector<32x32xf32>
      %40 = tpu.matmul %37, %39, %cst_18 {dimension_numbers = #tpu.dot_dimension_numbers<[1], [0], [0], [1], [0, 0, 1, 1], [], []>} : vector<32x128xf32>, vector<128x32xf32>, vector<32x32xf32> -> vector<32x32xf32>
      %c0_19 = arith.constant 0 : index
      %c0_20 = arith.constant 0 : index
      %c0_21 = arith.constant 0 : index
      %41 = vector.load %arg13[%c0_19, %c0_20, %c0_21] : memref<4x32x32xf32, #tpu.memory_space<vmem>>, vector<1x32x32xf32>
      %42 = vector.shape_cast %41 : vector<1x32x32xf32> to vector<32x32xf32>
      %43 = vector.shape_cast %40 : vector<32x32xf32> to vector<1x32x32xf32>
      tpu.vector_store %arg13[%c0_19, %c0_20, %c0_21], %43 {strides = array<i32>} : memref<4x32x32xf32, #tpu.memory_space<vmem>>, vector<1x32x32xf32>,
      %c1 = arith.constant 1 : index
      %c0_22 = arith.constant 0 : index
      %c0_23 = arith.constant 0 : index
      %44 = vector.load %arg7[%c1, %c0_22, %c0_23] : memref<4x128x32xf32, #tpu.memory_space<vmem>>, vector<1x128x32xf32>
      %45 = vector.shape_cast %44 : vector<1x128x32xf32> to vector<128x32xf32>
      %cst_24 = arith.constant dense<0.000000e+00> : vector<32x32xf32>
      %46 = tpu.matmul %37, %45, %cst_24 {dimension_numbers = #tpu.dot_dimension_numbers<[1], [0], [0], [1], [0, 0, 1, 1], [], []>} : vector<32x128xf32>, vector<128x32xf32>, vector<32x32xf32> -> vector<32x32xf32>
      %c1_25 = arith.constant 1 : index
      %c0_26 = arith.constant 0 : index
      %c0_27 = arith.constant 0 : index
      %47 = vector.load %arg13[%c1_25, %c0_26, %c0_27] : memref<4x32x32xf32, #tpu.memory_space<vmem>>, vector<1x32x32xf32>
      %48 = vector.shape_cast %47 : vector<1x32x32xf32> to vector<32x32xf32>
      %49 = vector.shape_cast %46 : vector<32x32xf32> to vector<1x32x32xf32>
      tpu.vector_store %arg13[%c1_25, %c0_26, %c0_27], %49 {strides = array<i32>} : memref<4x32x32xf32, #tpu.memory_space<vmem>>, vector<1x32x32xf32>,
      %c2 = arith.constant 2 : index
      %c0_28 = arith.constant 0 : index
      %c0_29 = arith.constant 0 : index
      %50 = vector.load %arg7[%c2, %c0_28, %c0_29] : memref<4x128x32xf32, #tpu.memory_space<vmem>>, vector<1x128x32xf32>
      %51 = vector.shape_cast %50 : vector<1x128x32xf32> to vector<128x32xf32>
      %cst_30 = arith.constant dense<0.000000e+00> : vector<32x32xf32>
      %52 = tpu.matmul %37, %51, %cst_30 {dimension_numbers = #tpu.dot_dimension_numbers<[1], [0], [0], [1], [0, 0, 1, 1], [], []>} : vector<32x128xf32>, vector<128x32xf32>, vector<32x32xf32> -> vector<32x32xf32>
      %c2_31 = arith.constant 2 : index
      %c0_32 = arith.constant 0 : index
      %c0_33 = arith.constant 0 : index
      %53 = vector.load %arg13[%c2_31, %c0_32, %c0_33] : memref<4x32x32xf32, #tpu.memory_space<vmem>>, vector<1x32x32xf32>
      %54 = vector.shape_cast %53 : vector<1x32x32xf32> to vector<32x32xf32>
      %55 = vector.shape_cast %52 : vector<32x32xf32> to vector<1x32x32xf32>
      tpu.vector_store %arg13[%c2_31, %c0_32, %c0_33], %55 {strides = array<i32>} : memref<4x32x32xf32, #tpu.memory_space<vmem>>, vector<1x32x32xf32>,
      %c3 = arith.constant 3 : index
      %c0_34 = arith.constant 0 : index
      %c0_35 = arith.constant 0 : index
      %56 = vector.load %arg7[%c3, %c0_34, %c0_35] : memref<4x128x32xf32, #tpu.memory_space<vmem>>, vector<1x128x32xf32>
      %57 = vector.shape_cast %56 : vector<1x128x32xf32> to vector<128x32xf32>
      %cst_36 = arith.constant dense<0.000000e+00> : vector<32x32xf32>
      %58 = tpu.matmul %37, %57, %cst_36 {dimension_numbers = #tpu.dot_dimension_numbers<[1], [0], [0], [1], [0, 0, 1, 1], [], []>} : vector<32x128xf32>, vector<128x32xf32>, vector<32x32xf32> -> vector<32x32xf32>
      %c3_37 = arith.constant 3 : index
      %c0_38 = arith.constant 0 : index
      %c0_39 = arith.constant 0 : index
      %59 = vector.load %arg13[%c3_37, %c0_38, %c0_39] : memref<4x32x32xf32, #tpu.memory_space<vmem>>, vector<1x32x32xf32>
      %60 = vector.shape_cast %59 : vector<1x32x32xf32> to vector<32x32xf32>
      %61 = vector.shape_cast %58 : vector<32x32xf32> to vector<1x32x32xf32>
      tpu.vector_store %arg13[%c3_37, %c0_38, %c0_39], %61 {strides = array<i32>} : memref<4x32x32xf32, #tpu.memory_space<vmem>>, vector<1x32x32xf32>,
      %cst_40 = arith.constant -1.000000e+30 : f32
      %62 = vector.broadcast %cst_40 : f32 to vector<4x32x1xf32>
      %c0_41 = arith.constant 0 : index
      %c0_42 = arith.constant 0 : index
      %c0_43 = arith.constant 0 : index
      %63 = vector.load %arg14[%c0_41, %c0_42, %c0_43] : memref<4x32x1xf32, #tpu.memory_space<vmem>>, vector<4x32x1xf32>
      tpu.vector_store %arg14[%c0_41, %c0_42, %c0_43], %62 {strides = array<i32>} : memref<4x32x1xf32, #tpu.memory_space<vmem>>, vector<4x32x1xf32>,
      %cst_44 = arith.constant 0.000000e+00 : f32
      %64 = vector.broadcast %cst_44 : f32 to vector<4x32x1xf32>
      %c0_45 = arith.constant 0 : index
      %c0_46 = arith.constant 0 : index
      %c0_47 = arith.constant 0 : index
      %65 = vector.load %arg15[%c0_45, %c0_46, %c0_47] : memref<4x32x1xf32, #tpu.memory_space<vmem>>, vector<4x32x1xf32>
      tpu.vector_store %arg15[%c0_45, %c0_46, %c0_47], %64 {strides = array<i32>} : memref<4x32x1xf32, #tpu.memory_space<vmem>>, vector<4x32x1xf32>,
      %cst_48 = arith.constant 0.000000e+00 : f32
      %66 = vector.broadcast %cst_48 : f32 to vector<4x32x32xf32>
      %c0_49 = arith.constant 0 : index
      %c0_50 = arith.constant 0 : index
      %c0_51 = arith.constant 0 : index
      %67 = vector.load %arg16[%c0_49, %c0_50, %c0_51] : memref<4x32x32xf32, #tpu.memory_space<vmem>>, vector<4x32x32xf32>
      tpu.vector_store %arg16[%c0_49, %c0_50, %c0_51], %66 {strides = array<i32>} : memref<4x32x32xf32, #tpu.memory_space<vmem>>, vector<4x32x32xf32>,
    } else {
    }
    %c32_i32_2 = arith.constant 32 : i32
    %5 = arith.addi %0, %c32_i32_2 : i32
    %6 = arith.cmpi slt, %1, %5 : i32
    %7 = arith.extui %6 : i1 to i32
    %c0_i32_3 = arith.constant 0 : i32
    %8 = arith.cmpi ne, %7, %c0_i32_3 : i32
    scf.if %8 {
      %c0 = arith.constant 0 : index
      %c0_5 = arith.constant 0 : index
      %c0_6 = arith.constant 0 : index
      %12 = vector.load %arg4[%c0, %c0_5, %c0_6] : memref<1x32x128xf32, #tpu.memory_space<vmem>>, vector<1x32x128xf32>
      %13 = vector.shape_cast %12 : vector<1x32x128xf32> to vector<32x128xf32>
      %cst = arith.constant dense<0.000000e+00> : vector<32xf32>
      %14 = vector.multi_reduction <add>, %13, %cst [1] : vector<32x128xf32> to vector<32xf32>
      %15 = vector.shape_cast %14 : vector<32xf32> to vector<32x1xf32>
      %cst_7 = arith.constant 1.280000e+02 : f32
      %16 = vector.broadcast %cst_7 : f32 to vector<32x1xf32>
      %17 = arith.divf %15, %16 : vector<32x1xf32>
      %18 = vector.broadcast %17 : vector<32x1xf32> to vector<32x128xf32>
      %19 = arith.subf %13, %18 : vector<32x128xf32>
      %20 = arith.mulf %19, %19 : vector<32x128xf32>
      %cst_8 = arith.constant dense<0.000000e+00> : vector<32xf32>
      %21 = vector.multi_reduction <add>, %20, %cst_8 [1] : vector<32x128xf32> to vector<32xf32>
      %22 = vector.shape_cast %21 : vector<32xf32> to vector<32x1xf32>
      %cst_9 = arith.constant 1.280000e+02 : f32
      %23 = vector.broadcast %cst_9 : f32 to vector<32x1xf32>
      %24 = arith.divf %22, %23 : vector<32x1xf32>
      %25 = vector.broadcast %17 : vector<32x1xf32> to vector<32x128xf32>
      %26 = arith.subf %13, %25 : vector<32x128xf32>
      %cst_10 = arith.constant 9.99999974E-6 : f32
      %27 = vector.broadcast %cst_10 : f32 to vector<32x1xf32>
      %28 = arith.addf %24, %27 : vector<32x1xf32>
      %29 = math.rsqrt %28 : vector<32x1xf32>
      %30 = vector.broadcast %29 : vector<32x1xf32> to vector<32x128xf32>
      %31 = arith.mulf %26, %30 : vector<32x128xf32>
      %c0_11 = arith.constant 0 : index
      %c0_12 = arith.constant 0 : index
      %32 = vector.load %arg5[%c0_11, %c0_12] : memref<1x128xf32, #tpu.memory_space<vmem>>, vector<1x128xf32>
      %33 = vector.broadcast %32 : vector<1x128xf32> to vector<32x128xf32>
      %34 = arith.mulf %31, %33 : vector<32x128xf32>
      %c0_13 = arith.constant 0 : index
      %c0_14 = arith.constant 0 : index
      %35 = vector.load %arg6[%c0_13, %c0_14] : memref<1x128xf32, #tpu.memory_space<vmem>>, vector<1x128xf32>
      %36 = vector.broadcast %35 : vector<1x128xf32> to vector<32x128xf32>
      %37 = arith.addf %34, %36 : vector<32x128xf32>
      %38 = tpu.iota {dimensions = array<i32: 0>} : vector<32x32xi32>
      %39 = vector.broadcast %0 : i32 to vector<32x32xi32>
      %40 = arith.addi %39, %38 : vector<32x32xi32>
      %41 = tpu.iota {dimensions = array<i32: 1>} : vector<32x32xi32>
      %42 = vector.broadcast %1 : i32 to vector<32x32xi32>
      %43 = arith.addi %42, %41 : vector<32x32xi32>
      %44 = arith.cmpi sgt, %43, %40 : vector<32x32xi32>
      %c0_15 = arith.constant 0 : index
      %c0_16 = arith.constant 0 : index
      %c0_17 = arith.constant 0 : index
      %45 = vector.load %arg8[%c0_15, %c0_16, %c0_17] : memref<4x128x32xf32, #tpu.memory_space<vmem>>, vector<1x128x32xf32>
      %46 = vector.shape_cast %45 : vector<1x128x32xf32> to vector<128x32xf32>
      %cst_18 = arith.constant dense<0.000000e+00> : vector<32x32xf32>
      %47 = tpu.matmul %37, %46, %cst_18 {dimension_numbers = #tpu.dot_dimension_numbers<[1], [0], [0], [1], [0, 0, 1, 1], [], []>} : vector<32x128xf32>, vector<128x32xf32>, vector<32x32xf32> -> vector<32x32xf32>
      %c0_19 = arith.constant 0 : index
      %c0_20 = arith.constant 0 : index
      %c0_21 = arith.constant 0 : index
      %48 = vector.load %arg9[%c0_19, %c0_20, %c0_21] : memref<4x128x32xf32, #tpu.memory_space<vmem>>, vector<1x128x32xf32>
      %49 = vector.shape_cast %48 : vector<1x128x32xf32> to vector<128x32xf32>
      %cst_22 = arith.constant dense<0.000000e+00> : vector<32x32xf32>
      %50 = tpu.matmul %37, %49, %cst_22 {dimension_numbers = #tpu.dot_dimension_numbers<[1], [0], [0], [1], [0, 0, 1, 1], [], []>} : vector<32x128xf32>, vector<128x32xf32>, vector<32x32xf32> -> vector<32x32xf32>
      %c0_23 = arith.constant 0 : index
      %c0_24 = arith.constant 0 : index
      %c0_25 = arith.constant 0 : index
      %51 = vector.load %arg13[%c0_23, %c0_24, %c0_25] : memref<4x32x32xf32, #tpu.memory_space<vmem>>, vector<1x32x32xf32>
      %52 = vector.shape_cast %51 : vector<1x32x32xf32> to vector<32x32xf32>
      "tpu.trace_start"() <{level = 10 : i32, message = "qd,kd->qk"}> : () -> ()
      %cst_26 = arith.constant dense<0.000000e+00> : vector<32x32xf32>
      %53 = tpu.matmul %52, %47, %cst_26 {dimension_numbers = #tpu.dot_dimension_numbers<[1], [1], [0], [0], [0, 0, 1, 0], [], []>} : vector<32x32xf32>, vector<32x32xf32>, vector<32x32xf32> -> vector<32x32xf32>
      "tpu.trace_stop"() : () -> ()
      %cst_27 = arith.constant 0.176776692 : f32
      %54 = vector.broadcast %cst_27 : f32 to vector<32x32xf32>
      %55 = arith.mulf %53, %54 : vector<32x32xf32>
      %cst_28 = arith.constant -1.000000e+30 : f32
      %56 = vector.broadcast %cst_28 : f32 to vector<32x32xf32>
      %57 = arith.select %44, %56, %55 : vector<32x32xi1>, vector<32x32xf32>
      %c0_29 = arith.constant 0 : index
      %c0_30 = arith.constant 0 : index
      %c0_31 = arith.constant 0 : index
      %58 = vector.load %arg14[%c0_29, %c0_30, %c0_31] : memref<4x32x1xf32, #tpu.memory_space<vmem>>, vector<1x32x1xf32>
      %59 = vector.shape_cast %58 : vector<1x32x1xf32> to vector<32x1xf32>
      %cst_32 = arith.constant dense<0xFF800000> : vector<32xf32>
      %60 = vector.multi_reduction <maximumf>, %57, %cst_32 [1] : vector<32x32xf32> to vector<32xf32>
      %61 = vector.shape_cast %60 : vector<32xf32> to vector<32x1xf32>
      %62 = arith.maximumf %59, %61 : vector<32x1xf32>
      %63 = arith.subf %59, %62 : vector<32x1xf32>
      %64 = math.exp %63 : vector<32x1xf32>
      %65 = vector.broadcast %62 : vector<32x1xf32> to vector<32x32xf32>
      %66 = arith.subf %57, %65 : vector<32x32xf32>
      %67 = math.exp %66 : vector<32x32xf32>
      %c0_33 = arith.constant 0 : index
      %c0_34 = arith.constant 0 : index
      %c0_35 = arith.constant 0 : index
      %68 = vector.load %arg15[%c0_33, %c0_34, %c0_35] : memref<4x32x1xf32, #tpu.memory_space<vmem>>, vector<1x32x1xf32>
      %69 = vector.shape_cast %68 : vector<1x32x1xf32> to vector<32x1xf32>
      %70 = arith.mulf %64, %69 : vector<32x1xf32>
      %cst_36 = arith.constant dense<0.000000e+00> : vector<32xf32>
      %71 = vector.multi_reduction <add>, %67, %cst_36 [1] : vector<32x32xf32> to vector<32xf32>
      %72 = vector.shape_cast %71 : vector<32xf32> to vector<32x1xf32>
      %73 = arith.addf %70, %72 : vector<32x1xf32>
      %c0_37 = arith.constant 0 : index
      %c0_38 = arith.constant 0 : index
      %c0_39 = arith.constant 0 : index
      %74 = vector.load %arg15[%c0_37, %c0_38, %c0_39] : memref<4x32x1xf32, #tpu.memory_space<vmem>>, vector<1x32x1xf32>
      %75 = vector.shape_cast %74 : vector<1x32x1xf32> to vector<32x1xf32>
      %76 = vector.shape_cast %73 : vector<32x1xf32> to vector<1x32x1xf32>
      tpu.vector_store %arg15[%c0_37, %c0_38, %c0_39], %76 {strides = array<i32>} : memref<4x32x1xf32, #tpu.memory_space<vmem>>, vector<1x32x1xf32>,
      %c0_40 = arith.constant 0 : index
      %c0_41 = arith.constant 0 : index
      %c0_42 = arith.constant 0 : index
      %77 = vector.load %arg16[%c0_40, %c0_41, %c0_42] : memref<4x32x32xf32, #tpu.memory_space<vmem>>, vector<1x32x32xf32>
      %78 = vector.shape_cast %77 : vector<1x32x32xf32> to vector<32x32xf32>
      %79 = vector.broadcast %64 : vector<32x1xf32> to vector<32x32xf32>
      %80 = arith.mulf %79, %78 : vector<32x32xf32>
      %cst_43 = arith.constant dense<0.000000e+00> : vector<32x32xf32>
      %81 = tpu.matmul %67, %50, %cst_43 {dimension_numbers = #tpu.dot_dimension_numbers<[1], [0], [0], [1], [0, 0, 1, 1], [], []>} : vector<32x32xf32>, vector<32x32xf32>, vector<32x32xf32> -> vector<32x32xf32>
      %82 = arith.addf %80, %81 : vector<32x32xf32>
      %c0_44 = arith.constant 0 : index
      %c0_45 = arith.constant 0 : index
      %c0_46 = arith.constant 0 : index
      %83 = vector.load %arg16[%c0_44, %c0_45, %c0_46] : memref<4x32x32xf32, #tpu.memory_space<vmem>>, vector<1x32x32xf32>
      %84 = vector.shape_cast %83 : vector<1x32x32xf32> to vector<32x32xf32>
      %85 = vector.shape_cast %82 : vector<32x32xf32> to vector<1x32x32xf32>
      tpu.vector_store %arg16[%c0_44, %c0_45, %c0_46], %85 {strides = array<i32>} : memref<4x32x32xf32, #tpu.memory_space<vmem>>, vector<1x32x32xf32>,
      %c0_47 = arith.constant 0 : index
      %c0_48 = arith.constant 0 : index
      %c0_49 = arith.constant 0 : index
      %86 = vector.load %arg14[%c0_47, %c0_48, %c0_49] : memref<4x32x1xf32, #tpu.memory_space<vmem>>, vector<1x32x1xf32>
      %87 = vector.shape_cast %86 : vector<1x32x1xf32> to vector<32x1xf32>
      %88 = vector.shape_cast %62 : vector<32x1xf32> to vector<1x32x1xf32>
      tpu.vector_store %arg14[%c0_47, %c0_48, %c0_49], %88 {strides = array<i32>} : memref<4x32x1xf32, #tpu.memory_space<vmem>>, vector<1x32x1xf32>,
      %c1 = arith.constant 1 : index
      %c0_50 = arith.constant 0 : index
      %c0_51 = arith.constant 0 : index
      %89 = vector.load %arg8[%c1, %c0_50, %c0_51] : memref<4x128x32xf32, #tpu.memory_space<vmem>>, vector<1x128x32xf32>
      %90 = vector.shape_cast %89 : vector<1x128x32xf32> to vector<128x32xf32>
      %cst_52 = arith.constant dense<0.000000e+00> : vector<32x32xf32>
      %91 = tpu.matmul %37, %90, %cst_52 {dimension_numbers = #tpu.dot_dimension_numbers<[1], [0], [0], [1], [0, 0, 1, 1], [], []>} : vector<32x128xf32>, vector<128x32xf32>, vector<32x32xf32> -> vector<32x32xf32>
      %c1_53 = arith.constant 1 : index
      %c0_54 = arith.constant 0 : index
      %c0_55 = arith.constant 0 : index
      %92 = vector.load %arg9[%c1_53, %c0_54, %c0_55] : memref<4x128x32xf32, #tpu.memory_space<vmem>>, vector<1x128x32xf32>
      %93 = vector.shape_cast %92 : vector<1x128x32xf32> to vector<128x32xf32>
      %cst_56 = arith.constant dense<0.000000e+00> : vector<32x32xf32>
      %94 = tpu.matmul %37, %93, %cst_56 {dimension_numbers = #tpu.dot_dimension_numbers<[1], [0], [0], [1], [0, 0, 1, 1], [], []>} : vector<32x128xf32>, vector<128x32xf32>, vector<32x32xf32> -> vector<32x32xf32>
      %c1_57 = arith.constant 1 : index
      %c0_58 = arith.constant 0 : index
      %c0_59 = arith.constant 0 : index
      %95 = vector.load %arg13[%c1_57, %c0_58, %c0_59] : memref<4x32x32xf32, #tpu.memory_space<vmem>>, vector<1x32x32xf32>
      %96 = vector.shape_cast %95 : vector<1x32x32xf32> to vector<32x32xf32>
      "tpu.trace_start"() <{level = 10 : i32, message = "qd,kd->qk"}> : () -> ()
      %cst_60 = arith.constant dense<0.000000e+00> : vector<32x32xf32>
      %97 = tpu.matmul %96, %91, %cst_60 {dimension_numbers = #tpu.dot_dimension_numbers<[1], [1], [0], [0], [0, 0, 1, 0], [], []>} : vector<32x32xf32>, vector<32x32xf32>, vector<32x32xf32> -> vector<32x32xf32>
      "tpu.trace_stop"() : () -> ()
      %cst_61 = arith.constant 0.176776692 : f32
      %98 = vector.broadcast %cst_61 : f32 to vector<32x32xf32>
      %99 = arith.mulf %97, %98 : vector<32x32xf32>
      %cst_62 = arith.constant -1.000000e+30 : f32
      %100 = vector.broadcast %cst_62 : f32 to vector<32x32xf32>
      %101 = arith.select %44, %100, %99 : vector<32x32xi1>, vector<32x32xf32>
      %c1_63 = arith.constant 1 : index
      %c0_64 = arith.constant 0 : index
      %c0_65 = arith.constant 0 : index
      %102 = vector.load %arg14[%c1_63, %c0_64, %c0_65] : memref<4x32x1xf32, #tpu.memory_space<vmem>>, vector<1x32x1xf32>
      %103 = vector.shape_cast %102 : vector<1x32x1xf32> to vector<32x1xf32>
      %cst_66 = arith.constant dense<0xFF800000> : vector<32xf32>
      %104 = vector.multi_reduction <maximumf>, %101, %cst_66 [1] : vector<32x32xf32> to vector<32xf32>
      %105 = vector.shape_cast %104 : vector<32xf32> to vector<32x1xf32>
      %106 = arith.maximumf %103, %105 : vector<32x1xf32>
      %107 = arith.subf %103, %106 : vector<32x1xf32>
      %108 = math.exp %107 : vector<32x1xf32>
      %109 = vector.broadcast %106 : vector<32x1xf32> to vector<32x32xf32>
      %110 = arith.subf %101, %109 : vector<32x32xf32>
      %111 = math.exp %110 : vector<32x32xf32>
      %c1_67 = arith.constant 1 : index
      %c0_68 = arith.constant 0 : index
      %c0_69 = arith.constant 0 : index
      %112 = vector.load %arg15[%c1_67, %c0_68, %c0_69] : memref<4x32x1xf32, #tpu.memory_space<vmem>>, vector<1x32x1xf32>
      %113 = vector.shape_cast %112 : vector<1x32x1xf32> to vector<32x1xf32>
      %114 = arith.mulf %108, %113 : vector<32x1xf32>
      %cst_70 = arith.constant dense<0.000000e+00> : vector<32xf32>
      %115 = vector.multi_reduction <add>, %111, %cst_70 [1] : vector<32x32xf32> to vector<32xf32>
      %116 = vector.shape_cast %115 : vector<32xf32> to vector<32x1xf32>
      %117 = arith.addf %114, %116 : vector<32x1xf32>
      %c1_71 = arith.constant 1 : index
      %c0_72 = arith.constant 0 : index
      %c0_73 = arith.constant 0 : index
      %118 = vector.load %arg15[%c1_71, %c0_72, %c0_73] : memref<4x32x1xf32, #tpu.memory_space<vmem>>, vector<1x32x1xf32>
      %119 = vector.shape_cast %118 : vector<1x32x1xf32> to vector<32x1xf32>
      %120 = vector.shape_cast %117 : vector<32x1xf32> to vector<1x32x1xf32>
      tpu.vector_store %arg15[%c1_71, %c0_72, %c0_73], %120 {strides = array<i32>} : memref<4x32x1xf32, #tpu.memory_space<vmem>>, vector<1x32x1xf32>,
      %c1_74 = arith.constant 1 : index
      %c0_75 = arith.constant 0 : index
      %c0_76 = arith.constant 0 : index
      %121 = vector.load %arg16[%c1_74, %c0_75, %c0_76] : memref<4x32x32xf32, #tpu.memory_space<vmem>>, vector<1x32x32xf32>
      %122 = vector.shape_cast %121 : vector<1x32x32xf32> to vector<32x32xf32>
      %123 = vector.broadcast %108 : vector<32x1xf32> to vector<32x32xf32>
      %124 = arith.mulf %123, %122 : vector<32x32xf32>
      %cst_77 = arith.constant dense<0.000000e+00> : vector<32x32xf32>
      %125 = tpu.matmul %111, %94, %cst_77 {dimension_numbers = #tpu.dot_dimension_numbers<[1], [0], [0], [1], [0, 0, 1, 1], [], []>} : vector<32x32xf32>, vector<32x32xf32>, vector<32x32xf32> -> vector<32x32xf32>
      %126 = arith.addf %124, %125 : vector<32x32xf32>
      %c1_78 = arith.constant 1 : index
      %c0_79 = arith.constant 0 : index
      %c0_80 = arith.constant 0 : index
      %127 = vector.load %arg16[%c1_78, %c0_79, %c0_80] : memref<4x32x32xf32, #tpu.memory_space<vmem>>, vector<1x32x32xf32>
      %128 = vector.shape_cast %127 : vector<1x32x32xf32> to vector<32x32xf32>
      %129 = vector.shape_cast %126 : vector<32x32xf32> to vector<1x32x32xf32>
      tpu.vector_store %arg16[%c1_78, %c0_79, %c0_80], %129 {strides = array<i32>} : memref<4x32x32xf32, #tpu.memory_space<vmem>>, vector<1x32x32xf32>,
      %c1_81 = arith.constant 1 : index
      %c0_82 = arith.constant 0 : index
      %c0_83 = arith.constant 0 : index
      %130 = vector.load %arg14[%c1_81, %c0_82, %c0_83] : memref<4x32x1xf32, #tpu.memory_space<vmem>>, vector<1x32x1xf32>
      %131 = vector.shape_cast %130 : vector<1x32x1xf32> to vector<32x1xf32>
      %132 = vector.shape_cast %106 : vector<32x1xf32> to vector<1x32x1xf32>
      tpu.vector_store %arg14[%c1_81, %c0_82, %c0_83], %132 {strides = array<i32>} : memref<4x32x1xf32, #tpu.memory_space<vmem>>, vector<1x32x1xf32>,
      %c2 = arith.constant 2 : index
      %c0_84 = arith.constant 0 : index
      %c0_85 = arith.constant 0 : index
      %133 = vector.load %arg8[%c2, %c0_84, %c0_85] : memref<4x128x32xf32, #tpu.memory_space<vmem>>, vector<1x128x32xf32>
      %134 = vector.shape_cast %133 : vector<1x128x32xf32> to vector<128x32xf32>
      %cst_86 = arith.constant dense<0.000000e+00> : vector<32x32xf32>
      %135 = tpu.matmul %37, %134, %cst_86 {dimension_numbers = #tpu.dot_dimension_numbers<[1], [0], [0], [1], [0, 0, 1, 1], [], []>} : vector<32x128xf32>, vector<128x32xf32>, vector<32x32xf32> -> vector<32x32xf32>
      %c2_87 = arith.constant 2 : index
      %c0_88 = arith.constant 0 : index
      %c0_89 = arith.constant 0 : index
      %136 = vector.load %arg9[%c2_87, %c0_88, %c0_89] : memref<4x128x32xf32, #tpu.memory_space<vmem>>, vector<1x128x32xf32>
      %137 = vector.shape_cast %136 : vector<1x128x32xf32> to vector<128x32xf32>
      %cst_90 = arith.constant dense<0.000000e+00> : vector<32x32xf32>
      %138 = tpu.matmul %37, %137, %cst_90 {dimension_numbers = #tpu.dot_dimension_numbers<[1], [0], [0], [1], [0, 0, 1, 1], [], []>} : vector<32x128xf32>, vector<128x32xf32>, vector<32x32xf32> -> vector<32x32xf32>
      %c2_91 = arith.constant 2 : index
      %c0_92 = arith.constant 0 : index
      %c0_93 = arith.constant 0 : index
      %139 = vector.load %arg13[%c2_91, %c0_92, %c0_93] : memref<4x32x32xf32, #tpu.memory_space<vmem>>, vector<1x32x32xf32>
      %140 = vector.shape_cast %139 : vector<1x32x32xf32> to vector<32x32xf32>
      "tpu.trace_start"() <{level = 10 : i32, message = "qd,kd->qk"}> : () -> ()
      %cst_94 = arith.constant dense<0.000000e+00> : vector<32x32xf32>
      %141 = tpu.matmul %140, %135, %cst_94 {dimension_numbers = #tpu.dot_dimension_numbers<[1], [1], [0], [0], [0, 0, 1, 0], [], []>} : vector<32x32xf32>, vector<32x32xf32>, vector<32x32xf32> -> vector<32x32xf32>
      "tpu.trace_stop"() : () -> ()
      %cst_95 = arith.constant 0.176776692 : f32
      %142 = vector.broadcast %cst_95 : f32 to vector<32x32xf32>
      %143 = arith.mulf %141, %142 : vector<32x32xf32>
      %cst_96 = arith.constant -1.000000e+30 : f32
      %144 = vector.broadcast %cst_96 : f32 to vector<32x32xf32>
      %145 = arith.select %44, %144, %143 : vector<32x32xi1>, vector<32x32xf32>
      %c2_97 = arith.constant 2 : index
      %c0_98 = arith.constant 0 : index
      %c0_99 = arith.constant 0 : index
      %146 = vector.load %arg14[%c2_97, %c0_98, %c0_99] : memref<4x32x1xf32, #tpu.memory_space<vmem>>, vector<1x32x1xf32>
      %147 = vector.shape_cast %146 : vector<1x32x1xf32> to vector<32x1xf32>
      %cst_100 = arith.constant dense<0xFF800000> : vector<32xf32>
      %148 = vector.multi_reduction <maximumf>, %145, %cst_100 [1] : vector<32x32xf32> to vector<32xf32>
      %149 = vector.shape_cast %148 : vector<32xf32> to vector<32x1xf32>
      %150 = arith.maximumf %147, %149 : vector<32x1xf32>
      %151 = arith.subf %147, %150 : vector<32x1xf32>
      %152 = math.exp %151 : vector<32x1xf32>
      %153 = vector.broadcast %150 : vector<32x1xf32> to vector<32x32xf32>
      %154 = arith.subf %145, %153 : vector<32x32xf32>
      %155 = math.exp %154 : vector<32x32xf32>
      %c2_101 = arith.constant 2 : index
      %c0_102 = arith.constant 0 : index
      %c0_103 = arith.constant 0 : index
      %156 = vector.load %arg15[%c2_101, %c0_102, %c0_103] : memref<4x32x1xf32, #tpu.memory_space<vmem>>, vector<1x32x1xf32>
      %157 = vector.shape_cast %156 : vector<1x32x1xf32> to vector<32x1xf32>
      %158 = arith.mulf %152, %157 : vector<32x1xf32>
      %cst_104 = arith.constant dense<0.000000e+00> : vector<32xf32>
      %159 = vector.multi_reduction <add>, %155, %cst_104 [1] : vector<32x32xf32> to vector<32xf32>
      %160 = vector.shape_cast %159 : vector<32xf32> to vector<32x1xf32>
      %161 = arith.addf %158, %160 : vector<32x1xf32>
      %c2_105 = arith.constant 2 : index
      %c0_106 = arith.constant 0 : index
      %c0_107 = arith.constant 0 : index
      %162 = vector.load %arg15[%c2_105, %c0_106, %c0_107] : memref<4x32x1xf32, #tpu.memory_space<vmem>>, vector<1x32x1xf32>
      %163 = vector.shape_cast %162 : vector<1x32x1xf32> to vector<32x1xf32>
      %164 = vector.shape_cast %161 : vector<32x1xf32> to vector<1x32x1xf32>
      tpu.vector_store %arg15[%c2_105, %c0_106, %c0_107], %164 {strides = array<i32>} : memref<4x32x1xf32, #tpu.memory_space<vmem>>, vector<1x32x1xf32>,
      %c2_108 = arith.constant 2 : index
      %c0_109 = arith.constant 0 : index
      %c0_110 = arith.constant 0 : index
      %165 = vector.load %arg16[%c2_108, %c0_109, %c0_110] : memref<4x32x32xf32, #tpu.memory_space<vmem>>, vector<1x32x32xf32>
      %166 = vector.shape_cast %165 : vector<1x32x32xf32> to vector<32x32xf32>
      %167 = vector.broadcast %152 : vector<32x1xf32> to vector<32x32xf32>
      %168 = arith.mulf %167, %166 : vector<32x32xf32>
      %cst_111 = arith.constant dense<0.000000e+00> : vector<32x32xf32>
      %169 = tpu.matmul %155, %138, %cst_111 {dimension_numbers = #tpu.dot_dimension_numbers<[1], [0], [0], [1], [0, 0, 1, 1], [], []>} : vector<32x32xf32>, vector<32x32xf32>, vector<32x32xf32> -> vector<32x32xf32>
      %170 = arith.addf %168, %169 : vector<32x32xf32>
      %c2_112 = arith.constant 2 : index
      %c0_113 = arith.constant 0 : index
      %c0_114 = arith.constant 0 : index
      %171 = vector.load %arg16[%c2_112, %c0_113, %c0_114] : memref<4x32x32xf32, #tpu.memory_space<vmem>>, vector<1x32x32xf32>
      %172 = vector.shape_cast %171 : vector<1x32x32xf32> to vector<32x32xf32>
      %173 = vector.shape_cast %170 : vector<32x32xf32> to vector<1x32x32xf32>
      tpu.vector_store %arg16[%c2_112, %c0_113, %c0_114], %173 {strides = array<i32>} : memref<4x32x32xf32, #tpu.memory_space<vmem>>, vector<1x32x32xf32>,
      %c2_115 = arith.constant 2 : index
      %c0_116 = arith.constant 0 : index
      %c0_117 = arith.constant 0 : index
      %174 = vector.load %arg14[%c2_115, %c0_116, %c0_117] : memref<4x32x1xf32, #tpu.memory_space<vmem>>, vector<1x32x1xf32>
      %175 = vector.shape_cast %174 : vector<1x32x1xf32> to vector<32x1xf32>
      %176 = vector.shape_cast %150 : vector<32x1xf32> to vector<1x32x1xf32>
      tpu.vector_store %arg14[%c2_115, %c0_116, %c0_117], %176 {strides = array<i32>} : memref<4x32x1xf32, #tpu.memory_space<vmem>>, vector<1x32x1xf32>,
      %c3 = arith.constant 3 : index
      %c0_118 = arith.constant 0 : index
      %c0_119 = arith.constant 0 : index
      %177 = vector.load %arg8[%c3, %c0_118, %c0_119] : memref<4x128x32xf32, #tpu.memory_space<vmem>>, vector<1x128x32xf32>
      %178 = vector.shape_cast %177 : vector<1x128x32xf32> to vector<128x32xf32>
      %cst_120 = arith.constant dense<0.000000e+00> : vector<32x32xf32>
      %179 = tpu.matmul %37, %178, %cst_120 {dimension_numbers = #tpu.dot_dimension_numbers<[1], [0], [0], [1], [0, 0, 1, 1], [], []>} : vector<32x128xf32>, vector<128x32xf32>, vector<32x32xf32> -> vector<32x32xf32>
      %c3_121 = arith.constant 3 : index
      %c0_122 = arith.constant 0 : index
      %c0_123 = arith.constant 0 : index
      %180 = vector.load %arg9[%c3_121, %c0_122, %c0_123] : memref<4x128x32xf32, #tpu.memory_space<vmem>>, vector<1x128x32xf32>
      %181 = vector.shape_cast %180 : vector<1x128x32xf32> to vector<128x32xf32>
      %cst_124 = arith.constant dense<0.000000e+00> : vector<32x32xf32>
      %182 = tpu.matmul %37, %181, %cst_124 {dimension_numbers = #tpu.dot_dimension_numbers<[1], [0], [0], [1], [0, 0, 1, 1], [], []>} : vector<32x128xf32>, vector<128x32xf32>, vector<32x32xf32> -> vector<32x32xf32>
      %c3_125 = arith.constant 3 : index
      %c0_126 = arith.constant 0 : index
      %c0_127 = arith.constant 0 : index
      %183 = vector.load %arg13[%c3_125, %c0_126, %c0_127] : memref<4x32x32xf32, #tpu.memory_space<vmem>>, vector<1x32x32xf32>
      %184 = vector.shape_cast %183 : vector<1x32x32xf32> to vector<32x32xf32>
      "tpu.trace_start"() <{level = 10 : i32, message = "qd,kd->qk"}> : () -> ()
      %cst_128 = arith.constant dense<0.000000e+00> : vector<32x32xf32>
      %185 = tpu.matmul %184, %179, %cst_128 {dimension_numbers = #tpu.dot_dimension_numbers<[1], [1], [0], [0], [0, 0, 1, 0], [], []>} : vector<32x32xf32>, vector<32x32xf32>, vector<32x32xf32> -> vector<32x32xf32>
      "tpu.trace_stop"() : () -> ()
      %cst_129 = arith.constant 0.176776692 : f32
      %186 = vector.broadcast %cst_129 : f32 to vector<32x32xf32>
      %187 = arith.mulf %185, %186 : vector<32x32xf32>
      %cst_130 = arith.constant -1.000000e+30 : f32
      %188 = vector.broadcast %cst_130 : f32 to vector<32x32xf32>
      %189 = arith.select %44, %188, %187 : vector<32x32xi1>, vector<32x32xf32>
      %c3_131 = arith.constant 3 : index
      %c0_132 = arith.constant 0 : index
      %c0_133 = arith.constant 0 : index
      %190 = vector.load %arg14[%c3_131, %c0_132, %c0_133] : memref<4x32x1xf32, #tpu.memory_space<vmem>>, vector<1x32x1xf32>
      %191 = vector.shape_cast %190 : vector<1x32x1xf32> to vector<32x1xf32>
      %cst_134 = arith.constant dense<0xFF800000> : vector<32xf32>
      %192 = vector.multi_reduction <maximumf>, %189, %cst_134 [1] : vector<32x32xf32> to vector<32xf32>
      %193 = vector.shape_cast %192 : vector<32xf32> to vector<32x1xf32>
      %194 = arith.maximumf %191, %193 : vector<32x1xf32>
      %195 = arith.subf %191, %194 : vector<32x1xf32>
      %196 = math.exp %195 : vector<32x1xf32>
      %197 = vector.broadcast %194 : vector<32x1xf32> to vector<32x32xf32>
      %198 = arith.subf %189, %197 : vector<32x32xf32>
      %199 = math.exp %198 : vector<32x32xf32>
      %c3_135 = arith.constant 3 : index
      %c0_136 = arith.constant 0 : index
      %c0_137 = arith.constant 0 : index
      %200 = vector.load %arg15[%c3_135, %c0_136, %c0_137] : memref<4x32x1xf32, #tpu.memory_space<vmem>>, vector<1x32x1xf32>
      %201 = vector.shape_cast %200 : vector<1x32x1xf32> to vector<32x1xf32>
      %202 = arith.mulf %196, %201 : vector<32x1xf32>
      %cst_138 = arith.constant dense<0.000000e+00> : vector<32xf32>
      %203 = vector.multi_reduction <add>, %199, %cst_138 [1] : vector<32x32xf32> to vector<32xf32>
      %204 = vector.shape_cast %203 : vector<32xf32> to vector<32x1xf32>
      %205 = arith.addf %202, %204 : vector<32x1xf32>
      %c3_139 = arith.constant 3 : index
      %c0_140 = arith.constant 0 : index
      %c0_141 = arith.constant 0 : index
      %206 = vector.load %arg15[%c3_139, %c0_140, %c0_141] : memref<4x32x1xf32, #tpu.memory_space<vmem>>, vector<1x32x1xf32>
      %207 = vector.shape_cast %206 : vector<1x32x1xf32> to vector<32x1xf32>
      %208 = vector.shape_cast %205 : vector<32x1xf32> to vector<1x32x1xf32>
      tpu.vector_store %arg15[%c3_139, %c0_140, %c0_141], %208 {strides = array<i32>} : memref<4x32x1xf32, #tpu.memory_space<vmem>>, vector<1x32x1xf32>,
      %c3_142 = arith.constant 3 : index
      %c0_143 = arith.constant 0 : index
      %c0_144 = arith.constant 0 : index
      %209 = vector.load %arg16[%c3_142, %c0_143, %c0_144] : memref<4x32x32xf32, #tpu.memory_space<vmem>>, vector<1x32x32xf32>
      %210 = vector.shape_cast %209 : vector<1x32x32xf32> to vector<32x32xf32>
      %211 = vector.broadcast %196 : vector<32x1xf32> to vector<32x32xf32>
      %212 = arith.mulf %211, %210 : vector<32x32xf32>
      %cst_145 = arith.constant dense<0.000000e+00> : vector<32x32xf32>
      %213 = tpu.matmul %199, %182, %cst_145 {dimension_numbers = #tpu.dot_dimension_numbers<[1], [0], [0], [1], [0, 0, 1, 1], [], []>} : vector<32x32xf32>, vector<32x32xf32>, vector<32x32xf32> -> vector<32x32xf32>
      %214 = arith.addf %212, %213 : vector<32x32xf32>
      %c3_146 = arith.constant 3 : index
      %c0_147 = arith.constant 0 : index
      %c0_148 = arith.constant 0 : index
      %215 = vector.load %arg16[%c3_146, %c0_147, %c0_148] : memref<4x32x32xf32, #tpu.memory_space<vmem>>, vector<1x32x32xf32>
      %216 = vector.shape_cast %215 : vector<1x32x32xf32> to vector<32x32xf32>
      %217 = vector.shape_cast %214 : vector<32x32xf32> to vector<1x32x32xf32>
      tpu.vector_store %arg16[%c3_146, %c0_147, %c0_148], %217 {strides = array<i32>} : memref<4x32x32xf32, #tpu.memory_space<vmem>>, vector<1x32x32xf32>,
      %c3_149 = arith.constant 3 : index
      %c0_150 = arith.constant 0 : index
      %c0_151 = arith.constant 0 : index
      %218 = vector.load %arg14[%c3_149, %c0_150, %c0_151] : memref<4x32x1xf32, #tpu.memory_space<vmem>>, vector<1x32x1xf32>
      %219 = vector.shape_cast %218 : vector<1x32x1xf32> to vector<32x1xf32>
      %220 = vector.shape_cast %194 : vector<32x1xf32> to vector<1x32x1xf32>
      tpu.vector_store %arg14[%c3_149, %c0_150, %c0_151], %220 {strides = array<i32>} : memref<4x32x1xf32, #tpu.memory_space<vmem>>, vector<1x32x1xf32>,
    } else {
    }
    %c1_i32 = arith.constant 1 : i32
    %9 = arith.cmpi eq, %arg2, %c1_i32 : i32
    %10 = arith.extui %9 : i1 to i32
    %c0_i32_4 = arith.constant 0 : i32
    %11 = arith.cmpi ne, %10, %c0_i32_4 : i32
    scf.if %11 {
      %c0 = arith.constant 0 : index
      %c0_5 = arith.constant 0 : index
      %c0_6 = arith.constant 0 : index
      %12 = vector.load %arg15[%c0, %c0_5, %c0_6] : memref<4x32x1xf32, #tpu.memory_space<vmem>>, vector<1x32x1xf32>
      %13 = vector.shape_cast %12 : vector<1x32x1xf32> to vector<32x1xf32>
      %14 = tpu.reciprocal %13 : vector<32x1xf32> -> vector<32x1xf32>
      %c0_7 = arith.constant 0 : index
      %c0_8 = arith.constant 0 : index
      %c0_9 = arith.constant 0 : index
      %15 = vector.load %arg16[%c0_7, %c0_8, %c0_9] : memref<4x32x32xf32, #tpu.memory_space<vmem>>, vector<1x32x32xf32>
      %16 = vector.shape_cast %15 : vector<1x32x32xf32> to vector<32x32xf32>
      %17 = vector.broadcast %14 : vector<32x1xf32> to vector<32x32xf32>
      %18 = arith.mulf %16, %17 : vector<32x32xf32>
      %c1 = arith.constant 1 : index
      %c0_10 = arith.constant 0 : index
      %c0_11 = arith.constant 0 : index
      %19 = vector.load %arg15[%c1, %c0_10, %c0_11] : memref<4x32x1xf32, #tpu.memory_space<vmem>>, vector<1x32x1xf32>
      %20 = vector.shape_cast %19 : vector<1x32x1xf32> to vector<32x1xf32>
      %21 = tpu.reciprocal %20 : vector<32x1xf32> -> vector<32x1xf32>
      %c1_12 = arith.constant 1 : index
      %c0_13 = arith.constant 0 : index
      %c0_14 = arith.constant 0 : index
      %22 = vector.load %arg16[%c1_12, %c0_13, %c0_14] : memref<4x32x32xf32, #tpu.memory_space<vmem>>, vector<1x32x32xf32>
      %23 = vector.shape_cast %22 : vector<1x32x32xf32> to vector<32x32xf32>
      %24 = vector.broadcast %21 : vector<32x1xf32> to vector<32x32xf32>
      %25 = arith.mulf %23, %24 : vector<32x32xf32>
      %c2 = arith.constant 2 : index
      %c0_15 = arith.constant 0 : index
      %c0_16 = arith.constant 0 : index
      %26 = vector.load %arg15[%c2, %c0_15, %c0_16] : memref<4x32x1xf32, #tpu.memory_space<vmem>>, vector<1x32x1xf32>
      %27 = vector.shape_cast %26 : vector<1x32x1xf32> to vector<32x1xf32>
      %28 = tpu.reciprocal %27 : vector<32x1xf32> -> vector<32x1xf32>
      %c2_17 = arith.constant 2 : index
      %c0_18 = arith.constant 0 : index
      %c0_19 = arith.constant 0 : index
      %29 = vector.load %arg16[%c2_17, %c0_18, %c0_19] : memref<4x32x32xf32, #tpu.memory_space<vmem>>, vector<1x32x32xf32>
      %30 = vector.shape_cast %29 : vector<1x32x32xf32> to vector<32x32xf32>
      %31 = vector.broadcast %28 : vector<32x1xf32> to vector<32x32xf32>
      %32 = arith.mulf %30, %31 : vector<32x32xf32>
      %c3 = arith.constant 3 : index
      %c0_20 = arith.constant 0 : index
      %c0_21 = arith.constant 0 : index
      %33 = vector.load %arg15[%c3, %c0_20, %c0_21] : memref<4x32x1xf32, #tpu.memory_space<vmem>>, vector<1x32x1xf32>
      %34 = vector.shape_cast %33 : vector<1x32x1xf32> to vector<32x1xf32>
      %35 = tpu.reciprocal %34 : vector<32x1xf32> -> vector<32x1xf32>
      %c3_22 = arith.constant 3 : index
      %c0_23 = arith.constant 0 : index
      %c0_24 = arith.constant 0 : index
      %36 = vector.load %arg16[%c3_22, %c0_23, %c0_24] : memref<4x32x32xf32, #tpu.memory_space<vmem>>, vector<1x32x32xf32>
      %37 = vector.shape_cast %36 : vector<1x32x32xf32> to vector<32x32xf32>
      %38 = vector.broadcast %35 : vector<32x1xf32> to vector<32x32xf32>
      %39 = arith.mulf %37, %38 : vector<32x32xf32>
      %40 = tpu.concatenate %18, %25, %32, %39 in 1 : vector<32x32xf32>, vector<32x32xf32>, vector<32x32xf32>, vector<32x32xf32> -> vector<32x128xf32>
      %c0_25 = arith.constant 0 : index
      %c0_26 = arith.constant 0 : index
      %41 = vector.load %arg10[%c0_25, %c0_26] : memref<128x128xf32, #tpu.memory_space<vmem>>, vector<128x128xf32>
      %cst = arith.constant dense<0.000000e+00> : vector<32x128xf32>
      %42 = tpu.matmul %40, %41, %cst {dimension_numbers = #tpu.dot_dimension_numbers<[1], [0], [0], [1], [0, 0, 1, 1], [], []>} : vector<32x128xf32>, vector<128x128xf32>, vector<32x128xf32> -> vector<32x128xf32>
      %c0_27 = arith.constant 0 : index
      %c0_28 = arith.constant 0 : index
      %43 = vector.load %arg11[%c0_27, %c0_28] : memref<1x128xf32, #tpu.memory_space<vmem>>, vector<1x128xf32>
      %44 = vector.broadcast %43 : vector<1x128xf32> to vector<32x128xf32>
      %45 = arith.addf %42, %44 : vector<32x128xf32>
      %c0_29 = arith.constant 0 : index
      %c0_30 = arith.constant 0 : index
      %c0_31 = arith.constant 0 : index
      %46 = vector.load %arg3[%c0_29, %c0_30, %c0_31] : memref<1x32x128xf32, #tpu.memory_space<vmem>>, vector<1x32x128xf32>
      %47 = vector.shape_cast %46 : vector<1x32x128xf32> to vector<32x128xf32>
      %48 = arith.addf %45, %47 : vector<32x128xf32>
      %c0_32 = arith.constant 0 : index
      %c0_33 = arith.constant 0 : index
      %c0_34 = arith.constant 0 : index
      %49 = vector.load %arg12[%c0_32, %c0_33, %c0_34] : memref<1x32x128xf32, #tpu.memory_space<vmem>>, vector<1x32x128xf32>
      %50 = vector.shape_cast %49 : vector<1x32x128xf32> to vector<32x128xf32>
      %51 = vector.shape_cast %48 : vector<32x128xf32> to vector<1x32x128xf32>
      tpu.vector_store %arg12[%c0_32, %c0_33, %c0_34], %51 {strides = array<i32>} : memref<1x32x128xf32, #tpu.memory_space<vmem>>, vector<1x32x128xf32>,
    } else {
    }
    return
  }
  func.func @transform_0(%arg0: i32, %arg1: i32, %arg2: i32) -> (i32, i32, i32) {
    %c0_i32 = arith.constant 0 : i32
    %c0_i32_0 = arith.constant 0 : i32
    return %arg0, %arg1, %c0_i32 : i32, i32, i32
  }
  func.func @transform_1(%arg0: i32, %arg1: i32, %arg2: i32) -> (i32, i32, i32) {
    %c0_i32 = arith.constant 0 : i32
    %c0_i32_0 = arith.constant 0 : i32
    return %arg0, %arg2, %c0_i32 : i32, i32, i32
  }
  func.func @transform_2(%arg0: i32, %arg1: i32, %arg2: i32) -> (i32, i32) {
    %c0_i32 = arith.constant 0 : i32
    %c0_i32_0 = arith.constant 0 : i32
    %c0_i32_1 = arith.constant 0 : i32
    return %c0_i32, %c0_i32_0 : i32, i32
  }
  func.func @transform_3(%arg0: i32, %arg1: i32, %arg2: i32) -> (i32, i32) {
    %c0_i32 = arith.constant 0 : i32
    %c0_i32_0 = arith.constant 0 : i32
    %c0_i32_1 = arith.constant 0 : i32
    return %c0_i32, %c0_i32_0 : i32, i32
  }
  func.func @transform_4(%arg0: i32, %arg1: i32, %arg2: i32) -> (i32, i32, i32) {
    %c0_i32 = arith.constant 0 : i32
    %c0_i32_0 = arith.constant 0 : i32
    %c0_i32_1 = arith.constant 0 : i32
    %c0_i32_2 = arith.constant 0 : i32
    return %c0_i32, %c0_i32_0, %c0_i32_1 : i32, i32, i32
  }
  func.func @transform_5(%arg0: i32, %arg1: i32, %arg2: i32) -> (i32, i32, i32) {
    %c0_i32 = arith.constant 0 : i32
    %c0_i32_0 = arith.constant 0 : i32
    %c0_i32_1 = arith.constant 0 : i32
    %c0_i32_2 = arith.constant 0 : i32
    return %c0_i32, %c0_i32_0, %c0_i32_1 : i32, i32, i32
  }
  func.func @transform_6(%arg0: i32, %arg1: i32, %arg2: i32) -> (i32, i32, i32) {
    %c0_i32 = arith.constant 0 : i32
    %c0_i32_0 = arith.constant 0 : i32
    %c0_i32_1 = arith.constant 0 : i32
    %c0_i32_2 = arith.constant 0 : i32
    return %c0_i32, %c0_i32_0, %c0_i32_1 : i32, i32, i32
  }
  func.func @transform_7(%arg0: i32, %arg1: i32, %arg2: i32) -> (i32, i32) {
    %c0_i32 = arith.constant 0 : i32
    %c0_i32_0 = arith.constant 0 : i32
    %c0_i32_1 = arith.constant 0 : i32
    return %c0_i32, %c0_i32_0 : i32, i32
  }
  func.func @transform_8(%arg0: i32, %arg1: i32, %arg2: i32) -> (i32, i32) {
    %c0_i32 = arith.constant 0 : i32
    %c0_i32_0 = arith.constant 0 : i32
    %c0_i32_1 = arith.constant 0 : i32
    return %c0_i32, %c0_i32_0 : i32, i32
  }
  func.func @transform_9(%arg0: i32, %arg1: i32, %arg2: i32) -> (i32, i32, i32) {
    %c0_i32 = arith.constant 0 : i32
    %c0_i32_0 = arith.constant 0 : i32
    return %arg0, %arg1, %c0_i32 : i32, i32, i32
  }
}

module attributes {stable_mosaic.version = 11 : i64} {
  func.func @_attn_flash_kernel(%arg0: i32, %arg1: i32, %arg2: i32, %arg3: memref<1x32x128xf32, #tpu.memory_space<vmem>>, %arg4: memref<1x32x128xf32, #tpu.memory_space<vmem>>, %arg5: memref<1x128xf32, #tpu.memory_space<vmem>>, %arg6: memref<1x128xf32, #tpu.memory_space<vmem>>, %arg7: memref<4x128x32xf32, #tpu.memory_space<vmem>>, %arg8: memref<4x128x32xf32, #tpu.memory_space<vmem>>, %arg9: memref<4x128x32xf32, #tpu.memory_space<vmem>>, %arg10: memref<128x128xf32, #tpu.memory_space<vmem>>, %arg11: memref<1x128xf32, #tpu.memory_space<vmem>>, %arg12: memref<1x32x128xf32, #tpu.memory_space<vmem>>, %arg13: memref<4x32x32xf32, #tpu.memory_space<vmem>>, %arg14: memref<4x32x1xf32, #tpu.memory_space<vmem>>, %arg15: memref<4x32x1xf32, #tpu.memory_space<vmem>>, %arg16: memref<4x32x32xf32, #tpu.memory_space<vmem>>) attributes {dimension_semantics = [#tpu.dimension_semantics<parallel>, #tpu.dimension_semantics<parallel>, #tpu.dimension_semantics<arbitrary>], iteration_bounds = array<i64: 2, 2, 2>, scalar_prefetch = 0 : i64, scratch_operands = 4 : i64, tpu.core_type = #tpu.core_type<tc>, window_params = [{transform_indices = @transform_0, window_bounds = array<i64: 1, 32, 128>}, {transform_indices = @transform_1, window_bounds = array<i64: 1, 32, 128>}, {pipeline_mode = #tpu.pipeline_mode<synchronous>, transform_indices = @transform_2, window_bounds = array<i64: 1, 128>}, {pipeline_mode = #tpu.pipeline_mode<synchronous>, transform_indices = @transform_3, window_bounds = array<i64: 1, 128>}, {pipeline_mode = #tpu.pipeline_mode<synchronous>, transform_indices = @transform_4, window_bounds = array<i64: 4, 128, 32>}, {pipeline_mode = #tpu.pipeline_mode<synchronous>, transform_indices = @transform_5, window_bounds = array<i64: 4, 128, 32>}, {pipeline_mode = #tpu.pipeline_mode<synchronous>, transform_indices = @transform_6, window_bounds = array<i64: 4, 128, 32>}, {pipeline_mode = #tpu.pipeline_mode<synchronous>, transform_indices = @transform_7, window_bounds = array<i64: 128, 128>}, {pipeline_mode = #tpu.pipeline_mode<synchronous>, transform_indices = @transform_8, window_bounds = array<i64: 1, 128>}, {transform_indices = @transform_9, window_bounds = array<i64: 1, 32, 128>}]} {
    %c32_i32 = arith.constant 32 : i32
    %0 = arith.muli %arg1, %c32_i32 : i32
    %c32_i32_0 = arith.constant 32 : i32
    %1 = arith.muli %arg2, %c32_i32_0 : i32
    %c0_i32 = arith.constant 0 : i32
    %2 = arith.cmpi eq, %arg2, %c0_i32 : i32
    %3 = arith.extui %2 : i1 to i32
    %c0_i32_1 = arith.constant 0 : i32
    %4 = arith.cmpi ne, %3, %c0_i32_1 : i32
    scf.if %4 {
      %c0 = arith.constant 0 : index
      %c0_5 = arith.constant 0 : index
      %c0_6 = arith.constant 0 : index
      %12 = vector.load %arg3[%c0, %c0_5, %c0_6] : memref<1x32x128xf32, #tpu.memory_space<vmem>>, vector<1x32x128xf32>
      %13 = vector.shape_cast %12 : vector<1x32x128xf32> to vector<32x128xf32>
      %cst = arith.constant dense<0.000000e+00> : vector<32xf32>
      %14 = vector.multi_reduction <add>, %13, %cst [1] : vector<32x128xf32> to vector<32xf32>
      %15 = vector.shape_cast %14 : vector<32xf32> to vector<32x1xf32>
      %cst_7 = arith.constant 1.280000e+02 : f32
      %16 = vector.broadcast %cst_7 : f32 to vector<32x1xf32>
      %17 = arith.divf %15, %16 : vector<32x1xf32>
      %18 = vector.broadcast %17 : vector<32x1xf32> to vector<32x128xf32>
      %19 = arith.subf %13, %18 : vector<32x128xf32>
      %20 = arith.mulf %19, %19 : vector<32x128xf32>
      %cst_8 = arith.constant dense<0.000000e+00> : vector<32xf32>
      %21 = vector.multi_reduction <add>, %20, %cst_8 [1] : vector<32x128xf32> to vector<32xf32>
      %22 = vector.shape_cast %21 : vector<32xf32> to vector<32x1xf32>
      %cst_9 = arith.constant 1.280000e+02 : f32
      %23 = vector.broadcast %cst_9 : f32 to vector<32x1xf32>
      %24 = arith.divf %22, %23 : vector<32x1xf32>
      %25 = vector.broadcast %17 : vector<32x1xf32> to vector<32x128xf32>
      %26 = arith.subf %13, %25 : vector<32x128xf32>
      %cst_10 = arith.constant 9.99999974E-6 : f32
      %27 = vector.broadcast %cst_10 : f32 to vector<32x1xf32>
      %28 = arith.addf %24, %27 : vector<32x1xf32>
      %29 = math.rsqrt %28 : vector<32x1xf32>
      %30 = vector.broadcast %29 : vector<32x1xf32> to vector<32x128xf32>
      %31 = arith.mulf %26, %30 : vector<32x128xf32>
      %c0_11 = arith.constant 0 : index
      %c0_12 = arith.constant 0 : index
      %32 = vector.load %arg5[%c0_11, %c0_12] : memref<1x128xf32, #tpu.memory_space<vmem>>, vector<1x128xf32>
      %33 = vector.broadcast %32 : vector<1x128xf32> to vector<32x128xf32>
      %34 = arith.mulf %31, %33 : vector<32x128xf32>
      %c0_13 = arith.constant 0 : index
      %c0_14 = arith.constant 0 : index
      %35 = vector.load %arg6[%c0_13, %c0_14] : memref<1x128xf32, #tpu.memory_space<vmem>>, vector<1x128xf32>
      %36 = vector.broadcast %35 : vector<1x128xf32> to vector<32x128xf32>
      %37 = arith.addf %34, %36 : vector<32x128xf32>
      %c0_15 = arith.constant 0 : index
      %c0_16 = arith.constant 0 : index
      %c0_17 = arith.constant 0 : index
      %38 = vector.load %arg7[%c0_15, %c0_16, %c0_17] : memref<4x128x32xf32, #tpu.memory_space<vmem>>, vector<1x128x32xf32>
      %39 = vector.shape_cast %38 : vector<1x128x32xf32> to vector<128x32xf32>
      %cst_18 = arith.constant dense<0.000000e+00> : vector<32x32xf32>
      %40 = tpu.matmul %37, %39, %cst_18 {dimension_numbers = #tpu.dot_dimension_numbers<[1], [0], [0], [1], [0, 0, 1, 1], [], []>} : vector<32x128xf32>, vector<128x32xf32>, vector<32x32xf32> -> vector<32x32xf32>
      %c0_19 = arith.constant 0 : index
      %c0_20 = arith.constant 0 : index
      %c0_21 = arith.constant 0 : index
      %41 = vector.load %arg13[%c0_19, %c0_20, %c0_21] : memref<4x32x32xf32, #tpu.memory_space<vmem>>, vector<1x32x32xf32>
      %42 = vector.shape_cast %41 : vector<1x32x32xf32> to vector<32x32xf32>
      %43 = vector.shape_cast %40 : vector<32x32xf32> to vector<1x32x32xf32>
      tpu.vector_store %arg13[%c0_19, %c0_20, %c0_21], %43 {strides = array<i32>} : memref<4x32x32xf32, #tpu.memory_space<vmem>>, vector<1x32x32xf32>,
      %c1 = arith.constant 1 : index
      %c0_22 = arith.constant 0 : index
      %c0_23 = arith.constant 0 : index
      %44 = vector.load %arg7[%c1, %c0_22, %c0_23] : memref<4x128x32xf32, #tpu.memory_space<vmem>>, vector<1x128x32xf32>
      %45 = vector.shape_cast %44 : vector<1x128x32xf32> to vector<128x32xf32>
      %cst_24 = arith.constant dense<0.000000e+00> : vector<32x32xf32>
      %46 = tpu.matmul %37, %45, %cst_24 {dimension_numbers = #tpu.dot_dimension_numbers<[1], [0], [0], [1], [0, 0, 1, 1], [], []>} : vector<32x128xf32>, vector<128x32xf32>, vector<32x32xf32> -> vector<32x32xf32>
      %c1_25 = arith.constant 1 : index
      %c0_26 = arith.constant 0 : index
      %c0_27 = arith.constant 0 : index
      %47 = vector.load %arg13[%c1_25, %c0_26, %c0_27] : memref<4x32x32xf32, #tpu.memory_space<vmem>>, vector<1x32x32xf32>
      %48 = vector.shape_cast %47 : vector<1x32x32xf32> to vector<32x32xf32>
      %49 = vector.shape_cast %46 : vector<32x32xf32> to vector<1x32x32xf32>
      tpu.vector_store %arg13[%c1_25, %c0_26, %c0_27], %49 {strides = array<i32>} : memref<4x32x32xf32, #tpu.memory_space<vmem>>, vector<1x32x32xf32>,
      %c2 = arith.constant 2 : index
      %c0_28 = arith.constant 0 : index
      %c0_29 = arith.constant 0 : index
      %50 = vector.load %arg7[%c2, %c0_28, %c0_29] : memref<4x128x32xf32, #tpu.memory_space<vmem>>, vector<1x128x32xf32>
      %51 = vector.shape_cast %50 : vector<1x128x32xf32> to vector<128x32xf32>
      %cst_30 = arith.constant dense<0.000000e+00> : vector<32x32xf32>
      %52 = tpu.matmul %37, %51, %cst_30 {dimension_numbers = #tpu.dot_dimension_numbers<[1], [0], [0], [1], [0, 0, 1, 1], [], []>} : vector<32x128xf32>, vector<128x32xf32>, vector<32x32xf32> -> vector<32x32xf32>
      %c2_31 = arith.constant 2 : index
      %c0_32 = arith.constant 0 : index
      %c0_33 = arith.constant 0 : index
      %53 = vector.load %arg13[%c2_31, %c0_32, %c0_33] : memref<4x32x32xf32, #tpu.memory_space<vmem>>, vector<1x32x32xf32>
      %54 = vector.shape_cast %53 : vector<1x32x32xf32> to vector<32x32xf32>
      %55 = vector.shape_cast %52 : vector<32x32xf32> to vector<1x32x32xf32>
      tpu.vector_store %arg13[%c2_31, %c0_32, %c0_33], %55 {strides = array<i32>} : memref<4x32x32xf32, #tpu.memory_space<vmem>>, vector<1x32x32xf32>,
      %c3 = arith.constant 3 : index
      %c0_34 = arith.constant 0 : index
      %c0_35 = arith.constant 0 : index
      %56 = vector.load %arg7[%c3, %c0_34, %c0_35] : memref<4x128x32xf32, #tpu.memory_space<vmem>>, vector<1x128x32xf32>
      %57 = vector.shape_cast %56 : vector<1x128x32xf32> to vector<128x32xf32>
      %cst_36 = arith.constant dense<0.000000e+00> : vector<32x32xf32>
      %58 = tpu.matmul %37, %57, %cst_36 {dimension_numbers = #tpu.dot_dimension_numbers<[1], [0], [0], [1], [0, 0, 1, 1], [], []>} : vector<32x128xf32>, vector<128x32xf32>, vector<32x32xf32> -> vector<32x32xf32>
      %c3_37 = arith.constant 3 : index
      %c0_38 = arith.constant 0 : index
      %c0_39 = arith.constant 0 : index
      %59 = vector.load %arg13[%c3_37, %c0_38, %c0_39] : memref<4x32x32xf32, #tpu.memory_space<vmem>>, vector<1x32x32xf32>
      %60 = vector.shape_cast %59 : vector<1x32x32xf32> to vector<32x32xf32>
      %61 = vector.shape_cast %58 : vector<32x32xf32> to vector<1x32x32xf32>
      tpu.vector_store %arg13[%c3_37, %c0_38, %c0_39], %61 {strides = array<i32>} : memref<4x32x32xf32, #tpu.memory_space<vmem>>, vector<1x32x32xf32>,
      %cst_40 = arith.constant -1.000000e+30 : f32
      %62 = vector.broadcast %cst_40 : f32 to vector<4x32x1xf32>
      %c0_41 = arith.constant 0 : index
      %c0_42 = arith.constant 0 : index
      %c0_43 = arith.constant 0 : index
      %63 = vector.load %arg14[%c0_41, %c0_42, %c0_43] : memref<4x32x1xf32, #tpu.memory_space<vmem>>, vector<4x32x1xf32>
      tpu.vector_store %arg14[%c0_41, %c0_42, %c0_43], %62 {strides = array<i32>} : memref<4x32x1xf32, #tpu.memory_space<vmem>>, vector<4x32x1xf32>,
      %cst_44 = arith.constant 0.000000e+00 : f32
      %64 = vector.broadcast %cst_44 : f32 to vector<4x32x1xf32>
      %c0_45 = arith.constant 0 : index
      %c0_46 = arith.constant 0 : index
      %c0_47 = arith.constant 0 : index
      %65 = vector.load %arg15[%c0_45, %c0_46, %c0_47] : memref<4x32x1xf32, #tpu.memory_space<vmem>>, vector<4x32x1xf32>
      tpu.vector_store %arg15[%c0_45, %c0_46, %c0_47], %64 {strides = array<i32>} : memref<4x32x1xf32, #tpu.memory_space<vmem>>, vector<4x32x1xf32>,
      %cst_48 = arith.constant 0.000000e+00 : f32
      %66 = vector.broadcast %cst_48 : f32 to vector<4x32x32xf32>
      %c0_49 = arith.constant 0 : index
      %c0_50 = arith.constant 0 : index
      %c0_51 = arith.constant 0 : index
      %67 = vector.load %arg16[%c0_49, %c0_50, %c0_51] : memref<4x32x32xf32, #tpu.memory_space<vmem>>, vector<4x32x32xf32>
      tpu.vector_store %arg16[%c0_49, %c0_50, %c0_51], %66 {strides = array<i32>} : memref<4x32x32xf32, #tpu.memory_space<vmem>>, vector<4x32x32xf32>,
    } else {
    }
    %c32_i32_2 = arith.constant 32 : i32
    %5 = arith.addi %0, %c32_i32_2 : i32
    %6 = arith.cmpi slt, %1, %5 : i32
    %7 = arith.extui %6 : i1 to i32
    %c0_i32_3 = arith.constant 0 : i32
    %8 = arith.cmpi ne, %7, %c0_i32_3 : i32
    scf.if %8 {
      %c0 = arith.constant 0 : index
      %c0_5 = arith.constant 0 : index
      %c0_6 = arith.constant 0 : index
      %12 = vector.load %arg4[%c0, %c0_5, %c0_6] : memref<1x32x128xf32, #tpu.memory_space<vmem>>, vector<1x32x128xf32>
      %13 = vector.shape_cast %12 : vector<1x32x128xf32> to vector<32x128xf32>
      %cst = arith.constant dense<0.000000e+00> : vector<32xf32>
      %14 = vector.multi_reduction <add>, %13, %cst [1] : vector<32x128xf32> to vector<32xf32>
      %15 = vector.shape_cast %14 : vector<32xf32> to vector<32x1xf32>
      %cst_7 = arith.constant 1.280000e+02 : f32
      %16 = vector.broadcast %cst_7 : f32 to vector<32x1xf32>
      %17 = arith.divf %15, %16 : vector<32x1xf32>
      %18 = vector.broadcast %17 : vector<32x1xf32> to vector<32x128xf32>
      %19 = arith.subf %13, %18 : vector<32x128xf32>
      %20 = arith.mulf %19, %19 : vector<32x128xf32>
      %cst_8 = arith.constant dense<0.000000e+00> : vector<32xf32>
      %21 = vector.multi_reduction <add>, %20, %cst_8 [1] : vector<32x128xf32> to vector<32xf32>
      %22 = vector.shape_cast %21 : vector<32xf32> to vector<32x1xf32>
      %cst_9 = arith.constant 1.280000e+02 : f32
      %23 = vector.broadcast %cst_9 : f32 to vector<32x1xf32>
      %24 = arith.divf %22, %23 : vector<32x1xf32>
      %25 = vector.broadcast %17 : vector<32x1xf32> to vector<32x128xf32>
      %26 = arith.subf %13, %25 : vector<32x128xf32>
      %cst_10 = arith.constant 9.99999974E-6 : f32
      %27 = vector.broadcast %cst_10 : f32 to vector<32x1xf32>
      %28 = arith.addf %24, %27 : vector<32x1xf32>
      %29 = math.rsqrt %28 : vector<32x1xf32>
      %30 = vector.broadcast %29 : vector<32x1xf32> to vector<32x128xf32>
      %31 = arith.mulf %26, %30 : vector<32x128xf32>
      %c0_11 = arith.constant 0 : index
      %c0_12 = arith.constant 0 : index
      %32 = vector.load %arg5[%c0_11, %c0_12] : memref<1x128xf32, #tpu.memory_space<vmem>>, vector<1x128xf32>
      %33 = vector.broadcast %32 : vector<1x128xf32> to vector<32x128xf32>
      %34 = arith.mulf %31, %33 : vector<32x128xf32>
      %c0_13 = arith.constant 0 : index
      %c0_14 = arith.constant 0 : index
      %35 = vector.load %arg6[%c0_13, %c0_14] : memref<1x128xf32, #tpu.memory_space<vmem>>, vector<1x128xf32>
      %36 = vector.broadcast %35 : vector<1x128xf32> to vector<32x128xf32>
      %37 = arith.addf %34, %36 : vector<32x128xf32>
      %38 = tpu.iota {dimensions = array<i32: 0>} : vector<32x32xi32>
      %39 = vector.broadcast %0 : i32 to vector<32x32xi32>
      %40 = arith.addi %39, %38 : vector<32x32xi32>
      %41 = tpu.iota {dimensions = array<i32: 1>} : vector<32x32xi32>
      %42 = vector.broadcast %1 : i32 to vector<32x32xi32>
      %43 = arith.addi %42, %41 : vector<32x32xi32>
      %44 = arith.cmpi sgt, %43, %40 : vector<32x32xi32>
      %c0_15 = arith.constant 0 : index
      %c0_16 = arith.constant 0 : index
      %c0_17 = arith.constant 0 : index
      %45 = vector.load %arg8[%c0_15, %c0_16, %c0_17] : memref<4x128x32xf32, #tpu.memory_space<vmem>>, vector<1x128x32xf32>
      %46 = vector.shape_cast %45 : vector<1x128x32xf32> to vector<128x32xf32>
      %cst_18 = arith.constant dense<0.000000e+00> : vector<32x32xf32>
      %47 = tpu.matmul %37, %46, %cst_18 {dimension_numbers = #tpu.dot_dimension_numbers<[1], [0], [0], [1], [0, 0, 1, 1], [], []>} : vector<32x128xf32>, vector<128x32xf32>, vector<32x32xf32> -> vector<32x32xf32>
      %c0_19 = arith.constant 0 : index
      %c0_20 = arith.constant 0 : index
      %c0_21 = arith.constant 0 : index
      %48 = vector.load %arg9[%c0_19, %c0_20, %c0_21] : memref<4x128x32xf32, #tpu.memory_space<vmem>>, vector<1x128x32xf32>
      %49 = vector.shape_cast %48 : vector<1x128x32xf32> to vector<128x32xf32>
      %cst_22 = arith.constant dense<0.000000e+00> : vector<32x32xf32>
      %50 = tpu.matmul %37, %49, %cst_22 {dimension_numbers = #tpu.dot_dimension_numbers<[1], [0], [0], [1], [0, 0, 1, 1], [], []>} : vector<32x128xf32>, vector<128x32xf32>, vector<32x32xf32> -> vector<32x32xf32>
      %c0_23 = arith.constant 0 : index
      %c0_24 = arith.constant 0 : index
      %c0_25 = arith.constant 0 : index
      %51 = vector.load %arg13[%c0_23, %c0_24, %c0_25] : memref<4x32x32xf32, #tpu.memory_space<vmem>>, vector<1x32x32xf32>
      %52 = vector.shape_cast %51 : vector<1x32x32xf32> to vector<32x32xf32>
      "tpu.trace_start"() <{level = 10 : i32, message = "qd,kd->qk"}> : () -> ()
      %cst_26 = arith.constant dense<0.000000e+00> : vector<32x32xf32>
      %53 = tpu.matmul %52, %47, %cst_26 {dimension_numbers = #tpu.dot_dimension_numbers<[1], [1], [0], [0], [0, 0, 1, 0], [], []>} : vector<32x32xf32>, vector<32x32xf32>, vector<32x32xf32> -> vector<32x32xf32>
      "tpu.trace_stop"() : () -> ()
      %cst_27 = arith.constant 0.176776692 : f32
      %54 = vector.broadcast %cst_27 : f32 to vector<32x32xf32>
      %55 = arith.mulf %53, %54 : vector<32x32xf32>
      %cst_28 = arith.constant -1.000000e+30 : f32
      %56 = vector.broadcast %cst_28 : f32 to vector<32x32xf32>
      %57 = arith.select %44, %56, %55 : vector<32x32xi1>, vector<32x32xf32>
      %c0_29 = arith.constant 0 : index
      %c0_30 = arith.constant 0 : index
      %c0_31 = arith.constant 0 : index
      %58 = vector.load %arg14[%c0_29, %c0_30, %c0_31] : memref<4x32x1xf32, #tpu.memory_space<vmem>>, vector<1x32x1xf32>
      %59 = vector.shape_cast %58 : vector<1x32x1xf32> to vector<32x1xf32>
      %cst_32 = arith.constant dense<0xFF800000> : vector<32xf32>
      %60 = vector.multi_reduction <maximumf>, %57, %cst_32 [1] : vector<32x32xf32> to vector<32xf32>
      %61 = vector.shape_cast %60 : vector<32xf32> to vector<32x1xf32>
      %62 = arith.maximumf %59, %61 : vector<32x1xf32>
      %63 = arith.subf %59, %62 : vector<32x1xf32>
      %64 = math.exp %63 : vector<32x1xf32>
      %65 = vector.broadcast %62 : vector<32x1xf32> to vector<32x32xf32>
      %66 = arith.subf %57, %65 : vector<32x32xf32>
      %67 = math.exp %66 : vector<32x32xf32>
      %c0_33 = arith.constant 0 : index
      %c0_34 = arith.constant 0 : index
      %c0_35 = arith.constant 0 : index
      %68 = vector.load %arg15[%c0_33, %c0_34, %c0_35] : memref<4x32x1xf32, #tpu.memory_space<vmem>>, vector<1x32x1xf32>
      %69 = vector.shape_cast %68 : vector<1x32x1xf32> to vector<32x1xf32>
      %70 = arith.mulf %64, %69 : vector<32x1xf32>
      %cst_36 = arith.constant dense<0.000000e+00> : vector<32xf32>
      %71 = vector.multi_reduction <add>, %67, %cst_36 [1] : vector<32x32xf32> to vector<32xf32>
      %72 = vector.shape_cast %71 : vector<32xf32> to vector<32x1xf32>
      %73 = arith.addf %70, %72 : vector<32x1xf32>
      %c0_37 = arith.constant 0 : index
      %c0_38 = arith.constant 0 : index
      %c0_39 = arith.constant 0 : index
      %74 = vector.load %arg15[%c0_37, %c0_38, %c0_39] : memref<4x32x1xf32, #tpu.memory_space<vmem>>, vector<1x32x1xf32>
      %75 = vector.shape_cast %74 : vector<1x32x1xf32> to vector<32x1xf32>
      %76 = vector.shape_cast %73 : vector<32x1xf32> to vector<1x32x1xf32>
      tpu.vector_store %arg15[%c0_37, %c0_38, %c0_39], %76 {strides = array<i32>} : memref<4x32x1xf32, #tpu.memory_space<vmem>>, vector<1x32x1xf32>,
      %c0_40 = arith.constant 0 : index
      %c0_41 = arith.constant 0 : index
      %c0_42 = arith.constant 0 : index
      %77 = vector.load %arg16[%c0_40, %c0_41, %c0_42] : memref<4x32x32xf32, #tpu.memory_space<vmem>>, vector<1x32x32xf32>
      %78 = vector.shape_cast %77 : vector<1x32x32xf32> to vector<32x32xf32>
      %79 = vector.broadcast %64 : vector<32x1xf32> to vector<32x32xf32>
      %80 = arith.mulf %79, %78 : vector<32x32xf32>
      %cst_43 = arith.constant dense<0.000000e+00> : vector<32x32xf32>
      %81 = tpu.matmul %67, %50, %cst_43 {dimension_numbers = #tpu.dot_dimension_numbers<[1], [0], [0], [1], [0, 0, 1, 1], [], []>} : vector<32x32xf32>, vector<32x32xf32>, vector<32x32xf32> -> vector<32x32xf32>
      %82 = arith.addf %80, %81 : vector<32x32xf32>
      %c0_44 = arith.constant 0 : index
      %c0_45 = arith.constant 0 : index
      %c0_46 = arith.constant 0 : index
      %83 = vector.load %arg16[%c0_44, %c0_45, %c0_46] : memref<4x32x32xf32, #tpu.memory_space<vmem>>, vector<1x32x32xf32>
      %84 = vector.shape_cast %83 : vector<1x32x32xf32> to vector<32x32xf32>
      %85 = vector.shape_cast %82 : vector<32x32xf32> to vector<1x32x32xf32>
      tpu.vector_store %arg16[%c0_44, %c0_45, %c0_46], %85 {strides = array<i32>} : memref<4x32x32xf32, #tpu.memory_space<vmem>>, vector<1x32x32xf32>,
      %c0_47 = arith.constant 0 : index
      %c0_48 = arith.constant 0 : index
      %c0_49 = arith.constant 0 : index
      %86 = vector.load %arg14[%c0_47, %c0_48, %c0_49] : memref<4x32x1xf32, #tpu.memory_space<vmem>>, vector<1x32x1xf32>
      %87 = vector.shape_cast %86 : vector<1x32x1xf32> to vector<32x1xf32>
      %88 = vector.shape_cast %62 : vector<32x1xf32> to vector<1x32x1xf32>
      tpu.vector_store %arg14[%c0_47, %c0_48, %c0_49], %88 {strides = array<i32>} : memref<4x32x1xf32, #tpu.memory_space<vmem>>, vector<1x32x1xf32>,
      %c1 = arith.constant 1 : index
      %c0_50 = arith.constant 0 : index
      %c0_51 = arith.constant 0 : index
      %89 = vector.load %arg8[%c1, %c0_50, %c0_51] : memref<4x128x32xf32, #tpu.memory_space<vmem>>, vector<1x128x32xf32>
      %90 = vector.shape_cast %89 : vector<1x128x32xf32> to vector<128x32xf32>
      %cst_52 = arith.constant dense<0.000000e+00> : vector<32x32xf32>
      %91 = tpu.matmul %37, %90, %cst_52 {dimension_numbers = #tpu.dot_dimension_numbers<[1], [0], [0], [1], [0, 0, 1, 1], [], []>} : vector<32x128xf32>, vector<128x32xf32>, vector<32x32xf32> -> vector<32x32xf32>
      %c1_53 = arith.constant 1 : index
      %c0_54 = arith.constant 0 : index
      %c0_55 = arith.constant 0 : index
      %92 = vector.load %arg9[%c1_53, %c0_54, %c0_55] : memref<4x128x32xf32, #tpu.memory_space<vmem>>, vector<1x128x32xf32>
      %93 = vector.shape_cast %92 : vector<1x128x32xf32> to vector<128x32xf32>
      %cst_56 = arith.constant dense<0.000000e+00> : vector<32x32xf32>
      %94 = tpu.matmul %37, %93, %cst_56 {dimension_numbers = #tpu.dot_dimension_numbers<[1], [0], [0], [1], [0, 0, 1, 1], [], []>} : vector<32x128xf32>, vector<128x32xf32>, vector<32x32xf32> -> vector<32x32xf32>
      %c1_57 = arith.constant 1 : index
      %c0_58 = arith.constant 0 : index
      %c0_59 = arith.constant 0 : index
      %95 = vector.load %arg13[%c1_57, %c0_58, %c0_59] : memref<4x32x32xf32, #tpu.memory_space<vmem>>, vector<1x32x32xf32>
      %96 = vector.shape_cast %95 : vector<1x32x32xf32> to vector<32x32xf32>
      "tpu.trace_start"() <{level = 10 : i32, message = "qd,kd->qk"}> : () -> ()
      %cst_60 = arith.constant dense<0.000000e+00> : vector<32x32xf32>
      %97 = tpu.matmul %96, %91, %cst_60 {dimension_numbers = #tpu.dot_dimension_numbers<[1], [1], [0], [0], [0, 0, 1, 0], [], []>} : vector<32x32xf32>, vector<32x32xf32>, vector<32x32xf32> -> vector<32x32xf32>
      "tpu.trace_stop"() : () -> ()
      %cst_61 = arith.constant 0.176776692 : f32
      %98 = vector.broadcast %cst_61 : f32 to vector<32x32xf32>
      %99 = arith.mulf %97, %98 : vector<32x32xf32>
      %cst_62 = arith.constant -1.000000e+30 : f32
      %100 = vector.broadcast %cst_62 : f32 to vector<32x32xf32>
      %101 = arith.select %44, %100, %99 : vector<32x32xi1>, vector<32x32xf32>
      %c1_63 = arith.constant 1 : index
      %c0_64 = arith.constant 0 : index
      %c0_65 = arith.constant 0 : index
      %102 = vector.load %arg14[%c1_63, %c0_64, %c0_65] : memref<4x32x1xf32, #tpu.memory_space<vmem>>, vector<1x32x1xf32>
      %103 = vector.shape_cast %102 : vector<1x32x1xf32> to vector<32x1xf32>
      %cst_66 = arith.constant dense<0xFF800000> : vector<32xf32>
      %104 = vector.multi_reduction <maximumf>, %101, %cst_66 [1] : vector<32x32xf32> to vector<32xf32>
      %105 = vector.shape_cast %104 : vector<32xf32> to vector<32x1xf32>
      %106 = arith.maximumf %103, %105 : vector<32x1xf32>
      %107 = arith.subf %103, %106 : vector<32x1xf32>
      %108 = math.exp %107 : vector<32x1xf32>
      %109 = vector.broadcast %106 : vector<32x1xf32> to vector<32x32xf32>
      %110 = arith.subf %101, %109 : vector<32x32xf32>
      %111 = math.exp %110 : vector<32x32xf32>
      %c1_67 = arith.constant 1 : index
      %c0_68 = arith.constant 0 : index
      %c0_69 = arith.constant 0 : index
      %112 = vector.load %arg15[%c1_67, %c0_68, %c0_69] : memref<4x32x1xf32, #tpu.memory_space<vmem>>, vector<1x32x1xf32>
      %113 = vector.shape_cast %112 : vector<1x32x1xf32> to vector<32x1xf32>
      %114 = arith.mulf %108, %113 : vector<32x1xf32>
      %cst_70 = arith.constant dense<0.000000e+00> : vector<32xf32>
      %115 = vector.multi_reduction <add>, %111, %cst_70 [1] : vector<32x32xf32> to vector<32xf32>
      %116 = vector.shape_cast %115 : vector<32xf32> to vector<32x1xf32>
      %117 = arith.addf %114, %116 : vector<32x1xf32>
      %c1_71 = arith.constant 1 : index
      %c0_72 = arith.constant 0 : index
      %c0_73 = arith.constant 0 : index
      %118 = vector.load %arg15[%c1_71, %c0_72, %c0_73] : memref<4x32x1xf32, #tpu.memory_space<vmem>>, vector<1x32x1xf32>
      %119 = vector.shape_cast %118 : vector<1x32x1xf32> to vector<32x1xf32>
      %120 = vector.shape_cast %117 : vector<32x1xf32> to vector<1x32x1xf32>
      tpu.vector_store %arg15[%c1_71, %c0_72, %c0_73], %120 {strides = array<i32>} : memref<4x32x1xf32, #tpu.memory_space<vmem>>, vector<1x32x1xf32>,
      %c1_74 = arith.constant 1 : index
      %c0_75 = arith.constant 0 : index
      %c0_76 = arith.constant 0 : index
      %121 = vector.load %arg16[%c1_74, %c0_75, %c0_76] : memref<4x32x32xf32, #tpu.memory_space<vmem>>, vector<1x32x32xf32>
      %122 = vector.shape_cast %121 : vector<1x32x32xf32> to vector<32x32xf32>
      %123 = vector.broadcast %108 : vector<32x1xf32> to vector<32x32xf32>
      %124 = arith.mulf %123, %122 : vector<32x32xf32>
      %cst_77 = arith.constant dense<0.000000e+00> : vector<32x32xf32>
      %125 = tpu.matmul %111, %94, %cst_77 {dimension_numbers = #tpu.dot_dimension_numbers<[1], [0], [0], [1], [0, 0, 1, 1], [], []>} : vector<32x32xf32>, vector<32x32xf32>, vector<32x32xf32> -> vector<32x32xf32>
      %126 = arith.addf %124, %125 : vector<32x32xf32>
      %c1_78 = arith.constant 1 : index
      %c0_79 = arith.constant 0 : index
      %c0_80 = arith.constant 0 : index
      %127 = vector.load %arg16[%c1_78, %c0_79, %c0_80] : memref<4x32x32xf32, #tpu.memory_space<vmem>>, vector<1x32x32xf32>
      %128 = vector.shape_cast %127 : vector<1x32x32xf32> to vector<32x32xf32>
      %129 = vector.shape_cast %126 : vector<32x32xf32> to vector<1x32x32xf32>
      tpu.vector_store %arg16[%c1_78, %c0_79, %c0_80], %129 {strides = array<i32>} : memref<4x32x32xf32, #tpu.memory_space<vmem>>, vector<1x32x32xf32>,
      %c1_81 = arith.constant 1 : index
      %c0_82 = arith.constant 0 : index
      %c0_83 = arith.constant 0 : index
      %130 = vector.load %arg14[%c1_81, %c0_82, %c0_83] : memref<4x32x1xf32, #tpu.memory_space<vmem>>, vector<1x32x1xf32>
      %131 = vector.shape_cast %130 : vector<1x32x1xf32> to vector<32x1xf32>
      %132 = vector.shape_cast %106 : vector<32x1xf32> to vector<1x32x1xf32>
      tpu.vector_store %arg14[%c1_81, %c0_82, %c0_83], %132 {strides = array<i32>} : memref<4x32x1xf32, #tpu.memory_space<vmem>>, vector<1x32x1xf32>,
      %c2 = arith.constant 2 : index
      %c0_84 = arith.constant 0 : index
      %c0_85 = arith.constant 0 : index
      %133 = vector.load %arg8[%c2, %c0_84, %c0_85] : memref<4x128x32xf32, #tpu.memory_space<vmem>>, vector<1x128x32xf32>
      %134 = vector.shape_cast %133 : vector<1x128x32xf32> to vector<128x32xf32>
      %cst_86 = arith.constant dense<0.000000e+00> : vector<32x32xf32>
      %135 = tpu.matmul %37, %134, %cst_86 {dimension_numbers = #tpu.dot_dimension_numbers<[1], [0], [0], [1], [0, 0, 1, 1], [], []>} : vector<32x128xf32>, vector<128x32xf32>, vector<32x32xf32> -> vector<32x32xf32>
      %c2_87 = arith.constant 2 : index
      %c0_88 = arith.constant 0 : index
      %c0_89 = arith.constant 0 : index
      %136 = vector.load %arg9[%c2_87, %c0_88, %c0_89] : memref<4x128x32xf32, #tpu.memory_space<vmem>>, vector<1x128x32xf32>
      %137 = vector.shape_cast %136 : vector<1x128x32xf32> to vector<128x32xf32>
      %cst_90 = arith.constant dense<0.000000e+00> : vector<32x32xf32>
      %138 = tpu.matmul %37, %137, %cst_90 {dimension_numbers = #tpu.dot_dimension_numbers<[1], [0], [0], [1], [0, 0, 1, 1], [], []>} : vector<32x128xf32>, vector<128x32xf32>, vector<32x32xf32> -> vector<32x32xf32>
      %c2_91 = arith.constant 2 : index
      %c0_92 = arith.constant 0 : index
      %c0_93 = arith.constant 0 : index
      %139 = vector.load %arg13[%c2_91, %c0_92, %c0_93] : memref<4x32x32xf32, #tpu.memory_space<vmem>>, vector<1x32x32xf32>
      %140 = vector.shape_cast %139 : vector<1x32x32xf32> to vector<32x32xf32>
      "tpu.trace_start"() <{level = 10 : i32, message = "qd,kd->qk"}> : () -> ()
      %cst_94 = arith.constant dense<0.000000e+00> : vector<32x32xf32>
      %141 = tpu.matmul %140, %135, %cst_94 {dimension_numbers = #tpu.dot_dimension_numbers<[1], [1], [0], [0], [0, 0, 1, 0], [], []>} : vector<32x32xf32>, vector<32x32xf32>, vector<32x32xf32> -> vector<32x32xf32>
      "tpu.trace_stop"() : () -> ()
      %cst_95 = arith.constant 0.176776692 : f32
      %142 = vector.broadcast %cst_95 : f32 to vector<32x32xf32>
      %143 = arith.mulf %141, %142 : vector<32x32xf32>
      %cst_96 = arith.constant -1.000000e+30 : f32
      %144 = vector.broadcast %cst_96 : f32 to vector<32x32xf32>
      %145 = arith.select %44, %144, %143 : vector<32x32xi1>, vector<32x32xf32>
      %c2_97 = arith.constant 2 : index
      %c0_98 = arith.constant 0 : index
      %c0_99 = arith.constant 0 : index
      %146 = vector.load %arg14[%c2_97, %c0_98, %c0_99] : memref<4x32x1xf32, #tpu.memory_space<vmem>>, vector<1x32x1xf32>
      %147 = vector.shape_cast %146 : vector<1x32x1xf32> to vector<32x1xf32>
      %cst_100 = arith.constant dense<0xFF800000> : vector<32xf32>
      %148 = vector.multi_reduction <maximumf>, %145, %cst_100 [1] : vector<32x32xf32> to vector<32xf32>
      %149 = vector.shape_cast %148 : vector<32xf32> to vector<32x1xf32>
      %150 = arith.maximumf %147, %149 : vector<32x1xf32>
      %151 = arith.subf %147, %150 : vector<32x1xf32>
      %152 = math.exp %151 : vector<32x1xf32>
      %153 = vector.broadcast %150 : vector<32x1xf32> to vector<32x32xf32>
      %154 = arith.subf %145, %153 : vector<32x32xf32>
      %155 = math.exp %154 : vector<32x32xf32>
      %c2_101 = arith.constant 2 : index
      %c0_102 = arith.constant 0 : index
      %c0_103 = arith.constant 0 : index
      %156 = vector.load %arg15[%c2_101, %c0_102, %c0_103] : memref<4x32x1xf32, #tpu.memory_space<vmem>>, vector<1x32x1xf32>
      %157 = vector.shape_cast %156 : vector<1x32x1xf32> to vector<32x1xf32>
      %158 = arith.mulf %152, %157 : vector<32x1xf32>
      %cst_104 = arith.constant dense<0.000000e+00> : vector<32xf32>
      %159 = vector.multi_reduction <add>, %155, %cst_104 [1] : vector<32x32xf32> to vector<32xf32>
      %160 = vector.shape_cast %159 : vector<32xf32> to vector<32x1xf32>
      %161 = arith.addf %158, %160 : vector<32x1xf32>
      %c2_105 = arith.constant 2 : index
      %c0_106 = arith.constant 0 : index
      %c0_107 = arith.constant 0 : index
      %162 = vector.load %arg15[%c2_105, %c0_106, %c0_107] : memref<4x32x1xf32, #tpu.memory_space<vmem>>, vector<1x32x1xf32>
      %163 = vector.shape_cast %162 : vector<1x32x1xf32> to vector<32x1xf32>
      %164 = vector.shape_cast %161 : vector<32x1xf32> to vector<1x32x1xf32>
      tpu.vector_store %arg15[%c2_105, %c0_106, %c0_107], %164 {strides = array<i32>} : memref<4x32x1xf32, #tpu.memory_space<vmem>>, vector<1x32x1xf32>,
      %c2_108 = arith.constant 2 : index
      %c0_109 = arith.constant 0 : index
      %c0_110 = arith.constant 0 : index
      %165 = vector.load %arg16[%c2_108, %c0_109, %c0_110] : memref<4x32x32xf32, #tpu.memory_space<vmem>>, vector<1x32x32xf32>
      %166 = vector.shape_cast %165 : vector<1x32x32xf32> to vector<32x32xf32>
      %167 = vector.broadcast %152 : vector<32x1xf32> to vector<32x32xf32>
      %168 = arith.mulf %167, %166 : vector<32x32xf32>
      %cst_111 = arith.constant dense<0.000000e+00> : vector<32x32xf32>
      %169 = tpu.matmul %155, %138, %cst_111 {dimension_numbers = #tpu.dot_dimension_numbers<[1], [0], [0], [1], [0, 0, 1, 1], [], []>} : vector<32x32xf32>, vector<32x32xf32>, vector<32x32xf32> -> vector<32x32xf32>
      %170 = arith.addf %168, %169 : vector<32x32xf32>
      %c2_112 = arith.constant 2 : index
      %c0_113 = arith.constant 0 : index
      %c0_114 = arith.constant 0 : index
      %171 = vector.load %arg16[%c2_112, %c0_113, %c0_114] : memref<4x32x32xf32, #tpu.memory_space<vmem>>, vector<1x32x32xf32>
      %172 = vector.shape_cast %171 : vector<1x32x32xf32> to vector<32x32xf32>
      %173 = vector.shape_cast %170 : vector<32x32xf32> to vector<1x32x32xf32>
      tpu.vector_store %arg16[%c2_112, %c0_113, %c0_114], %173 {strides = array<i32>} : memref<4x32x32xf32, #tpu.memory_space<vmem>>, vector<1x32x32xf32>,
      %c2_115 = arith.constant 2 : index
      %c0_116 = arith.constant 0 : index
      %c0_117 = arith.constant 0 : index
      %174 = vector.load %arg14[%c2_115, %c0_116, %c0_117] : memref<4x32x1xf32, #tpu.memory_space<vmem>>, vector<1x32x1xf32>
      %175 = vector.shape_cast %174 : vector<1x32x1xf32> to vector<32x1xf32>
      %176 = vector.shape_cast %150 : vector<32x1xf32> to vector<1x32x1xf32>
      tpu.vector_store %arg14[%c2_115, %c0_116, %c0_117], %176 {strides = array<i32>} : memref<4x32x1xf32, #tpu.memory_space<vmem>>, vector<1x32x1xf32>,
      %c3 = arith.constant 3 : index
      %c0_118 = arith.constant 0 : index
      %c0_119 = arith.constant 0 : index
      %177 = vector.load %arg8[%c3, %c0_118, %c0_119] : memref<4x128x32xf32, #tpu.memory_space<vmem>>, vector<1x128x32xf32>
      %178 = vector.shape_cast %177 : vector<1x128x32xf32> to vector<128x32xf32>
      %cst_120 = arith.constant dense<0.000000e+00> : vector<32x32xf32>
      %179 = tpu.matmul %37, %178, %cst_120 {dimension_numbers = #tpu.dot_dimension_numbers<[1], [0], [0], [1], [0, 0, 1, 1], [], []>} : vector<32x128xf32>, vector<128x32xf32>, vector<32x32xf32> -> vector<32x32xf32>
      %c3_121 = arith.constant 3 : index
      %c0_122 = arith.constant 0 : index
      %c0_123 = arith.constant 0 : index
      %180 = vector.load %arg9[%c3_121, %c0_122, %c0_123] : memref<4x128x32xf32, #tpu.memory_space<vmem>>, vector<1x128x32xf32>
      %181 = vector.shape_cast %180 : vector<1x128x32xf32> to vector<128x32xf32>
      %cst_124 = arith.constant dense<0.000000e+00> : vector<32x32xf32>
      %182 = tpu.matmul %37, %181, %cst_124 {dimension_numbers = #tpu.dot_dimension_numbers<[1], [0], [0], [1], [0, 0, 1, 1], [], []>} : vector<32x128xf32>, vector<128x32xf32>, vector<32x32xf32> -> vector<32x32xf32>
      %c3_125 = arith.constant 3 : index
      %c0_126 = arith.constant 0 : index
      %c0_127 = arith.constant 0 : index
      %183 = vector.load %arg13[%c3_125, %c0_126, %c0_127] : memref<4x32x32xf32, #tpu.memory_space<vmem>>, vector<1x32x32xf32>
      %184 = vector.shape_cast %183 : vector<1x32x32xf32> to vector<32x32xf32>
      "tpu.trace_start"() <{level = 10 : i32, message = "qd,kd->qk"}> : () -> ()
      %cst_128 = arith.constant dense<0.000000e+00> : vector<32x32xf32>
      %185 = tpu.matmul %184, %179, %cst_128 {dimension_numbers = #tpu.dot_dimension_numbers<[1], [1], [0], [0], [0, 0, 1, 0], [], []>} : vector<32x32xf32>, vector<32x32xf32>, vector<32x32xf32> -> vector<32x32xf32>
      "tpu.trace_stop"() : () -> ()
      %cst_129 = arith.constant 0.176776692 : f32
      %186 = vector.broadcast %cst_129 : f32 to vector<32x32xf32>
      %187 = arith.mulf %185, %186 : vector<32x32xf32>
      %cst_130 = arith.constant -1.000000e+30 : f32
      %188 = vector.broadcast %cst_130 : f32 to vector<32x32xf32>
      %189 = arith.select %44, %188, %187 : vector<32x32xi1>, vector<32x32xf32>
      %c3_131 = arith.constant 3 : index
      %c0_132 = arith.constant 0 : index
      %c0_133 = arith.constant 0 : index
      %190 = vector.load %arg14[%c3_131, %c0_132, %c0_133] : memref<4x32x1xf32, #tpu.memory_space<vmem>>, vector<1x32x1xf32>
      %191 = vector.shape_cast %190 : vector<1x32x1xf32> to vector<32x1xf32>
      %cst_134 = arith.constant dense<0xFF800000> : vector<32xf32>
      %192 = vector.multi_reduction <maximumf>, %189, %cst_134 [1] : vector<32x32xf32> to vector<32xf32>
      %193 = vector.shape_cast %192 : vector<32xf32> to vector<32x1xf32>
      %194 = arith.maximumf %191, %193 : vector<32x1xf32>
      %195 = arith.subf %191, %194 : vector<32x1xf32>
      %196 = math.exp %195 : vector<32x1xf32>
      %197 = vector.broadcast %194 : vector<32x1xf32> to vector<32x32xf32>
      %198 = arith.subf %189, %197 : vector<32x32xf32>
      %199 = math.exp %198 : vector<32x32xf32>
      %c3_135 = arith.constant 3 : index
      %c0_136 = arith.constant 0 : index
      %c0_137 = arith.constant 0 : index
      %200 = vector.load %arg15[%c3_135, %c0_136, %c0_137] : memref<4x32x1xf32, #tpu.memory_space<vmem>>, vector<1x32x1xf32>
      %201 = vector.shape_cast %200 : vector<1x32x1xf32> to vector<32x1xf32>
      %202 = arith.mulf %196, %201 : vector<32x1xf32>
      %cst_138 = arith.constant dense<0.000000e+00> : vector<32xf32>
      %203 = vector.multi_reduction <add>, %199, %cst_138 [1] : vector<32x32xf32> to vector<32xf32>
      %204 = vector.shape_cast %203 : vector<32xf32> to vector<32x1xf32>
      %205 = arith.addf %202, %204 : vector<32x1xf32>
      %c3_139 = arith.constant 3 : index
      %c0_140 = arith.constant 0 : index
      %c0_141 = arith.constant 0 : index
      %206 = vector.load %arg15[%c3_139, %c0_140, %c0_141] : memref<4x32x1xf32, #tpu.memory_space<vmem>>, vector<1x32x1xf32>
      %207 = vector.shape_cast %206 : vector<1x32x1xf32> to vector<32x1xf32>
      %208 = vector.shape_cast %205 : vector<32x1xf32> to vector<1x32x1xf32>
      tpu.vector_store %arg15[%c3_139, %c0_140, %c0_141], %208 {strides = array<i32>} : memref<4x32x1xf32, #tpu.memory_space<vmem>>, vector<1x32x1xf32>,
      %c3_142 = arith.constant 3 : index
      %c0_143 = arith.constant 0 : index
      %c0_144 = arith.constant 0 : index
      %209 = vector.load %arg16[%c3_142, %c0_143, %c0_144] : memref<4x32x32xf32, #tpu.memory_space<vmem>>, vector<1x32x32xf32>
      %210 = vector.shape_cast %209 : vector<1x32x32xf32> to vector<32x32xf32>
      %211 = vector.broadcast %196 : vector<32x1xf32> to vector<32x32xf32>
      %212 = arith.mulf %211, %210 : vector<32x32xf32>
      %cst_145 = arith.constant dense<0.000000e+00> : vector<32x32xf32>
      %213 = tpu.matmul %199, %182, %cst_145 {dimension_numbers = #tpu.dot_dimension_numbers<[1], [0], [0], [1], [0, 0, 1, 1], [], []>} : vector<32x32xf32>, vector<32x32xf32>, vector<32x32xf32> -> vector<32x32xf32>
      %214 = arith.addf %212, %213 : vector<32x32xf32>
      %c3_146 = arith.constant 3 : index
      %c0_147 = arith.constant 0 : index
      %c0_148 = arith.constant 0 : index
      %215 = vector.load %arg16[%c3_146, %c0_147, %c0_148] : memref<4x32x32xf32, #tpu.memory_space<vmem>>, vector<1x32x32xf32>
      %216 = vector.shape_cast %215 : vector<1x32x32xf32> to vector<32x32xf32>
      %217 = vector.shape_cast %214 : vector<32x32xf32> to vector<1x32x32xf32>
      tpu.vector_store %arg16[%c3_146, %c0_147, %c0_148], %217 {strides = array<i32>} : memref<4x32x32xf32, #tpu.memory_space<vmem>>, vector<1x32x32xf32>,
      %c3_149 = arith.constant 3 : index
      %c0_150 = arith.constant 0 : index
      %c0_151 = arith.constant 0 : index
      %218 = vector.load %arg14[%c3_149, %c0_150, %c0_151] : memref<4x32x1xf32, #tpu.memory_space<vmem>>, vector<1x32x1xf32>
      %219 = vector.shape_cast %218 : vector<1x32x1xf32> to vector<32x1xf32>
      %220 = vector.shape_cast %194 : vector<32x1xf32> to vector<1x32x1xf32>
      tpu.vector_store %arg14[%c3_149, %c0_150, %c0_151], %220 {strides = array<i32>} : memref<4x32x1xf32, #tpu.memory_space<vmem>>, vector<1x32x1xf32>,
    } else {
    }
    %c1_i32 = arith.constant 1 : i32
    %9 = arith.cmpi eq, %arg2, %c1_i32 : i32
    %10 = arith.extui %9 : i1 to i32
    %c0_i32_4 = arith.constant 0 : i32
    %11 = arith.cmpi ne, %10, %c0_i32_4 : i32
    scf.if %11 {
      %c0 = arith.constant 0 : index
      %c0_5 = arith.constant 0 : index
      %c0_6 = arith.constant 0 : index
      %12 = vector.load %arg15[%c0, %c0_5, %c0_6] : memref<4x32x1xf32, #tpu.memory_space<vmem>>, vector<1x32x1xf32>
      %13 = vector.shape_cast %12 : vector<1x32x1xf32> to vector<32x1xf32>
      %14 = tpu.reciprocal %13 : vector<32x1xf32> -> vector<32x1xf32>
      %c0_7 = arith.constant 0 : index
      %c0_8 = arith.constant 0 : index
      %c0_9 = arith.constant 0 : index
      %15 = vector.load %arg16[%c0_7, %c0_8, %c0_9] : memref<4x32x32xf32, #tpu.memory_space<vmem>>, vector<1x32x32xf32>
      %16 = vector.shape_cast %15 : vector<1x32x32xf32> to vector<32x32xf32>
      %17 = vector.broadcast %14 : vector<32x1xf32> to vector<32x32xf32>
      %18 = arith.mulf %16, %17 : vector<32x32xf32>
      %c1 = arith.constant 1 : index
      %c0_10 = arith.constant 0 : index
      %c0_11 = arith.constant 0 : index
      %19 = vector.load %arg15[%c1, %c0_10, %c0_11] : memref<4x32x1xf32, #tpu.memory_space<vmem>>, vector<1x32x1xf32>
      %20 = vector.shape_cast %19 : vector<1x32x1xf32> to vector<32x1xf32>
      %21 = tpu.reciprocal %20 : vector<32x1xf32> -> vector<32x1xf32>
      %c1_12 = arith.constant 1 : index
      %c0_13 = arith.constant 0 : index
      %c0_14 = arith.constant 0 : index
      %22 = vector.load %arg16[%c1_12, %c0_13, %c0_14] : memref<4x32x32xf32, #tpu.memory_space<vmem>>, vector<1x32x32xf32>
      %23 = vector.shape_cast %22 : vector<1x32x32xf32> to vector<32x32xf32>
      %24 = vector.broadcast %21 : vector<32x1xf32> to vector<32x32xf32>
      %25 = arith.mulf %23, %24 : vector<32x32xf32>
      %c2 = arith.constant 2 : index
      %c0_15 = arith.constant 0 : index
      %c0_16 = arith.constant 0 : index
      %26 = vector.load %arg15[%c2, %c0_15, %c0_16] : memref<4x32x1xf32, #tpu.memory_space<vmem>>, vector<1x32x1xf32>
      %27 = vector.shape_cast %26 : vector<1x32x1xf32> to vector<32x1xf32>
      %28 = tpu.reciprocal %27 : vector<32x1xf32> -> vector<32x1xf32>
      %c2_17 = arith.constant 2 : index
      %c0_18 = arith.constant 0 : index
      %c0_19 = arith.constant 0 : index
      %29 = vector.load %arg16[%c2_17, %c0_18, %c0_19] : memref<4x32x32xf32, #tpu.memory_space<vmem>>, vector<1x32x32xf32>
      %30 = vector.shape_cast %29 : vector<1x32x32xf32> to vector<32x32xf32>
      %31 = vector.broadcast %28 : vector<32x1xf32> to vector<32x32xf32>
      %32 = arith.mulf %30, %31 : vector<32x32xf32>
      %c3 = arith.constant 3 : index
      %c0_20 = arith.constant 0 : index
      %c0_21 = arith.constant 0 : index
      %33 = vector.load %arg15[%c3, %c0_20, %c0_21] : memref<4x32x1xf32, #tpu.memory_space<vmem>>, vector<1x32x1xf32>
      %34 = vector.shape_cast %33 : vector<1x32x1xf32> to vector<32x1xf32>
      %35 = tpu.reciprocal %34 : vector<32x1xf32> -> vector<32x1xf32>
      %c3_22 = arith.constant 3 : index
      %c0_23 = arith.constant 0 : index
      %c0_24 = arith.constant 0 : index
      %36 = vector.load %arg16[%c3_22, %c0_23, %c0_24] : memref<4x32x32xf32, #tpu.memory_space<vmem>>, vector<1x32x32xf32>
      %37 = vector.shape_cast %36 : vector<1x32x32xf32> to vector<32x32xf32>
      %38 = vector.broadcast %35 : vector<32x1xf32> to vector<32x32xf32>
      %39 = arith.mulf %37, %38 : vector<32x32xf32>
      %40 = tpu.concatenate %18, %25, %32, %39 in 1 : vector<32x32xf32>, vector<32x32xf32>, vector<32x32xf32>, vector<32x32xf32> -> vector<32x128xf32>
      %c0_25 = arith.constant 0 : index
      %c0_26 = arith.constant 0 : index
      %41 = vector.load %arg10[%c0_25, %c0_26] : memref<128x128xf32, #tpu.memory_space<vmem>>, vector<128x128xf32>
      %cst = arith.constant dense<0.000000e+00> : vector<32x128xf32>
      %42 = tpu.matmul %40, %41, %cst {dimension_numbers = #tpu.dot_dimension_numbers<[1], [0], [0], [1], [0, 0, 1, 1], [], []>} : vector<32x128xf32>, vector<128x128xf32>, vector<32x128xf32> -> vector<32x128xf32>
      %c0_27 = arith.constant 0 : index
      %c0_28 = arith.constant 0 : index
      %43 = vector.load %arg11[%c0_27, %c0_28] : memref<1x128xf32, #tpu.memory_space<vmem>>, vector<1x128xf32>
      %44 = vector.broadcast %43 : vector<1x128xf32> to vector<32x128xf32>
      %45 = arith.addf %42, %44 : vector<32x128xf32>
      %c0_29 = arith.constant 0 : index
      %c0_30 = arith.constant 0 : index
      %c0_31 = arith.constant 0 : index
      %46 = vector.load %arg3[%c0_29, %c0_30, %c0_31] : memref<1x32x128xf32, #tpu.memory_space<vmem>>, vector<1x32x128xf32>
      %47 = vector.shape_cast %46 : vector<1x32x128xf32> to vector<32x128xf32>
      %48 = arith.addf %45, %47 : vector<32x128xf32>
      %c0_32 = arith.constant 0 : index
      %c0_33 = arith.constant 0 : index
      %c0_34 = arith.constant 0 : index
      %49 = vector.load %arg12[%c0_32, %c0_33, %c0_34] : memref<1x32x128xf32, #tpu.memory_space<vmem>>, vector<1x32x128xf32>
      %50 = vector.shape_cast %49 : vector<1x32x128xf32> to vector<32x128xf32>
      %51 = vector.shape_cast %48 : vector<32x128xf32> to vector<1x32x128xf32>
      tpu.vector_store %arg12[%c0_32, %c0_33, %c0_34], %51 {strides = array<i32>} : memref<1x32x128xf32, #tpu.memory_space<vmem>>, vector<1x32x128xf32>,
    } else {
    }
    return
  }
  func.func @transform_0(%arg0: i32, %arg1: i32, %arg2: i32) -> (i32, i32, i32) {
    %c0_i32 = arith.constant 0 : i32
    %c0_i32_0 = arith.constant 0 : i32
    return %arg0, %arg1, %c0_i32 : i32, i32, i32
  }
  func.func @transform_1(%arg0: i32, %arg1: i32, %arg2: i32) -> (i32, i32, i32) {
    %c0_i32 = arith.constant 0 : i32
    %c0_i32_0 = arith.constant 0 : i32
    return %arg0, %arg2, %c0_i32 : i32, i32, i32
  }
  func.func @transform_2(%arg0: i32, %arg1: i32, %arg2: i32) -> (i32, i32) {
    %c0_i32 = arith.constant 0 : i32
    %c0_i32_0 = arith.constant 0 : i32
    %c0_i32_1 = arith.constant 0 : i32
    return %c0_i32, %c0_i32_0 : i32, i32
  }
  func.func @transform_3(%arg0: i32, %arg1: i32, %arg2: i32) -> (i32, i32) {
    %c0_i32 = arith.constant 0 : i32
    %c0_i32_0 = arith.constant 0 : i32
    %c0_i32_1 = arith.constant 0 : i32
    return %c0_i32, %c0_i32_0 : i32, i32
  }
  func.func @transform_4(%arg0: i32, %arg1: i32, %arg2: i32) -> (i32, i32, i32) {
    %c0_i32 = arith.constant 0 : i32
    %c0_i32_0 = arith.constant 0 : i32
    %c0_i32_1 = arith.constant 0 : i32
    %c0_i32_2 = arith.constant 0 : i32
    return %c0_i32, %c0_i32_0, %c0_i32_1 : i32, i32, i32
  }
  func.func @transform_5(%arg0: i32, %arg1: i32, %arg2: i32) -> (i32, i32, i32) {
    %c0_i32 = arith.constant 0 : i32
    %c0_i32_0 = arith.constant 0 : i32
    %c0_i32_1 = arith.constant 0 : i32
    %c0_i32_2 = arith.constant 0 : i32
    return %c0_i32, %c0_i32_0, %c0_i32_1 : i32, i32, i32
  }
  func.func @transform_6(%arg0: i32, %arg1: i32, %arg2: i32) -> (i32, i32, i32) {
    %c0_i32 = arith.constant 0 : i32
    %c0_i32_0 = arith.constant 0 : i32
    %c0_i32_1 = arith.constant 0 : i32
    %c0_i32_2 = arith.constant 0 : i32
    return %c0_i32, %c0_i32_0, %c0_i32_1 : i32, i32, i32
  }
  func.func @transform_7(%arg0: i32, %arg1: i32, %arg2: i32) -> (i32, i32) {
    %c0_i32 = arith.constant 0 : i32
    %c0_i32_0 = arith.constant 0 : i32
    %c0_i32_1 = arith.constant 0 : i32
    return %c0_i32, %c0_i32_0 : i32, i32
  }
  func.func @transform_8(%arg0: i32, %arg1: i32, %arg2: i32) -> (i32, i32) {
    %c0_i32 = arith.constant 0 : i32
    %c0_i32_0 = arith.constant 0 : i32
    %c0_i32_1 = arith.constant 0 : i32
    return %c0_i32, %c0_i32_0 : i32, i32
  }
  func.func @transform_9(%arg0: i32, %arg1: i32, %arg2: i32) -> (i32, i32, i32) {
    %c0_i32 = arith.constant 0 : i32
    %c0_i32_0 = arith.constant 0 : i32
    return %arg0, %arg1, %c0_i32 : i32, i32, i32
  }
}

</mosaic_0001>

<llo_original>
// kernel: tpu_custom_call.1
$region0: #{tpu_custom_call.1}
  #allocation0 [shape = 'u32[]', space=smem, size = 0x4, offset = 0x4, fixed_abs, tag = 'smem constant byte address 0x4 - core index']
  #allocation1 [shape = 'u32[144,128]{1,0:T(1,128)}', space=vmem, size = 0x12000, scoped, tag = 'internal scratch']
  #allocation2 [shape = 'f32[4,32,32]{2,1,0:T(8,128)}', space=vmem, size = 0x10000, scoped, tag = 'scratch operand']
  #allocation3 [shape = 'f32[4,32,1]{2,1,0:T(8,128)}', space=vmem, size = 0x10000, scoped, tag = 'scratch operand']
  #allocation4 [shape = 'f32[4,32,1]{2,1,0:T(8,128)}', space=vmem, size = 0x10000, scoped, tag = 'scratch operand']
  #allocation5 [shape = 'f32[4,32,32]{2,1,0:T(8,128)}', space=vmem, size = 0x10000, scoped, tag = 'scratch operand']
  %s0 = inlined_call_operand.vmem [shape: f32[2,64,128], index: 0, kind: input, shape index: {}]
  %s1 = inlined_call_operand.vmem [shape: f32[2,64,128], index: 1, kind: input, shape index: {}]
  %s2 = inlined_call_operand.vmem [shape: f32[1,128], index: 2, kind: input, shape index: {}]
  %s3 = inlined_call_operand.vmem [shape: f32[1,128], index: 3, kind: input, shape index: {}]
  %s4 = inlined_call_operand.vmem [shape: f32[4,128,32], index: 4, kind: input, shape index: {}]
  %s5 = inlined_call_operand.vmem [shape: f32[4,128,32], index: 5, kind: input, shape index: {}]
  %s6 = inlined_call_operand.vmem [shape: f32[4,128,32], index: 6, kind: input, shape index: {}]
  %s7 = inlined_call_operand.vmem [shape: f32[128,128], index: 7, kind: input, shape index: {}]
  %s8 = inlined_call_operand.vmem [shape: f32[1,128], index: 8, kind: input, shape index: {}]
  %s9 = inlined_call_operand.hbm [shape: f32[2,64,128], index: 9, kind: output, shape index: {}]
  %s10 = sld [smem:[#allocation0]]
  $region81: #{tpu_custom_call.1} parent=0
    _
  %s12 = ssub.s32 1, %s10
  %s13 = scalar_select 0, %s12, %s10
  $region1: #{tpu_custom_call.1} parent=0
    #allocation6 [shape = 'u8[32768]{0}', space=vmem, size = 0x8000, scoped, tag = 'output window, operand 0']
    #allocation7 [shape = 's32[2]{0}', space=sflag, size = 0x8, scoped, tag = 'scoped memory for tpu_custom_call.1']
    %14 = vsyncpa [#allocation7], 0
    %s15 = scalar_lea.sflag [#allocation7], 1
    %16 = vsyncpa %s15, 0
    loop: start=0, step=1, limit=10
    $region2: #{tpu_custom_call.1} parent=1 // loop_pre_header
      _
    $region3: #{tpu_custom_call.1} parent=1 // loop_header
      %s18 = sphi 0, %s22
      %p19 = scmp.ge.s32.totalorder %s18, 10
      %s25 = sphi 0, %s44
      %s26 = sphi 0, %s40
      %s27 = sphi 0, %s36
      %s28 = sphi 0, %s25
      %s29 = sphi 0, %s26
      %s30 = sphi 0, %s27
      %s31 = sphi 0, %s28
      %s32 = sphi 0, %s29
      %s33 = sphi 0, %s30
      %s49 = sphi 0, %s51
      %s52 = sphi 0, %s49
      %s53 = sphi 0, %s52
      %s69 = sphi 0, %s53
      %s77 = sphi 0, %s79
      %s80 = sphi 0, %s77
      %s81 = sphi 0, %s80
      %s97 = sphi 0, %s81
      %s101 = sphi 0, %s101
      %s103 = sphi 0, %s101
      %s104 = sphi 0, %s103
      %s118 = sphi 0, %s104
      %s122 = sphi 0, %s122
      %s124 = sphi 0, %s122
      %s125 = sphi 0, %s124
      %s139 = sphi 0, %s125
      %s143 = sphi 0, %s143
      %s145 = sphi 0, %s143
      %s146 = sphi 0, %s145
      %s160 = sphi 0, %s146
      %s164 = sphi 0, %s164
      %s166 = sphi 0, %s164
      %s167 = sphi 0, %s166
      %s181 = sphi 0, %s167
      %s185 = sphi 0, %s185
      %s187 = sphi 0, %s185
      %s188 = sphi 0, %s187
      %s202 = sphi 0, %s188
      %s206 = sphi 0, %s206
      %s208 = sphi 0, %s206
      %s209 = sphi 0, %s208
      %s223 = sphi 0, %s209
      %s227 = sphi 0, %s227
      %s229 = sphi 0, %s227
      %s230 = sphi 0, %s229
      %s244 = sphi 0, %s230
      %s252 = sphi 0, %s254
      %s255 = sphi 0, %s252
      %s256 = sphi 0, %s255
      %s272 = sphi 0, %s256
    $region4: #{tpu_custom_call.1} parent=1 // loop_header_branch
      %21 = sbr.rel (%p19) target = $region8
    $region5: #{tpu_custom_call.1} parent=1 // loop_body
      %s23 = ssub.s32 %s18, 1
      %s24 = ssub.s32 %s18, 2
      %s34 = sadd.s32 1, %s27
      %p35 = scmp.ge.s32.totalorder %s34, 2
      %s36 = scalar_select %p35, 0, %s34
      %s37 = sadd.s32 1, %s26
      %s38 = scalar_select %p35, %s37, %s26
      %p39 = scmp.ge.s32.totalorder %s38, 2
      %s40 = scalar_select %p39, 0, %s38
      %s41 = sadd.s32 1, %s25
      %s42 = scalar_select %p39, %s41, %s25
      %p43 = scmp.ge.s32.totalorder %s42, 2
      %s44 = scalar_select %p43, 0, %s42
      %s45 = ssub.s32 %s25, %s44
      %s46 = ssub.s32 %s26, %s40
      %s47 = sor.u32 %s45, %s46
      %p48 = scmp.eq.s32.totalorder %s47, 0
      %s50 = sadd.s32 %s49, 1
      %s51 = scalar_select %p48, %s49, %s50
      %p54 = pneg %p48
      %p55 = scmp.eq.s32.totalorder %s18, 7
      %p56 = por %p54, %p55
      %p57 = scmp.ne.s32.totalorder %s49, %s52
      %p58 = scmp.eq.s32.totalorder %s18, 0
      %p59 = por %p57, %p58
      %p60 = scmp.ne.s32.totalorder %s49, %s52
      %p61 = scmp.eq.s32.totalorder %s23, 7
      %p62 = por %p60, %p61
      %p63 = scmp.ne.s32.totalorder %s52, %s53
      %p64 = scmp.eq.s32.totalorder %s23, 0
      %p65 = por %p63, %p64
      %p66 = scmp.ne.s32.totalorder %s52, %s53
      %p67 = scmp.eq.s32.totalorder %s24, 7
      %p68 = por %p66, %p67
      %p70 = scmp.ne.s32.totalorder %s53, %s69
      %p71 = scmp.eq.s32.totalorder %s24, 0
      %p72 = por %p70, %p71
      %s73 = ssub.s32 %s25, %s44
      %s74 = ssub.s32 %s27, %s36
      %s75 = sor.u32 %s73, %s74
      %p76 = scmp.eq.s32.totalorder %s75, 0
      %s78 = sadd.s32 %s77, 1
      %s79 = scalar_select %p76, %s77, %s78
      %p82 = pneg %p76
      %p83 = scmp.eq.s32.totalorder %s18, 7
      %p84 = por %p82, %p83
      %p85 = scmp.ne.s32.totalorder %s77, %s80
      %p86 = scmp.eq.s32.totalorder %s18, 0
      %p87 = por %p85, %p86
      %p88 = scmp.ne.s32.totalorder %s77, %s80
      %p89 = scmp.eq.s32.totalorder %s23, 7
      %p90 = por %p88, %p89
      %p91 = scmp.ne.s32.totalorder %s80, %s81
      %p92 = scmp.eq.s32.totalorder %s23, 0
      %p93 = por %p91, %p92
      %p94 = scmp.ne.s32.totalorder %s80, %s81
      %p95 = scmp.eq.s32.totalorder %s24, 7
      %p96 = por %p94, %p95
      %p98 = scmp.ne.s32.totalorder %s81, %s97
      %p99 = scmp.eq.s32.totalorder %s24, 0
      %p100 = por %p98, %p99
      %s102 = sadd.s32 %s101, 1
      %p105 = scmp.eq.s32.totalorder %s18, 7
      %p106 = scmp.ne.s32.totalorder %s101, %s103
      %p107 = scmp.eq.s32.totalorder %s18, 0
      %p108 = por %p106, %p107
      %p109 = scmp.ne.s32.totalorder %s101, %s103
      %p110 = scmp.eq.s32.totalorder %s23, 7
      %p111 = por %p109, %p110
      %p112 = scmp.ne.s32.totalorder %s103, %s104
      %p113 = scmp.eq.s32.totalorder %s23, 0
      %p114 = por %p112, %p113
      %p115 = scmp.ne.s32.totalorder %s103, %s104
      %p116 = scmp.eq.s32.totalorder %s24, 7
      %p117 = por %p115, %p116
      %p119 = scmp.ne.s32.totalorder %s104, %s118
      %p120 = scmp.eq.s32.totalorder %s24, 0
      %p121 = por %p119, %p120
      %s123 = sadd.s32 %s122, 1
      %p126 = scmp.eq.s32.totalorder %s18, 7
      %p127 = scmp.ne.s32.totalorder %s122, %s124
      %p128 = scmp.eq.s32.totalorder %s18, 0
      %p129 = por %p127, %p128
      %p130 = scmp.ne.s32.totalorder %s122, %s124
      %p131 = scmp.eq.s32.totalorder %s23, 7
      %p132 = por %p130, %p131
      %p133 = scmp.ne.s32.totalorder %s124, %s125
      %p134 = scmp.eq.s32.totalorder %s23, 0
      %p135 = por %p133, %p134
      %p136 = scmp.ne.s32.totalorder %s124, %s125
      %p137 = scmp.eq.s32.totalorder %s24, 7
      %p138 = por %p136, %p137
      %p140 = scmp.ne.s32.totalorder %s125, %s139
      %p141 = scmp.eq.s32.totalorder %s24, 0
      %p142 = por %p140, %p141
      %s144 = sadd.s32 %s143, 1
      %p147 = scmp.eq.s32.totalorder %s18, 7
      %p148 = scmp.ne.s32.totalorder %s143, %s145
      %p149 = scmp.eq.s32.totalorder %s18, 0
      %p150 = por %p148, %p149
      %p151 = scmp.ne.s32.totalorder %s143, %s145
      %p152 = scmp.eq.s32.totalorder %s23, 7
      %p153 = por %p151, %p152
      %p154 = scmp.ne.s32.totalorder %s145, %s146
      %p155 = scmp.eq.s32.totalorder %s23, 0
      %p156 = por %p154, %p155
      %p157 = scmp.ne.s32.totalorder %s145, %s146
      %p158 = scmp.eq.s32.totalorder %s24, 7
      %p159 = por %p157, %p158
      %p161 = scmp.ne.s32.totalorder %s146, %s160
      %p162 = scmp.eq.s32.totalorder %s24, 0
      %p163 = por %p161, %p162
      %s165 = sadd.s32 %s164, 1
      %p168 = scmp.eq.s32.totalorder %s18, 7
      %p169 = scmp.ne.s32.totalorder %s164, %s166
      %p170 = scmp.eq.s32.totalorder %s18, 0
      %p171 = por %p169, %p170
      %p172 = scmp.ne.s32.totalorder %s164, %s166
      %p173 = scmp.eq.s32.totalorder %s23, 7
      %p174 = por %p172, %p173
      %p175 = scmp.ne.s32.totalorder %s166, %s167
      %p176 = scmp.eq.s32.totalorder %s23, 0
      %p177 = por %p175, %p176
      %p178 = scmp.ne.s32.totalorder %s166, %s167
      %p179 = scmp.eq.s32.totalorder %s24, 7
      %p180 = por %p178, %p179
      %p182 = scmp.ne.s32.totalorder %s167, %s181
      %p183 = scmp.eq.s32.totalorder %s24, 0
      %p184 = por %p182, %p183
      %s186 = sadd.s32 %s185, 1
      %p189 = scmp.eq.s32.totalorder %s18, 7
      %p190 = scmp.ne.s32.totalorder %s185, %s187
      %p191 = scmp.eq.s32.totalorder %s18, 0
      %p192 = por %p190, %p191
      %p193 = scmp.ne.s32.totalorder %s185, %s187
      %p194 = scmp.eq.s32.totalorder %s23, 7
      %p195 = por %p193, %p194
      %p196 = scmp.ne.s32.totalorder %s187, %s188
      %p197 = scmp.eq.s32.totalorder %s23, 0
      %p198 = por %p196, %p197
      %p199 = scmp.ne.s32.totalorder %s187, %s188
      %p200 = scmp.eq.s32.totalorder %s24, 7
      %p201 = por %p199, %p200
      %p203 = scmp.ne.s32.totalorder %s188, %s202
      %p204 = scmp.eq.s32.totalorder %s24, 0
      %p205 = por %p203, %p204
      %s207 = sadd.s32 %s206, 1
      %p210 = scmp.eq.s32.totalorder %s18, 7
      %p211 = scmp.ne.s32.totalorder %s206, %s208
      %p212 = scmp.eq.s32.totalorder %s18, 0
      %p213 = por %p211, %p212
      %p214 = scmp.ne.s32.totalorder %s206, %s208
      %p215 = scmp.eq.s32.totalorder %s23, 7
      %p216 = por %p214, %p215
      %p217 = scmp.ne.s32.totalorder %s208, %s209
      %p218 = scmp.eq.s32.totalorder %s23, 0
      %p219 = por %p217, %p218
      %p220 = scmp.ne.s32.totalorder %s208, %s209
      %p221 = scmp.eq.s32.totalorder %s24, 7
      %p222 = por %p220, %p221
      %p224 = scmp.ne.s32.totalorder %s209, %s223
      %p225 = scmp.eq.s32.totalorder %s24, 0
      %p226 = por %p224, %p225
      %s228 = sadd.s32 %s227, 1
      %p231 = scmp.eq.s32.totalorder %s18, 7
      %p232 = scmp.ne.s32.totalorder %s227, %s229
      %p233 = scmp.eq.s32.totalorder %s18, 0
      %p234 = por %p232, %p233
      %p235 = scmp.ne.s32.totalorder %s227, %s229
      %p236 = scmp.eq.s32.totalorder %s23, 7
      %p237 = por %p235, %p236
      %p238 = scmp.ne.s32.totalorder %s229, %s230
      %p239 = scmp.eq.s32.totalorder %s23, 0
      %p240 = por %p238, %p239
      %p241 = scmp.ne.s32.totalorder %s229, %s230
      %p242 = scmp.eq.s32.totalorder %s24, 7
      %p243 = por %p241, %p242
      %p245 = scmp.ne.s32.totalorder %s230, %s244
      %p246 = scmp.eq.s32.totalorder %s24, 0
      %p247 = por %p245, %p246
      %s248 = ssub.s32 %s25, %s44
      %s249 = ssub.s32 %s26, %s40
      %s250 = sor.u32 %s248, %s249
      %p251 = scmp.eq.s32.totalorder %s250, 0
      %s253 = sadd.s32 %s252, 1
      %s254 = scalar_select %p251, %s252, %s253
      %p257 = pneg %p251
      %p258 = scmp.eq.s32.totalorder %s18, 7
      %p259 = por %p257, %p258
      %p260 = scmp.ne.s32.totalorder %s252, %s255
      %p261 = scmp.eq.s32.totalorder %s18, 0
      %p262 = por %p260, %p261
      %p263 = scmp.ne.s32.totalorder %s252, %s255
      %p264 = scmp.eq.s32.totalorder %s23, 7
      %p265 = por %p263, %p264
      %p266 = scmp.ne.s32.totalorder %s255, %s256
      %p267 = scmp.eq.s32.totalorder %s23, 0
      %p268 = por %p266, %p267
      %p269 = scmp.ne.s32.totalorder %s255, %s256
      %p270 = scmp.eq.s32.totalorder %s24, 7
      %p271 = por %p269, %p270
      %p273 = scmp.ne.s32.totalorder %s256, %s272
      %p274 = scmp.eq.s32.totalorder %s24, 0
      %p275 = por %p273, %p274
      %p276 = scmp.le.s32.totalorder 1, %s18
      %p277 = scmp.lt.s32.totalorder %s18, 9
      %p278 = pnand %p276, %p277
      %p279 = pneg %p278
      // Predicated region
      $region9: #{tpu_custom_call.1} parent=5 // pred_check
        _
      $region10: #{tpu_custom_call.1} parent=5 // pred_check_branch
        %281 = sbr.rel (%p278) target = $region12
      $region11: #{tpu_custom_call.1} parent=5 // pred_region
        %s282 = ssub.s32 %s18, 1
        // Predicated region
        $region13: #{tpu_custom_call.1} parent=11 // pred_check
          %p283 = pneg %p114
        $region14: #{tpu_custom_call.1} parent=11 // pred_check_branch
          %285 = sbr.rel (%p283) target = $region16
        $region15: #{tpu_custom_call.1} parent=11 // pred_region
          _
        $region16: #{tpu_custom_call.1} parent=11 // pred_fallthru
          _
        // Predicated region
        $region17: #{tpu_custom_call.1} parent=11 // pred_check
          %p286 = pneg %p135
        $region18: #{tpu_custom_call.1} parent=11 // pred_check_branch
          %288 = sbr.rel (%p286) target = $region20
        $region19: #{tpu_custom_call.1} parent=11 // pred_region
          _
        $region20: #{tpu_custom_call.1} parent=11 // pred_fallthru
          _
        // Predicated region
        $region21: #{tpu_custom_call.1} parent=11 // pred_check
          %p289 = pneg %p156
        $region22: #{tpu_custom_call.1} parent=11 // pred_check_branch
          %291 = sbr.rel (%p289) target = $region24
        $region23: #{tpu_custom_call.1} parent=11 // pred_region
          _
        $region24: #{tpu_custom_call.1} parent=11 // pred_fallthru
          _
        // Predicated region
        $region25: #{tpu_custom_call.1} parent=11 // pred_check
          %p292 = pneg %p177
        $region26: #{tpu_custom_call.1} parent=11 // pred_check_branch
          %294 = sbr.rel (%p292) target = $region28
        $region27: #{tpu_custom_call.1} parent=11 // pred_region
          _
        $region28: #{tpu_custom_call.1} parent=11 // pred_fallthru
          _
        // Predicated region
        $region29: #{tpu_custom_call.1} parent=11 // pred_check
          %p295 = pneg %p198
        $region30: #{tpu_custom_call.1} parent=11 // pred_check_branch
          %297 = sbr.rel (%p295) target = $region32
        $region31: #{tpu_custom_call.1} parent=11 // pred_region
          _
        $region32: #{tpu_custom_call.1} parent=11 // pred_fallthru
          _
        // Predicated region
        $region33: #{tpu_custom_call.1} parent=11 // pred_check
          %p298 = pneg %p219
        $region34: #{tpu_custom_call.1} parent=11 // pred_check_branch
          %300 = sbr.rel (%p298) target = $region36
        $region35: #{tpu_custom_call.1} parent=11 // pred_region
          _
        $region36: #{tpu_custom_call.1} parent=11 // pred_fallthru
          _
        // Predicated region
        $region37: #{tpu_custom_call.1} parent=11 // pred_check
          %p301 = pneg %p240
        $region38: #{tpu_custom_call.1} parent=11 // pred_check_branch
          %303 = sbr.rel (%p301) target = $region40
        $region39: #{tpu_custom_call.1} parent=11 // pred_region
          _
        $region40: #{tpu_custom_call.1} parent=11 // pred_fallthru
          _
      $region12: #{tpu_custom_call.1} parent=5 // pred_fallthru
        _
      %p304 = scmp.lt.s32.totalorder %s18, 8
      // Predicated region
      $region41: #{tpu_custom_call.1} parent=5 // pred_check
        %p305 = pneg %p304
      $region42: #{tpu_custom_call.1} parent=5 // pred_check_branch
        %307 = sbr.rel (%p305) target = $region44
      $region43: #{tpu_custom_call.1} parent=5 // pred_region
        // Predicated region
        $region45: #{tpu_custom_call.1} parent=43 // pred_check
          %p308 = pneg %p59
        $region46: #{tpu_custom_call.1} parent=43 // pred_check_branch
          %310 = sbr.rel (%p308) target = $region48
        $region47: #{tpu_custom_call.1} parent=43 // pred_region
          %s311 = smul.u32 4, %s26
          %p312 = scmp.lt.s32.totalorder %s25, 1
          %s313 = scalar_select %p312, %s25, 1
          %p314 = scmp.lt.s32.totalorder %s311, 7
          %s315 = scalar_select %p314, %s311, 7
          %s316 = smul.addr %s313, 8
          %s317 = sadd.s32 %s315, %s316
          %s318 = smul.addr %s317, 8
          %s319 = scalar_lea.vmem %s0, %s318
          %s320 = smul.u32 4, %s26
        $region48: #{tpu_custom_call.1} parent=43 // pred_fallthru
          _
        // Predicated region
        $region49: #{tpu_custom_call.1} parent=43 // pred_check
          %p321 = pneg %p87
        $region50: #{tpu_custom_call.1} parent=43 // pred_check_branch
          %323 = sbr.rel (%p321) target = $region52
        $region51: #{tpu_custom_call.1} parent=43 // pred_region
          %s324 = smul.u32 4, %s27
          %p325 = scmp.lt.s32.totalorder %s25, 1
          %s326 = scalar_select %p325, %s25, 1
          %p327 = scmp.lt.s32.totalorder %s324, 7
          %s328 = scalar_select %p327, %s324, 7
          %s329 = smul.addr %s326, 8
          %s330 = sadd.s32 %s328, %s329
          %s331 = smul.addr %s330, 8
          %s332 = scalar_lea.vmem %s1, %s331
          %s333 = smul.u32 4, %s27
        $region52: #{tpu_custom_call.1} parent=43 // pred_fallthru
          _
      $region44: #{tpu_custom_call.1} parent=5 // pred_fallthru
        _
      %p334 = scmp.le.s32.totalorder 1, %s18
      %p335 = scmp.lt.s32.totalorder %s18, 9
      %p336 = pnand %p334, %p335
      %p337 = pneg %p336
      // Predicated region
      $region53: #{tpu_custom_call.1} parent=5 // pred_check
        _
      $region54: #{tpu_custom_call.1} parent=5 // pred_check_branch
        %339 = sbr.rel (%p336) target = $region56
      $region55: #{tpu_custom_call.1} parent=5 // pred_region
        %s340 = ssub.s32 %s18, 1
        %s341 = smul.u32 4, %s29
        %p342 = scmp.lt.s32.totalorder %s28, 1
        %s343 = scalar_select %p342, %s28, 1
        %p344 = scmp.lt.s32.totalorder %s341, 7
        %s345 = scalar_select %p344, %s341, 7
        %s346 = smul.addr %s343, 8
        %s347 = sadd.s32 %s345, %s346
        %s348 = smul.addr %s347, 8
        %s349 = scalar_lea.vmem %s0, %s348
        %p350 = pneg %p65
        %p351 = pneg %p62
        %s352 = smul.u32 4, %s30
        %p353 = scmp.lt.s32.totalorder %s28, 1
        %s354 = scalar_select %p353, %s28, 1
        %p355 = scmp.lt.s32.totalorder %s352, 7
        %s356 = scalar_select %p355, %s352, 7
        %s357 = smul.addr %s354, 8
        %s358 = sadd.s32 %s356, %s357
        %s359 = smul.addr %s358, 8
        %s360 = scalar_lea.vmem %s1, %s359
        %p361 = pneg %p93
        %p362 = pneg %p90
        %p363 = pneg %p114
        %p364 = pneg %p111
        %p365 = pneg %p135
        %p366 = pneg %p132
        %p367 = pneg %p156
        %p368 = pneg %p153
        %p369 = pneg %p177
        %p370 = pneg %p174
        %p371 = pneg %p198
        %p372 = pneg %p195
        %p373 = pneg %p219
        %p374 = pneg %p216
        %p375 = pneg %p240
        %p376 = pneg %p237
        %p377 = pneg %p268
        %p378 = pneg %p265
        %s379 = sand.u32 %s255, 1
        %s380 = scalar_lea.sflag [#allocation7], %s379
        %s381 = sand.u32 %s255, 1
        %s382 = smul.addr %s381, 32
        %s383 = scalar_lea.vmem [#allocation6], %s382
        %s384 = smul.u32 4, %s29
        %p385 = scmp.lt.s32.totalorder %s28, 1
        %s386 = scalar_select %p385, %s28, 1
        %p387 = scmp.lt.s32.totalorder %s384, 7
        %s388 = scalar_select %p387, %s384, 7
        %s389 = smul.addr %s386, 8
        %s390 = sadd.s32 %s388, %s389
        %s391 = smul.addr %s390, 8
        %s392 = scalar_lea.vmem %s0, %s391
        %s393 = smul.u32 4, %s29
        %s394 = smul.u32 4, %s30
        %p395 = scmp.lt.s32.totalorder %s28, 1
        %s396 = scalar_select %p395, %s28, 1
        %p397 = scmp.lt.s32.totalorder %s394, 7
        %s398 = scalar_select %p397, %s394, 7
        %s399 = smul.addr %s396, 8
        %s400 = sadd.s32 %s398, %s399
        %s401 = smul.addr %s400, 8
        %s402 = scalar_lea.vmem %s1, %s401
        %s403 = smul.u32 4, %s30
        %s404 = smul.u32 4, %s29
        %s405 = smul.u32 %s29, 32
        %s406 = smul.u32 %s30, 32
        %p407 = scmp.eq.s32.totalorder %s30, 0
        // Predicated region
        $region57: #{tpu_custom_call.1} parent=55 // pred_check
          %p408 = pneg %p407
        $region58: #{tpu_custom_call.1} parent=55 // pred_check_branch
          %410 = sbr.rel (%p408) target = $region60
        $region59: #{tpu_custom_call.1} parent=55 // pred_region
          %v411 = vld [vmem:[%s392] sm:$0xff]
          %v412 = vld [vmem:[%s392 + $0x8] sm:$0xff]
          %v413 = vld [vmem:[%s392 + $0x10] sm:$0xff]
          %v414 = vld [vmem:[%s392 + $0x18] sm:$0xff]
          %415 = vadd.xlane.f32.xlu0 %v411
          %v416 = vpop.xlane.xlu0 %415
          %417 = vadd.xlane.f32.xlu0 %v412
          %v418 = vpop.xlane.xlu0 %417
          %419 = vadd.xlane.f32.xlu0 %v413
          %v420 = vpop.xlane.xlu0 %419
          %421 = vadd.xlane.f32.xlu0 %v414
          %v422 = vpop.xlane.xlu0 %421
          %v423 = vrcp.pop 128.0
          %v424 = vmul.f32 %v416, %v423
          %v425 = vmul.f32 %v418, %v423
          %v426 = vmul.f32 %v420, %v423
          %v427 = vmul.f32 %v422, %v423
          %v428 = vsub.f32 %v411, %v424
          %v429 = vsub.f32 %v412, %v425
          %v430 = vsub.f32 %v413, %v426
          %v431 = vsub.f32 %v414, %v427
          %v432 = vmul.f32 %v428, %v428
          %v433 = vmul.f32 %v429, %v429
          %v434 = vmul.f32 %v430, %v430
          %v435 = vmul.f32 %v431, %v431
          %436 = vadd.xlane.f32.xlu0 %v432
          %v437 = vpop.xlane.xlu0 %436
          %438 = vadd.xlane.f32.xlu0 %v433
          %v439 = vpop.xlane.xlu0 %438
          %440 = vadd.xlane.f32.xlu0 %v434
          %v441 = vpop.xlane.xlu0 %440
          %442 = vadd.xlane.f32.xlu0 %v435
          %v443 = vpop.xlane.xlu0 %442
          %v444 = vmul.f32 %v437, %v423
          %v445 = vmul.f32 %v439, %v423
          %v446 = vmul.f32 %v441, %v423
          %v447 = vmul.f32 %v443, %v423
          %v448 = vadd.f32 %v444, 1e-05
          %v449 = vadd.f32 %v445, 1e-05
          %v450 = vadd.f32 %v446, 1e-05
          %v451 = vadd.f32 %v447, 1e-05
          %v452 = vrsqrt.pop %v448
          %v453 = vrsqrt.pop %v449
          %v454 = vrsqrt.pop %v450
          %v455 = vrsqrt.pop %v451
          %v456 = vmul.f32 %v428, %v452
          %v457 = vmul.f32 %v429, %v453
          %v458 = vmul.f32 %v430, %v454
          %v459 = vmul.f32 %v431, %v455
          %v460 = vld [vmem:[%s2] sm:$0x1]
          %v462 = vlaneseq
          %v463 = vshrl.u32 %v462, 7
          %v464 = vsub.s32 0, %v463
          %v465 = vrot.slane %v460, %v464
          %v467 = vmul.f32 %v456, %v465
          %v468 = vmul.f32 %v457, %v465
          %v469 = vmul.f32 %v458, %v465
          %v470 = vmul.f32 %v459, %v465
          %v471 = vld [vmem:[%s3] sm:$0x1]
          %v473 = vlaneseq
          %v474 = vshrl.u32 %v473, 7
          %v475 = vsub.s32 0, %v474
          %v476 = vrot.slane %v471, %v475
          %v478 = vadd.f32 %v467, %v476
          %v479 = vadd.f32 %v468, %v476
          %v480 = vadd.f32 %v469, %v476
          %v481 = vadd.f32 %v470, %v476
          %v482 = vld [vmem:[%s4] sm:$0xff]
          %v483 = vld [vmem:[%s4 + $0x8] sm:$0xff]
          %v484 = vld [vmem:[%s4 + $0x10] sm:$0xff]
          %v485 = vld [vmem:[%s4 + $0x18] sm:$0xff]
          %v486 = vld [vmem:[%s4 + $0x20] sm:$0xff]
          %v487 = vld [vmem:[%s4 + $0x28] sm:$0xff]
          %v488 = vld [vmem:[%s4 + $0x30] sm:$0xff]
          %v489 = vld [vmem:[%s4 + $0x38] sm:$0xff]
          %v490 = vld [vmem:[%s4 + $0x40] sm:$0xff]
          %v491 = vld [vmem:[%s4 + $0x48] sm:$0xff]
          %v492 = vld [vmem:[%s4 + $0x50] sm:$0xff]
          %v493 = vld [vmem:[%s4 + $0x58] sm:$0xff]
          %v494 = vld [vmem:[%s4 + $0x60] sm:$0xff]
          %v495 = vld [vmem:[%s4 + $0x68] sm:$0xff]
          %v496 = vld [vmem:[%s4 + $0x70] sm:$0xff]
          %v497 = vld [vmem:[%s4 + $0x78] sm:$0xff]
          %498 = vmatprep.subr.mxu0 0.0
          %499 = vmatpush1.msra.mxu0 %v482
          %500 = vmatprep.subr.mxu0 0.0
          %501 = vmatpush1.msra.mxu0 %v483
          %502 = vmatprep.subr.mxu0 0.0
          %503 = vmatpush1.msra.mxu0 %v484
          %504 = vmatprep.subr.mxu0 0.0
          %505 = vmatpush1.msra.mxu0 %v485
          %506 = vmatprep.subr.mxu0 0.0
          %507 = vmatpush1.msra.mxu0 %v486
          %508 = vmatprep.subr.mxu0 0.0
          %509 = vmatpush1.msra.mxu0 %v487
          %510 = vmatprep.subr.mxu0 0.0
          %511 = vmatpush1.msra.mxu0 %v488
          %512 = vmatprep.subr.mxu0 0.0
          %513 = vmatpush1.msra.mxu0 %v489
          %514 = vmatprep.subr.mxu0 0.0
          %515 = vmatpush1.msra.mxu0 %v490
          %516 = vmatprep.subr.mxu0 0.0
          %517 = vmatpush1.msra.mxu0 %v491
          %518 = vmatprep.subr.mxu0 0.0
          %519 = vmatpush1.msra.mxu0 %v492
          %520 = vmatprep.subr.mxu0 0.0
          %521 = vmatpush1.msra.mxu0 %v493
          %522 = vmatprep.subr.mxu0 0.0
          %523 = vmatpush1.msra.mxu0 %v494
          %524 = vmatprep.subr.mxu0 0.0
          %525 = vmatpush1.msra.mxu0 %v495
          %526 = vmatprep.subr.mxu0 0.0
          %527 = vmatpush1.msra.mxu0 %v496
          %528 = vmatprep.subr.mxu0 0.0
          %529 = vmatpush1.msra.mxu0 %v497
          %530 = vmatprep.subr.mxu0 0.0
          %531 = vmatpush1.msra.mxu0 0.0
          %532 = vmatprep.subr.mxu0 0.0
          %533 = vmatpush1.msra.mxu0 0.0
          %534 = vmatprep.subr.mxu0 0.0
          %535 = vmatpush1.msra.mxu0 0.0
          %536 = vmatprep.subr.mxu0 0.0
          %537 = vmatpush1.msra.mxu0 0.0
          %538 = vmatprep.subr.mxu0 0.0
          %539 = vmatpush1.msra.mxu0 0.0
          %540 = vmatprep.subr.mxu0 0.0
          %541 = vmatpush1.msra.mxu0 0.0
          %542 = vmatprep.subr.mxu0 0.0
          %543 = vmatpush1.msra.mxu0 0.0
          %544 = vmatprep.subr.mxu0 0.0
          %545 = vmatpush1.msra.mxu0 0.0
          %546 = vmatprep.subr.mxu0 0.0
          %547 = vmatpush1.msra.mxu0 0.0
          %548 = vmatprep.subr.mxu0 0.0
          %549 = vmatpush1.msra.mxu0 0.0
          %550 = vmatprep.subr.mxu0 0.0
          %551 = vmatpush1.msra.mxu0 0.0
          %552 = vmatprep.subr.mxu0 0.0
          %553 = vmatpush1.msra.mxu0 0.0
          %554 = vmatprep.subr.mxu0 0.0
          %555 = vmatpush1.msra.mxu0 0.0
          %556 = vmatprep.subr.mxu0 0.0
          %557 = vmatpush1.msra.mxu0 0.0
          %558 = vmatprep.subr.mxu0 0.0
          %559 = vmatpush1.msra.mxu0 0.0
          %560 = vmatprep.subr.mxu0 0.0
          %561 = vmatpush1.msra.mxu0 0.0
          %562 = vmatprep.mubr.f32.mxu0 0.0
          %563 = vmatmul.mubr.f32.gmra.mrb[0].mxu0 %v478
          %v564 = vpop.f32.mrb[0].mxu0
          %v565 = vadd.f32 0.0, %v564
          %v566 = vpop.f32.mrb[0].mxu0
          %567 = vmatprep.mubr.f32.mxu0 0.0
          %568 = vmatmul.mubr.f32.gmra.mrb[0].mxu0 %v479
          %v569 = vpop.f32.mrb[0].mxu0
          %v570 = vadd.f32 0.0, %v569
          %v571 = vpop.f32.mrb[0].mxu0
          %572 = vmatprep.mubr.f32.mxu0 0.0
          %573 = vmatmul.mubr.f32.gmra.mrb[0].mxu0 %v480
          %v574 = vpop.f32.mrb[0].mxu0
          %v575 = vadd.f32 0.0, %v574
          %v576 = vpop.f32.mrb[0].mxu0
          %577 = vmatprep.mubr.f32.mxu0 0.0
          %578 = vmatmul.mubr.f32.gmra.mrb[0].mxu0 %v481
          %v579 = vpop.f32.mrb[0].mxu0
          %v580 = vadd.f32 0.0, %v579
          %v581 = vpop.f32.mrb[0].mxu0
          %582 = vdwg.mxu0
          %vm583 = vcmask 261120
          %584 = vst.msk [vmem:[#allocation2] sm:$0xff] %vm583, %v565
          %585 = vst.msk [vmem:[#allocation2 + $0x8] sm:$0xff] %vm583, %v570
          %586 = vst.msk [vmem:[#allocation2 + $0x10] sm:$0xff] %vm583, %v575
          %587 = vst.msk [vmem:[#allocation2 + $0x18] sm:$0xff] %vm583, %v580
          %s588 = scalar_lea.vmem %s4, 128
          %v589 = vld [vmem:[%s588] sm:$0xff]
          %v590 = vld [vmem:[%s588 + $0x8] sm:$0xff]
          %v591 = vld [vmem:[%s588 + $0x10] sm:$0xff]
          %v592 = vld [vmem:[%s588 + $0x18] sm:$0xff]
          %v593 = vld [vmem:[%s588 + $0x20] sm:$0xff]
          %v594 = vld [vmem:[%s588 + $0x28] sm:$0xff]
          %v595 = vld [vmem:[%s588 + $0x30] sm:$0xff]
          %v596 = vld [vmem:[%s588 + $0x38] sm:$0xff]
          %v597 = vld [vmem:[%s588 + $0x40] sm:$0xff]
          %v598 = vld [vmem:[%s588 + $0x48] sm:$0xff]
          %v599 = vld [vmem:[%s588 + $0x50] sm:$0xff]
          %v600 = vld [vmem:[%s588 + $0x58] sm:$0xff]
          %v601 = vld [vmem:[%s588 + $0x60] sm:$0xff]
          %v602 = vld [vmem:[%s588 + $0x68] sm:$0xff]
          %v603 = vld [vmem:[%s588 + $0x70] sm:$0xff]
          %v604 = vld [vmem:[%s588 + $0x78] sm:$0xff]
          %605 = vmatprep.subr.mxu0 0.0
          %606 = vmatpush1.msra.mxu0 %v589
          %607 = vmatprep.subr.mxu0 0.0
          %608 = vmatpush1.msra.mxu0 %v590
          %609 = vmatprep.subr.mxu0 0.0
          %610 = vmatpush1.msra.mxu0 %v591
          %611 = vmatprep.subr.mxu0 0.0
          %612 = vmatpush1.msra.mxu0 %v592
          %613 = vmatprep.subr.mxu0 0.0
          %614 = vmatpush1.msra.mxu0 %v593
          %615 = vmatprep.subr.mxu0 0.0
          %616 = vmatpush1.msra.mxu0 %v594
          %617 = vmatprep.subr.mxu0 0.0
          %618 = vmatpush1.msra.mxu0 %v595
          %619 = vmatprep.subr.mxu0 0.0
          %620 = vmatpush1.msra.mxu0 %v596
          %621 = vmatprep.subr.mxu0 0.0
          %622 = vmatpush1.msra.mxu0 %v597
          %623 = vmatprep.subr.mxu0 0.0
          %624 = vmatpush1.msra.mxu0 %v598
          %625 = vmatprep.subr.mxu0 0.0
          %626 = vmatpush1.msra.mxu0 %v599
          %627 = vmatprep.subr.mxu0 0.0
          %628 = vmatpush1.msra.mxu0 %v600
          %629 = vmatprep.subr.mxu0 0.0
          %630 = vmatpush1.msra.mxu0 %v601
          %631 = vmatprep.subr.mxu0 0.0
          %632 = vmatpush1.msra.mxu0 %v602
          %633 = vmatprep.subr.mxu0 0.0
          %634 = vmatpush1.msra.mxu0 %v603
          %635 = vmatprep.subr.mxu0 0.0
          %636 = vmatpush1.msra.mxu0 %v604
          %637 = vmatprep.subr.mxu0 0.0
          %638 = vmatpush1.msra.mxu0 0.0
          %639 = vmatprep.subr.mxu0 0.0
          %640 = vmatpush1.msra.mxu0 0.0
          %641 = vmatprep.subr.mxu0 0.0
          %642 = vmatpush1.msra.mxu0 0.0
          %643 = vmatprep.subr.mxu0 0.0
          %644 = vmatpush1.msra.mxu0 0.0
          %645 = vmatprep.subr.mxu0 0.0
          %646 = vmatpush1.msra.mxu0 0.0
          %647 = vmatprep.subr.mxu0 0.0
          %648 = vmatpush1.msra.mxu0 0.0
          %649 = vmatprep.subr.mxu0 0.0
          %650 = vmatpush1.msra.mxu0 0.0
          %651 = vmatprep.subr.mxu0 0.0
          %652 = vmatpush1.msra.mxu0 0.0
          %653 = vmatprep.subr.mxu0 0.0
          %654 = vmatpush1.msra.mxu0 0.0
          %655 = vmatprep.subr.mxu0 0.0
          %656 = vmatpush1.msra.mxu0 0.0
          %657 = vmatprep.subr.mxu0 0.0
          %658 = vmatpush1.msra.mxu0 0.0
          %659 = vmatprep.subr.mxu0 0.0
          %660 = vmatpush1.msra.mxu0 0.0
          %661 = vmatprep.subr.mxu0 0.0
          %662 = vmatpush1.msra.mxu0 0.0
          %663 = vmatprep.subr.mxu0 0.0
          %664 = vmatpush1.msra.mxu0 0.0
          %665 = vmatprep.subr.mxu0 0.0
          %666 = vmatpush1.msra.mxu0 0.0
          %667 = vmatprep.subr.mxu0 0.0
          %668 = vmatpush1.msra.mxu0 0.0
          %669 = vmatprep.mubr.f32.mxu0 0.0
          %670 = vmatmul.mubr.f32.gmra.mrb[0].mxu0 %v478
          %v671 = vpop.f32.mrb[0].mxu0
          %v672 = vadd.f32 0.0, %v671
          %v673 = vpop.f32.mrb[0].mxu0
          %674 = vmatprep.mubr.f32.mxu0 0.0
          %675 = vmatmul.mubr.f32.gmra.mrb[0].mxu0 %v479
          %v676 = vpop.f32.mrb[0].mxu0
          %v677 = vadd.f32 0.0, %v676
          %v678 = vpop.f32.mrb[0].mxu0
          %679 = vmatprep.mubr.f32.mxu0 0.0
          %680 = vmatmul.mubr.f32.gmra.mrb[0].mxu0 %v480
          %v681 = vpop.f32.mrb[0].mxu0
          %v682 = vadd.f32 0.0, %v681
          %v683 = vpop.f32.mrb[0].mxu0
          %684 = vmatprep.mubr.f32.mxu0 0.0
          %685 = vmatmul.mubr.f32.gmra.mrb[0].mxu0 %v481
          %v686 = vpop.f32.mrb[0].mxu0
          %v687 = vadd.f32 0.0, %v686
          %v688 = vpop.f32.mrb[0].mxu0
          %689 = vdwg.mxu0
          %s690 = scalar_lea.vmem [#allocation2], 32
          %691 = vst.msk [vmem:[%s690] sm:$0xff] %vm583, %v672
          %692 = vst.msk [vmem:[%s690 + $0x8] sm:$0xff] %vm583, %v677
          %693 = vst.msk [vmem:[%s690 + $0x10] sm:$0xff] %vm583, %v682
          %694 = vst.msk [vmem:[%s690 + $0x18] sm:$0xff] %vm583, %v687
          %s695 = scalar_lea.vmem %s4, 256
          %v696 = vld [vmem:[%s695] sm:$0xff]
          %v697 = vld [vmem:[%s695 + $0x8] sm:$0xff]
          %v698 = vld [vmem:[%s695 + $0x10] sm:$0xff]
          %v699 = vld [vmem:[%s695 + $0x18] sm:$0xff]
          %v700 = vld [vmem:[%s695 + $0x20] sm:$0xff]
          %v701 = vld [vmem:[%s695 + $0x28] sm:$0xff]
          %v702 = vld [vmem:[%s695 + $0x30] sm:$0xff]
          %v703 = vld [vmem:[%s695 + $0x38] sm:$0xff]
          %v704 = vld [vmem:[%s695 + $0x40] sm:$0xff]
          %v705 = vld [vmem:[%s695 + $0x48] sm:$0xff]
          %v706 = vld [vmem:[%s695 + $0x50] sm:$0xff]
          %v707 = vld [vmem:[%s695 + $0x58] sm:$0xff]
          %v708 = vld [vmem:[%s695 + $0x60] sm:$0xff]
          %v709 = vld [vmem:[%s695 + $0x68] sm:$0xff]
          %v710 = vld [vmem:[%s695 + $0x70] sm:$0xff]
          %v711 = vld [vmem:[%s695 + $0x78] sm:$0xff]
          %712 = vmatprep.subr.mxu0 0.0
          %713 = vmatpush1.msra.mxu0 %v696
          %714 = vmatprep.subr.mxu0 0.0
          %715 = vmatpush1.msra.mxu0 %v697
          %716 = vmatprep.subr.mxu0 0.0
          %717 = vmatpush1.msra.mxu0 %v698
          %718 = vmatprep.subr.mxu0 0.0
          %719 = vmatpush1.msra.mxu0 %v699
          %720 = vmatprep.subr.mxu0 0.0
          %721 = vmatpush1.msra.mxu0 %v700
          %722 = vmatprep.subr.mxu0 0.0
          %723 = vmatpush1.msra.mxu0 %v701
          %724 = vmatprep.subr.mxu0 0.0
          %725 = vmatpush1.msra.mxu0 %v702
          %726 = vmatprep.subr.mxu0 0.0
          %727 = vmatpush1.msra.mxu0 %v703
          %728 = vmatprep.subr.mxu0 0.0
          %729 = vmatpush1.msra.mxu0 %v704
          %730 = vmatprep.subr.mxu0 0.0
          %731 = vmatpush1.msra.mxu0 %v705
          %732 = vmatprep.subr.mxu0 0.0
          %733 = vmatpush1.msra.mxu0 %v706
          %734 = vmatprep.subr.mxu0 0.0
          %735 = vmatpush1.msra.mxu0 %v707
          %736 = vmatprep.subr.mxu0 0.0
          %737 = vmatpush1.msra.mxu0 %v708
          %738 = vmatprep.subr.mxu0 0.0
          %739 = vmatpush1.msra.mxu0 %v709
          %740 = vmatprep.subr.mxu0 0.0
          %741 = vmatpush1.msra.mxu0 %v710
          %742 = vmatprep.subr.mxu0 0.0
          %743 = vmatpush1.msra.mxu0 %v711
          %744 = vmatprep.subr.mxu0 0.0
          %745 = vmatpush1.msra.mxu0 0.0
          %746 = vmatprep.subr.mxu0 0.0
          %747 = vmatpush1.msra.mxu0 0.0
          %748 = vmatprep.subr.mxu0 0.0
          %749 = vmatpush1.msra.mxu0 0.0
          %750 = vmatprep.subr.mxu0 0.0
          %751 = vmatpush1.msra.mxu0 0.0
          %752 = vmatprep.subr.mxu0 0.0
          %753 = vmatpush1.msra.mxu0 0.0
          %754 = vmatprep.subr.mxu0 0.0
          %755 = vmatpush1.msra.mxu0 0.0
          %756 = vmatprep.subr.mxu0 0.0
          %757 = vmatpush1.msra.mxu0 0.0
          %758 = vmatprep.subr.mxu0 0.0
          %759 = vmatpush1.msra.mxu0 0.0
          %760 = vmatprep.subr.mxu0 0.0
          %761 = vmatpush1.msra.mxu0 0.0
          %762 = vmatprep.subr.mxu0 0.0
          %763 = vmatpush1.msra.mxu0 0.0
          %764 = vmatprep.subr.mxu0 0.0
          %765 = vmatpush1.msra.mxu0 0.0
          %766 = vmatprep.subr.mxu0 0.0
          %767 = vmatpush1.msra.mxu0 0.0
          %768 = vmatprep.subr.mxu0 0.0
          %769 = vmatpush1.msra.mxu0 0.0
          %770 = vmatprep.subr.mxu0 0.0
          %771 = vmatpush1.msra.mxu0 0.0
          %772 = vmatprep.subr.mxu0 0.0
          %773 = vmatpush1.msra.mxu0 0.0
          %774 = vmatprep.subr.mxu0 0.0
          %775 = vmatpush1.msra.mxu0 0.0
          %776 = vmatprep.mubr.f32.mxu0 0.0
          %777 = vmatmul.mubr.f32.gmra.mrb[0].mxu0 %v478
          %v778 = vpop.f32.mrb[0].mxu0
          %v779 = vadd.f32 0.0, %v778
          %v780 = vpop.f32.mrb[0].mxu0
          %781 = vmatprep.mubr.f32.mxu0 0.0
          %782 = vmatmul.mubr.f32.gmra.mrb[0].mxu0 %v479
          %v783 = vpop.f32.mrb[0].mxu0
          %v784 = vadd.f32 0.0, %v783
          %v785 = vpop.f32.mrb[0].mxu0
          %786 = vmatprep.mubr.f32.mxu0 0.0
          %787 = vmatmul.mubr.f32.gmra.mrb[0].mxu0 %v480
          %v788 = vpop.f32.mrb[0].mxu0
          %v789 = vadd.f32 0.0, %v788
          %v790 = vpop.f32.mrb[0].mxu0
          %791 = vmatprep.mubr.f32.mxu0 0.0
          %792 = vmatmul.mubr.f32.gmra.mrb[0].mxu0 %v481
          %v793 = vpop.f32.mrb[0].mxu0
          %v794 = vadd.f32 0.0, %v793
          %v795 = vpop.f32.mrb[0].mxu0
          %796 = vdwg.mxu0
          %s797 = scalar_lea.vmem [#allocation2], 64
          %798 = vst.msk [vmem:[%s797] sm:$0xff] %vm583, %v779
          %799 = vst.msk [vmem:[%s797 + $0x8] sm:$0xff] %vm583, %v784
          %800 = vst.msk [vmem:[%s797 + $0x10] sm:$0xff] %vm583, %v789
          %801 = vst.msk [vmem:[%s797 + $0x18] sm:$0xff] %vm583, %v794
          %s802 = scalar_lea.vmem %s4, 384
          %v803 = vld [vmem:[%s802] sm:$0xff]
          %v804 = vld [vmem:[%s802 + $0x8] sm:$0xff]
          %v805 = vld [vmem:[%s802 + $0x10] sm:$0xff]
          %v806 = vld [vmem:[%s802 + $0x18] sm:$0xff]
          %v807 = vld [vmem:[%s802 + $0x20] sm:$0xff]
          %v808 = vld [vmem:[%s802 + $0x28] sm:$0xff]
          %v809 = vld [vmem:[%s802 + $0x30] sm:$0xff]
          %v810 = vld [vmem:[%s802 + $0x38] sm:$0xff]
          %v811 = vld [vmem:[%s802 + $0x40] sm:$0xff]
          %v812 = vld [vmem:[%s802 + $0x48] sm:$0xff]
          %v813 = vld [vmem:[%s802 + $0x50] sm:$0xff]
          %v814 = vld [vmem:[%s802 + $0x58] sm:$0xff]
          %v815 = vld [vmem:[%s802 + $0x60] sm:$0xff]
          %v816 = vld [vmem:[%s802 + $0x68] sm:$0xff]
          %v817 = vld [vmem:[%s802 + $0x70] sm:$0xff]
          %v818 = vld [vmem:[%s802 + $0x78] sm:$0xff]
          %819 = vmatprep.subr.mxu0 0.0
          %820 = vmatpush1.msra.mxu0 %v803
          %821 = vmatprep.subr.mxu0 0.0
          %822 = vmatpush1.msra.mxu0 %v804
          %823 = vmatprep.subr.mxu0 0.0
          %824 = vmatpush1.msra.mxu0 %v805
          %825 = vmatprep.subr.mxu0 0.0
          %826 = vmatpush1.msra.mxu0 %v806
          %827 = vmatprep.subr.mxu0 0.0
          %828 = vmatpush1.msra.mxu0 %v807
          %829 = vmatprep.subr.mxu0 0.0
          %830 = vmatpush1.msra.mxu0 %v808
          %831 = vmatprep.subr.mxu0 0.0
          %832 = vmatpush1.msra.mxu0 %v809
          %833 = vmatprep.subr.mxu0 0.0
          %834 = vmatpush1.msra.mxu0 %v810
          %835 = vmatprep.subr.mxu0 0.0
          %836 = vmatpush1.msra.mxu0 %v811
          %837 = vmatprep.subr.mxu0 0.0
          %838 = vmatpush1.msra.mxu0 %v812
          %839 = vmatprep.subr.mxu0 0.0
          %840 = vmatpush1.msra.mxu0 %v813
          %841 = vmatprep.subr.mxu0 0.0
          %842 = vmatpush1.msra.mxu0 %v814
          %843 = vmatprep.subr.mxu0 0.0
          %844 = vmatpush1.msra.mxu0 %v815
          %845 = vmatprep.subr.mxu0 0.0
          %846 = vmatpush1.msra.mxu0 %v816
          %847 = vmatprep.subr.mxu0 0.0
          %848 = vmatpush1.msra.mxu0 %v817
          %849 = vmatprep.subr.mxu0 0.0
          %850 = vmatpush1.msra.mxu0 %v818
          %851 = vmatprep.subr.mxu0 0.0
          %852 = vmatpush1.msra.mxu0 0.0
          %853 = vmatprep.subr.mxu0 0.0
          %854 = vmatpush1.msra.mxu0 0.0
          %855 = vmatprep.subr.mxu0 0.0
          %856 = vmatpush1.msra.mxu0 0.0
          %857 = vmatprep.subr.mxu0 0.0
          %858 = vmatpush1.msra.mxu0 0.0
          %859 = vmatprep.subr.mxu0 0.0
          %860 = vmatpush1.msra.mxu0 0.0
          %861 = vmatprep.subr.mxu0 0.0
          %862 = vmatpush1.msra.mxu0 0.0
          %863 = vmatprep.subr.mxu0 0.0
          %864 = vmatpush1.msra.mxu0 0.0
          %865 = vmatprep.subr.mxu0 0.0
          %866 = vmatpush1.msra.mxu0 0.0
          %867 = vmatprep.subr.mxu0 0.0
          %868 = vmatpush1.msra.mxu0 0.0
          %869 = vmatprep.subr.mxu0 0.0
          %870 = vmatpush1.msra.mxu0 0.0
          %871 = vmatprep.subr.mxu0 0.0
          %872 = vmatpush1.msra.mxu0 0.0
          %873 = vmatprep.subr.mxu0 0.0
          %874 = vmatpush1.msra.mxu0 0.0
          %875 = vmatprep.subr.mxu0 0.0
          %876 = vmatpush1.msra.mxu0 0.0
          %877 = vmatprep.subr.mxu0 0.0
          %878 = vmatpush1.msra.mxu0 0.0
          %879 = vmatprep.subr.mxu0 0.0
          %880 = vmatpush1.msra.mxu0 0.0
          %881 = vmatprep.subr.mxu0 0.0
          %882 = vmatpush1.msra.mxu0 0.0
          %883 = vmatprep.mubr.f32.mxu0 0.0
          %884 = vmatmul.mubr.f32.gmra.mrb[0].mxu0 %v478
          %v885 = vpop.f32.mrb[0].mxu0
          %v886 = vadd.f32 0.0, %v885
          %v887 = vpop.f32.mrb[0].mxu0
          %888 = vmatprep.mubr.f32.mxu0 0.0
          %889 = vmatmul.mubr.f32.gmra.mrb[0].mxu0 %v479
          %v890 = vpop.f32.mrb[0].mxu0
          %v891 = vadd.f32 0.0, %v890
          %v892 = vpop.f32.mrb[0].mxu0
          %893 = vmatprep.mubr.f32.mxu0 0.0
          %894 = vmatmul.mubr.f32.gmra.mrb[0].mxu0 %v480
          %v895 = vpop.f32.mrb[0].mxu0
          %v896 = vadd.f32 0.0, %v895
          %v897 = vpop.f32.mrb[0].mxu0
          %898 = vmatprep.mubr.f32.mxu0 0.0
          %899 = vmatmul.mubr.f32.gmra.mrb[0].mxu0 %v481
          %v900 = vpop.f32.mrb[0].mxu0
          %v901 = vadd.f32 0.0, %v900
          %v902 = vpop.f32.mrb[0].mxu0
          %903 = vdwg.mxu0
          %s904 = scalar_lea.vmem [#allocation2], 96
          %905 = vst.msk [vmem:[%s904] sm:$0xff] %vm583, %v886
          %906 = vst.msk [vmem:[%s904 + $0x8] sm:$0xff] %vm583, %v891
          %907 = vst.msk [vmem:[%s904 + $0x10] sm:$0xff] %vm583, %v896
          %908 = vst.msk [vmem:[%s904 + $0x18] sm:$0xff] %vm583, %v901
          %vm909 = vcmask 7168
          %910 = vst.msk [vmem:[#allocation3] sm:$0xff] %vm909, -1e+30
          %911 = vst.msk [vmem:[#allocation3 + $0x8] sm:$0xff] %vm909, -1e+30
          %912 = vst.msk [vmem:[#allocation3 + $0x10] sm:$0xff] %vm909, -1e+30
          %913 = vst.msk [vmem:[#allocation3 + $0x18] sm:$0xff] %vm909, -1e+30
          %914 = vst.msk [vmem:[#allocation3 + $0x20] sm:$0xff] %vm909, -1e+30
          %915 = vst.msk [vmem:[#allocation3 + $0x28] sm:$0xff] %vm909, -1e+30
          %916 = vst.msk [vmem:[#allocation3 + $0x30] sm:$0xff] %vm909, -1e+30
          %917 = vst.msk [vmem:[#allocation3 + $0x38] sm:$0xff] %vm909, -1e+30
          %918 = vst.msk [vmem:[#allocation3 + $0x40] sm:$0xff] %vm909, -1e+30
          %919 = vst.msk [vmem:[#allocation3 + $0x48] sm:$0xff] %vm909, -1e+30
          %920 = vst.msk [vmem:[#allocation3 + $0x50] sm:$0xff] %vm909, -1e+30
          %921 = vst.msk [vmem:[#allocation3 + $0x58] sm:$0xff] %vm909, -1e+30
          %922 = vst.msk [vmem:[#allocation3 + $0x60] sm:$0xff] %vm909, -1e+30
          %923 = vst.msk [vmem:[#allocation3 + $0x68] sm:$0xff] %vm909, -1e+30
          %924 = vst.msk [vmem:[#allocation3 + $0x70] sm:$0xff] %vm909, -1e+30
          %925 = vst.msk [vmem:[#allocation3 + $0x78] sm:$0xff] %vm909, -1e+30
          %926 = vst.msk [vmem:[#allocation4] sm:$0xff] %vm909, 0.0
          %927 = vst.msk [vmem:[#allocation4 + $0x8] sm:$0xff] %vm909, 0.0
          %928 = vst.msk [vmem:[#allocation4 + $0x10] sm:$0xff] %vm909, 0.0
          %929 = vst.msk [vmem:[#allocation4 + $0x18] sm:$0xff] %vm909, 0.0
          %930 = vst.msk [vmem:[#allocation4 + $0x20] sm:$0xff] %vm909, 0.0
          %931 = vst.msk [vmem:[#allocation4 + $0x28] sm:$0xff] %vm909, 0.0
          %932 = vst.msk [vmem:[#allocation4 + $0x30] sm:$0xff] %vm909, 0.0
          %933 = vst.msk [vmem:[#allocation4 + $0x38] sm:$0xff] %vm909, 0.0
          %934 = vst.msk [vmem:[#allocation4 + $0x40] sm:$0xff] %vm909, 0.0
          %935 = vst.msk [vmem:[#allocation4 + $0x48] sm:$0xff] %vm909, 0.0
          %936 = vst.msk [vmem:[#allocation4 + $0x50] sm:$0xff] %vm909, 0.0
          %937 = vst.msk [vmem:[#allocation4 + $0x58] sm:$0xff] %vm909, 0.0
          %938 = vst.msk [vmem:[#allocation4 + $0x60] sm:$0xff] %vm909, 0.0
          %939 = vst.msk [vmem:[#allocation4 + $0x68] sm:$0xff] %vm909, 0.0
          %940 = vst.msk [vmem:[#allocation4 + $0x70] sm:$0xff] %vm909, 0.0
          %941 = vst.msk [vmem:[#allocation4 + $0x78] sm:$0xff] %vm909, 0.0
          %942 = vst.msk [vmem:[#allocation5] sm:$0xff] %vm583, 0.0
          %943 = vst.msk [vmem:[#allocation5 + $0x8] sm:$0xff] %vm583, 0.0
          %944 = vst.msk [vmem:[#allocation5 + $0x10] sm:$0xff] %vm583, 0.0
          %945 = vst.msk [vmem:[#allocation5 + $0x18] sm:$0xff] %vm583, 0.0
          %946 = vst.msk [vmem:[#allocation5 + $0x20] sm:$0xff] %vm583, 0.0
          %947 = vst.msk [vmem:[#allocation5 + $0x28] sm:$0xff] %vm583, 0.0
          %948 = vst.msk [vmem:[#allocation5 + $0x30] sm:$0xff] %vm583, 0.0
          %949 = vst.msk [vmem:[#allocation5 + $0x38] sm:$0xff] %vm583, 0.0
          %950 = vst.msk [vmem:[#allocation5 + $0x40] sm:$0xff] %vm583, 0.0
          %951 = vst.msk [vmem:[#allocation5 + $0x48] sm:$0xff] %vm583, 0.0
          %952 = vst.msk [vmem:[#allocation5 + $0x50] sm:$0xff] %vm583, 0.0
          %953 = vst.msk [vmem:[#allocation5 + $0x58] sm:$0xff] %vm583, 0.0
          %954 = vst.msk [vmem:[#allocation5 + $0x60] sm:$0xff] %vm583, 0.0
          %955 = vst.msk [vmem:[#allocation5 + $0x68] sm:$0xff] %vm583, 0.0
          %956 = vst.msk [vmem:[#allocation5 + $0x70] sm:$0xff] %vm583, 0.0
          %957 = vst.msk [vmem:[#allocation5 + $0x78] sm:$0xff] %vm583, 0.0
        $region60: #{tpu_custom_call.1} parent=55 // pred_fallthru
          _
        %s958 = sadd.s32 %s405, 32
        %p959 = scmp.lt.s32.totalorder %s406, %s958
        // Predicated region
        $region61: #{tpu_custom_call.1} parent=55 // pred_check
          %p960 = pneg %p959
        $region62: #{tpu_custom_call.1} parent=55 // pred_check_branch
          %962 = sbr.rel (%p960) target = $region64
        $region63: #{tpu_custom_call.1} parent=55 // pred_region
          %v963 = vld [vmem:[%s402] sm:$0xff]
          %v964 = vld [vmem:[%s402 + $0x8] sm:$0xff]
          %v965 = vld [vmem:[%s402 + $0x10] sm:$0xff]
          %v966 = vld [vmem:[%s402 + $0x18] sm:$0xff]
          %967 = vadd.xlane.f32.xlu0 %v963
          %v968 = vpop.xlane.xlu0 %967
          %969 = vadd.xlane.f32.xlu0 %v964
          %v970 = vpop.xlane.xlu0 %969
          %971 = vadd.xlane.f32.xlu0 %v965
          %v972 = vpop.xlane.xlu0 %971
          %973 = vadd.xlane.f32.xlu0 %v966
          %v974 = vpop.xlane.xlu0 %973
          %v975 = vrcp.pop 128.0
          %v976 = vmul.f32 %v968, %v975
          %v977 = vmul.f32 %v970, %v975
          %v978 = vmul.f32 %v972, %v975
          %v979 = vmul.f32 %v974, %v975
          %v980 = vsub.f32 %v963, %v976
          %v981 = vsub.f32 %v964, %v977
          %v982 = vsub.f32 %v965, %v978
          %v983 = vsub.f32 %v966, %v979
          %v984 = vmul.f32 %v980, %v980
          %v985 = vmul.f32 %v981, %v981
          %v986 = vmul.f32 %v982, %v982
          %v987 = vmul.f32 %v983, %v983
          %988 = vadd.xlane.f32.xlu0 %v984
          %v989 = vpop.xlane.xlu0 %988
          %990 = vadd.xlane.f32.xlu0 %v985
          %v991 = vpop.xlane.xlu0 %990
          %992 = vadd.xlane.f32.xlu0 %v986
          %v993 = vpop.xlane.xlu0 %992
          %994 = vadd.xlane.f32.xlu0 %v987
          %v995 = vpop.xlane.xlu0 %994
          %v996 = vmul.f32 %v989, %v975
          %v997 = vmul.f32 %v991, %v975
          %v998 = vmul.f32 %v993, %v975
          %v999 = vmul.f32 %v995, %v975
          %v1000 = vadd.f32 %v996, 1e-05
          %v1001 = vadd.f32 %v997, 1e-05
          %v1002 = vadd.f32 %v998, 1e-05
          %v1003 = vadd.f32 %v999, 1e-05
          %v1004 = vrsqrt.pop %v1000
          %v1005 = vrsqrt.pop %v1001
          %v1006 = vrsqrt.pop %v1002
          %v1007 = vrsqrt.pop %v1003
          %v1008 = vmul.f32 %v980, %v1004
          %v1009 = vmul.f32 %v981, %v1005
          %v1010 = vmul.f32 %v982, %v1006
          %v1011 = vmul.f32 %v983, %v1007
          %v1012 = vld [vmem:[%s2] sm:$0x1]
          %v1014 = vlaneseq
          %v1015 = vshrl.u32 %v1014, 7
          %v1016 = vsub.s32 0, %v1015
          %v1017 = vrot.slane %v1012, %v1016
          %v1019 = vmul.f32 %v1008, %v1017
          %v1020 = vmul.f32 %v1009, %v1017
          %v1021 = vmul.f32 %v1010, %v1017
          %v1022 = vmul.f32 %v1011, %v1017
          %v1023 = vld [vmem:[%s3] sm:$0x1]
          %v1025 = vlaneseq
          %v1026 = vshrl.u32 %v1025, 7
          %v1027 = vsub.s32 0, %v1026
          %v1028 = vrot.slane %v1023, %v1027
          %v1030 = vadd.f32 %v1019, %v1028
          %v1031 = vadd.f32 %v1020, %v1028
          %v1032 = vadd.f32 %v1021, %v1028
          %v1033 = vadd.f32 %v1022, %v1028
          %v1034 = vlaneseq
          %v1035 = vshrl.u32 %v1034, 7
          %v1036 = vadd.s32 %v1035, 8
          %v1037 = vadd.s32 %v1035, 16
          %v1038 = vadd.s32 %v1035, 24
          %v1039 = vstv %s405
          %v1040 = vadd.s32 %v1039, %v1035
          %v1041 = vadd.s32 %v1039, %v1036
          %v1042 = vadd.s32 %v1039, %v1037
          %v1043 = vadd.s32 %v1039, %v1038
          %v1044 = vlaneseq
          %v1045 = vand.u32 %v1044, 127
          %v1046 = vstv %s406
          %v1047 = vadd.s32 %v1046, %v1045
          %vm1048 = vcmp.gt.s32.totalorder %v1047, %v1040
          %vm1049 = vcmp.gt.s32.totalorder %v1047, %v1041
          %vm1050 = vcmp.gt.s32.totalorder %v1047, %v1042
          %vm1051 = vcmp.gt.s32.totalorder %v1047, %v1043
          %v1052 = vld [vmem:[%s5] sm:$0xff]
          %v1053 = vld [vmem:[%s5 + $0x8] sm:$0xff]
          %v1054 = vld [vmem:[%s5 + $0x10] sm:$0xff]
          %v1055 = vld [vmem:[%s5 + $0x18] sm:$0xff]
          %v1056 = vld [vmem:[%s5 + $0x20] sm:$0xff]
          %v1057 = vld [vmem:[%s5 + $0x28] sm:$0xff]
          %v1058 = vld [vmem:[%s5 + $0x30] sm:$0xff]
          %v1059 = vld [vmem:[%s5 + $0x38] sm:$0xff]
          %v1060 = vld [vmem:[%s5 + $0x40] sm:$0xff]
          %v1061 = vld [vmem:[%s5 + $0x48] sm:$0xff]
          %v1062 = vld [vmem:[%s5 + $0x50] sm:$0xff]
          %v1063 = vld [vmem:[%s5 + $0x58] sm:$0xff]
          %v1064 = vld [vmem:[%s5 + $0x60] sm:$0xff]
          %v1065 = vld [vmem:[%s5 + $0x68] sm:$0xff]
          %v1066 = vld [vmem:[%s5 + $0x70] sm:$0xff]
          %v1067 = vld [vmem:[%s5 + $0x78] sm:$0xff]
          %1068 = vmatprep.subr.mxu0 0.0
          %1069 = vmatpush1.msra.mxu0 %v1052
          %1070 = vmatprep.subr.mxu0 0.0
          %1071 = vmatpush1.msra.mxu0 %v1053
          %1072 = vmatprep.subr.mxu0 0.0
          %1073 = vmatpush1.msra.mxu0 %v1054
          %1074 = vmatprep.subr.mxu0 0.0
          %1075 = vmatpush1.msra.mxu0 %v1055
          %1076 = vmatprep.subr.mxu0 0.0
          %1077 = vmatpush1.msra.mxu0 %v1056
          %1078 = vmatprep.subr.mxu0 0.0
          %1079 = vmatpush1.msra.mxu0 %v1057
          %1080 = vmatprep.subr.mxu0 0.0
          %1081 = vmatpush1.msra.mxu0 %v1058
          %1082 = vmatprep.subr.mxu0 0.0
          %1083 = vmatpush1.msra.mxu0 %v1059
          %1084 = vmatprep.subr.mxu0 0.0
          %1085 = vmatpush1.msra.mxu0 %v1060
          %1086 = vmatprep.subr.mxu0 0.0
          %1087 = vmatpush1.msra.mxu0 %v1061
          %1088 = vmatprep.subr.mxu0 0.0
          %1089 = vmatpush1.msra.mxu0 %v1062
          %1090 = vmatprep.subr.mxu0 0.0
          %1091 = vmatpush1.msra.mxu0 %v1063
          %1092 = vmatprep.subr.mxu0 0.0
          %1093 = vmatpush1.msra.mxu0 %v1064
          %1094 = vmatprep.subr.mxu0 0.0
          %1095 = vmatpush1.msra.mxu0 %v1065
          %1096 = vmatprep.subr.mxu0 0.0
          %1097 = vmatpush1.msra.mxu0 %v1066
          %1098 = vmatprep.subr.mxu0 0.0
          %1099 = vmatpush1.msra.mxu0 %v1067
          %1100 = vmatprep.subr.mxu0 0.0
          %1101 = vmatpush1.msra.mxu0 0.0
          %1102 = vmatprep.subr.mxu0 0.0
          %1103 = vmatpush1.msra.mxu0 0.0
          %1104 = vmatprep.subr.mxu0 0.0
          %1105 = vmatpush1.msra.mxu0 0.0
          %1106 = vmatprep.subr.mxu0 0.0
          %1107 = vmatpush1.msra.mxu0 0.0
          %1108 = vmatprep.subr.mxu0 0.0
          %1109 = vmatpush1.msra.mxu0 0.0
          %1110 = vmatprep.subr.mxu0 0.0
          %1111 = vmatpush1.msra.mxu0 0.0
          %1112 = vmatprep.subr.mxu0 0.0
          %1113 = vmatpush1.msra.mxu0 0.0
          %1114 = vmatprep.subr.mxu0 0.0
          %1115 = vmatpush1.msra.mxu0 0.0
          %1116 = vmatprep.subr.mxu0 0.0
          %1117 = vmatpush1.msra.mxu0 0.0
          %1118 = vmatprep.subr.mxu0 0.0
          %1119 = vmatpush1.msra.mxu0 0.0
          %1120 = vmatprep.subr.mxu0 0.0
          %1121 = vmatpush1.msra.mxu0 0.0
          %1122 = vmatprep.subr.mxu0 0.0
          %1123 = vmatpush1.msra.mxu0 0.0
          %1124 = vmatprep.subr.mxu0 0.0
          %1125 = vmatpush1.msra.mxu0 0.0
          %1126 = vmatprep.subr.mxu0 0.0
          %1127 = vmatpush1.msra.mxu0 0.0
          %1128 = vmatprep.subr.mxu0 0.0
          %1129 = vmatpush1.msra.mxu0 0.0
          %1130 = vmatprep.subr.mxu0 0.0
          %1131 = vmatpush1.msra.mxu0 0.0
          %1132 = vmatprep.mubr.f32.mxu0 0.0
          %1133 = vmatmul.mubr.f32.gmra.mrb[0].mxu0 %v1030
          %v1134 = vpop.f32.mrb[0].mxu0
          %v1135 = vadd.f32 0.0, %v1134
          %v1136 = vpop.f32.mrb[0].mxu0
          %1137 = vmatprep.mubr.f32.mxu0 0.0
          %1138 = vmatmul.mubr.f32.gmra.mrb[0].mxu0 %v1031
          %v1139 = vpop.f32.mrb[0].mxu0
          %v1140 = vadd.f32 0.0, %v1139
          %v1141 = vpop.f32.mrb[0].mxu0
          %1142 = vmatprep.mubr.f32.mxu0 0.0
          %1143 = vmatmul.mubr.f32.gmra.mrb[0].mxu0 %v1032
          %v1144 = vpop.f32.mrb[0].mxu0
          %v1145 = vadd.f32 0.0, %v1144
          %v1146 = vpop.f32.mrb[0].mxu0
          %1147 = vmatprep.mubr.f32.mxu0 0.0
          %1148 = vmatmul.mubr.f32.gmra.mrb[0].mxu0 %v1033
          %v1149 = vpop.f32.mrb[0].mxu0
          %v1150 = vadd.f32 0.0, %v1149
          %v1151 = vpop.f32.mrb[0].mxu0
          %1152 = vdwg.mxu0
          %v1153 = vld [vmem:[%s6] sm:$0xff]
          %v1154 = vld [vmem:[%s6 + $0x8] sm:$0xff]
          %v1155 = vld [vmem:[%s6 + $0x10] sm:$0xff]
          %v1156 = vld [vmem:[%s6 + $0x18] sm:$0xff]
          %v1157 = vld [vmem:[%s6 + $0x20] sm:$0xff]
          %v1158 = vld [vmem:[%s6 + $0x28] sm:$0xff]
          %v1159 = vld [vmem:[%s6 + $0x30] sm:$0xff]
          %v1160 = vld [vmem:[%s6 + $0x38] sm:$0xff]
          %v1161 = vld [vmem:[%s6 + $0x40] sm:$0xff]
          %v1162 = vld [vmem:[%s6 + $0x48] sm:$0xff]
          %v1163 = vld [vmem:[%s6 + $0x50] sm:$0xff]
          %v1164 = vld [vmem:[%s6 + $0x58] sm:$0xff]
          %v1165 = vld [vmem:[%s6 + $0x60] sm:$0xff]
          %v1166 = vld [vmem:[%s6 + $0x68] sm:$0xff]
          %v1167 = vld [vmem:[%s6 + $0x70] sm:$0xff]
          %v1168 = vld [vmem:[%s6 + $0x78] sm:$0xff]
          %1169 = vmatprep.subr.mxu0 0.0
          %1170 = vmatpush1.msra.mxu0 %v1153
          %1171 = vmatprep.subr.mxu0 0.0
          %1172 = vmatpush1.msra.mxu0 %v1154
          %1173 = vmatprep.subr.mxu0 0.0
          %1174 = vmatpush1.msra.mxu0 %v1155
          %1175 = vmatprep.subr.mxu0 0.0
          %1176 = vmatpush1.msra.mxu0 %v1156
          %1177 = vmatprep.subr.mxu0 0.0
          %1178 = vmatpush1.msra.mxu0 %v1157
          %1179 = vmatprep.subr.mxu0 0.0
          %1180 = vmatpush1.msra.mxu0 %v1158
          %1181 = vmatprep.subr.mxu0 0.0
          %1182 = vmatpush1.msra.mxu0 %v1159
          %1183 = vmatprep.subr.mxu0 0.0
          %1184 = vmatpush1.msra.mxu0 %v1160
          %1185 = vmatprep.subr.mxu0 0.0
          %1186 = vmatpush1.msra.mxu0 %v1161
          %1187 = vmatprep.subr.mxu0 0.0
          %1188 = vmatpush1.msra.mxu0 %v1162
          %1189 = vmatprep.subr.mxu0 0.0
          %1190 = vmatpush1.msra.mxu0 %v1163
          %1191 = vmatprep.subr.mxu0 0.0
          %1192 = vmatpush1.msra.mxu0 %v1164
          %1193 = vmatprep.subr.mxu0 0.0
          %1194 = vmatpush1.msra.mxu0 %v1165
          %1195 = vmatprep.subr.mxu0 0.0
          %1196 = vmatpush1.msra.mxu0 %v1166
          %1197 = vmatprep.subr.mxu0 0.0
          %1198 = vmatpush1.msra.mxu0 %v1167
          %1199 = vmatprep.subr.mxu0 0.0
          %1200 = vmatpush1.msra.mxu0 %v1168
          %1201 = vmatprep.subr.mxu0 0.0
          %1202 = vmatpush1.msra.mxu0 0.0
          %1203 = vmatprep.subr.mxu0 0.0
          %1204 = vmatpush1.msra.mxu0 0.0
          %1205 = vmatprep.subr.mxu0 0.0
          %1206 = vmatpush1.msra.mxu0 0.0
          %1207 = vmatprep.subr.mxu0 0.0
          %1208 = vmatpush1.msra.mxu0 0.0
          %1209 = vmatprep.subr.mxu0 0.0
          %1210 = vmatpush1.msra.mxu0 0.0
          %1211 = vmatprep.subr.mxu0 0.0
          %1212 = vmatpush1.msra.mxu0 0.0
          %1213 = vmatprep.subr.mxu0 0.0
          %1214 = vmatpush1.msra.mxu0 0.0
          %1215 = vmatprep.subr.mxu0 0.0
          %1216 = vmatpush1.msra.mxu0 0.0
          %1217 = vmatprep.subr.mxu0 0.0
          %1218 = vmatpush1.msra.mxu0 0.0
          %1219 = vmatprep.subr.mxu0 0.0
          %1220 = vmatpush1.msra.mxu0 0.0
          %1221 = vmatprep.subr.mxu0 0.0
          %1222 = vmatpush1.msra.mxu0 0.0
          %1223 = vmatprep.subr.mxu0 0.0
          %1224 = vmatpush1.msra.mxu0 0.0
          %1225 = vmatprep.subr.mxu0 0.0
          %1226 = vmatpush1.msra.mxu0 0.0
          %1227 = vmatprep.subr.mxu0 0.0
          %1228 = vmatpush1.msra.mxu0 0.0
          %1229 = vmatprep.subr.mxu0 0.0
          %1230 = vmatpush1.msra.mxu0 0.0
          %1231 = vmatprep.subr.mxu0 0.0
          %1232 = vmatpush1.msra.mxu0 0.0
          %1233 = vmatprep.mubr.f32.mxu0 0.0
          %1234 = vmatmul.mubr.f32.gmra.mrb[0].mxu0 %v1030
          %v1235 = vpop.f32.mrb[0].mxu0
          %v1236 = vadd.f32 0.0, %v1235
          %v1237 = vpop.f32.mrb[0].mxu0
          %1238 = vmatprep.mubr.f32.mxu0 0.0
          %1239 = vmatmul.mubr.f32.gmra.mrb[0].mxu0 %v1031
          %v1240 = vpop.f32.mrb[0].mxu0
          %v1241 = vadd.f32 0.0, %v1240
          %v1242 = vpop.f32.mrb[0].mxu0
          %1243 = vmatprep.mubr.f32.mxu0 0.0
          %1244 = vmatmul.mubr.f32.gmra.mrb[0].mxu0 %v1032
          %v1245 = vpop.f32.mrb[0].mxu0
          %v1246 = vadd.f32 0.0, %v1245
          %v1247 = vpop.f32.mrb[0].mxu0
          %1248 = vmatprep.mubr.f32.mxu0 0.0
          %1249 = vmatmul.mubr.f32.gmra.mrb[0].mxu0 %v1033
          %v1250 = vpop.f32.mrb[0].mxu0
          %v1251 = vadd.f32 0.0, %v1250
          %v1252 = vpop.f32.mrb[0].mxu0
          %1253 = vdwg.mxu0
          %v1254 = vld [vmem:[#allocation2] sm:$0xff]
          %v1255 = vld [vmem:[#allocation2 + $0x8] sm:$0xff]
          %v1256 = vld [vmem:[#allocation2 + $0x10] sm:$0xff]
          %v1257 = vld [vmem:[#allocation2 + $0x18] sm:$0xff]
          %vm1258 = vcmask 261120
          %v1260 = vsel %vm1258, %v1254, 0
          %v1263 = vsel %vm1258, %v1255, 0
          %v1266 = vsel %vm1258, %v1256, 0
          %v1269 = vsel %vm1258, %v1257, 0
          %v1272 = vsel %vm1258, %v1135, 0
          %v1275 = vsel %vm1258, %v1140, 0
          %v1278 = vsel %vm1258, %v1145, 0
          %v1281 = vsel %vm1258, %v1150, 0
          %1283 = vmatprep.subr.mxu0 0.0
          %1284 = vmatpush1.xpose.msra.mxu0 %v1272
          %1285 = vmatprep.subr.mxu0 0.0
          %1286 = vmatpush1.xpose.msra.mxu0 %v1275
          %1287 = vmatprep.subr.mxu0 0.0
          %1288 = vmatpush1.xpose.msra.mxu0 %v1278
          %1289 = vmatprep.subr.mxu0 0.0
          %1290 = vmatpush1.xpose.msra.mxu0 %v1281
          %1291 = vmatprep.subr.mxu0 0.0
          %1292 = vmatpush1.xpose.msra.mxu0 0.0
          %1293 = vmatprep.subr.mxu0 0.0
          %1294 = vmatpush1.xpose.msra.mxu0 0.0
          %1295 = vmatprep.subr.mxu0 0.0
          %1296 = vmatpush1.xpose.msra.mxu0 0.0
          %1297 = vmatprep.subr.mxu0 0.0
          %1298 = vmatpush1.xpose.msra.mxu0 0.0
          %1299 = vmatprep.subr.mxu0 0.0
          %1300 = vmatpush1.xpose.msra.mxu0 0.0
          %1301 = vmatprep.subr.mxu0 0.0
          %1302 = vmatpush1.xpose.msra.mxu0 0.0
          %1303 = vmatprep.subr.mxu0 0.0
          %1304 = vmatpush1.xpose.msra.mxu0 0.0
          %1305 = vmatprep.subr.mxu0 0.0
          %1306 = vmatpush1.xpose.msra.mxu0 0.0
          %1307 = vmatprep.subr.mxu0 0.0
          %1308 = vmatpush1.xpose.msra.mxu0 0.0
          %1309 = vmatprep.subr.mxu0 0.0
          %1310 = vmatpush1.xpose.msra.mxu0 0.0
          %1311 = vmatprep.subr.mxu0 0.0
          %1312 = vmatpush1.xpose.msra.mxu0 0.0
          %1313 = vmatprep.subr.mxu0 0.0
          %1314 = vmatpush1.xpose.msra.mxu0 0.0
          %1315 = vmatprep.subr.mxu0 0.0
          %1316 = vmatpush1.xpose.msra.mxu0 0.0
          %1317 = vmatprep.subr.mxu0 0.0
          %1318 = vmatpush1.xpose.msra.mxu0 0.0
          %1319 = vmatprep.subr.mxu0 0.0
          %1320 = vmatpush1.xpose.msra.mxu0 0.0
          %1321 = vmatprep.subr.mxu0 0.0
          %1322 = vmatpush1.xpose.msra.mxu0 0.0
          %1323 = vmatprep.subr.mxu0 0.0
          %1324 = vmatpush1.xpose.msra.mxu0 0.0
          %1325 = vmatprep.subr.mxu0 0.0
          %1326 = vmatpush1.xpose.msra.mxu0 0.0
          %1327 = vmatprep.subr.mxu0 0.0
          %1328 = vmatpush1.xpose.msra.mxu0 0.0
          %1329 = vmatprep.subr.mxu0 0.0
          %1330 = vmatpush1.xpose.msra.mxu0 0.0
          %1331 = vmatprep.subr.mxu0 0.0
          %1332 = vmatpush1.xpose.msra.mxu0 0.0
          %1333 = vmatprep.subr.mxu0 0.0
          %1334 = vmatpush1.xpose.msra.mxu0 0.0
          %1335 = vmatprep.subr.mxu0 0.0
          %1336 = vmatpush1.xpose.msra.mxu0 0.0
          %1337 = vmatprep.subr.mxu0 0.0
          %1338 = vmatpush1.xpose.msra.mxu0 0.0
          %1339 = vmatprep.subr.mxu0 0.0
          %1340 = vmatpush1.xpose.msra.mxu0 0.0
          %1341 = vmatprep.subr.mxu0 0.0
          %1342 = vmatpush1.xpose.msra.mxu0 0.0
          %1343 = vmatprep.subr.mxu0 0.0
          %1344 = vmatpush1.xpose.msra.mxu0 0.0
          %1345 = vmatprep.subr.mxu0 0.0
          %1346 = vmatpush1.xpose.msra.mxu0 0.0
          %1347 = vmatprep.mubr.f32.mxu0 0.0
          %1348 = vmatmul.mubr.f32.gmra.mrb[0].mxu0 %v1260
          %v1349 = vpop.f32.mrb[0].mxu0
          %v1350 = vadd.f32 0.0, %v1349
          %v1351 = vpop.f32.mrb[0].mxu0
          %1352 = vmatprep.mubr.f32.mxu0 0.0
          %1353 = vmatmul.mubr.f32.gmra.mrb[0].mxu0 %v1263
          %v1354 = vpop.f32.mrb[0].mxu0
          %v1355 = vadd.f32 0.0, %v1354
          %v1356 = vpop.f32.mrb[0].mxu0
          %1357 = vmatprep.mubr.f32.mxu0 0.0
          %1358 = vmatmul.mubr.f32.gmra.mrb[0].mxu0 %v1266
          %v1359 = vpop.f32.mrb[0].mxu0
          %v1360 = vadd.f32 0.0, %v1359
          %v1361 = vpop.f32.mrb[0].mxu0
          %1362 = vmatprep.mubr.f32.mxu0 0.0
          %1363 = vmatmul.mubr.f32.gmra.mrb[0].mxu0 %v1269
          %v1364 = vpop.f32.mrb[0].mxu0
          %v1365 = vadd.f32 0.0, %v1364
          %v1366 = vpop.f32.mrb[0].mxu0
          %1367 = vdwg.mxu0
          %v1368 = vmul.f32 %v1350, 0.17677669
          %v1369 = vmul.f32 %v1355, 0.17677669
          %v1370 = vmul.f32 %v1360, 0.17677669
          %v1371 = vmul.f32 %v1365, 0.17677669
          %v1372 = vsel %vm1048, -1e+30, %v1368
          %v1373 = vsel %vm1049, -1e+30, %v1369
          %v1374 = vsel %vm1050, -1e+30, %v1370
          %v1375 = vsel %vm1051, -1e+30, %v1371
          %v1376 = vld [vmem:[#allocation3] sm:$0xff]
          %v1377 = vld [vmem:[#allocation3 + $0x8] sm:$0xff]
          %v1378 = vld [vmem:[#allocation3 + $0x10] sm:$0xff]
          %v1379 = vld [vmem:[#allocation3 + $0x18] sm:$0xff]
          %v1380 = vsel %vm1258, %v1372, -inf
          %1381 = vmax.xlane.f32.xlu0 %v1380
          %v1382 = vpop.xlane.xlu0 %1381
          %v1383 = vsel %vm1258, %v1373, -inf
          %1384 = vmax.xlane.f32.xlu0 %v1383
          %v1385 = vpop.xlane.xlu0 %1384
          %v1386 = vsel %vm1258, %v1374, -inf
          %1387 = vmax.xlane.f32.xlu0 %v1386
          %v1388 = vpop.xlane.xlu0 %1387
          %v1389 = vsel %vm1258, %v1375, -inf
          %1390 = vmax.xlane.f32.xlu0 %v1389
          %v1391 = vpop.xlane.xlu0 %1390
          %v1392 = vmax.f32 %v1376, %v1382
          %v1393 = vmax.f32 %v1377, %v1385
          %v1394 = vmax.f32 %v1378, %v1388
          %v1395 = vmax.f32 %v1379, %v1391
          %v1396 = vsub.f32 %v1376, %v1392
          %v1397 = vsub.f32 %v1377, %v1393
          %v1398 = vsub.f32 %v1378, %v1394
          %v1399 = vsub.f32 %v1379, %v1395
          %v1400 = vmul.f32 %v1396, 1.442695
          %v1401 = vpow.pop %v1400
          %v1402 = vmul.f32 %v1397, 1.442695
          %v1403 = vpow.pop %v1402
          %v1404 = vmul.f32 %v1398, 1.442695
          %v1405 = vpow.pop %v1404
          %v1406 = vmul.f32 %v1399, 1.442695
          %v1407 = vpow.pop %v1406
          %1409 = vset.pattern.permute.xlu0 0
          %1410 = vperm.xlu0 %1409, %v1392
          %v1411 = vpop.permute.xlu0 %1410
          %1414 = vset.pattern.permute.xlu0 0
          %1415 = vperm.xlu0 %1414, %v1393
          %v1416 = vpop.permute.xlu0 %1415
          %1419 = vset.pattern.permute.xlu0 0
          %1420 = vperm.xlu0 %1419, %v1394
          %v1421 = vpop.permute.xlu0 %1420
          %1424 = vset.pattern.permute.xlu0 0
          %1425 = vperm.xlu0 %1424, %v1395
          %v1426 = vpop.permute.xlu0 %1425
          %v1428 = vsub.f32 %v1372, %v1411
          %v1429 = vsub.f32 %v1373, %v1416
          %v1430 = vsub.f32 %v1374, %v1421
          %v1431 = vsub.f32 %v1375, %v1426
          %v1432 = vmul.f32 %v1428, 1.442695
          %v1433 = vpow.pop %v1432
          %v1434 = vmul.f32 %v1429, 1.442695
          %v1435 = vpow.pop %v1434
          %v1436 = vmul.f32 %v1430, 1.442695
          %v1437 = vpow.pop %v1436
          %v1438 = vmul.f32 %v1431, 1.442695
          %v1439 = vpow.pop %v1438
          %v1440 = vld [vmem:[#allocation4] sm:$0xff]
          %v1441 = vld [vmem:[#allocation4 + $0x8] sm:$0xff]
          %v1442 = vld [vmem:[#allocation4 + $0x10] sm:$0xff]
          %v1443 = vld [vmem:[#allocation4 + $0x18] sm:$0xff]
          %v1444 = vmul.f32 %v1401, %v1440
          %v1445 = vmul.f32 %v1403, %v1441
          %v1446 = vmul.f32 %v1405, %v1442
          %v1447 = vmul.f32 %v1407, %v1443
          %v1448 = vsel %vm1258, %v1433, 0.0
          %1449 = vadd.xlane.f32.xlu0 %v1448
          %v1450 = vpop.xlane.xlu0 %1449
          %v1451 = vsel %vm1258, %v1435, 0.0
          %1452 = vadd.xlane.f32.xlu0 %v1451
          %v1453 = vpop.xlane.xlu0 %1452
          %v1454 = vsel %vm1258, %v1437, 0.0
          %1455 = vadd.xlane.f32.xlu0 %v1454
          %v1456 = vpop.xlane.xlu0 %1455
          %v1457 = vsel %vm1258, %v1439, 0.0
          %1458 = vadd.xlane.f32.xlu0 %v1457
          %v1459 = vpop.xlane.xlu0 %1458
          %v1460 = vadd.f32 %v1444, %v1450
          %v1461 = vadd.f32 %v1445, %v1453
          %v1462 = vadd.f32 %v1446, %v1456
          %v1463 = vadd.f32 %v1447, %v1459
          %vm1464 = vcmask 7168
          %1465 = vst.msk [vmem:[#allocation4] sm:$0xff] %vm1464, %v1460
          %1466 = vst.msk [vmem:[#allocation4 + $0x8] sm:$0xff] %vm1464, %v1461
          %1467 = vst.msk [vmem:[#allocation4 + $0x10] sm:$0xff] %vm1464, %v1462
          %1468 = vst.msk [vmem:[#allocation4 + $0x18] sm:$0xff] %vm1464, %v1463
          %v1469 = vld [vmem:[#allocation5] sm:$0xff]
          %v1470 = vld [vmem:[#allocation5 + $0x8] sm:$0xff]
          %v1471 = vld [vmem:[#allocation5 + $0x10] sm:$0xff]
          %v1472 = vld [vmem:[#allocation5 + $0x18] sm:$0xff]
          %1474 = vset.pattern.permute.xlu0 0
          %1475 = vperm.xlu0 %1474, %v1401
          %v1476 = vpop.permute.xlu0 %1475
          %1479 = vset.pattern.permute.xlu0 0
          %1480 = vperm.xlu0 %1479, %v1403
          %v1481 = vpop.permute.xlu0 %1480
          %1484 = vset.pattern.permute.xlu0 0
          %1485 = vperm.xlu0 %1484, %v1405
          %v1486 = vpop.permute.xlu0 %1485
          %1489 = vset.pattern.permute.xlu0 0
          %1490 = vperm.xlu0 %1489, %v1407
          %v1491 = vpop.permute.xlu0 %1490
          %v1493 = vmul.f32 %v1476, %v1469
          %v1494 = vmul.f32 %v1481, %v1470
          %v1495 = vmul.f32 %v1486, %v1471
          %v1496 = vmul.f32 %v1491, %v1472
          %v1498 = vsel %vm1258, %v1433, 0
          %v1501 = vsel %vm1258, %v1435, 0
          %v1504 = vsel %vm1258, %v1437, 0
          %v1507 = vsel %vm1258, %v1439, 0
          %1509 = vmatprep.subr.mxu0 0.0
          %1510 = vmatpush1.msra.mxu0 %v1236
          %1511 = vmatprep.subr.mxu0 0.0
          %1512 = vmatpush1.msra.mxu0 %v1241
          %1513 = vmatprep.subr.mxu0 0.0
          %1514 = vmatpush1.msra.mxu0 %v1246
          %1515 = vmatprep.subr.mxu0 0.0
          %1516 = vmatpush1.msra.mxu0 %v1251
          %1517 = vmatprep.subr.mxu0 0.0
          %1518 = vmatpush1.msra.mxu0 0.0
          %1519 = vmatprep.subr.mxu0 0.0
          %1520 = vmatpush1.msra.mxu0 0.0
          %1521 = vmatprep.subr.mxu0 0.0
          %1522 = vmatpush1.msra.mxu0 0.0
          %1523 = vmatprep.subr.mxu0 0.0
          %1524 = vmatpush1.msra.mxu0 0.0
          %1525 = vmatprep.subr.mxu0 0.0
          %1526 = vmatpush1.msra.mxu0 0.0
          %1527 = vmatprep.subr.mxu0 0.0
          %1528 = vmatpush1.msra.mxu0 0.0
          %1529 = vmatprep.subr.mxu0 0.0
          %1530 = vmatpush1.msra.mxu0 0.0
          %1531 = vmatprep.subr.mxu0 0.0
          %1532 = vmatpush1.msra.mxu0 0.0
          %1533 = vmatprep.subr.mxu0 0.0
          %1534 = vmatpush1.msra.mxu0 0.0
          %1535 = vmatprep.subr.mxu0 0.0
          %1536 = vmatpush1.msra.mxu0 0.0
          %1537 = vmatprep.subr.mxu0 0.0
          %1538 = vmatpush1.msra.mxu0 0.0
          %1539 = vmatprep.subr.mxu0 0.0
          %1540 = vmatpush1.msra.mxu0 0.0
          %1541 = vmatprep.subr.mxu0 0.0
          %1542 = vmatpush1.msra.mxu0 0.0
          %1543 = vmatprep.subr.mxu0 0.0
          %1544 = vmatpush1.msra.mxu0 0.0
          %1545 = vmatprep.subr.mxu0 0.0
          %1546 = vmatpush1.msra.mxu0 0.0
          %1547 = vmatprep.subr.mxu0 0.0
          %1548 = vmatpush1.msra.mxu0 0.0
          %1549 = vmatprep.subr.mxu0 0.0
          %1550 = vmatpush1.msra.mxu0 0.0
          %1551 = vmatprep.subr.mxu0 0.0
          %1552 = vmatpush1.msra.mxu0 0.0
          %1553 = vmatprep.subr.mxu0 0.0
          %1554 = vmatpush1.msra.mxu0 0.0
          %1555 = vmatprep.subr.mxu0 0.0
          %1556 = vmatpush1.msra.mxu0 0.0
          %1557 = vmatprep.subr.mxu0 0.0
          %1558 = vmatpush1.msra.mxu0 0.0
          %1559 = vmatprep.subr.mxu0 0.0
          %1560 = vmatpush1.msra.mxu0 0.0
          %1561 = vmatprep.subr.mxu0 0.0
          %1562 = vmatpush1.msra.mxu0 0.0
          %1563 = vmatprep.subr.mxu0 0.0
          %1564 = vmatpush1.msra.mxu0 0.0
          %1565 = vmatprep.subr.mxu0 0.0
          %1566 = vmatpush1.msra.mxu0 0.0
          %1567 = vmatprep.subr.mxu0 0.0
          %1568 = vmatpush1.msra.mxu0 0.0
          %1569 = vmatprep.subr.mxu0 0.0
          %1570 = vmatpush1.msra.mxu0 0.0
          %1571 = vmatprep.subr.mxu0 0.0
          %1572 = vmatpush1.msra.mxu0 0.0
          %1573 = vmatprep.mubr.f32.mxu0 0.0
          %1574 = vmatmul.mubr.f32.gmra.mrb[0].mxu0 %v1498
          %v1575 = vpop.f32.mrb[0].mxu0
          %v1576 = vadd.f32 0.0, %v1575
          %v1577 = vpop.f32.mrb[0].mxu0
          %1578 = vmatprep.mubr.f32.mxu0 0.0
          %1579 = vmatmul.mubr.f32.gmra.mrb[0].mxu0 %v1501
          %v1580 = vpop.f32.mrb[0].mxu0
          %v1581 = vadd.f32 0.0, %v1580
          %v1582 = vpop.f32.mrb[0].mxu0
          %1583 = vmatprep.mubr.f32.mxu0 0.0
          %1584 = vmatmul.mubr.f32.gmra.mrb[0].mxu0 %v1504
          %v1585 = vpop.f32.mrb[0].mxu0
          %v1586 = vadd.f32 0.0, %v1585
          %v1587 = vpop.f32.mrb[0].mxu0
          %1588 = vmatprep.mubr.f32.mxu0 0.0
          %1589 = vmatmul.mubr.f32.gmra.mrb[0].mxu0 %v1507
          %v1590 = vpop.f32.mrb[0].mxu0
          %v1591 = vadd.f32 0.0, %v1590
          %v1592 = vpop.f32.mrb[0].mxu0
          %1593 = vdwg.mxu0
          %v1594 = vadd.f32 %v1493, %v1576
          %v1595 = vadd.f32 %v1494, %v1581
          %v1596 = vadd.f32 %v1495, %v1586
          %v1597 = vadd.f32 %v1496, %v1591
          %1598 = vst.msk [vmem:[#allocation5] sm:$0xff] %vm1258, %v1594
          %1599 = vst.msk [vmem:[#allocation5 + $0x8] sm:$0xff] %vm1258, %v1595
          %1600 = vst.msk [vmem:[#allocation5 + $0x10] sm:$0xff] %vm1258, %v1596
          %1601 = vst.msk [vmem:[#allocation5 + $0x18] sm:$0xff] %vm1258, %v1597
          %1602 = vst.msk [vmem:[#allocation3] sm:$0xff] %vm1464, %v1392
          %1603 = vst.msk [vmem:[#allocation3 + $0x8] sm:$0xff] %vm1464, %v1393
          %1604 = vst.msk [vmem:[#allocation3 + $0x10] sm:$0xff] %vm1464, %v1394
          %1605 = vst.msk [vmem:[#allocation3 + $0x18] sm:$0xff] %vm1464, %v1395
          %s1606 = scalar_lea.vmem %s5, 128
          %v1607 = vld [vmem:[%s1606] sm:$0xff]
          %v1608 = vld [vmem:[%s1606 + $0x8] sm:$0xff]
          %v1609 = vld [vmem:[%s1606 + $0x10] sm:$0xff]
          %v1610 = vld [vmem:[%s1606 + $0x18] sm:$0xff]
          %v1611 = vld [vmem:[%s1606 + $0x20] sm:$0xff]
          %v1612 = vld [vmem:[%s1606 + $0x28] sm:$0xff]
          %v1613 = vld [vmem:[%s1606 + $0x30] sm:$0xff]
          %v1614 = vld [vmem:[%s1606 + $0x38] sm:$0xff]
          %v1615 = vld [vmem:[%s1606 + $0x40] sm:$0xff]
          %v1616 = vld [vmem:[%s1606 + $0x48] sm:$0xff]
          %v1617 = vld [vmem:[%s1606 + $0x50] sm:$0xff]
          %v1618 = vld [vmem:[%s1606 + $0x58] sm:$0xff]
          %v1619 = vld [vmem:[%s1606 + $0x60] sm:$0xff]
          %v1620 = vld [vmem:[%s1606 + $0x68] sm:$0xff]
          %v1621 = vld [vmem:[%s1606 + $0x70] sm:$0xff]
          %v1622 = vld [vmem:[%s1606 + $0x78] sm:$0xff]
          %1623 = vmatprep.subr.mxu0 0.0
          %1624 = vmatpush1.msra.mxu0 %v1607
          %1625 = vmatprep.subr.mxu0 0.0
          %1626 = vmatpush1.msra.mxu0 %v1608
          %1627 = vmatprep.subr.mxu0 0.0
          %1628 = vmatpush1.msra.mxu0 %v1609
          %1629 = vmatprep.subr.mxu0 0.0
          %1630 = vmatpush1.msra.mxu0 %v1610
          %1631 = vmatprep.subr.mxu0 0.0
          %1632 = vmatpush1.msra.mxu0 %v1611
          %1633 = vmatprep.subr.mxu0 0.0
          %1634 = vmatpush1.msra.mxu0 %v1612
          %1635 = vmatprep.subr.mxu0 0.0
          %1636 = vmatpush1.msra.mxu0 %v1613
          %1637 = vmatprep.subr.mxu0 0.0
          %1638 = vmatpush1.msra.mxu0 %v1614
          %1639 = vmatprep.subr.mxu0 0.0
          %1640 = vmatpush1.msra.mxu0 %v1615
          %1641 = vmatprep.subr.mxu0 0.0
          %1642 = vmatpush1.msra.mxu0 %v1616
          %1643 = vmatprep.subr.mxu0 0.0
          %1644 = vmatpush1.msra.mxu0 %v1617
          %1645 = vmatprep.subr.mxu0 0.0
          %1646 = vmatpush1.msra.mxu0 %v1618
          %1647 = vmatprep.subr.mxu0 0.0
          %1648 = vmatpush1.msra.mxu0 %v1619
          %1649 = vmatprep.subr.mxu0 0.0
          %1650 = vmatpush1.msra.mxu0 %v1620
          %1651 = vmatprep.subr.mxu0 0.0
          %1652 = vmatpush1.msra.mxu0 %v1621
          %1653 = vmatprep.subr.mxu0 0.0
          %1654 = vmatpush1.msra.mxu0 %v1622
          %1655 = vmatprep.subr.mxu0 0.0
          %1656 = vmatpush1.msra.mxu0 0.0
          %1657 = vmatprep.subr.mxu0 0.0
          %1658 = vmatpush1.msra.mxu0 0.0
          %1659 = vmatprep.subr.mxu0 0.0
          %1660 = vmatpush1.msra.mxu0 0.0
          %1661 = vmatprep.subr.mxu0 0.0
          %1662 = vmatpush1.msra.mxu0 0.0
          %1663 = vmatprep.subr.mxu0 0.0
          %1664 = vmatpush1.msra.mxu0 0.0
          %1665 = vmatprep.subr.mxu0 0.0
          %1666 = vmatpush1.msra.mxu0 0.0
          %1667 = vmatprep.subr.mxu0 0.0
          %1668 = vmatpush1.msra.mxu0 0.0
          %1669 = vmatprep.subr.mxu0 0.0
          %1670 = vmatpush1.msra.mxu0 0.0
          %1671 = vmatprep.subr.mxu0 0.0
          %1672 = vmatpush1.msra.mxu0 0.0
          %1673 = vmatprep.subr.mxu0 0.0
          %1674 = vmatpush1.msra.mxu0 0.0
          %1675 = vmatprep.subr.mxu0 0.0
          %1676 = vmatpush1.msra.mxu0 0.0
          %1677 = vmatprep.subr.mxu0 0.0
          %1678 = vmatpush1.msra.mxu0 0.0
          %1679 = vmatprep.subr.mxu0 0.0
          %1680 = vmatpush1.msra.mxu0 0.0
          %1681 = vmatprep.subr.mxu0 0.0
          %1682 = vmatpush1.msra.mxu0 0.0
          %1683 = vmatprep.subr.mxu0 0.0
          %1684 = vmatpush1.msra.mxu0 0.0
          %1685 = vmatprep.subr.mxu0 0.0
          %1686 = vmatpush1.msra.mxu0 0.0
          %1687 = vmatprep.mubr.f32.mxu0 0.0
          %1688 = vmatmul.mubr.f32.gmra.mrb[0].mxu0 %v1030
          %v1689 = vpop.f32.mrb[0].mxu0
          %v1690 = vadd.f32 0.0, %v1689
          %v1691 = vpop.f32.mrb[0].mxu0
          %1692 = vmatprep.mubr.f32.mxu0 0.0
          %1693 = vmatmul.mubr.f32.gmra.mrb[0].mxu0 %v1031
          %v1694 = vpop.f32.mrb[0].mxu0
          %v1695 = vadd.f32 0.0, %v1694
          %v1696 = vpop.f32.mrb[0].mxu0
          %1697 = vmatprep.mubr.f32.mxu0 0.0
          %1698 = vmatmul.mubr.f32.gmra.mrb[0].mxu0 %v1032
          %v1699 = vpop.f32.mrb[0].mxu0
          %v1700 = vadd.f32 0.0, %v1699
          %v1701 = vpop.f32.mrb[0].mxu0
          %1702 = vmatprep.mubr.f32.mxu0 0.0
          %1703 = vmatmul.mubr.f32.gmra.mrb[0].mxu0 %v1033
          %v1704 = vpop.f32.mrb[0].mxu0
          %v1705 = vadd.f32 0.0, %v1704
          %v1706 = vpop.f32.mrb[0].mxu0
          %1707 = vdwg.mxu0
          %s1708 = scalar_lea.vmem %s6, 128
          %v1709 = vld [vmem:[%s1708] sm:$0xff]
          %v1710 = vld [vmem:[%s1708 + $0x8] sm:$0xff]
          %v1711 = vld [vmem:[%s1708 + $0x10] sm:$0xff]
          %v1712 = vld [vmem:[%s1708 + $0x18] sm:$0xff]
          %v1713 = vld [vmem:[%s1708 + $0x20] sm:$0xff]
          %v1714 = vld [vmem:[%s1708 + $0x28] sm:$0xff]
          %v1715 = vld [vmem:[%s1708 + $0x30] sm:$0xff]
          %v1716 = vld [vmem:[%s1708 + $0x38] sm:$0xff]
          %v1717 = vld [vmem:[%s1708 + $0x40] sm:$0xff]
          %v1718 = vld [vmem:[%s1708 + $0x48] sm:$0xff]
          %v1719 = vld [vmem:[%s1708 + $0x50] sm:$0xff]
          %v1720 = vld [vmem:[%s1708 + $0x58] sm:$0xff]
          %v1721 = vld [vmem:[%s1708 + $0x60] sm:$0xff]
          %v1722 = vld [vmem:[%s1708 + $0x68] sm:$0xff]
          %v1723 = vld [vmem:[%s1708 + $0x70] sm:$0xff]
          %v1724 = vld [vmem:[%s1708 + $0x78] sm:$0xff]
          %1725 = vmatprep.subr.mxu0 0.0
          %1726 = vmatpush1.msra.mxu0 %v1709
          %1727 = vmatprep.subr.mxu0 0.0
          %1728 = vmatpush1.msra.mxu0 %v1710
          %1729 = vmatprep.subr.mxu0 0.0
          %1730 = vmatpush1.msra.mxu0 %v1711
          %1731 = vmatprep.subr.mxu0 0.0
          %1732 = vmatpush1.msra.mxu0 %v1712
          %1733 = vmatprep.subr.mxu0 0.0
          %1734 = vmatpush1.msra.mxu0 %v1713
          %1735 = vmatprep.subr.mxu0 0.0
          %1736 = vmatpush1.msra.mxu0 %v1714
          %1737 = vmatprep.subr.mxu0 0.0
          %1738 = vmatpush1.msra.mxu0 %v1715
          %1739 = vmatprep.subr.mxu0 0.0
          %1740 = vmatpush1.msra.mxu0 %v1716
          %1741 = vmatprep.subr.mxu0 0.0
          %1742 = vmatpush1.msra.mxu0 %v1717
          %1743 = vmatprep.subr.mxu0 0.0
          %1744 = vmatpush1.msra.mxu0 %v1718
          %1745 = vmatprep.subr.mxu0 0.0
          %1746 = vmatpush1.msra.mxu0 %v1719
          %1747 = vmatprep.subr.mxu0 0.0
          %1748 = vmatpush1.msra.mxu0 %v1720
          %1749 = vmatprep.subr.mxu0 0.0
          %1750 = vmatpush1.msra.mxu0 %v1721
          %1751 = vmatprep.subr.mxu0 0.0
          %1752 = vmatpush1.msra.mxu0 %v1722
          %1753 = vmatprep.subr.mxu0 0.0
          %1754 = vmatpush1.msra.mxu0 %v1723
          %1755 = vmatprep.subr.mxu0 0.0
          %1756 = vmatpush1.msra.mxu0 %v1724
          %1757 = vmatprep.subr.mxu0 0.0
          %1758 = vmatpush1.msra.mxu0 0.0
          %1759 = vmatprep.subr.mxu0 0.0
          %1760 = vmatpush1.msra.mxu0 0.0
          %1761 = vmatprep.subr.mxu0 0.0
          %1762 = vmatpush1.msra.mxu0 0.0
          %1763 = vmatprep.subr.mxu0 0.0
          %1764 = vmatpush1.msra.mxu0 0.0
          %1765 = vmatprep.subr.mxu0 0.0
          %1766 = vmatpush1.msra.mxu0 0.0
          %1767 = vmatprep.subr.mxu0 0.0
          %1768 = vmatpush1.msra.mxu0 0.0
          %1769 = vmatprep.subr.mxu0 0.0
          %1770 = vmatpush1.msra.mxu0 0.0
          %1771 = vmatprep.subr.mxu0 0.0
          %1772 = vmatpush1.msra.mxu0 0.0
          %1773 = vmatprep.subr.mxu0 0.0
          %1774 = vmatpush1.msra.mxu0 0.0
          %1775 = vmatprep.subr.mxu0 0.0
          %1776 = vmatpush1.msra.mxu0 0.0
          %1777 = vmatprep.subr.mxu0 0.0
          %1778 = vmatpush1.msra.mxu0 0.0
          %1779 = vmatprep.subr.mxu0 0.0
          %1780 = vmatpush1.msra.mxu0 0.0
          %1781 = vmatprep.subr.mxu0 0.0
          %1782 = vmatpush1.msra.mxu0 0.0
          %1783 = vmatprep.subr.mxu0 0.0
          %1784 = vmatpush1.msra.mxu0 0.0
          %1785 = vmatprep.subr.mxu0 0.0
          %1786 = vmatpush1.msra.mxu0 0.0
          %1787 = vmatprep.subr.mxu0 0.0
          %1788 = vmatpush1.msra.mxu0 0.0
          %1789 = vmatprep.mubr.f32.mxu0 0.0
          %1790 = vmatmul.mubr.f32.gmra.mrb[0].mxu0 %v1030
          %v1791 = vpop.f32.mrb[0].mxu0
          %v1792 = vadd.f32 0.0, %v1791
          %v1793 = vpop.f32.mrb[0].mxu0
          %1794 = vmatprep.mubr.f32.mxu0 0.0
          %1795 = vmatmul.mubr.f32.gmra.mrb[0].mxu0 %v1031
          %v1796 = vpop.f32.mrb[0].mxu0
          %v1797 = vadd.f32 0.0, %v1796
          %v1798 = vpop.f32.mrb[0].mxu0
          %1799 = vmatprep.mubr.f32.mxu0 0.0
          %1800 = vmatmul.mubr.f32.gmra.mrb[0].mxu0 %v1032
          %v1801 = vpop.f32.mrb[0].mxu0
          %v1802 = vadd.f32 0.0, %v1801
          %v1803 = vpop.f32.mrb[0].mxu0
          %1804 = vmatprep.mubr.f32.mxu0 0.0
          %1805 = vmatmul.mubr.f32.gmra.mrb[0].mxu0 %v1033
          %v1806 = vpop.f32.mrb[0].mxu0
          %v1807 = vadd.f32 0.0, %v1806
          %v1808 = vpop.f32.mrb[0].mxu0
          %1809 = vdwg.mxu0
          %s1810 = scalar_lea.vmem [#allocation2], 32
          %v1811 = vld [vmem:[%s1810] sm:$0xff]
          %v1812 = vld [vmem:[%s1810 + $0x8] sm:$0xff]
          %v1813 = vld [vmem:[%s1810 + $0x10] sm:$0xff]
          %v1814 = vld [vmem:[%s1810 + $0x18] sm:$0xff]
          %v1816 = vsel %vm1258, %v1811, 0
          %v1819 = vsel %vm1258, %v1812, 0
          %v1822 = vsel %vm1258, %v1813, 0
          %v1825 = vsel %vm1258, %v1814, 0
          %v1828 = vsel %vm1258, %v1690, 0
          %v1831 = vsel %vm1258, %v1695, 0
          %v1834 = vsel %vm1258, %v1700, 0
          %v1837 = vsel %vm1258, %v1705, 0
          %1839 = vmatprep.subr.mxu0 0.0
          %1840 = vmatpush1.xpose.msra.mxu0 %v1828
          %1841 = vmatprep.subr.mxu0 0.0
          %1842 = vmatpush1.xpose.msra.mxu0 %v1831
          %1843 = vmatprep.subr.mxu0 0.0
          %1844 = vmatpush1.xpose.msra.mxu0 %v1834
          %1845 = vmatprep.subr.mxu0 0.0
          %1846 = vmatpush1.xpose.msra.mxu0 %v1837
          %1847 = vmatprep.subr.mxu0 0.0
          %1848 = vmatpush1.xpose.msra.mxu0 0.0
          %1849 = vmatprep.subr.mxu0 0.0
          %1850 = vmatpush1.xpose.msra.mxu0 0.0
          %1851 = vmatprep.subr.mxu0 0.0
          %1852 = vmatpush1.xpose.msra.mxu0 0.0
          %1853 = vmatprep.subr.mxu0 0.0
          %1854 = vmatpush1.xpose.msra.mxu0 0.0
          %1855 = vmatprep.subr.mxu0 0.0
          %1856 = vmatpush1.xpose.msra.mxu0 0.0
          %1857 = vmatprep.subr.mxu0 0.0
          %1858 = vmatpush1.xpose.msra.mxu0 0.0
          %1859 = vmatprep.subr.mxu0 0.0
          %1860 = vmatpush1.xpose.msra.mxu0 0.0
          %1861 = vmatprep.subr.mxu0 0.0
          %1862 = vmatpush1.xpose.msra.mxu0 0.0
          %1863 = vmatprep.subr.mxu0 0.0
          %1864 = vmatpush1.xpose.msra.mxu0 0.0
          %1865 = vmatprep.subr.mxu0 0.0
          %1866 = vmatpush1.xpose.msra.mxu0 0.0
          %1867 = vmatprep.subr.mxu0 0.0
          %1868 = vmatpush1.xpose.msra.mxu0 0.0
          %1869 = vmatprep.subr.mxu0 0.0
          %1870 = vmatpush1.xpose.msra.mxu0 0.0
          %1871 = vmatprep.subr.mxu0 0.0
          %1872 = vmatpush1.xpose.msra.mxu0 0.0
          %1873 = vmatprep.subr.mxu0 0.0
          %1874 = vmatpush1.xpose.msra.mxu0 0.0
          %1875 = vmatprep.subr.mxu0 0.0
          %1876 = vmatpush1.xpose.msra.mxu0 0.0
          %1877 = vmatprep.subr.mxu0 0.0
          %1878 = vmatpush1.xpose.msra.mxu0 0.0
          %1879 = vmatprep.subr.mxu0 0.0
          %1880 = vmatpush1.xpose.msra.mxu0 0.0
          %1881 = vmatprep.subr.mxu0 0.0
          %1882 = vmatpush1.xpose.msra.mxu0 0.0
          %1883 = vmatprep.subr.mxu0 0.0
          %1884 = vmatpush1.xpose.msra.mxu0 0.0
          %1885 = vmatprep.subr.mxu0 0.0
          %1886 = vmatpush1.xpose.msra.mxu0 0.0
          %1887 = vmatprep.subr.mxu0 0.0
          %1888 = vmatpush1.xpose.msra.mxu0 0.0
          %1889 = vmatprep.subr.mxu0 0.0
          %1890 = vmatpush1.xpose.msra.mxu0 0.0
          %1891 = vmatprep.subr.mxu0 0.0
          %1892 = vmatpush1.xpose.msra.mxu0 0.0
          %1893 = vmatprep.subr.mxu0 0.0
          %1894 = vmatpush1.xpose.msra.mxu0 0.0
          %1895 = vmatprep.subr.mxu0 0.0
          %1896 = vmatpush1.xpose.msra.mxu0 0.0
          %1897 = vmatprep.subr.mxu0 0.0
          %1898 = vmatpush1.xpose.msra.mxu0 0.0
          %1899 = vmatprep.subr.mxu0 0.0
          %1900 = vmatpush1.xpose.msra.mxu0 0.0
          %1901 = vmatprep.subr.mxu0 0.0
          %1902 = vmatpush1.xpose.msra.mxu0 0.0
          %1903 = vmatprep.mubr.f32.mxu0 0.0
          %1904 = vmatmul.mubr.f32.gmra.mrb[0].mxu0 %v1816
          %v1905 = vpop.f32.mrb[0].mxu0
          %v1906 = vadd.f32 0.0, %v1905
          %v1907 = vpop.f32.mrb[0].mxu0
          %1908 = vmatprep.mubr.f32.mxu0 0.0
          %1909 = vmatmul.mubr.f32.gmra.mrb[0].mxu0 %v1819
          %v1910 = vpop.f32.mrb[0].mxu0
          %v1911 = vadd.f32 0.0, %v1910
          %v1912 = vpop.f32.mrb[0].mxu0
          %1913 = vmatprep.mubr.f32.mxu0 0.0
          %1914 = vmatmul.mubr.f32.gmra.mrb[0].mxu0 %v1822
          %v1915 = vpop.f32.mrb[0].mxu0
          %v1916 = vadd.f32 0.0, %v1915
          %v1917 = vpop.f32.mrb[0].mxu0
          %1918 = vmatprep.mubr.f32.mxu0 0.0
          %1919 = vmatmul.mubr.f32.gmra.mrb[0].mxu0 %v1825
          %v1920 = vpop.f32.mrb[0].mxu0
          %v1921 = vadd.f32 0.0, %v1920
          %v1922 = vpop.f32.mrb[0].mxu0
          %1923 = vdwg.mxu0
          %v1924 = vmul.f32 %v1906, 0.17677669
          %v1925 = vmul.f32 %v1911, 0.17677669
          %v1926 = vmul.f32 %v1916, 0.17677669
          %v1927 = vmul.f32 %v1921, 0.17677669
          %v1928 = vsel %vm1048, -1e+30, %v1924
          %v1929 = vsel %vm1049, -1e+30, %v1925
          %v1930 = vsel %vm1050, -1e+30, %v1926
          %v1931 = vsel %vm1051, -1e+30, %v1927
          %s1932 = scalar_lea.vmem [#allocation3], 32
          %v1933 = vld [vmem:[%s1932] sm:$0xff]
          %v1934 = vld [vmem:[%s1932 + $0x8] sm:$0xff]
          %v1935 = vld [vmem:[%s1932 + $0x10] sm:$0xff]
          %v1936 = vld [vmem:[%s1932 + $0x18] sm:$0xff]
          %v1937 = vsel %vm1258, %v1928, -inf
          %1938 = vmax.xlane.f32.xlu0 %v1937
          %v1939 = vpop.xlane.xlu0 %1938
          %v1940 = vsel %vm1258, %v1929, -inf
          %1941 = vmax.xlane.f32.xlu0 %v1940
          %v1942 = vpop.xlane.xlu0 %1941
          %v1943 = vsel %vm1258, %v1930, -inf
          %1944 = vmax.xlane.f32.xlu0 %v1943
          %v1945 = vpop.xlane.xlu0 %1944
          %v1946 = vsel %vm1258, %v1931, -inf
          %1947 = vmax.xlane.f32.xlu0 %v1946
          %v1948 = vpop.xlane.xlu0 %1947
          %v1949 = vmax.f32 %v1933, %v1939
          %v1950 = vmax.f32 %v1934, %v1942
          %v1951 = vmax.f32 %v1935, %v1945
          %v1952 = vmax.f32 %v1936, %v1948
          %v1953 = vsub.f32 %v1933, %v1949
          %v1954 = vsub.f32 %v1934, %v1950
          %v1955 = vsub.f32 %v1935, %v1951
          %v1956 = vsub.f32 %v1936, %v1952
          %v1957 = vmul.f32 %v1953, 1.442695
          %v1958 = vpow.pop %v1957
          %v1959 = vmul.f32 %v1954, 1.442695
          %v1960 = vpow.pop %v1959
          %v1961 = vmul.f32 %v1955, 1.442695
          %v1962 = vpow.pop %v1961
          %v1963 = vmul.f32 %v1956, 1.442695
          %v1964 = vpow.pop %v1963
          %1966 = vset.pattern.permute.xlu0 0
          %1967 = vperm.xlu0 %1966, %v1949
          %v1968 = vpop.permute.xlu0 %1967
          %1971 = vset.pattern.permute.xlu0 0
          %1972 = vperm.xlu0 %1971, %v1950
          %v1973 = vpop.permute.xlu0 %1972
          %1976 = vset.pattern.permute.xlu0 0
          %1977 = vperm.xlu0 %1976, %v1951
          %v1978 = vpop.permute.xlu0 %1977
          %1981 = vset.pattern.permute.xlu0 0
          %1982 = vperm.xlu0 %1981, %v1952
          %v1983 = vpop.permute.xlu0 %1982
          %v1985 = vsub.f32 %v1928, %v1968
          %v1986 = vsub.f32 %v1929, %v1973
          %v1987 = vsub.f32 %v1930, %v1978
          %v1988 = vsub.f32 %v1931, %v1983
          %v1989 = vmul.f32 %v1985, 1.442695
          %v1990 = vpow.pop %v1989
          %v1991 = vmul.f32 %v1986, 1.442695
          %v1992 = vpow.pop %v1991
          %v1993 = vmul.f32 %v1987, 1.442695
          %v1994 = vpow.pop %v1993
          %v1995 = vmul.f32 %v1988, 1.442695
          %v1996 = vpow.pop %v1995
          %s1997 = scalar_lea.vmem [#allocation4], 32
          %v1998 = vld [vmem:[%s1997] sm:$0xff]
          %v1999 = vld [vmem:[%s1997 + $0x8] sm:$0xff]
          %v2000 = vld [vmem:[%s1997 + $0x10] sm:$0xff]
          %v2001 = vld [vmem:[%s1997 + $0x18] sm:$0xff]
          %v2002 = vmul.f32 %v1958, %v1998
          %v2003 = vmul.f32 %v1960, %v1999
          %v2004 = vmul.f32 %v1962, %v2000
          %v2005 = vmul.f32 %v1964, %v2001
          %v2006 = vsel %vm1258, %v1990, 0.0
          %2007 = vadd.xlane.f32.xlu0 %v2006
          %v2008 = vpop.xlane.xlu0 %2007
          %v2009 = vsel %vm1258, %v1992, 0.0
          %2010 = vadd.xlane.f32.xlu0 %v2009
          %v2011 = vpop.xlane.xlu0 %2010
          %v2012 = vsel %vm1258, %v1994, 0.0
          %2013 = vadd.xlane.f32.xlu0 %v2012
          %v2014 = vpop.xlane.xlu0 %2013
          %v2015 = vsel %vm1258, %v1996, 0.0
          %2016 = vadd.xlane.f32.xlu0 %v2015
          %v2017 = vpop.xlane.xlu0 %2016
          %v2018 = vadd.f32 %v2002, %v2008
          %v2019 = vadd.f32 %v2003, %v2011
          %v2020 = vadd.f32 %v2004, %v2014
          %v2021 = vadd.f32 %v2005, %v2017
          %2022 = vst.msk [vmem:[%s1997] sm:$0xff] %vm1464, %v2018
          %2023 = vst.msk [vmem:[%s1997 + $0x8] sm:$0xff] %vm1464, %v2019
          %2024 = vst.msk [vmem:[%s1997 + $0x10] sm:$0xff] %vm1464, %v2020
          %2025 = vst.msk [vmem:[%s1997 + $0x18] sm:$0xff] %vm1464, %v2021
          %s2026 = scalar_lea.vmem [#allocation5], 32
          %v2027 = vld [vmem:[%s2026] sm:$0xff]
          %v2028 = vld [vmem:[%s2026 + $0x8] sm:$0xff]
          %v2029 = vld [vmem:[%s2026 + $0x10] sm:$0xff]
          %v2030 = vld [vmem:[%s2026 + $0x18] sm:$0xff]
          %2032 = vset.pattern.permute.xlu0 0
          %2033 = vperm.xlu0 %2032, %v1958
          %v2034 = vpop.permute.xlu0 %2033
          %2037 = vset.pattern.permute.xlu0 0
          %2038 = vperm.xlu0 %2037, %v1960
          %v2039 = vpop.permute.xlu0 %2038
          %2042 = vset.pattern.permute.xlu0 0
          %2043 = vperm.xlu0 %2042, %v1962
          %v2044 = vpop.permute.xlu0 %2043
          %2047 = vset.pattern.permute.xlu0 0
          %2048 = vperm.xlu0 %2047, %v1964
          %v2049 = vpop.permute.xlu0 %2048
          %v2051 = vmul.f32 %v2034, %v2027
          %v2052 = vmul.f32 %v2039, %v2028
          %v2053 = vmul.f32 %v2044, %v2029
          %v2054 = vmul.f32 %v2049, %v2030
          %v2056 = vsel %vm1258, %v1990, 0
          %v2059 = vsel %vm1258, %v1992, 0
          %v2062 = vsel %vm1258, %v1994, 0
          %v2065 = vsel %vm1258, %v1996, 0
          %2067 = vmatprep.subr.mxu0 0.0
          %2068 = vmatpush1.msra.mxu0 %v1792
          %2069 = vmatprep.subr.mxu0 0.0
          %2070 = vmatpush1.msra.mxu0 %v1797
          %2071 = vmatprep.subr.mxu0 0.0
          %2072 = vmatpush1.msra.mxu0 %v1802
          %2073 = vmatprep.subr.mxu0 0.0
          %2074 = vmatpush1.msra.mxu0 %v1807
          %2075 = vmatprep.subr.mxu0 0.0
          %2076 = vmatpush1.msra.mxu0 0.0
          %2077 = vmatprep.subr.mxu0 0.0
          %2078 = vmatpush1.msra.mxu0 0.0
          %2079 = vmatprep.subr.mxu0 0.0
          %2080 = vmatpush1.msra.mxu0 0.0
          %2081 = vmatprep.subr.mxu0 0.0
          %2082 = vmatpush1.msra.mxu0 0.0
          %2083 = vmatprep.subr.mxu0 0.0
          %2084 = vmatpush1.msra.mxu0 0.0
          %2085 = vmatprep.subr.mxu0 0.0
          %2086 = vmatpush1.msra.mxu0 0.0
          %2087 = vmatprep.subr.mxu0 0.0
          %2088 = vmatpush1.msra.mxu0 0.0
          %2089 = vmatprep.subr.mxu0 0.0
          %2090 = vmatpush1.msra.mxu0 0.0
          %2091 = vmatprep.subr.mxu0 0.0
          %2092 = vmatpush1.msra.mxu0 0.0
          %2093 = vmatprep.subr.mxu0 0.0
          %2094 = vmatpush1.msra.mxu0 0.0
          %2095 = vmatprep.subr.mxu0 0.0
          %2096 = vmatpush1.msra.mxu0 0.0
          %2097 = vmatprep.subr.mxu0 0.0
          %2098 = vmatpush1.msra.mxu0 0.0
          %2099 = vmatprep.subr.mxu0 0.0
          %2100 = vmatpush1.msra.mxu0 0.0
          %2101 = vmatprep.subr.mxu0 0.0
          %2102 = vmatpush1.msra.mxu0 0.0
          %2103 = vmatprep.subr.mxu0 0.0
          %2104 = vmatpush1.msra.mxu0 0.0
          %2105 = vmatprep.subr.mxu0 0.0
          %2106 = vmatpush1.msra.mxu0 0.0
          %2107 = vmatprep.subr.mxu0 0.0
          %2108 = vmatpush1.msra.mxu0 0.0
          %2109 = vmatprep.subr.mxu0 0.0
          %2110 = vmatpush1.msra.mxu0 0.0
          %2111 = vmatprep.subr.mxu0 0.0
          %2112 = vmatpush1.msra.mxu0 0.0
          %2113 = vmatprep.subr.mxu0 0.0
          %2114 = vmatpush1.msra.mxu0 0.0
          %2115 = vmatprep.subr.mxu0 0.0
          %2116 = vmatpush1.msra.mxu0 0.0
          %2117 = vmatprep.subr.mxu0 0.0
          %2118 = vmatpush1.msra.mxu0 0.0
          %2119 = vmatprep.subr.mxu0 0.0
          %2120 = vmatpush1.msra.mxu0 0.0
          %2121 = vmatprep.subr.mxu0 0.0
          %2122 = vmatpush1.msra.mxu0 0.0
          %2123 = vmatprep.subr.mxu0 0.0
          %2124 = vmatpush1.msra.mxu0 0.0
          %2125 = vmatprep.subr.mxu0 0.0
          %2126 = vmatpush1.msra.mxu0 0.0
          %2127 = vmatprep.subr.mxu0 0.0
          %2128 = vmatpush1.msra.mxu0 0.0
          %2129 = vmatprep.subr.mxu0 0.0
          %2130 = vmatpush1.msra.mxu0 0.0
          %2131 = vmatprep.mubr.f32.mxu0 0.0
          %2132 = vmatmul.mubr.f32.gmra.mrb[0].mxu0 %v2056
          %v2133 = vpop.f32.mrb[0].mxu0
          %v2134 = vadd.f32 0.0, %v2133
          %v2135 = vpop.f32.mrb[0].mxu0
          %2136 = vmatprep.mubr.f32.mxu0 0.0
          %2137 = vmatmul.mubr.f32.gmra.mrb[0].mxu0 %v2059
          %v2138 = vpop.f32.mrb[0].mxu0
          %v2139 = vadd.f32 0.0, %v2138
          %v2140 = vpop.f32.mrb[0].mxu0
          %2141 = vmatprep.mubr.f32.mxu0 0.0
          %2142 = vmatmul.mubr.f32.gmra.mrb[0].mxu0 %v2062
          %v2143 = vpop.f32.mrb[0].mxu0
          %v2144 = vadd.f32 0.0, %v2143
          %v2145 = vpop.f32.mrb[0].mxu0
          %2146 = vmatprep.mubr.f32.mxu0 0.0
          %2147 = vmatmul.mubr.f32.gmra.mrb[0].mxu0 %v2065
          %v2148 = vpop.f32.mrb[0].mxu0
          %v2149 = vadd.f32 0.0, %v2148
          %v2150 = vpop.f32.mrb[0].mxu0
          %2151 = vdwg.mxu0
          %v2152 = vadd.f32 %v2051, %v2134
          %v2153 = vadd.f32 %v2052, %v2139
          %v2154 = vadd.f32 %v2053, %v2144
          %v2155 = vadd.f32 %v2054, %v2149
          %2156 = vst.msk [vmem:[%s2026] sm:$0xff] %vm1258, %v2152
          %2157 = vst.msk [vmem:[%s2026 + $0x8] sm:$0xff] %vm1258, %v2153
          %2158 = vst.msk [vmem:[%s2026 + $0x10] sm:$0xff] %vm1258, %v2154
          %2159 = vst.msk [vmem:[%s2026 + $0x18] sm:$0xff] %vm1258, %v2155
          %2160 = vst.msk [vmem:[%s1932] sm:$0xff] %vm1464, %v1949
          %2161 = vst.msk [vmem:[%s1932 + $0x8] sm:$0xff] %vm1464, %v1950
          %2162 = vst.msk [vmem:[%s1932 + $0x10] sm:$0xff] %vm1464, %v1951
          %2163 = vst.msk [vmem:[%s1932 + $0x18] sm:$0xff] %vm1464, %v1952
          %s2164 = scalar_lea.vmem %s5, 256
          %v2165 = vld [vmem:[%s2164] sm:$0xff]
          %v2166 = vld [vmem:[%s2164 + $0x8] sm:$0xff]
          %v2167 = vld [vmem:[%s2164 + $0x10] sm:$0xff]
          %v2168 = vld [vmem:[%s2164 + $0x18] sm:$0xff]
          %v2169 = vld [vmem:[%s2164 + $0x20] sm:$0xff]
          %v2170 = vld [vmem:[%s2164 + $0x28] sm:$0xff]
          %v2171 = vld [vmem:[%s2164 + $0x30] sm:$0xff]
          %v2172 = vld [vmem:[%s2164 + $0x38] sm:$0xff]
          %v2173 = vld [vmem:[%s2164 + $0x40] sm:$0xff]
          %v2174 = vld [vmem:[%s2164 + $0x48] sm:$0xff]
          %v2175 = vld [vmem:[%s2164 + $0x50] sm:$0xff]
          %v2176 = vld [vmem:[%s2164 + $0x58] sm:$0xff]
          %v2177 = vld [vmem:[%s2164 + $0x60] sm:$0xff]
          %v2178 = vld [vmem:[%s2164 + $0x68] sm:$0xff]
          %v2179 = vld [vmem:[%s2164 + $0x70] sm:$0xff]
          %v2180 = vld [vmem:[%s2164 + $0x78] sm:$0xff]
          %2181 = vmatprep.subr.mxu0 0.0
          %2182 = vmatpush1.msra.mxu0 %v2165
          %2183 = vmatprep.subr.mxu0 0.0
          %2184 = vmatpush1.msra.mxu0 %v2166
          %2185 = vmatprep.subr.mxu0 0.0
          %2186 = vmatpush1.msra.mxu0 %v2167
          %2187 = vmatprep.subr.mxu0 0.0
          %2188 = vmatpush1.msra.mxu0 %v2168
          %2189 = vmatprep.subr.mxu0 0.0
          %2190 = vmatpush1.msra.mxu0 %v2169
          %2191 = vmatprep.subr.mxu0 0.0
          %2192 = vmatpush1.msra.mxu0 %v2170
          %2193 = vmatprep.subr.mxu0 0.0
          %2194 = vmatpush1.msra.mxu0 %v2171
          %2195 = vmatprep.subr.mxu0 0.0
          %2196 = vmatpush1.msra.mxu0 %v2172
          %2197 = vmatprep.subr.mxu0 0.0
          %2198 = vmatpush1.msra.mxu0 %v2173
          %2199 = vmatprep.subr.mxu0 0.0
          %2200 = vmatpush1.msra.mxu0 %v2174
          %2201 = vmatprep.subr.mxu0 0.0
          %2202 = vmatpush1.msra.mxu0 %v2175
          %2203 = vmatprep.subr.mxu0 0.0
          %2204 = vmatpush1.msra.mxu0 %v2176
          %2205 = vmatprep.subr.mxu0 0.0
          %2206 = vmatpush1.msra.mxu0 %v2177
          %2207 = vmatprep.subr.mxu0 0.0
          %2208 = vmatpush1.msra.mxu0 %v2178
          %2209 = vmatprep.subr.mxu0 0.0
          %2210 = vmatpush1.msra.mxu0 %v2179
          %2211 = vmatprep.subr.mxu0 0.0
          %2212 = vmatpush1.msra.mxu0 %v2180
          %2213 = vmatprep.subr.mxu0 0.0
          %2214 = vmatpush1.msra.mxu0 0.0
          %2215 = vmatprep.subr.mxu0 0.0
          %2216 = vmatpush1.msra.mxu0 0.0
          %2217 = vmatprep.subr.mxu0 0.0
          %2218 = vmatpush1.msra.mxu0 0.0
          %2219 = vmatprep.subr.mxu0 0.0
          %2220 = vmatpush1.msra.mxu0 0.0
          %2221 = vmatprep.subr.mxu0 0.0
          %2222 = vmatpush1.msra.mxu0 0.0
          %2223 = vmatprep.subr.mxu0 0.0
          %2224 = vmatpush1.msra.mxu0 0.0
          %2225 = vmatprep.subr.mxu0 0.0
          %2226 = vmatpush1.msra.mxu0 0.0
          %2227 = vmatprep.subr.mxu0 0.0
          %2228 = vmatpush1.msra.mxu0 0.0
          %2229 = vmatprep.subr.mxu0 0.0
          %2230 = vmatpush1.msra.mxu0 0.0
          %2231 = vmatprep.subr.mxu0 0.0
          %2232 = vmatpush1.msra.mxu0 0.0
          %2233 = vmatprep.subr.mxu0 0.0
          %2234 = vmatpush1.msra.mxu0 0.0
          %2235 = vmatprep.subr.mxu0 0.0
          %2236 = vmatpush1.msra.mxu0 0.0
          %2237 = vmatprep.subr.mxu0 0.0
          %2238 = vmatpush1.msra.mxu0 0.0
          %2239 = vmatprep.subr.mxu0 0.0
          %2240 = vmatpush1.msra.mxu0 0.0
          %2241 = vmatprep.subr.mxu0 0.0
          %2242 = vmatpush1.msra.mxu0 0.0
          %2243 = vmatprep.subr.mxu0 0.0
          %2244 = vmatpush1.msra.mxu0 0.0
          %2245 = vmatprep.mubr.f32.mxu0 0.0
          %2246 = vmatmul.mubr.f32.gmra.mrb[0].mxu0 %v1030
          %v2247 = vpop.f32.mrb[0].mxu0
          %v2248 = vadd.f32 0.0, %v2247
          %v2249 = vpop.f32.mrb[0].mxu0
          %2250 = vmatprep.mubr.f32.mxu0 0.0
          %2251 = vmatmul.mubr.f32.gmra.mrb[0].mxu0 %v1031
          %v2252 = vpop.f32.mrb[0].mxu0
          %v2253 = vadd.f32 0.0, %v2252
          %v2254 = vpop.f32.mrb[0].mxu0
          %2255 = vmatprep.mubr.f32.mxu0 0.0
          %2256 = vmatmul.mubr.f32.gmra.mrb[0].mxu0 %v1032
          %v2257 = vpop.f32.mrb[0].mxu0
          %v2258 = vadd.f32 0.0, %v2257
          %v2259 = vpop.f32.mrb[0].mxu0
          %2260 = vmatprep.mubr.f32.mxu0 0.0
          %2261 = vmatmul.mubr.f32.gmra.mrb[0].mxu0 %v1033
          %v2262 = vpop.f32.mrb[0].mxu0
          %v2263 = vadd.f32 0.0, %v2262
          %v2264 = vpop.f32.mrb[0].mxu0
          %2265 = vdwg.mxu0
          %s2266 = scalar_lea.vmem %s6, 256
          %v2267 = vld [vmem:[%s2266] sm:$0xff]
          %v2268 = vld [vmem:[%s2266 + $0x8] sm:$0xff]
          %v2269 = vld [vmem:[%s2266 + $0x10] sm:$0xff]
          %v2270 = vld [vmem:[%s2266 + $0x18] sm:$0xff]
          %v2271 = vld [vmem:[%s2266 + $0x20] sm:$0xff]
          %v2272 = vld [vmem:[%s2266 + $0x28] sm:$0xff]
          %v2273 = vld [vmem:[%s2266 + $0x30] sm:$0xff]
          %v2274 = vld [vmem:[%s2266 + $0x38] sm:$0xff]
          %v2275 = vld [vmem:[%s2266 + $0x40] sm:$0xff]
          %v2276 = vld [vmem:[%s2266 + $0x48] sm:$0xff]
          %v2277 = vld [vmem:[%s2266 + $0x50] sm:$0xff]
          %v2278 = vld [vmem:[%s2266 + $0x58] sm:$0xff]
          %v2279 = vld [vmem:[%s2266 + $0x60] sm:$0xff]
          %v2280 = vld [vmem:[%s2266 + $0x68] sm:$0xff]
          %v2281 = vld [vmem:[%s2266 + $0x70] sm:$0xff]
          %v2282 = vld [vmem:[%s2266 + $0x78] sm:$0xff]
          %2283 = vmatprep.subr.mxu0 0.0
          %2284 = vmatpush1.msra.mxu0 %v2267
          %2285 = vmatprep.subr.mxu0 0.0
          %2286 = vmatpush1.msra.mxu0 %v2268
          %2287 = vmatprep.subr.mxu0 0.0
          %2288 = vmatpush1.msra.mxu0 %v2269
          %2289 = vmatprep.subr.mxu0 0.0
          %2290 = vmatpush1.msra.mxu0 %v2270
          %2291 = vmatprep.subr.mxu0 0.0
          %2292 = vmatpush1.msra.mxu0 %v2271
          %2293 = vmatprep.subr.mxu0 0.0
          %2294 = vmatpush1.msra.mxu0 %v2272
          %2295 = vmatprep.subr.mxu0 0.0
          %2296 = vmatpush1.msra.mxu0 %v2273
          %2297 = vmatprep.subr.mxu0 0.0
          %2298 = vmatpush1.msra.mxu0 %v2274
          %2299 = vmatprep.subr.mxu0 0.0
          %2300 = vmatpush1.msra.mxu0 %v2275
          %2301 = vmatprep.subr.mxu0 0.0
          %2302 = vmatpush1.msra.mxu0 %v2276
          %2303 = vmatprep.subr.mxu0 0.0
          %2304 = vmatpush1.msra.mxu0 %v2277
          %2305 = vmatprep.subr.mxu0 0.0
          %2306 = vmatpush1.msra.mxu0 %v2278
          %2307 = vmatprep.subr.mxu0 0.0
          %2308 = vmatpush1.msra.mxu0 %v2279
          %2309 = vmatprep.subr.mxu0 0.0
          %2310 = vmatpush1.msra.mxu0 %v2280
          %2311 = vmatprep.subr.mxu0 0.0
          %2312 = vmatpush1.msra.mxu0 %v2281
          %2313 = vmatprep.subr.mxu0 0.0
          %2314 = vmatpush1.msra.mxu0 %v2282
          %2315 = vmatprep.subr.mxu0 0.0
          %2316 = vmatpush1.msra.mxu0 0.0
          %2317 = vmatprep.subr.mxu0 0.0
          %2318 = vmatpush1.msra.mxu0 0.0
          %2319 = vmatprep.subr.mxu0 0.0
          %2320 = vmatpush1.msra.mxu0 0.0
          %2321 = vmatprep.subr.mxu0 0.0
          %2322 = vmatpush1.msra.mxu0 0.0
          %2323 = vmatprep.subr.mxu0 0.0
          %2324 = vmatpush1.msra.mxu0 0.0
          %2325 = vmatprep.subr.mxu0 0.0
          %2326 = vmatpush1.msra.mxu0 0.0
          %2327 = vmatprep.subr.mxu0 0.0
          %2328 = vmatpush1.msra.mxu0 0.0
          %2329 = vmatprep.subr.mxu0 0.0
          %2330 = vmatpush1.msra.mxu0 0.0
          %2331 = vmatprep.subr.mxu0 0.0
          %2332 = vmatpush1.msra.mxu0 0.0
          %2333 = vmatprep.subr.mxu0 0.0
          %2334 = vmatpush1.msra.mxu0 0.0
          %2335 = vmatprep.subr.mxu0 0.0
          %2336 = vmatpush1.msra.mxu0 0.0
          %2337 = vmatprep.subr.mxu0 0.0
          %2338 = vmatpush1.msra.mxu0 0.0
          %2339 = vmatprep.subr.mxu0 0.0
          %2340 = vmatpush1.msra.mxu0 0.0
          %2341 = vmatprep.subr.mxu0 0.0
          %2342 = vmatpush1.msra.mxu0 0.0
          %2343 = vmatprep.subr.mxu0 0.0
          %2344 = vmatpush1.msra.mxu0 0.0
          %2345 = vmatprep.subr.mxu0 0.0
          %2346 = vmatpush1.msra.mxu0 0.0
          %2347 = vmatprep.mubr.f32.mxu0 0.0
          %2348 = vmatmul.mubr.f32.gmra.mrb[0].mxu0 %v1030
          %v2349 = vpop.f32.mrb[0].mxu0
          %v2350 = vadd.f32 0.0, %v2349
          %v2351 = vpop.f32.mrb[0].mxu0
          %2352 = vmatprep.mubr.f32.mxu0 0.0
          %2353 = vmatmul.mubr.f32.gmra.mrb[0].mxu0 %v1031
          %v2354 = vpop.f32.mrb[0].mxu0
          %v2355 = vadd.f32 0.0, %v2354
          %v2356 = vpop.f32.mrb[0].mxu0
          %2357 = vmatprep.mubr.f32.mxu0 0.0
          %2358 = vmatmul.mubr.f32.gmra.mrb[0].mxu0 %v1032
          %v2359 = vpop.f32.mrb[0].mxu0
          %v2360 = vadd.f32 0.0, %v2359
          %v2361 = vpop.f32.mrb[0].mxu0
          %2362 = vmatprep.mubr.f32.mxu0 0.0
          %2363 = vmatmul.mubr.f32.gmra.mrb[0].mxu0 %v1033
          %v2364 = vpop.f32.mrb[0].mxu0
          %v2365 = vadd.f32 0.0, %v2364
          %v2366 = vpop.f32.mrb[0].mxu0
          %2367 = vdwg.mxu0
          %s2368 = scalar_lea.vmem [#allocation2], 64
          %v2369 = vld [vmem:[%s2368] sm:$0xff]
          %v2370 = vld [vmem:[%s2368 + $0x8] sm:$0xff]
          %v2371 = vld [vmem:[%s2368 + $0x10] sm:$0xff]
          %v2372 = vld [vmem:[%s2368 + $0x18] sm:$0xff]
          %v2374 = vsel %vm1258, %v2369, 0
          %v2377 = vsel %vm1258, %v2370, 0
          %v2380 = vsel %vm1258, %v2371, 0
          %v2383 = vsel %vm1258, %v2372, 0
          %v2386 = vsel %vm1258, %v2248, 0
          %v2389 = vsel %vm1258, %v2253, 0
          %v2392 = vsel %vm1258, %v2258, 0
          %v2395 = vsel %vm1258, %v2263, 0
          %2397 = vmatprep.subr.mxu0 0.0
          %2398 = vmatpush1.xpose.msra.mxu0 %v2386
          %2399 = vmatprep.subr.mxu0 0.0
          %2400 = vmatpush1.xpose.msra.mxu0 %v2389
          %2401 = vmatprep.subr.mxu0 0.0
          %2402 = vmatpush1.xpose.msra.mxu0 %v2392
          %2403 = vmatprep.subr.mxu0 0.0
          %2404 = vmatpush1.xpose.msra.mxu0 %v2395
          %2405 = vmatprep.subr.mxu0 0.0
          %2406 = vmatpush1.xpose.msra.mxu0 0.0
          %2407 = vmatprep.subr.mxu0 0.0
          %2408 = vmatpush1.xpose.msra.mxu0 0.0
          %2409 = vmatprep.subr.mxu0 0.0
          %2410 = vmatpush1.xpose.msra.mxu0 0.0
          %2411 = vmatprep.subr.mxu0 0.0
          %2412 = vmatpush1.xpose.msra.mxu0 0.0
          %2413 = vmatprep.subr.mxu0 0.0
          %2414 = vmatpush1.xpose.msra.mxu0 0.0
          %2415 = vmatprep.subr.mxu0 0.0
          %2416 = vmatpush1.xpose.msra.mxu0 0.0
          %2417 = vmatprep.subr.mxu0 0.0
          %2418 = vmatpush1.xpose.msra.mxu0 0.0
          %2419 = vmatprep.subr.mxu0 0.0
          %2420 = vmatpush1.xpose.msra.mxu0 0.0
          %2421 = vmatprep.subr.mxu0 0.0
          %2422 = vmatpush1.xpose.msra.mxu0 0.0
          %2423 = vmatprep.subr.mxu0 0.0
          %2424 = vmatpush1.xpose.msra.mxu0 0.0
          %2425 = vmatprep.subr.mxu0 0.0
          %2426 = vmatpush1.xpose.msra.mxu0 0.0
          %2427 = vmatprep.subr.mxu0 0.0
          %2428 = vmatpush1.xpose.msra.mxu0 0.0
          %2429 = vmatprep.subr.mxu0 0.0
          %2430 = vmatpush1.xpose.msra.mxu0 0.0
          %2431 = vmatprep.subr.mxu0 0.0
          %2432 = vmatpush1.xpose.msra.mxu0 0.0
          %2433 = vmatprep.subr.mxu0 0.0
          %2434 = vmatpush1.xpose.msra.mxu0 0.0
          %2435 = vmatprep.subr.mxu0 0.0
          %2436 = vmatpush1.xpose.msra.mxu0 0.0
          %2437 = vmatprep.subr.mxu0 0.0
          %2438 = vmatpush1.xpose.msra.mxu0 0.0
          %2439 = vmatprep.subr.mxu0 0.0
          %2440 = vmatpush1.xpose.msra.mxu0 0.0
          %2441 = vmatprep.subr.mxu0 0.0
          %2442 = vmatpush1.xpose.msra.mxu0 0.0
          %2443 = vmatprep.subr.mxu0 0.0
          %2444 = vmatpush1.xpose.msra.mxu0 0.0
          %2445 = vmatprep.subr.mxu0 0.0
          %2446 = vmatpush1.xpose.msra.mxu0 0.0
          %2447 = vmatprep.subr.mxu0 0.0
          %2448 = vmatpush1.xpose.msra.mxu0 0.0
          %2449 = vmatprep.subr.mxu0 0.0
          %2450 = vmatpush1.xpose.msra.mxu0 0.0
          %2451 = vmatprep.subr.mxu0 0.0
          %2452 = vmatpush1.xpose.msra.mxu0 0.0
          %2453 = vmatprep.subr.mxu0 0.0
          %2454 = vmatpush1.xpose.msra.mxu0 0.0
          %2455 = vmatprep.subr.mxu0 0.0
          %2456 = vmatpush1.xpose.msra.mxu0 0.0
          %2457 = vmatprep.subr.mxu0 0.0
          %2458 = vmatpush1.xpose.msra.mxu0 0.0
          %2459 = vmatprep.subr.mxu0 0.0
          %2460 = vmatpush1.xpose.msra.mxu0 0.0
          %2461 = vmatprep.mubr.f32.mxu0 0.0
          %2462 = vmatmul.mubr.f32.gmra.mrb[0].mxu0 %v2374
          %v2463 = vpop.f32.mrb[0].mxu0
          %v2464 = vadd.f32 0.0, %v2463
          %v2465 = vpop.f32.mrb[0].mxu0
          %2466 = vmatprep.mubr.f32.mxu0 0.0
          %2467 = vmatmul.mubr.f32.gmra.mrb[0].mxu0 %v2377
          %v2468 = vpop.f32.mrb[0].mxu0
          %v2469 = vadd.f32 0.0, %v2468
          %v2470 = vpop.f32.mrb[0].mxu0
          %2471 = vmatprep.mubr.f32.mxu0 0.0
          %2472 = vmatmul.mubr.f32.gmra.mrb[0].mxu0 %v2380
          %v2473 = vpop.f32.mrb[0].mxu0
          %v2474 = vadd.f32 0.0, %v2473
          %v2475 = vpop.f32.mrb[0].mxu0
          %2476 = vmatprep.mubr.f32.mxu0 0.0
          %2477 = vmatmul.mubr.f32.gmra.mrb[0].mxu0 %v2383
          %v2478 = vpop.f32.mrb[0].mxu0
          %v2479 = vadd.f32 0.0, %v2478
          %v2480 = vpop.f32.mrb[0].mxu0
          %2481 = vdwg.mxu0
          %v2482 = vmul.f32 %v2464, 0.17677669
          %v2483 = vmul.f32 %v2469, 0.17677669
          %v2484 = vmul.f32 %v2474, 0.17677669
          %v2485 = vmul.f32 %v2479, 0.17677669
          %v2486 = vsel %vm1048, -1e+30, %v2482
          %v2487 = vsel %vm1049, -1e+30, %v2483
          %v2488 = vsel %vm1050, -1e+30, %v2484
          %v2489 = vsel %vm1051, -1e+30, %v2485
          %s2490 = scalar_lea.vmem [#allocation3], 64
          %v2491 = vld [vmem:[%s2490] sm:$0xff]
          %v2492 = vld [vmem:[%s2490 + $0x8] sm:$0xff]
          %v2493 = vld [vmem:[%s2490 + $0x10] sm:$0xff]
          %v2494 = vld [vmem:[%s2490 + $0x18] sm:$0xff]
          %v2495 = vsel %vm1258, %v2486, -inf
          %2496 = vmax.xlane.f32.xlu0 %v2495
          %v2497 = vpop.xlane.xlu0 %2496
          %v2498 = vsel %vm1258, %v2487, -inf
          %2499 = vmax.xlane.f32.xlu0 %v2498
          %v2500 = vpop.xlane.xlu0 %2499
          %v2501 = vsel %vm1258, %v2488, -inf
          %2502 = vmax.xlane.f32.xlu0 %v2501
          %v2503 = vpop.xlane.xlu0 %2502
          %v2504 = vsel %vm1258, %v2489, -inf
          %2505 = vmax.xlane.f32.xlu0 %v2504
          %v2506 = vpop.xlane.xlu0 %2505
          %v2507 = vmax.f32 %v2491, %v2497
          %v2508 = vmax.f32 %v2492, %v2500
          %v2509 = vmax.f32 %v2493, %v2503
          %v2510 = vmax.f32 %v2494, %v2506
          %v2511 = vsub.f32 %v2491, %v2507
          %v2512 = vsub.f32 %v2492, %v2508
          %v2513 = vsub.f32 %v2493, %v2509
          %v2514 = vsub.f32 %v2494, %v2510
          %v2515 = vmul.f32 %v2511, 1.442695
          %v2516 = vpow.pop %v2515
          %v2517 = vmul.f32 %v2512, 1.442695
          %v2518 = vpow.pop %v2517
          %v2519 = vmul.f32 %v2513, 1.442695
          %v2520 = vpow.pop %v2519
          %v2521 = vmul.f32 %v2514, 1.442695
          %v2522 = vpow.pop %v2521
          %2524 = vset.pattern.permute.xlu0 0
          %2525 = vperm.xlu0 %2524, %v2507
          %v2526 = vpop.permute.xlu0 %2525
          %2529 = vset.pattern.permute.xlu0 0
          %2530 = vperm.xlu0 %2529, %v2508
          %v2531 = vpop.permute.xlu0 %2530
          %2534 = vset.pattern.permute.xlu0 0
          %2535 = vperm.xlu0 %2534, %v2509
          %v2536 = vpop.permute.xlu0 %2535
          %2539 = vset.pattern.permute.xlu0 0
          %2540 = vperm.xlu0 %2539, %v2510
          %v2541 = vpop.permute.xlu0 %2540
          %v2543 = vsub.f32 %v2486, %v2526
          %v2544 = vsub.f32 %v2487, %v2531
          %v2545 = vsub.f32 %v2488, %v2536
          %v2546 = vsub.f32 %v2489, %v2541
          %v2547 = vmul.f32 %v2543, 1.442695
          %v2548 = vpow.pop %v2547
          %v2549 = vmul.f32 %v2544, 1.442695
          %v2550 = vpow.pop %v2549
          %v2551 = vmul.f32 %v2545, 1.442695
          %v2552 = vpow.pop %v2551
          %v2553 = vmul.f32 %v2546, 1.442695
          %v2554 = vpow.pop %v2553
          %s2555 = scalar_lea.vmem [#allocation4], 64
          %v2556 = vld [vmem:[%s2555] sm:$0xff]
          %v2557 = vld [vmem:[%s2555 + $0x8] sm:$0xff]
          %v2558 = vld [vmem:[%s2555 + $0x10] sm:$0xff]
          %v2559 = vld [vmem:[%s2555 + $0x18] sm:$0xff]
          %v2560 = vmul.f32 %v2516, %v2556
          %v2561 = vmul.f32 %v2518, %v2557
          %v2562 = vmul.f32 %v2520, %v2558
          %v2563 = vmul.f32 %v2522, %v2559
          %v2564 = vsel %vm1258, %v2548, 0.0
          %2565 = vadd.xlane.f32.xlu0 %v2564
          %v2566 = vpop.xlane.xlu0 %2565
          %v2567 = vsel %vm1258, %v2550, 0.0
          %2568 = vadd.xlane.f32.xlu0 %v2567
          %v2569 = vpop.xlane.xlu0 %2568
          %v2570 = vsel %vm1258, %v2552, 0.0
          %2571 = vadd.xlane.f32.xlu0 %v2570
          %v2572 = vpop.xlane.xlu0 %2571
          %v2573 = vsel %vm1258, %v2554, 0.0
          %2574 = vadd.xlane.f32.xlu0 %v2573
          %v2575 = vpop.xlane.xlu0 %2574
          %v2576 = vadd.f32 %v2560, %v2566
          %v2577 = vadd.f32 %v2561, %v2569
          %v2578 = vadd.f32 %v2562, %v2572
          %v2579 = vadd.f32 %v2563, %v2575
          %2580 = vst.msk [vmem:[%s2555] sm:$0xff] %vm1464, %v2576
          %2581 = vst.msk [vmem:[%s2555 + $0x8] sm:$0xff] %vm1464, %v2577
          %2582 = vst.msk [vmem:[%s2555 + $0x10] sm:$0xff] %vm1464, %v2578
          %2583 = vst.msk [vmem:[%s2555 + $0x18] sm:$0xff] %vm1464, %v2579
          %s2584 = scalar_lea.vmem [#allocation5], 64
          %v2585 = vld [vmem:[%s2584] sm:$0xff]
          %v2586 = vld [vmem:[%s2584 + $0x8] sm:$0xff]
          %v2587 = vld [vmem:[%s2584 + $0x10] sm:$0xff]
          %v2588 = vld [vmem:[%s2584 + $0x18] sm:$0xff]
          %2590 = vset.pattern.permute.xlu0 0
          %2591 = vperm.xlu0 %2590, %v2516
          %v2592 = vpop.permute.xlu0 %2591
          %2595 = vset.pattern.permute.xlu0 0
          %2596 = vperm.xlu0 %2595, %v2518
          %v2597 = vpop.permute.xlu0 %2596
          %2600 = vset.pattern.permute.xlu0 0
          %2601 = vperm.xlu0 %2600, %v2520
          %v2602 = vpop.permute.xlu0 %2601
          %2605 = vset.pattern.permute.xlu0 0
          %2606 = vperm.xlu0 %2605, %v2522
          %v2607 = vpop.permute.xlu0 %2606
          %v2609 = vmul.f32 %v2592, %v2585
          %v2610 = vmul.f32 %v2597, %v2586
          %v2611 = vmul.f32 %v2602, %v2587
          %v2612 = vmul.f32 %v2607, %v2588
          %v2614 = vsel %vm1258, %v2548, 0
          %v2617 = vsel %vm1258, %v2550, 0
          %v2620 = vsel %vm1258, %v2552, 0
          %v2623 = vsel %vm1258, %v2554, 0
          %2625 = vmatprep.subr.mxu0 0.0
          %2626 = vmatpush1.msra.mxu0 %v2350
          %2627 = vmatprep.subr.mxu0 0.0
          %2628 = vmatpush1.msra.mxu0 %v2355
          %2629 = vmatprep.subr.mxu0 0.0
          %2630 = vmatpush1.msra.mxu0 %v2360
          %2631 = vmatprep.subr.mxu0 0.0
          %2632 = vmatpush1.msra.mxu0 %v2365
          %2633 = vmatprep.subr.mxu0 0.0
          %2634 = vmatpush1.msra.mxu0 0.0
          %2635 = vmatprep.subr.mxu0 0.0
          %2636 = vmatpush1.msra.mxu0 0.0
          %2637 = vmatprep.subr.mxu0 0.0
          %2638 = vmatpush1.msra.mxu0 0.0
          %2639 = vmatprep.subr.mxu0 0.0
          %2640 = vmatpush1.msra.mxu0 0.0
          %2641 = vmatprep.subr.mxu0 0.0
          %2642 = vmatpush1.msra.mxu0 0.0
          %2643 = vmatprep.subr.mxu0 0.0
          %2644 = vmatpush1.msra.mxu0 0.0
          %2645 = vmatprep.subr.mxu0 0.0
          %2646 = vmatpush1.msra.mxu0 0.0
          %2647 = vmatprep.subr.mxu0 0.0
          %2648 = vmatpush1.msra.mxu0 0.0
          %2649 = vmatprep.subr.mxu0 0.0
          %2650 = vmatpush1.msra.mxu0 0.0
          %2651 = vmatprep.subr.mxu0 0.0
          %2652 = vmatpush1.msra.mxu0 0.0
          %2653 = vmatprep.subr.mxu0 0.0
          %2654 = vmatpush1.msra.mxu0 0.0
          %2655 = vmatprep.subr.mxu0 0.0
          %2656 = vmatpush1.msra.mxu0 0.0
          %2657 = vmatprep.subr.mxu0 0.0
          %2658 = vmatpush1.msra.mxu0 0.0
          %2659 = vmatprep.subr.mxu0 0.0
          %2660 = vmatpush1.msra.mxu0 0.0
          %2661 = vmatprep.subr.mxu0 0.0
          %2662 = vmatpush1.msra.mxu0 0.0
          %2663 = vmatprep.subr.mxu0 0.0
          %2664 = vmatpush1.msra.mxu0 0.0
          %2665 = vmatprep.subr.mxu0 0.0
          %2666 = vmatpush1.msra.mxu0 0.0
          %2667 = vmatprep.subr.mxu0 0.0
          %2668 = vmatpush1.msra.mxu0 0.0
          %2669 = vmatprep.subr.mxu0 0.0
          %2670 = vmatpush1.msra.mxu0 0.0
          %2671 = vmatprep.subr.mxu0 0.0
          %2672 = vmatpush1.msra.mxu0 0.0
          %2673 = vmatprep.subr.mxu0 0.0
          %2674 = vmatpush1.msra.mxu0 0.0
          %2675 = vmatprep.subr.mxu0 0.0
          %2676 = vmatpush1.msra.mxu0 0.0
          %2677 = vmatprep.subr.mxu0 0.0
          %2678 = vmatpush1.msra.mxu0 0.0
          %2679 = vmatprep.subr.mxu0 0.0
          %2680 = vmatpush1.msra.mxu0 0.0
          %2681 = vmatprep.subr.mxu0 0.0
          %2682 = vmatpush1.msra.mxu0 0.0
          %2683 = vmatprep.subr.mxu0 0.0
          %2684 = vmatpush1.msra.mxu0 0.0
          %2685 = vmatprep.subr.mxu0 0.0
          %2686 = vmatpush1.msra.mxu0 0.0
          %2687 = vmatprep.subr.mxu0 0.0
          %2688 = vmatpush1.msra.mxu0 0.0
          %2689 = vmatprep.mubr.f32.mxu0 0.0
          %2690 = vmatmul.mubr.f32.gmra.mrb[0].mxu0 %v2614
          %v2691 = vpop.f32.mrb[0].mxu0
          %v2692 = vadd.f32 0.0, %v2691
          %v2693 = vpop.f32.mrb[0].mxu0
          %2694 = vmatprep.mubr.f32.mxu0 0.0
          %2695 = vmatmul.mubr.f32.gmra.mrb[0].mxu0 %v2617
          %v2696 = vpop.f32.mrb[0].mxu0
          %v2697 = vadd.f32 0.0, %v2696
          %v2698 = vpop.f32.mrb[0].mxu0
          %2699 = vmatprep.mubr.f32.mxu0 0.0
          %2700 = vmatmul.mubr.f32.gmra.mrb[0].mxu0 %v2620
          %v2701 = vpop.f32.mrb[0].mxu0
          %v2702 = vadd.f32 0.0, %v2701
          %v2703 = vpop.f32.mrb[0].mxu0
          %2704 = vmatprep.mubr.f32.mxu0 0.0
          %2705 = vmatmul.mubr.f32.gmra.mrb[0].mxu0 %v2623
          %v2706 = vpop.f32.mrb[0].mxu0
          %v2707 = vadd.f32 0.0, %v2706
          %v2708 = vpop.f32.mrb[0].mxu0
          %2709 = vdwg.mxu0
          %v2710 = vadd.f32 %v2609, %v2692
          %v2711 = vadd.f32 %v2610, %v2697
          %v2712 = vadd.f32 %v2611, %v2702
          %v2713 = vadd.f32 %v2612, %v2707
          %2714 = vst.msk [vmem:[%s2584] sm:$0xff] %vm1258, %v2710
          %2715 = vst.msk [vmem:[%s2584 + $0x8] sm:$0xff] %vm1258, %v2711
          %2716 = vst.msk [vmem:[%s2584 + $0x10] sm:$0xff] %vm1258, %v2712
          %2717 = vst.msk [vmem:[%s2584 + $0x18] sm:$0xff] %vm1258, %v2713
          %2718 = vst.msk [vmem:[%s2490] sm:$0xff] %vm1464, %v2507
          %2719 = vst.msk [vmem:[%s2490 + $0x8] sm:$0xff] %vm1464, %v2508
          %2720 = vst.msk [vmem:[%s2490 + $0x10] sm:$0xff] %vm1464, %v2509
          %2721 = vst.msk [vmem:[%s2490 + $0x18] sm:$0xff] %vm1464, %v2510
          %s2722 = scalar_lea.vmem %s5, 384
          %v2723 = vld [vmem:[%s2722] sm:$0xff]
          %v2724 = vld [vmem:[%s2722 + $0x8] sm:$0xff]
          %v2725 = vld [vmem:[%s2722 + $0x10] sm:$0xff]
          %v2726 = vld [vmem:[%s2722 + $0x18] sm:$0xff]
          %v2727 = vld [vmem:[%s2722 + $0x20] sm:$0xff]
          %v2728 = vld [vmem:[%s2722 + $0x28] sm:$0xff]
          %v2729 = vld [vmem:[%s2722 + $0x30] sm:$0xff]
          %v2730 = vld [vmem:[%s2722 + $0x38] sm:$0xff]
          %v2731 = vld [vmem:[%s2722 + $0x40] sm:$0xff]
          %v2732 = vld [vmem:[%s2722 + $0x48] sm:$0xff]
          %v2733 = vld [vmem:[%s2722 + $0x50] sm:$0xff]
          %v2734 = vld [vmem:[%s2722 + $0x58] sm:$0xff]
          %v2735 = vld [vmem:[%s2722 + $0x60] sm:$0xff]
          %v2736 = vld [vmem:[%s2722 + $0x68] sm:$0xff]
          %v2737 = vld [vmem:[%s2722 + $0x70] sm:$0xff]
          %v2738 = vld [vmem:[%s2722 + $0x78] sm:$0xff]
          %2739 = vmatprep.subr.mxu0 0.0
          %2740 = vmatpush1.msra.mxu0 %v2723
          %2741 = vmatprep.subr.mxu0 0.0
          %2742 = vmatpush1.msra.mxu0 %v2724
          %2743 = vmatprep.subr.mxu0 0.0
          %2744 = vmatpush1.msra.mxu0 %v2725
          %2745 = vmatprep.subr.mxu0 0.0
          %2746 = vmatpush1.msra.mxu0 %v2726
          %2747 = vmatprep.subr.mxu0 0.0
          %2748 = vmatpush1.msra.mxu0 %v2727
          %2749 = vmatprep.subr.mxu0 0.0
          %2750 = vmatpush1.msra.mxu0 %v2728
          %2751 = vmatprep.subr.mxu0 0.0
          %2752 = vmatpush1.msra.mxu0 %v2729
          %2753 = vmatprep.subr.mxu0 0.0
          %2754 = vmatpush1.msra.mxu0 %v2730
          %2755 = vmatprep.subr.mxu0 0.0
          %2756 = vmatpush1.msra.mxu0 %v2731
          %2757 = vmatprep.subr.mxu0 0.0
          %2758 = vmatpush1.msra.mxu0 %v2732
          %2759 = vmatprep.subr.mxu0 0.0
          %2760 = vmatpush1.msra.mxu0 %v2733
          %2761 = vmatprep.subr.mxu0 0.0
          %2762 = vmatpush1.msra.mxu0 %v2734
          %2763 = vmatprep.subr.mxu0 0.0
          %2764 = vmatpush1.msra.mxu0 %v2735
          %2765 = vmatprep.subr.mxu0 0.0
          %2766 = vmatpush1.msra.mxu0 %v2736
          %2767 = vmatprep.subr.mxu0 0.0
          %2768 = vmatpush1.msra.mxu0 %v2737
          %2769 = vmatprep.subr.mxu0 0.0
          %2770 = vmatpush1.msra.mxu0 %v2738
          %2771 = vmatprep.subr.mxu0 0.0
          %2772 = vmatpush1.msra.mxu0 0.0
          %2773 = vmatprep.subr.mxu0 0.0
          %2774 = vmatpush1.msra.mxu0 0.0
          %2775 = vmatprep.subr.mxu0 0.0
          %2776 = vmatpush1.msra.mxu0 0.0
          %2777 = vmatprep.subr.mxu0 0.0
          %2778 = vmatpush1.msra.mxu0 0.0
          %2779 = vmatprep.subr.mxu0 0.0
          %2780 = vmatpush1.msra.mxu0 0.0
          %2781 = vmatprep.subr.mxu0 0.0
          %2782 = vmatpush1.msra.mxu0 0.0
          %2783 = vmatprep.subr.mxu0 0.0
          %2784 = vmatpush1.msra.mxu0 0.0
          %2785 = vmatprep.subr.mxu0 0.0
          %2786 = vmatpush1.msra.mxu0 0.0
          %2787 = vmatprep.subr.mxu0 0.0
          %2788 = vmatpush1.msra.mxu0 0.0
          %2789 = vmatprep.subr.mxu0 0.0
          %2790 = vmatpush1.msra.mxu0 0.0
          %2791 = vmatprep.subr.mxu0 0.0
          %2792 = vmatpush1.msra.mxu0 0.0
          %2793 = vmatprep.subr.mxu0 0.0
          %2794 = vmatpush1.msra.mxu0 0.0
          %2795 = vmatprep.subr.mxu0 0.0
          %2796 = vmatpush1.msra.mxu0 0.0
          %2797 = vmatprep.subr.mxu0 0.0
          %2798 = vmatpush1.msra.mxu0 0.0
          %2799 = vmatprep.subr.mxu0 0.0
          %2800 = vmatpush1.msra.mxu0 0.0
          %2801 = vmatprep.subr.mxu0 0.0
          %2802 = vmatpush1.msra.mxu0 0.0
          %2803 = vmatprep.mubr.f32.mxu0 0.0
          %2804 = vmatmul.mubr.f32.gmra.mrb[0].mxu0 %v1030
          %v2805 = vpop.f32.mrb[0].mxu0
          %v2806 = vadd.f32 0.0, %v2805
          %v2807 = vpop.f32.mrb[0].mxu0
          %2808 = vmatprep.mubr.f32.mxu0 0.0
          %2809 = vmatmul.mubr.f32.gmra.mrb[0].mxu0 %v1031
          %v2810 = vpop.f32.mrb[0].mxu0
          %v2811 = vadd.f32 0.0, %v2810
          %v2812 = vpop.f32.mrb[0].mxu0
          %2813 = vmatprep.mubr.f32.mxu0 0.0
          %2814 = vmatmul.mubr.f32.gmra.mrb[0].mxu0 %v1032
          %v2815 = vpop.f32.mrb[0].mxu0
          %v2816 = vadd.f32 0.0, %v2815
          %v2817 = vpop.f32.mrb[0].mxu0
          %2818 = vmatprep.mubr.f32.mxu0 0.0
          %2819 = vmatmul.mubr.f32.gmra.mrb[0].mxu0 %v1033
          %v2820 = vpop.f32.mrb[0].mxu0
          %v2821 = vadd.f32 0.0, %v2820
          %v2822 = vpop.f32.mrb[0].mxu0
          %2823 = vdwg.mxu0
          %s2824 = scalar_lea.vmem %s6, 384
          %v2825 = vld [vmem:[%s2824] sm:$0xff]
          %v2826 = vld [vmem:[%s2824 + $0x8] sm:$0xff]
          %v2827 = vld [vmem:[%s2824 + $0x10] sm:$0xff]
          %v2828 = vld [vmem:[%s2824 + $0x18] sm:$0xff]
          %v2829 = vld [vmem:[%s2824 + $0x20] sm:$0xff]
          %v2830 = vld [vmem:[%s2824 + $0x28] sm:$0xff]
          %v2831 = vld [vmem:[%s2824 + $0x30] sm:$0xff]
          %v2832 = vld [vmem:[%s2824 + $0x38] sm:$0xff]
          %v2833 = vld [vmem:[%s2824 + $0x40] sm:$0xff]
          %v2834 = vld [vmem:[%s2824 + $0x48] sm:$0xff]
          %v2835 = vld [vmem:[%s2824 + $0x50] sm:$0xff]
          %v2836 = vld [vmem:[%s2824 + $0x58] sm:$0xff]
          %v2837 = vld [vmem:[%s2824 + $0x60] sm:$0xff]
          %v2838 = vld [vmem:[%s2824 + $0x68] sm:$0xff]
          %v2839 = vld [vmem:[%s2824 + $0x70] sm:$0xff]
          %v2840 = vld [vmem:[%s2824 + $0x78] sm:$0xff]
          %2841 = vmatprep.subr.mxu0 0.0
          %2842 = vmatpush1.msra.mxu0 %v2825
          %2843 = vmatprep.subr.mxu0 0.0
          %2844 = vmatpush1.msra.mxu0 %v2826
          %2845 = vmatprep.subr.mxu0 0.0
          %2846 = vmatpush1.msra.mxu0 %v2827
          %2847 = vmatprep.subr.mxu0 0.0
          %2848 = vmatpush1.msra.mxu0 %v2828
          %2849 = vmatprep.subr.mxu0 0.0
          %2850 = vmatpush1.msra.mxu0 %v2829
          %2851 = vmatprep.subr.mxu0 0.0
          %2852 = vmatpush1.msra.mxu0 %v2830
          %2853 = vmatprep.subr.mxu0 0.0
          %2854 = vmatpush1.msra.mxu0 %v2831
          %2855 = vmatprep.subr.mxu0 0.0
          %2856 = vmatpush1.msra.mxu0 %v2832
          %2857 = vmatprep.subr.mxu0 0.0
          %2858 = vmatpush1.msra.mxu0 %v2833
          %2859 = vmatprep.subr.mxu0 0.0
          %2860 = vmatpush1.msra.mxu0 %v2834
          %2861 = vmatprep.subr.mxu0 0.0
          %2862 = vmatpush1.msra.mxu0 %v2835
          %2863 = vmatprep.subr.mxu0 0.0
          %2864 = vmatpush1.msra.mxu0 %v2836
          %2865 = vmatprep.subr.mxu0 0.0
          %2866 = vmatpush1.msra.mxu0 %v2837
          %2867 = vmatprep.subr.mxu0 0.0
          %2868 = vmatpush1.msra.mxu0 %v2838
          %2869 = vmatprep.subr.mxu0 0.0
          %2870 = vmatpush1.msra.mxu0 %v2839
          %2871 = vmatprep.subr.mxu0 0.0
          %2872 = vmatpush1.msra.mxu0 %v2840
          %2873 = vmatprep.subr.mxu0 0.0
          %2874 = vmatpush1.msra.mxu0 0.0
          %2875 = vmatprep.subr.mxu0 0.0
          %2876 = vmatpush1.msra.mxu0 0.0
          %2877 = vmatprep.subr.mxu0 0.0
          %2878 = vmatpush1.msra.mxu0 0.0
          %2879 = vmatprep.subr.mxu0 0.0
          %2880 = vmatpush1.msra.mxu0 0.0
          %2881 = vmatprep.subr.mxu0 0.0
          %2882 = vmatpush1.msra.mxu0 0.0
          %2883 = vmatprep.subr.mxu0 0.0
          %2884 = vmatpush1.msra.mxu0 0.0
          %2885 = vmatprep.subr.mxu0 0.0
          %2886 = vmatpush1.msra.mxu0 0.0
          %2887 = vmatprep.subr.mxu0 0.0
          %2888 = vmatpush1.msra.mxu0 0.0
          %2889 = vmatprep.subr.mxu0 0.0
          %2890 = vmatpush1.msra.mxu0 0.0
          %2891 = vmatprep.subr.mxu0 0.0
          %2892 = vmatpush1.msra.mxu0 0.0
          %2893 = vmatprep.subr.mxu0 0.0
          %2894 = vmatpush1.msra.mxu0 0.0
          %2895 = vmatprep.subr.mxu0 0.0
          %2896 = vmatpush1.msra.mxu0 0.0
          %2897 = vmatprep.subr.mxu0 0.0
          %2898 = vmatpush1.msra.mxu0 0.0
          %2899 = vmatprep.subr.mxu0 0.0
          %2900 = vmatpush1.msra.mxu0 0.0
          %2901 = vmatprep.subr.mxu0 0.0
          %2902 = vmatpush1.msra.mxu0 0.0
          %2903 = vmatprep.subr.mxu0 0.0
          %2904 = vmatpush1.msra.mxu0 0.0
          %2905 = vmatprep.mubr.f32.mxu0 0.0
          %2906 = vmatmul.mubr.f32.gmra.mrb[0].mxu0 %v1030
          %v2907 = vpop.f32.mrb[0].mxu0
          %v2908 = vadd.f32 0.0, %v2907
          %v2909 = vpop.f32.mrb[0].mxu0
          %2910 = vmatprep.mubr.f32.mxu0 0.0
          %2911 = vmatmul.mubr.f32.gmra.mrb[0].mxu0 %v1031
          %v2912 = vpop.f32.mrb[0].mxu0
          %v2913 = vadd.f32 0.0, %v2912
          %v2914 = vpop.f32.mrb[0].mxu0
          %2915 = vmatprep.mubr.f32.mxu0 0.0
          %2916 = vmatmul.mubr.f32.gmra.mrb[0].mxu0 %v1032
          %v2917 = vpop.f32.mrb[0].mxu0
          %v2918 = vadd.f32 0.0, %v2917
          %v2919 = vpop.f32.mrb[0].mxu0
          %2920 = vmatprep.mubr.f32.mxu0 0.0
          %2921 = vmatmul.mubr.f32.gmra.mrb[0].mxu0 %v1033
          %v2922 = vpop.f32.mrb[0].mxu0
          %v2923 = vadd.f32 0.0, %v2922
          %v2924 = vpop.f32.mrb[0].mxu0
          %2925 = vdwg.mxu0
          %s2926 = scalar_lea.vmem [#allocation2], 96
          %v2927 = vld [vmem:[%s2926] sm:$0xff]
          %v2928 = vld [vmem:[%s2926 + $0x8] sm:$0xff]
          %v2929 = vld [vmem:[%s2926 + $0x10] sm:$0xff]
          %v2930 = vld [vmem:[%s2926 + $0x18] sm:$0xff]
          %v2932 = vsel %vm1258, %v2927, 0
          %v2935 = vsel %vm1258, %v2928, 0
          %v2938 = vsel %vm1258, %v2929, 0
          %v2941 = vsel %vm1258, %v2930, 0
          %v2944 = vsel %vm1258, %v2806, 0
          %v2947 = vsel %vm1258, %v2811, 0
          %v2950 = vsel %vm1258, %v2816, 0
          %v2953 = vsel %vm1258, %v2821, 0
          %2955 = vmatprep.subr.mxu0 0.0
          %2956 = vmatpush1.xpose.msra.mxu0 %v2944
          %2957 = vmatprep.subr.mxu0 0.0
          %2958 = vmatpush1.xpose.msra.mxu0 %v2947
          %2959 = vmatprep.subr.mxu0 0.0
          %2960 = vmatpush1.xpose.msra.mxu0 %v2950
          %2961 = vmatprep.subr.mxu0 0.0
          %2962 = vmatpush1.xpose.msra.mxu0 %v2953
          %2963 = vmatprep.subr.mxu0 0.0
          %2964 = vmatpush1.xpose.msra.mxu0 0.0
          %2965 = vmatprep.subr.mxu0 0.0
          %2966 = vmatpush1.xpose.msra.mxu0 0.0
          %2967 = vmatprep.subr.mxu0 0.0
          %2968 = vmatpush1.xpose.msra.mxu0 0.0
          %2969 = vmatprep.subr.mxu0 0.0
          %2970 = vmatpush1.xpose.msra.mxu0 0.0
          %2971 = vmatprep.subr.mxu0 0.0
          %2972 = vmatpush1.xpose.msra.mxu0 0.0
          %2973 = vmatprep.subr.mxu0 0.0
          %2974 = vmatpush1.xpose.msra.mxu0 0.0
          %2975 = vmatprep.subr.mxu0 0.0
          %2976 = vmatpush1.xpose.msra.mxu0 0.0
          %2977 = vmatprep.subr.mxu0 0.0
          %2978 = vmatpush1.xpose.msra.mxu0 0.0
          %2979 = vmatprep.subr.mxu0 0.0
          %2980 = vmatpush1.xpose.msra.mxu0 0.0
          %2981 = vmatprep.subr.mxu0 0.0
          %2982 = vmatpush1.xpose.msra.mxu0 0.0
          %2983 = vmatprep.subr.mxu0 0.0
          %2984 = vmatpush1.xpose.msra.mxu0 0.0
          %2985 = vmatprep.subr.mxu0 0.0
          %2986 = vmatpush1.xpose.msra.mxu0 0.0
          %2987 = vmatprep.subr.mxu0 0.0
          %2988 = vmatpush1.xpose.msra.mxu0 0.0
          %2989 = vmatprep.subr.mxu0 0.0
          %2990 = vmatpush1.xpose.msra.mxu0 0.0
          %2991 = vmatprep.subr.mxu0 0.0
          %2992 = vmatpush1.xpose.msra.mxu0 0.0
          %2993 = vmatprep.subr.mxu0 0.0
          %2994 = vmatpush1.xpose.msra.mxu0 0.0
          %2995 = vmatprep.subr.mxu0 0.0
          %2996 = vmatpush1.xpose.msra.mxu0 0.0
          %2997 = vmatprep.subr.mxu0 0.0
          %2998 = vmatpush1.xpose.msra.mxu0 0.0
          %2999 = vmatprep.subr.mxu0 0.0
          %3000 = vmatpush1.xpose.msra.mxu0 0.0
          %3001 = vmatprep.subr.mxu0 0.0
          %3002 = vmatpush1.xpose.msra.mxu0 0.0
          %3003 = vmatprep.subr.mxu0 0.0
          %3004 = vmatpush1.xpose.msra.mxu0 0.0
          %3005 = vmatprep.subr.mxu0 0.0
          %3006 = vmatpush1.xpose.msra.mxu0 0.0
          %3007 = vmatprep.subr.mxu0 0.0
          %3008 = vmatpush1.xpose.msra.mxu0 0.0
          %3009 = vmatprep.subr.mxu0 0.0
          %3010 = vmatpush1.xpose.msra.mxu0 0.0
          %3011 = vmatprep.subr.mxu0 0.0
          %3012 = vmatpush1.xpose.msra.mxu0 0.0
          %3013 = vmatprep.subr.mxu0 0.0
          %3014 = vmatpush1.xpose.msra.mxu0 0.0
          %3015 = vmatprep.subr.mxu0 0.0
          %3016 = vmatpush1.xpose.msra.mxu0 0.0
          %3017 = vmatprep.subr.mxu0 0.0
          %3018 = vmatpush1.xpose.msra.mxu0 0.0
          %3019 = vmatprep.mubr.f32.mxu0 0.0
          %3020 = vmatmul.mubr.f32.gmra.mrb[0].mxu0 %v2932
          %v3021 = vpop.f32.mrb[0].mxu0
          %v3022 = vadd.f32 0.0, %v3021
          %v3023 = vpop.f32.mrb[0].mxu0
          %3024 = vmatprep.mubr.f32.mxu0 0.0
          %3025 = vmatmul.mubr.f32.gmra.mrb[0].mxu0 %v2935
          %v3026 = vpop.f32.mrb[0].mxu0
          %v3027 = vadd.f32 0.0, %v3026
          %v3028 = vpop.f32.mrb[0].mxu0
          %3029 = vmatprep.mubr.f32.mxu0 0.0
          %3030 = vmatmul.mubr.f32.gmra.mrb[0].mxu0 %v2938
          %v3031 = vpop.f32.mrb[0].mxu0
          %v3032 = vadd.f32 0.0, %v3031
          %v3033 = vpop.f32.mrb[0].mxu0
          %3034 = vmatprep.mubr.f32.mxu0 0.0
          %3035 = vmatmul.mubr.f32.gmra.mrb[0].mxu0 %v2941
          %v3036 = vpop.f32.mrb[0].mxu0
          %v3037 = vadd.f32 0.0, %v3036
          %v3038 = vpop.f32.mrb[0].mxu0
          %3039 = vdwg.mxu0
          %v3040 = vmul.f32 %v3022, 0.17677669
          %v3041 = vmul.f32 %v3027, 0.17677669
          %v3042 = vmul.f32 %v3032, 0.17677669
          %v3043 = vmul.f32 %v3037, 0.17677669
          %v3044 = vsel %vm1048, -1e+30, %v3040
          %v3045 = vsel %vm1049, -1e+30, %v3041
          %v3046 = vsel %vm1050, -1e+30, %v3042
          %v3047 = vsel %vm1051, -1e+30, %v3043
          %s3048 = scalar_lea.vmem [#allocation3], 96
          %v3049 = vld [vmem:[%s3048] sm:$0xff]
          %v3050 = vld [vmem:[%s3048 + $0x8] sm:$0xff]
          %v3051 = vld [vmem:[%s3048 + $0x10] sm:$0xff]
          %v3052 = vld [vmem:[%s3048 + $0x18] sm:$0xff]
          %v3053 = vsel %vm1258, %v3044, -inf
          %3054 = vmax.xlane.f32.xlu0 %v3053
          %v3055 = vpop.xlane.xlu0 %3054
          %v3056 = vsel %vm1258, %v3045, -inf
          %3057 = vmax.xlane.f32.xlu0 %v3056
          %v3058 = vpop.xlane.xlu0 %3057
          %v3059 = vsel %vm1258, %v3046, -inf
          %3060 = vmax.xlane.f32.xlu0 %v3059
          %v3061 = vpop.xlane.xlu0 %3060
          %v3062 = vsel %vm1258, %v3047, -inf
          %3063 = vmax.xlane.f32.xlu0 %v3062
          %v3064 = vpop.xlane.xlu0 %3063
          %v3065 = vmax.f32 %v3049, %v3055
          %v3066 = vmax.f32 %v3050, %v3058
          %v3067 = vmax.f32 %v3051, %v3061
          %v3068 = vmax.f32 %v3052, %v3064
          %v3069 = vsub.f32 %v3049, %v3065
          %v3070 = vsub.f32 %v3050, %v3066
          %v3071 = vsub.f32 %v3051, %v3067
          %v3072 = vsub.f32 %v3052, %v3068
          %v3073 = vmul.f32 %v3069, 1.442695
          %v3074 = vpow.pop %v3073
          %v3075 = vmul.f32 %v3070, 1.442695
          %v3076 = vpow.pop %v3075
          %v3077 = vmul.f32 %v3071, 1.442695
          %v3078 = vpow.pop %v3077
          %v3079 = vmul.f32 %v3072, 1.442695
          %v3080 = vpow.pop %v3079
          %3082 = vset.pattern.permute.xlu0 0
          %3083 = vperm.xlu0 %3082, %v3065
          %v3084 = vpop.permute.xlu0 %3083
          %3087 = vset.pattern.permute.xlu0 0
          %3088 = vperm.xlu0 %3087, %v3066
          %v3089 = vpop.permute.xlu0 %3088
          %3092 = vset.pattern.permute.xlu0 0
          %3093 = vperm.xlu0 %3092, %v3067
          %v3094 = vpop.permute.xlu0 %3093
          %3097 = vset.pattern.permute.xlu0 0
          %3098 = vperm.xlu0 %3097, %v3068
          %v3099 = vpop.permute.xlu0 %3098
          %v3101 = vsub.f32 %v3044, %v3084
          %v3102 = vsub.f32 %v3045, %v3089
          %v3103 = vsub.f32 %v3046, %v3094
          %v3104 = vsub.f32 %v3047, %v3099
          %v3105 = vmul.f32 %v3101, 1.442695
          %v3106 = vpow.pop %v3105
          %v3107 = vmul.f32 %v3102, 1.442695
          %v3108 = vpow.pop %v3107
          %v3109 = vmul.f32 %v3103, 1.442695
          %v3110 = vpow.pop %v3109
          %v3111 = vmul.f32 %v3104, 1.442695
          %v3112 = vpow.pop %v3111
          %s3113 = scalar_lea.vmem [#allocation4], 96
          %v3114 = vld [vmem:[%s3113] sm:$0xff]
          %v3115 = vld [vmem:[%s3113 + $0x8] sm:$0xff]
          %v3116 = vld [vmem:[%s3113 + $0x10] sm:$0xff]
          %v3117 = vld [vmem:[%s3113 + $0x18] sm:$0xff]
          %v3118 = vmul.f32 %v3074, %v3114
          %v3119 = vmul.f32 %v3076, %v3115
          %v3120 = vmul.f32 %v3078, %v3116
          %v3121 = vmul.f32 %v3080, %v3117
          %v3122 = vsel %vm1258, %v3106, 0.0
          %3123 = vadd.xlane.f32.xlu0 %v3122
          %v3124 = vpop.xlane.xlu0 %3123
          %v3125 = vsel %vm1258, %v3108, 0.0
          %3126 = vadd.xlane.f32.xlu0 %v3125
          %v3127 = vpop.xlane.xlu0 %3126
          %v3128 = vsel %vm1258, %v3110, 0.0
          %3129 = vadd.xlane.f32.xlu0 %v3128
          %v3130 = vpop.xlane.xlu0 %3129
          %v3131 = vsel %vm1258, %v3112, 0.0
          %3132 = vadd.xlane.f32.xlu0 %v3131
          %v3133 = vpop.xlane.xlu0 %3132
          %v3134 = vadd.f32 %v3118, %v3124
          %v3135 = vadd.f32 %v3119, %v3127
          %v3136 = vadd.f32 %v3120, %v3130
          %v3137 = vadd.f32 %v3121, %v3133
          %3138 = vst.msk [vmem:[%s3113] sm:$0xff] %vm1464, %v3134
          %3139 = vst.msk [vmem:[%s3113 + $0x8] sm:$0xff] %vm1464, %v3135
          %3140 = vst.msk [vmem:[%s3113 + $0x10] sm:$0xff] %vm1464, %v3136
          %3141 = vst.msk [vmem:[%s3113 + $0x18] sm:$0xff] %vm1464, %v3137
          %s3142 = scalar_lea.vmem [#allocation5], 96
          %v3143 = vld [vmem:[%s3142] sm:$0xff]
          %v3144 = vld [vmem:[%s3142 + $0x8] sm:$0xff]
          %v3145 = vld [vmem:[%s3142 + $0x10] sm:$0xff]
          %v3146 = vld [vmem:[%s3142 + $0x18] sm:$0xff]
          %3148 = vset.pattern.permute.xlu0 0
          %3149 = vperm.xlu0 %3148, %v3074
          %v3150 = vpop.permute.xlu0 %3149
          %3153 = vset.pattern.permute.xlu0 0
          %3154 = vperm.xlu0 %3153, %v3076
          %v3155 = vpop.permute.xlu0 %3154
          %3158 = vset.pattern.permute.xlu0 0
          %3159 = vperm.xlu0 %3158, %v3078
          %v3160 = vpop.permute.xlu0 %3159
          %3163 = vset.pattern.permute.xlu0 0
          %3164 = vperm.xlu0 %3163, %v3080
          %v3165 = vpop.permute.xlu0 %3164
          %v3167 = vmul.f32 %v3150, %v3143
          %v3168 = vmul.f32 %v3155, %v3144
          %v3169 = vmul.f32 %v3160, %v3145
          %v3170 = vmul.f32 %v3165, %v3146
          %v3172 = vsel %vm1258, %v3106, 0
          %v3175 = vsel %vm1258, %v3108, 0
          %v3178 = vsel %vm1258, %v3110, 0
          %v3181 = vsel %vm1258, %v3112, 0
          %3183 = vmatprep.subr.mxu0 0.0
          %3184 = vmatpush1.msra.mxu0 %v2908
          %3185 = vmatprep.subr.mxu0 0.0
          %3186 = vmatpush1.msra.mxu0 %v2913
          %3187 = vmatprep.subr.mxu0 0.0
          %3188 = vmatpush1.msra.mxu0 %v2918
          %3189 = vmatprep.subr.mxu0 0.0
          %3190 = vmatpush1.msra.mxu0 %v2923
          %3191 = vmatprep.subr.mxu0 0.0
          %3192 = vmatpush1.msra.mxu0 0.0
          %3193 = vmatprep.subr.mxu0 0.0
          %3194 = vmatpush1.msra.mxu0 0.0
          %3195 = vmatprep.subr.mxu0 0.0
          %3196 = vmatpush1.msra.mxu0 0.0
          %3197 = vmatprep.subr.mxu0 0.0
          %3198 = vmatpush1.msra.mxu0 0.0
          %3199 = vmatprep.subr.mxu0 0.0
          %3200 = vmatpush1.msra.mxu0 0.0
          %3201 = vmatprep.subr.mxu0 0.0
          %3202 = vmatpush1.msra.mxu0 0.0
          %3203 = vmatprep.subr.mxu0 0.0
          %3204 = vmatpush1.msra.mxu0 0.0
          %3205 = vmatprep.subr.mxu0 0.0
          %3206 = vmatpush1.msra.mxu0 0.0
          %3207 = vmatprep.subr.mxu0 0.0
          %3208 = vmatpush1.msra.mxu0 0.0
          %3209 = vmatprep.subr.mxu0 0.0
          %3210 = vmatpush1.msra.mxu0 0.0
          %3211 = vmatprep.subr.mxu0 0.0
          %3212 = vmatpush1.msra.mxu0 0.0
          %3213 = vmatprep.subr.mxu0 0.0
          %3214 = vmatpush1.msra.mxu0 0.0
          %3215 = vmatprep.subr.mxu0 0.0
          %3216 = vmatpush1.msra.mxu0 0.0
          %3217 = vmatprep.subr.mxu0 0.0
          %3218 = vmatpush1.msra.mxu0 0.0
          %3219 = vmatprep.subr.mxu0 0.0
          %3220 = vmatpush1.msra.mxu0 0.0
          %3221 = vmatprep.subr.mxu0 0.0
          %3222 = vmatpush1.msra.mxu0 0.0
          %3223 = vmatprep.subr.mxu0 0.0
          %3224 = vmatpush1.msra.mxu0 0.0
          %3225 = vmatprep.subr.mxu0 0.0
          %3226 = vmatpush1.msra.mxu0 0.0
          %3227 = vmatprep.subr.mxu0 0.0
          %3228 = vmatpush1.msra.mxu0 0.0
          %3229 = vmatprep.subr.mxu0 0.0
          %3230 = vmatpush1.msra.mxu0 0.0
          %3231 = vmatprep.subr.mxu0 0.0
          %3232 = vmatpush1.msra.mxu0 0.0
          %3233 = vmatprep.subr.mxu0 0.0
          %3234 = vmatpush1.msra.mxu0 0.0
          %3235 = vmatprep.subr.mxu0 0.0
          %3236 = vmatpush1.msra.mxu0 0.0
          %3237 = vmatprep.subr.mxu0 0.0
          %3238 = vmatpush1.msra.mxu0 0.0
          %3239 = vmatprep.subr.mxu0 0.0
          %3240 = vmatpush1.msra.mxu0 0.0
          %3241 = vmatprep.subr.mxu0 0.0
          %3242 = vmatpush1.msra.mxu0 0.0
          %3243 = vmatprep.subr.mxu0 0.0
          %3244 = vmatpush1.msra.mxu0 0.0
          %3245 = vmatprep.subr.mxu0 0.0
          %3246 = vmatpush1.msra.mxu0 0.0
          %3247 = vmatprep.mubr.f32.mxu0 0.0
          %3248 = vmatmul.mubr.f32.gmra.mrb[0].mxu0 %v3172
          %v3249 = vpop.f32.mrb[0].mxu0
          %v3250 = vadd.f32 0.0, %v3249
          %v3251 = vpop.f32.mrb[0].mxu0
          %3252 = vmatprep.mubr.f32.mxu0 0.0
          %3253 = vmatmul.mubr.f32.gmra.mrb[0].mxu0 %v3175
          %v3254 = vpop.f32.mrb[0].mxu0
          %v3255 = vadd.f32 0.0, %v3254
          %v3256 = vpop.f32.mrb[0].mxu0
          %3257 = vmatprep.mubr.f32.mxu0 0.0
          %3258 = vmatmul.mubr.f32.gmra.mrb[0].mxu0 %v3178
          %v3259 = vpop.f32.mrb[0].mxu0
          %v3260 = vadd.f32 0.0, %v3259
          %v3261 = vpop.f32.mrb[0].mxu0
          %3262 = vmatprep.mubr.f32.mxu0 0.0
          %3263 = vmatmul.mubr.f32.gmra.mrb[0].mxu0 %v3181
          %v3264 = vpop.f32.mrb[0].mxu0
          %v3265 = vadd.f32 0.0, %v3264
          %v3266 = vpop.f32.mrb[0].mxu0
          %3267 = vdwg.mxu0
          %v3268 = vadd.f32 %v3167, %v3250
          %v3269 = vadd.f32 %v3168, %v3255
          %v3270 = vadd.f32 %v3169, %v3260
          %v3271 = vadd.f32 %v3170, %v3265
          %3272 = vst.msk [vmem:[%s3142] sm:$0xff] %vm1258, %v3268
          %3273 = vst.msk [vmem:[%s3142 + $0x8] sm:$0xff] %vm1258, %v3269
          %3274 = vst.msk [vmem:[%s3142 + $0x10] sm:$0xff] %vm1258, %v3270
          %3275 = vst.msk [vmem:[%s3142 + $0x18] sm:$0xff] %vm1258, %v3271
          %3276 = vst.msk [vmem:[%s3048] sm:$0xff] %vm1464, %v3065
          %3277 = vst.msk [vmem:[%s3048 + $0x8] sm:$0xff] %vm1464, %v3066
          %3278 = vst.msk [vmem:[%s3048 + $0x10] sm:$0xff] %vm1464, %v3067
          %3279 = vst.msk [vmem:[%s3048 + $0x18] sm:$0xff] %vm1464, %v3068
        $region64: #{tpu_custom_call.1} parent=55 // pred_fallthru
          _
        %p3280 = scmp.eq.s32.totalorder %s30, 1
        // Predicated region
        $region65: #{tpu_custom_call.1} parent=55 // pred_check
          %p3281 = pneg %p3280
        $region66: #{tpu_custom_call.1} parent=55 // pred_check_branch
          %3283 = sbr.rel (%p3281) target = $region68
        $region67: #{tpu_custom_call.1} parent=55 // pred_region
          %v3284 = vld [vmem:[#allocation4] sm:$0xff]
          %v3285 = vld [vmem:[#allocation4 + $0x8] sm:$0xff]
          %v3286 = vld [vmem:[#allocation4 + $0x10] sm:$0xff]
          %v3287 = vld [vmem:[#allocation4 + $0x18] sm:$0xff]
          %v3288 = vrcp.pop %v3284
          %v3289 = vrcp.pop %v3285
          %v3290 = vrcp.pop %v3286
          %v3291 = vrcp.pop %v3287
          %v3292 = vld [vmem:[#allocation5] sm:$0xff]
          %v3293 = vld [vmem:[#allocation5 + $0x8] sm:$0xff]
          %v3294 = vld [vmem:[#allocation5 + $0x10] sm:$0xff]
          %v3295 = vld [vmem:[#allocation5 + $0x18] sm:$0xff]
          %3297 = vset.pattern.permute.xlu0 0
          %3298 = vperm.xlu0 %3297, %v3288
          %v3299 = vpop.permute.xlu0 %3298
          %3302 = vset.pattern.permute.xlu0 0
          %3303 = vperm.xlu0 %3302, %v3289
          %v3304 = vpop.permute.xlu0 %3303
          %3307 = vset.pattern.permute.xlu0 0
          %3308 = vperm.xlu0 %3307, %v3290
          %v3309 = vpop.permute.xlu0 %3308
          %3312 = vset.pattern.permute.xlu0 0
          %3313 = vperm.xlu0 %3312, %v3291
          %v3314 = vpop.permute.xlu0 %3313
          %v3316 = vmul.f32 %v3292, %v3299
          %v3317 = vmul.f32 %v3293, %v3304
          %v3318 = vmul.f32 %v3294, %v3309
          %v3319 = vmul.f32 %v3295, %v3314
          %s3320 = scalar_lea.vmem [#allocation4], 32
          %v3321 = vld [vmem:[%s3320] sm:$0xff]
          %v3322 = vld [vmem:[%s3320 + $0x8] sm:$0xff]
          %v3323 = vld [vmem:[%s3320 + $0x10] sm:$0xff]
          %v3324 = vld [vmem:[%s3320 + $0x18] sm:$0xff]
          %v3325 = vrcp.pop %v3321
          %v3326 = vrcp.pop %v3322
          %v3327 = vrcp.pop %v3323
          %v3328 = vrcp.pop %v3324
          %s3329 = scalar_lea.vmem [#allocation5], 32
          %v3330 = vld [vmem:[%s3329] sm:$0xff]
          %v3331 = vld [vmem:[%s3329 + $0x8] sm:$0xff]
          %v3332 = vld [vmem:[%s3329 + $0x10] sm:$0xff]
          %v3333 = vld [vmem:[%s3329 + $0x18] sm:$0xff]
          %3335 = vset.pattern.permute.xlu0 0
          %3336 = vperm.xlu0 %3335, %v3325
          %v3337 = vpop.permute.xlu0 %3336
          %3340 = vset.pattern.permute.xlu0 0
          %3341 = vperm.xlu0 %3340, %v3326
          %v3342 = vpop.permute.xlu0 %3341
          %3345 = vset.pattern.permute.xlu0 0
          %3346 = vperm.xlu0 %3345, %v3327
          %v3347 = vpop.permute.xlu0 %3346
          %3350 = vset.pattern.permute.xlu0 0
          %3351 = vperm.xlu0 %3350, %v3328
          %v3352 = vpop.permute.xlu0 %3351
          %v3354 = vmul.f32 %v3330, %v3337
          %v3355 = vmul.f32 %v3331, %v3342
          %v3356 = vmul.f32 %v3332, %v3347
          %v3357 = vmul.f32 %v3333, %v3352
          %s3358 = scalar_lea.vmem [#allocation4], 64
          %v3359 = vld [vmem:[%s3358] sm:$0xff]
          %v3360 = vld [vmem:[%s3358 + $0x8] sm:$0xff]
          %v3361 = vld [vmem:[%s3358 + $0x10] sm:$0xff]
          %v3362 = vld [vmem:[%s3358 + $0x18] sm:$0xff]
          %v3363 = vrcp.pop %v3359
          %v3364 = vrcp.pop %v3360
          %v3365 = vrcp.pop %v3361
          %v3366 = vrcp.pop %v3362
          %s3367 = scalar_lea.vmem [#allocation5], 64
          %v3368 = vld [vmem:[%s3367] sm:$0xff]
          %v3369 = vld [vmem:[%s3367 + $0x8] sm:$0xff]
          %v3370 = vld [vmem:[%s3367 + $0x10] sm:$0xff]
          %v3371 = vld [vmem:[%s3367 + $0x18] sm:$0xff]
          %3373 = vset.pattern.permute.xlu0 0
          %3374 = vperm.xlu0 %3373, %v3363
          %v3375 = vpop.permute.xlu0 %3374
          %3378 = vset.pattern.permute.xlu0 0
          %3379 = vperm.xlu0 %3378, %v3364
          %v3380 = vpop.permute.xlu0 %3379
          %3383 = vset.pattern.permute.xlu0 0
          %3384 = vperm.xlu0 %3383, %v3365
          %v3385 = vpop.permute.xlu0 %3384
          %3388 = vset.pattern.permute.xlu0 0
          %3389 = vperm.xlu0 %3388, %v3366
          %v3390 = vpop.permute.xlu0 %3389
          %v3392 = vmul.f32 %v3368, %v3375
          %v3393 = vmul.f32 %v3369, %v3380
          %v3394 = vmul.f32 %v3370, %v3385
          %v3395 = vmul.f32 %v3371, %v3390
          %s3396 = scalar_lea.vmem [#allocation4], 96
          %v3397 = vld [vmem:[%s3396] sm:$0xff]
          %v3398 = vld [vmem:[%s3396 + $0x8] sm:$0xff]
          %v3399 = vld [vmem:[%s3396 + $0x10] sm:$0xff]
          %v3400 = vld [vmem:[%s3396 + $0x18] sm:$0xff]
          %v3401 = vrcp.pop %v3397
          %v3402 = vrcp.pop %v3398
          %v3403 = vrcp.pop %v3399
          %v3404 = vrcp.pop %v3400
          %s3405 = scalar_lea.vmem [#allocation5], 96
          %v3406 = vld [vmem:[%s3405] sm:$0xff]
          %v3407 = vld [vmem:[%s3405 + $0x8] sm:$0xff]
          %v3408 = vld [vmem:[%s3405 + $0x10] sm:$0xff]
          %v3409 = vld [vmem:[%s3405 + $0x18] sm:$0xff]
          %3411 = vset.pattern.permute.xlu0 0
          %3412 = vperm.xlu0 %3411, %v3401
          %v3413 = vpop.permute.xlu0 %3412
          %3416 = vset.pattern.permute.xlu0 0
          %3417 = vperm.xlu0 %3416, %v3402
          %v3418 = vpop.permute.xlu0 %3417
          %3421 = vset.pattern.permute.xlu0 0
          %3422 = vperm.xlu0 %3421, %v3403
          %v3423 = vpop.permute.xlu0 %3422
          %3426 = vset.pattern.permute.xlu0 0
          %3427 = vperm.xlu0 %3426, %v3404
          %v3428 = vpop.permute.xlu0 %3427
          %v3430 = vmul.f32 %v3406, %v3413
          %v3431 = vmul.f32 %v3407, %v3418
          %v3432 = vmul.f32 %v3408, %v3423
          %v3433 = vmul.f32 %v3409, %v3428
          %3438 = vrot.lane.b32.xlu0 %v3354, 32
          %v3439 = vpop.permute.xlu0 %3438
          %3440 = vrot.lane.b32.xlu0 %v3355, 32
          %v3441 = vpop.permute.xlu0 %3440
          %3442 = vrot.lane.b32.xlu0 %v3356, 32
          %v3443 = vpop.permute.xlu0 %3442
          %3444 = vrot.lane.b32.xlu0 %v3357, 32
          %v3445 = vpop.permute.xlu0 %3444
          %3454 = vrot.lane.b32.xlu0 %v3392, 64
          %v3455 = vpop.permute.xlu0 %3454
          %3456 = vrot.lane.b32.xlu0 %v3393, 64
          %v3457 = vpop.permute.xlu0 %3456
          %3458 = vrot.lane.b32.xlu0 %v3394, 64
          %v3459 = vpop.permute.xlu0 %3458
          %3460 = vrot.lane.b32.xlu0 %v3395, 64
          %v3461 = vpop.permute.xlu0 %3460
          %3470 = vrot.lane.b32.xlu0 %v3430, 96
          %v3471 = vpop.permute.xlu0 %3470
          %3472 = vrot.lane.b32.xlu0 %v3431, 96
          %v3473 = vpop.permute.xlu0 %3472
          %3474 = vrot.lane.b32.xlu0 %v3432, 96
          %v3475 = vpop.permute.xlu0 %3474
          %3476 = vrot.lane.b32.xlu0 %v3433, 96
          %v3477 = vpop.permute.xlu0 %3476
          %vm3482 = vcmask 261120
          %v3483 = vsel %vm3482, %v3316, %v3439
          %v3484 = vsel %vm3482, %v3317, %v3441
          %v3485 = vsel %vm3482, %v3318, %v3443
          %v3486 = vsel %vm3482, %v3319, %v3445
          %vm3487 = vcmask 523264
          %v3488 = vsel %vm3487, %v3483, %v3455
          %v3489 = vsel %vm3487, %v3484, %v3457
          %v3490 = vsel %vm3487, %v3485, %v3459
          %v3491 = vsel %vm3487, %v3486, %v3461
          %vm3492 = vcmask 785408
          %v3493 = vsel %vm3492, %v3488, %v3471
          %v3494 = vsel %vm3492, %v3489, %v3473
          %v3495 = vsel %vm3492, %v3490, %v3475
          %v3496 = vsel %vm3492, %v3491, %v3477
          %v3497 = vld [vmem:[%s7] sm:$0xff]
          %v3498 = vld [vmem:[%s7 + $0x8] sm:$0xff]
          %v3499 = vld [vmem:[%s7 + $0x10] sm:$0xff]
          %v3500 = vld [vmem:[%s7 + $0x18] sm:$0xff]
          %v3501 = vld [vmem:[%s7 + $0x20] sm:$0xff]
          %v3502 = vld [vmem:[%s7 + $0x28] sm:$0xff]
          %v3503 = vld [vmem:[%s7 + $0x30] sm:$0xff]
          %v3504 = vld [vmem:[%s7 + $0x38] sm:$0xff]
          %v3505 = vld [vmem:[%s7 + $0x40] sm:$0xff]
          %v3506 = vld [vmem:[%s7 + $0x48] sm:$0xff]
          %v3507 = vld [vmem:[%s7 + $0x50] sm:$0xff]
          %v3508 = vld [vmem:[%s7 + $0x58] sm:$0xff]
          %v3509 = vld [vmem:[%s7 + $0x60] sm:$0xff]
          %v3510 = vld [vmem:[%s7 + $0x68] sm:$0xff]
          %v3511 = vld [vmem:[%s7 + $0x70] sm:$0xff]
          %v3512 = vld [vmem:[%s7 + $0x78] sm:$0xff]
          %v3513 = vld [vmem:[%s8] sm:$0x1]
          %v3515 = vlaneseq
          %v3516 = vshrl.u32 %v3515, 7
          %v3517 = vsub.s32 0, %v3516
          %v3518 = vrot.slane %v3513, %v3517
          %3520 = vmatprep.subr.mxu0 0.0
          %3521 = vmatpush1.msra.mxu0 %v3497
          %3522 = vmatprep.subr.mxu0 0.0
          %3523 = vmatpush1.msra.mxu0 %v3498
          %3524 = vmatprep.subr.mxu0 0.0
          %3525 = vmatpush1.msra.mxu0 %v3499
          %3526 = vmatprep.subr.mxu0 0.0
          %3527 = vmatpush1.msra.mxu0 %v3500
          %3528 = vmatprep.subr.mxu0 0.0
          %3529 = vmatpush1.msra.mxu0 %v3501
          %3530 = vmatprep.subr.mxu0 0.0
          %3531 = vmatpush1.msra.mxu0 %v3502
          %3532 = vmatprep.subr.mxu0 0.0
          %3533 = vmatpush1.msra.mxu0 %v3503
          %3534 = vmatprep.subr.mxu0 0.0
          %3535 = vmatpush1.msra.mxu0 %v3504
          %3536 = vmatprep.subr.mxu0 0.0
          %3537 = vmatpush1.msra.mxu0 %v3505
          %3538 = vmatprep.subr.mxu0 0.0
          %3539 = vmatpush1.msra.mxu0 %v3506
          %3540 = vmatprep.subr.mxu0 0.0
          %3541 = vmatpush1.msra.mxu0 %v3507
          %3542 = vmatprep.subr.mxu0 0.0
          %3543 = vmatpush1.msra.mxu0 %v3508
          %3544 = vmatprep.subr.mxu0 0.0
          %3545 = vmatpush1.msra.mxu0 %v3509
          %3546 = vmatprep.subr.mxu0 0.0
          %3547 = vmatpush1.msra.mxu0 %v3510
          %3548 = vmatprep.subr.mxu0 0.0
          %3549 = vmatpush1.msra.mxu0 %v3511
          %3550 = vmatprep.subr.mxu0 0.0
          %3551 = vmatpush1.msra.mxu0 %v3512
          %3552 = vmatprep.subr.mxu0 0.0
          %3553 = vmatpush1.msra.mxu0 0.0
          %3554 = vmatprep.subr.mxu0 0.0
          %3555 = vmatpush1.msra.mxu0 0.0
          %3556 = vmatprep.subr.mxu0 0.0
          %3557 = vmatpush1.msra.mxu0 0.0
          %3558 = vmatprep.subr.mxu0 0.0
          %3559 = vmatpush1.msra.mxu0 0.0
          %3560 = vmatprep.subr.mxu0 0.0
          %3561 = vmatpush1.msra.mxu0 0.0
          %3562 = vmatprep.subr.mxu0 0.0
          %3563 = vmatpush1.msra.mxu0 0.0
          %3564 = vmatprep.subr.mxu0 0.0
          %3565 = vmatpush1.msra.mxu0 0.0
          %3566 = vmatprep.subr.mxu0 0.0
          %3567 = vmatpush1.msra.mxu0 0.0
          %3568 = vmatprep.subr.mxu0 0.0
          %3569 = vmatpush1.msra.mxu0 0.0
          %3570 = vmatprep.subr.mxu0 0.0
          %3571 = vmatpush1.msra.mxu0 0.0
          %3572 = vmatprep.subr.mxu0 0.0
          %3573 = vmatpush1.msra.mxu0 0.0
          %3574 = vmatprep.subr.mxu0 0.0
          %3575 = vmatpush1.msra.mxu0 0.0
          %3576 = vmatprep.subr.mxu0 0.0
          %3577 = vmatpush1.msra.mxu0 0.0
          %3578 = vmatprep.subr.mxu0 0.0
          %3579 = vmatpush1.msra.mxu0 0.0
          %3580 = vmatprep.subr.mxu0 0.0
          %3581 = vmatpush1.msra.mxu0 0.0
          %3582 = vmatprep.subr.mxu0 0.0
          %3583 = vmatpush1.msra.mxu0 0.0
          %3584 = vmatprep.mubr.f32.mxu0 0.0
          %3585 = vmatmul.mubr.f32.gmra.mrb[0].mxu0 %v3493
          %v3586 = vpop.f32.mrb[0].mxu0
          %v3587 = vadd.f32 %v3518, %v3586
          %v3588 = vpop.f32.mrb[0].mxu0
          %3589 = vmatprep.mubr.f32.mxu0 0.0
          %3590 = vmatmul.mubr.f32.gmra.mrb[0].mxu0 %v3494
          %v3591 = vpop.f32.mrb[0].mxu0
          %v3592 = vadd.f32 %v3518, %v3591
          %v3593 = vpop.f32.mrb[0].mxu0
          %3594 = vmatprep.mubr.f32.mxu0 0.0
          %3595 = vmatmul.mubr.f32.gmra.mrb[0].mxu0 %v3495
          %v3596 = vpop.f32.mrb[0].mxu0
          %v3597 = vadd.f32 %v3518, %v3596
          %v3598 = vpop.f32.mrb[0].mxu0
          %3599 = vmatprep.mubr.f32.mxu0 0.0
          %3600 = vmatmul.mubr.f32.gmra.mrb[0].mxu0 %v3496
          %v3601 = vpop.f32.mrb[0].mxu0
          %v3602 = vadd.f32 %v3518, %v3601
          %v3603 = vpop.f32.mrb[0].mxu0
          %3604 = vdwg.mxu0
          %v3605 = vld [vmem:[%s392] sm:$0xff]
          %v3606 = vld [vmem:[%s392 + $0x8] sm:$0xff]
          %v3607 = vld [vmem:[%s392 + $0x10] sm:$0xff]
          %v3608 = vld [vmem:[%s392 + $0x18] sm:$0xff]
          %v3609 = vadd.f32 %v3587, %v3605
          %v3610 = vadd.f32 %v3592, %v3606
          %v3611 = vadd.f32 %v3597, %v3607
          %v3612 = vadd.f32 %v3602, %v3608
          %3613 = vst [vmem:[%s383] sm:$0xff] %v3609
          %3614 = vst [vmem:[%s383 + $0x8] sm:$0xff] %v3610
          %3615 = vst [vmem:[%s383 + $0x10] sm:$0xff] %v3611
          %3616 = vst [vmem:[%s383 + $0x18] sm:$0xff] %v3612
        $region68: #{tpu_custom_call.1} parent=55 // pred_fallthru
          _
        %s3617 = sand.u32 %s255, 1
        %s3618 = scalar_lea.sflag [#allocation7], %s3617
        %s3619 = sand.u32 %s255, 1
        %s3620 = smul.addr %s3619, 32
        %s3621 = scalar_lea.vmem [#allocation6], %s3620
        // Predicated region
        $region69: #{tpu_custom_call.1} parent=55 // pred_check
          %p3622 = pneg %p265
        $region70: #{tpu_custom_call.1} parent=55 // pred_check_branch
          %3624 = sbr.rel (%p3622) target = $region72
        $region71: #{tpu_custom_call.1} parent=55 // pred_region
          %s3625 = smul.u32 4, %s29
          %s3627 = ssub.s32 512, 512
          %3628 = vsyncadd %s3618, %s3627
          %s3629 = smul.addr %s28, 8
          %s3630 = sadd.s32 %s3625, %s3629
          %s3631 = smul.addr %s3630, 128
          %s3632 = scalar_lea.hbm %s9, %s3631
          %s3633 = sshll.u32 %s3621, 4
          %s3634 = int_to_ptr.vmem [resolvable:$true] %s3633
          %3639 = dma.vmem_to_hbm [thread:$0]  %s3634, 512, %s3632, %s3618, 128, 128, 8
        $region72: #{tpu_custom_call.1} parent=55 // pred_fallthru
          _
      $region56: #{tpu_custom_call.1} parent=5 // pred_fallthru
        _
      %p3640 = scmp.le.s32.totalorder 2, %s18
      // Predicated region
      $region73: #{tpu_custom_call.1} parent=5 // pred_check
        %p3641 = pneg %p3640
      $region74: #{tpu_custom_call.1} parent=5 // pred_check_branch
        %3643 = sbr.rel (%p3641) target = $region76
      $region75: #{tpu_custom_call.1} parent=5 // pred_region
        %s3644 = ssub.s32 %s18, 2
        // Predicated region
        $region77: #{tpu_custom_call.1} parent=75 // pred_check
          %p3645 = pneg %p271
        $region78: #{tpu_custom_call.1} parent=75 // pred_check_branch
          %3647 = sbr.rel (%p3645) target = $region80
        $region79: #{tpu_custom_call.1} parent=75 // pred_region
          %s3648 = sand.u32 %s256, 1
          %s3649 = scalar_lea.sflag [#allocation7], %s3648
          %s3650 = sand.u32 %s256, 1
          %s3651 = smul.addr %s3650, 32
          %s3652 = scalar_lea.vmem [#allocation6], %s3651
          %3653 = dma.done %s3649, 512
        $region80: #{tpu_custom_call.1} parent=75 // pred_fallthru
          _
      $region76: #{tpu_custom_call.1} parent=5 // pred_fallthru
        _
    $region6: #{tpu_custom_call.1} parent=1 // loop_footer
      %s22 = sadd.s32 1, %s18
    $region7: #{tpu_custom_call.1} parent=1 // loop_footer_branch
      %17 = sbr.rel target = $region3
    $region8: #{tpu_custom_call.1} parent=1 // loop_exit
      _
    %3654 = vsyncpa [#allocation7], 1
    %s3655 = scalar_lea.sflag [#allocation7], 1
    %3656 = vsyncpa %s3655, 1

// kernel: tpu_custom_call.1
$region0: #{tpu_custom_call.1}
  #allocation0 [shape = 'u32[]', space=smem, size = 0x4, offset = 0x4, fixed_abs, tag = 'smem constant byte address 0x4 - core index']
  #allocation1 [shape = 'u32[144,128]{1,0:T(1,128)}', space=vmem, size = 0x12000, scoped, tag = 'internal scratch']
  #allocation2 [shape = 'f32[4,32,32]{2,1,0:T(8,128)}', space=vmem, size = 0x10000, scoped, tag = 'scratch operand']
  #allocation3 [shape = 'f32[4,32,1]{2,1,0:T(8,128)}', space=vmem, size = 0x10000, scoped, tag = 'scratch operand']
  #allocation4 [shape = 'f32[4,32,1]{2,1,0:T(8,128)}', space=vmem, size = 0x10000, scoped, tag = 'scratch operand']
  #allocation5 [shape = 'f32[4,32,32]{2,1,0:T(8,128)}', space=vmem, size = 0x10000, scoped, tag = 'scratch operand']
  %s0 = inlined_call_operand.vmem [shape: f32[2,64,128], index: 0, kind: input, shape index: {}]
  %s1 = inlined_call_operand.vmem [shape: f32[2,64,128], index: 1, kind: input, shape index: {}]
  %s2 = inlined_call_operand.vmem [shape: f32[1,128], index: 2, kind: input, shape index: {}]
  %s3 = inlined_call_operand.vmem [shape: f32[1,128], index: 3, kind: input, shape index: {}]
  %s4 = inlined_call_operand.vmem [shape: f32[4,128,32], index: 4, kind: input, shape index: {}]
  %s5 = inlined_call_operand.vmem [shape: f32[4,128,32], index: 5, kind: input, shape index: {}]
  %s6 = inlined_call_operand.vmem [shape: f32[4,128,32], index: 6, kind: input, shape index: {}]
  %s7 = inlined_call_operand.vmem [shape: f32[128,128], index: 7, kind: input, shape index: {}]
  %s8 = inlined_call_operand.vmem [shape: f32[1,128], index: 8, kind: input, shape index: {}]
  %s9 = inlined_call_operand.hbm [shape: f32[2,64,128], index: 9, kind: output, shape index: {}]
  %s10 = sld [smem:[#allocation0]]
  $region81: #{tpu_custom_call.1} parent=0
    _
  %s12 = ssub.s32 1, %s10
  %s13 = scalar_select 0, %s12, %s10
  $region1: #{tpu_custom_call.1} parent=0
    #allocation6 [shape = 'u8[32768]{0}', space=vmem, size = 0x8000, scoped, tag = 'output window, operand 0']
    #allocation7 [shape = 's32[2]{0}', space=sflag, size = 0x8, scoped, tag = 'scoped memory for tpu_custom_call.1']
    %14 = vsyncpa [#allocation7], 0
    %s15 = scalar_lea.sflag [#allocation7], 1
    %16 = vsyncpa %s15, 0
    loop: start=0, step=1, limit=10
    $region2: #{tpu_custom_call.1} parent=1 // loop_pre_header
      _
    $region3: #{tpu_custom_call.1} parent=1 // loop_header
      %s18 = sphi 0, %s22
      %p19 = scmp.ge.s32.totalorder %s18, 10
      %s25 = sphi 0, %s44
      %s26 = sphi 0, %s40
      %s27 = sphi 0, %s36
      %s28 = sphi 0, %s25
      %s29 = sphi 0, %s26
      %s30 = sphi 0, %s27
      %s31 = sphi 0, %s28
      %s32 = sphi 0, %s29
      %s33 = sphi 0, %s30
      %s49 = sphi 0, %s51
      %s52 = sphi 0, %s49
      %s53 = sphi 0, %s52
      %s69 = sphi 0, %s53
      %s77 = sphi 0, %s79
      %s80 = sphi 0, %s77
      %s81 = sphi 0, %s80
      %s97 = sphi 0, %s81
      %s101 = sphi 0, %s101
      %s103 = sphi 0, %s101
      %s104 = sphi 0, %s103
      %s118 = sphi 0, %s104
      %s122 = sphi 0, %s122
      %s124 = sphi 0, %s122
      %s125 = sphi 0, %s124
      %s139 = sphi 0, %s125
      %s143 = sphi 0, %s143
      %s145 = sphi 0, %s143
      %s146 = sphi 0, %s145
      %s160 = sphi 0, %s146
      %s164 = sphi 0, %s164
      %s166 = sphi 0, %s164
      %s167 = sphi 0, %s166
      %s181 = sphi 0, %s167
      %s185 = sphi 0, %s185
      %s187 = sphi 0, %s185
      %s188 = sphi 0, %s187
      %s202 = sphi 0, %s188
      %s206 = sphi 0, %s206
      %s208 = sphi 0, %s206
      %s209 = sphi 0, %s208
      %s223 = sphi 0, %s209
      %s227 = sphi 0, %s227
      %s229 = sphi 0, %s227
      %s230 = sphi 0, %s229
      %s244 = sphi 0, %s230
      %s252 = sphi 0, %s254
      %s255 = sphi 0, %s252
      %s256 = sphi 0, %s255
      %s272 = sphi 0, %s256
    $region4: #{tpu_custom_call.1} parent=1 // loop_header_branch
      %21 = sbr.rel (%p19) target = $region8
    $region5: #{tpu_custom_call.1} parent=1 // loop_body
      %s23 = ssub.s32 %s18, 1
      %s24 = ssub.s32 %s18, 2
      %s34 = sadd.s32 1, %s27
      %p35 = scmp.ge.s32.totalorder %s34, 2
      %s36 = scalar_select %p35, 0, %s34
      %s37 = sadd.s32 1, %s26
      %s38 = scalar_select %p35, %s37, %s26
      %p39 = scmp.ge.s32.totalorder %s38, 2
      %s40 = scalar_select %p39, 0, %s38
      %s41 = sadd.s32 1, %s25
      %s42 = scalar_select %p39, %s41, %s25
      %p43 = scmp.ge.s32.totalorder %s42, 2
      %s44 = scalar_select %p43, 0, %s42
      %s45 = ssub.s32 %s25, %s44
      %s46 = ssub.s32 %s26, %s40
      %s47 = sor.u32 %s45, %s46
      %p48 = scmp.eq.s32.totalorder %s47, 0
      %s50 = sadd.s32 %s49, 1
      %s51 = scalar_select %p48, %s49, %s50
      %p54 = pneg %p48
      %p55 = scmp.eq.s32.totalorder %s18, 7
      %p56 = por %p54, %p55
      %p57 = scmp.ne.s32.totalorder %s49, %s52
      %p58 = scmp.eq.s32.totalorder %s18, 0
      %p59 = por %p57, %p58
      %p60 = scmp.ne.s32.totalorder %s49, %s52
      %p61 = scmp.eq.s32.totalorder %s23, 7
      %p62 = por %p60, %p61
      %p63 = scmp.ne.s32.totalorder %s52, %s53
      %p64 = scmp.eq.s32.totalorder %s23, 0
      %p65 = por %p63, %p64
      %p66 = scmp.ne.s32.totalorder %s52, %s53
      %p67 = scmp.eq.s32.totalorder %s24, 7
      %p68 = por %p66, %p67
      %p70 = scmp.ne.s32.totalorder %s53, %s69
      %p71 = scmp.eq.s32.totalorder %s24, 0
      %p72 = por %p70, %p71
      %s73 = ssub.s32 %s25, %s44
      %s74 = ssub.s32 %s27, %s36
      %s75 = sor.u32 %s73, %s74
      %p76 = scmp.eq.s32.totalorder %s75, 0
      %s78 = sadd.s32 %s77, 1
      %s79 = scalar_select %p76, %s77, %s78
      %p82 = pneg %p76
      %p83 = scmp.eq.s32.totalorder %s18, 7
      %p84 = por %p82, %p83
      %p85 = scmp.ne.s32.totalorder %s77, %s80
      %p86 = scmp.eq.s32.totalorder %s18, 0
      %p87 = por %p85, %p86
      %p88 = scmp.ne.s32.totalorder %s77, %s80
      %p89 = scmp.eq.s32.totalorder %s23, 7
      %p90 = por %p88, %p89
      %p91 = scmp.ne.s32.totalorder %s80, %s81
      %p92 = scmp.eq.s32.totalorder %s23, 0
      %p93 = por %p91, %p92
      %p94 = scmp.ne.s32.totalorder %s80, %s81
      %p95 = scmp.eq.s32.totalorder %s24, 7
      %p96 = por %p94, %p95
      %p98 = scmp.ne.s32.totalorder %s81, %s97
      %p99 = scmp.eq.s32.totalorder %s24, 0
      %p100 = por %p98, %p99
      %s102 = sadd.s32 %s101, 1
      %p105 = scmp.eq.s32.totalorder %s18, 7
      %p106 = scmp.ne.s32.totalorder %s101, %s103
      %p107 = scmp.eq.s32.totalorder %s18, 0
      %p108 = por %p106, %p107
      %p109 = scmp.ne.s32.totalorder %s101, %s103
      %p110 = scmp.eq.s32.totalorder %s23, 7
      %p111 = por %p109, %p110
      %p112 = scmp.ne.s32.totalorder %s103, %s104
      %p113 = scmp.eq.s32.totalorder %s23, 0
      %p114 = por %p112, %p113
      %p115 = scmp.ne.s32.totalorder %s103, %s104
      %p116 = scmp.eq.s32.totalorder %s24, 7
      %p117 = por %p115, %p116
      %p119 = scmp.ne.s32.totalorder %s104, %s118
      %p120 = scmp.eq.s32.totalorder %s24, 0
      %p121 = por %p119, %p120
      %s123 = sadd.s32 %s122, 1
      %p126 = scmp.eq.s32.totalorder %s18, 7
      %p127 = scmp.ne.s32.totalorder %s122, %s124
      %p128 = scmp.eq.s32.totalorder %s18, 0
      %p129 = por %p127, %p128
      %p130 = scmp.ne.s32.totalorder %s122, %s124
      %p131 = scmp.eq.s32.totalorder %s23, 7
      %p132 = por %p130, %p131
      %p133 = scmp.ne.s32.totalorder %s124, %s125
      %p134 = scmp.eq.s32.totalorder %s23, 0
      %p135 = por %p133, %p134
      %p136 = scmp.ne.s32.totalorder %s124, %s125
      %p137 = scmp.eq.s32.totalorder %s24, 7
      %p138 = por %p136, %p137
      %p140 = scmp.ne.s32.totalorder %s125, %s139
      %p141 = scmp.eq.s32.totalorder %s24, 0
      %p142 = por %p140, %p141
      %s144 = sadd.s32 %s143, 1
      %p147 = scmp.eq.s32.totalorder %s18, 7
      %p148 = scmp.ne.s32.totalorder %s143, %s145
      %p149 = scmp.eq.s32.totalorder %s18, 0
      %p150 = por %p148, %p149
      %p151 = scmp.ne.s32.totalorder %s143, %s145
      %p152 = scmp.eq.s32.totalorder %s23, 7
      %p153 = por %p151, %p152
      %p154 = scmp.ne.s32.totalorder %s145, %s146
      %p155 = scmp.eq.s32.totalorder %s23, 0
      %p156 = por %p154, %p155
      %p157 = scmp.ne.s32.totalorder %s145, %s146
      %p158 = scmp.eq.s32.totalorder %s24, 7
      %p159 = por %p157, %p158
      %p161 = scmp.ne.s32.totalorder %s146, %s160
      %p162 = scmp.eq.s32.totalorder %s24, 0
      %p163 = por %p161, %p162
      %s165 = sadd.s32 %s164, 1
      %p168 = scmp.eq.s32.totalorder %s18, 7
      %p169 = scmp.ne.s32.totalorder %s164, %s166
      %p170 = scmp.eq.s32.totalorder %s18, 0
      %p171 = por %p169, %p170
      %p172 = scmp.ne.s32.totalorder %s164, %s166
      %p173 = scmp.eq.s32.totalorder %s23, 7
      %p174 = por %p172, %p173
      %p175 = scmp.ne.s32.totalorder %s166, %s167
      %p176 = scmp.eq.s32.totalorder %s23, 0
      %p177 = por %p175, %p176
      %p178 = scmp.ne.s32.totalorder %s166, %s167
      %p179 = scmp.eq.s32.totalorder %s24, 7
      %p180 = por %p178, %p179
      %p182 = scmp.ne.s32.totalorder %s167, %s181
      %p183 = scmp.eq.s32.totalorder %s24, 0
      %p184 = por %p182, %p183
      %s186 = sadd.s32 %s185, 1
      %p189 = scmp.eq.s32.totalorder %s18, 7
      %p190 = scmp.ne.s32.totalorder %s185, %s187
      %p191 = scmp.eq.s32.totalorder %s18, 0
      %p192 = por %p190, %p191
      %p193 = scmp.ne.s32.totalorder %s185, %s187
      %p194 = scmp.eq.s32.totalorder %s23, 7
      %p195 = por %p193, %p194
      %p196 = scmp.ne.s32.totalorder %s187, %s188
      %p197 = scmp.eq.s32.totalorder %s23, 0
      %p198 = por %p196, %p197
      %p199 = scmp.ne.s32.totalorder %s187, %s188
      %p200 = scmp.eq.s32.totalorder %s24, 7
      %p201 = por %p199, %p200
      %p203 = scmp.ne.s32.totalorder %s188, %s202
      %p204 = scmp.eq.s32.totalorder %s24, 0
      %p205 = por %p203, %p204
      %s207 = sadd.s32 %s206, 1
      %p210 = scmp.eq.s32.totalorder %s18, 7
      %p211 = scmp.ne.s32.totalorder %s206, %s208
      %p212 = scmp.eq.s32.totalorder %s18, 0
      %p213 = por %p211, %p212
      %p214 = scmp.ne.s32.totalorder %s206, %s208
      %p215 = scmp.eq.s32.totalorder %s23, 7
      %p216 = por %p214, %p215
      %p217 = scmp.ne.s32.totalorder %s208, %s209
      %p218 = scmp.eq.s32.totalorder %s23, 0
      %p219 = por %p217, %p218
      %p220 = scmp.ne.s32.totalorder %s208, %s209
      %p221 = scmp.eq.s32.totalorder %s24, 7
      %p222 = por %p220, %p221
      %p224 = scmp.ne.s32.totalorder %s209, %s223
      %p225 = scmp.eq.s32.totalorder %s24, 0
      %p226 = por %p224, %p225
      %s228 = sadd.s32 %s227, 1
      %p231 = scmp.eq.s32.totalorder %s18, 7
      %p232 = scmp.ne.s32.totalorder %s227, %s229
      %p233 = scmp.eq.s32.totalorder %s18, 0
      %p234 = por %p232, %p233
      %p235 = scmp.ne.s32.totalorder %s227, %s229
      %p236 = scmp.eq.s32.totalorder %s23, 7
      %p237 = por %p235, %p236
      %p238 = scmp.ne.s32.totalorder %s229, %s230
      %p239 = scmp.eq.s32.totalorder %s23, 0
      %p240 = por %p238, %p239
      %p241 = scmp.ne.s32.totalorder %s229, %s230
      %p242 = scmp.eq.s32.totalorder %s24, 7
      %p243 = por %p241, %p242
      %p245 = scmp.ne.s32.totalorder %s230, %s244
      %p246 = scmp.eq.s32.totalorder %s24, 0
      %p247 = por %p245, %p246
      %s248 = ssub.s32 %s25, %s44
      %s249 = ssub.s32 %s26, %s40
      %s250 = sor.u32 %s248, %s249
      %p251 = scmp.eq.s32.totalorder %s250, 0
      %s253 = sadd.s32 %s252, 1
      %s254 = scalar_select %p251, %s252, %s253
      %p257 = pneg %p251
      %p258 = scmp.eq.s32.totalorder %s18, 7
      %p259 = por %p257, %p258
      %p260 = scmp.ne.s32.totalorder %s252, %s255
      %p261 = scmp.eq.s32.totalorder %s18, 0
      %p262 = por %p260, %p261
      %p263 = scmp.ne.s32.totalorder %s252, %s255
      %p264 = scmp.eq.s32.totalorder %s23, 7
      %p265 = por %p263, %p264
      %p266 = scmp.ne.s32.totalorder %s255, %s256
      %p267 = scmp.eq.s32.totalorder %s23, 0
      %p268 = por %p266, %p267
      %p269 = scmp.ne.s32.totalorder %s255, %s256
      %p270 = scmp.eq.s32.totalorder %s24, 7
      %p271 = por %p269, %p270
      %p273 = scmp.ne.s32.totalorder %s256, %s272
      %p274 = scmp.eq.s32.totalorder %s24, 0
      %p275 = por %p273, %p274
      %p276 = scmp.le.s32.totalorder 1, %s18
      %p277 = scmp.lt.s32.totalorder %s18, 9
      %p278 = pnand %p276, %p277
      %p279 = pneg %p278
      // Predicated region
      $region9: #{tpu_custom_call.1} parent=5 // pred_check
        _
      $region10: #{tpu_custom_call.1} parent=5 // pred_check_branch
        %281 = sbr.rel (%p278) target = $region12
      $region11: #{tpu_custom_call.1} parent=5 // pred_region
        %s282 = ssub.s32 %s18, 1
        // Predicated region
        $region13: #{tpu_custom_call.1} parent=11 // pred_check
          %p283 = pneg %p114
        $region14: #{tpu_custom_call.1} parent=11 // pred_check_branch
          %285 = sbr.rel (%p283) target = $region16
        $region15: #{tpu_custom_call.1} parent=11 // pred_region
          _
        $region16: #{tpu_custom_call.1} parent=11 // pred_fallthru
          _
        // Predicated region
        $region17: #{tpu_custom_call.1} parent=11 // pred_check
          %p286 = pneg %p135
        $region18: #{tpu_custom_call.1} parent=11 // pred_check_branch
          %288 = sbr.rel (%p286) target = $region20
        $region19: #{tpu_custom_call.1} parent=11 // pred_region
          _
        $region20: #{tpu_custom_call.1} parent=11 // pred_fallthru
          _
        // Predicated region
        $region21: #{tpu_custom_call.1} parent=11 // pred_check
          %p289 = pneg %p156
        $region22: #{tpu_custom_call.1} parent=11 // pred_check_branch
          %291 = sbr.rel (%p289) target = $region24
        $region23: #{tpu_custom_call.1} parent=11 // pred_region
          _
        $region24: #{tpu_custom_call.1} parent=11 // pred_fallthru
          _
        // Predicated region
        $region25: #{tpu_custom_call.1} parent=11 // pred_check
          %p292 = pneg %p177
        $region26: #{tpu_custom_call.1} parent=11 // pred_check_branch
          %294 = sbr.rel (%p292) target = $region28
        $region27: #{tpu_custom_call.1} parent=11 // pred_region
          _
        $region28: #{tpu_custom_call.1} parent=11 // pred_fallthru
          _
        // Predicated region
        $region29: #{tpu_custom_call.1} parent=11 // pred_check
          %p295 = pneg %p198
        $region30: #{tpu_custom_call.1} parent=11 // pred_check_branch
          %297 = sbr.rel (%p295) target = $region32
        $region31: #{tpu_custom_call.1} parent=11 // pred_region
          _
        $region32: #{tpu_custom_call.1} parent=11 // pred_fallthru
          _
        // Predicated region
        $region33: #{tpu_custom_call.1} parent=11 // pred_check
          %p298 = pneg %p219
        $region34: #{tpu_custom_call.1} parent=11 // pred_check_branch
          %300 = sbr.rel (%p298) target = $region36
        $region35: #{tpu_custom_call.1} parent=11 // pred_region
          _
        $region36: #{tpu_custom_call.1} parent=11 // pred_fallthru
          _
        // Predicated region
        $region37: #{tpu_custom_call.1} parent=11 // pred_check
          %p301 = pneg %p240
        $region38: #{tpu_custom_call.1} parent=11 // pred_check_branch
          %303 = sbr.rel (%p301) target = $region40
        $region39: #{tpu_custom_call.1} parent=11 // pred_region
          _
        $region40: #{tpu_custom_call.1} parent=11 // pred_fallthru
          _
      $region12: #{tpu_custom_call.1} parent=5 // pred_fallthru
        _
      %p304 = scmp.lt.s32.totalorder %s18, 8
      // Predicated region
      $region41: #{tpu_custom_call.1} parent=5 // pred_check
        %p305 = pneg %p304
      $region42: #{tpu_custom_call.1} parent=5 // pred_check_branch
        %307 = sbr.rel (%p305) target = $region44
      $region43: #{tpu_custom_call.1} parent=5 // pred_region
        // Predicated region
        $region45: #{tpu_custom_call.1} parent=43 // pred_check
          %p308 = pneg %p59
        $region46: #{tpu_custom_call.1} parent=43 // pred_check_branch
          %310 = sbr.rel (%p308) target = $region48
        $region47: #{tpu_custom_call.1} parent=43 // pred_region
          %s311 = smul.u32 4, %s26
          %p312 = scmp.lt.s32.totalorder %s25, 1
          %s313 = scalar_select %p312, %s25, 1
          %p314 = scmp.lt.s32.totalorder %s311, 7
          %s315 = scalar_select %p314, %s311, 7
          %s316 = smul.addr %s313, 8
          %s317 = sadd.s32 %s315, %s316
          %s318 = smul.addr %s317, 8
          %s319 = scalar_lea.vmem %s0, %s318
          %s320 = smul.u32 4, %s26
        $region48: #{tpu_custom_call.1} parent=43 // pred_fallthru
          _
        // Predicated region
        $region49: #{tpu_custom_call.1} parent=43 // pred_check
          %p321 = pneg %p87
        $region50: #{tpu_custom_call.1} parent=43 // pred_check_branch
          %323 = sbr.rel (%p321) target = $region52
        $region51: #{tpu_custom_call.1} parent=43 // pred_region
          %s324 = smul.u32 4, %s27
          %p325 = scmp.lt.s32.totalorder %s25, 1
          %s326 = scalar_select %p325, %s25, 1
          %p327 = scmp.lt.s32.totalorder %s324, 7
          %s328 = scalar_select %p327, %s324, 7
          %s329 = smul.addr %s326, 8
          %s330 = sadd.s32 %s328, %s329
          %s331 = smul.addr %s330, 8
          %s332 = scalar_lea.vmem %s1, %s331
          %s333 = smul.u32 4, %s27
        $region52: #{tpu_custom_call.1} parent=43 // pred_fallthru
          _
      $region44: #{tpu_custom_call.1} parent=5 // pred_fallthru
        _
      %p334 = scmp.le.s32.totalorder 1, %s18
      %p335 = scmp.lt.s32.totalorder %s18, 9
      %p336 = pnand %p334, %p335
      %p337 = pneg %p336
      // Predicated region
      $region53: #{tpu_custom_call.1} parent=5 // pred_check
        _
      $region54: #{tpu_custom_call.1} parent=5 // pred_check_branch
        %339 = sbr.rel (%p336) target = $region56
      $region55: #{tpu_custom_call.1} parent=5 // pred_region
        %s340 = ssub.s32 %s18, 1
        %s341 = smul.u32 4, %s29
        %p342 = scmp.lt.s32.totalorder %s28, 1
        %s343 = scalar_select %p342, %s28, 1
        %p344 = scmp.lt.s32.totalorder %s341, 7
        %s345 = scalar_select %p344, %s341, 7
        %s346 = smul.addr %s343, 8
        %s347 = sadd.s32 %s345, %s346
        %s348 = smul.addr %s347, 8
        %s349 = scalar_lea.vmem %s0, %s348
        %p350 = pneg %p65
        %p351 = pneg %p62
        %s352 = smul.u32 4, %s30
        %p353 = scmp.lt.s32.totalorder %s28, 1
        %s354 = scalar_select %p353, %s28, 1
        %p355 = scmp.lt.s32.totalorder %s352, 7
        %s356 = scalar_select %p355, %s352, 7
        %s357 = smul.addr %s354, 8
        %s358 = sadd.s32 %s356, %s357
        %s359 = smul.addr %s358, 8
        %s360 = scalar_lea.vmem %s1, %s359
        %p361 = pneg %p93
        %p362 = pneg %p90
        %p363 = pneg %p114
        %p364 = pneg %p111
        %p365 = pneg %p135
        %p366 = pneg %p132
        %p367 = pneg %p156
        %p368 = pneg %p153
        %p369 = pneg %p177
        %p370 = pneg %p174
        %p371 = pneg %p198
        %p372 = pneg %p195
        %p373 = pneg %p219
        %p374 = pneg %p216
        %p375 = pneg %p240
        %p376 = pneg %p237
        %p377 = pneg %p268
        %p378 = pneg %p265
        %s379 = sand.u32 %s255, 1
        %s380 = scalar_lea.sflag [#allocation7], %s379
        %s381 = sand.u32 %s255, 1
        %s382 = smul.addr %s381, 32
        %s383 = scalar_lea.vmem [#allocation6], %s382
        %s384 = smul.u32 4, %s29
        %p385 = scmp.lt.s32.totalorder %s28, 1
        %s386 = scalar_select %p385, %s28, 1
        %p387 = scmp.lt.s32.totalorder %s384, 7
        %s388 = scalar_select %p387, %s384, 7
        %s389 = smul.addr %s386, 8
        %s390 = sadd.s32 %s388, %s389
        %s391 = smul.addr %s390, 8
        %s392 = scalar_lea.vmem %s0, %s391
        %s393 = smul.u32 4, %s29
        %s394 = smul.u32 4, %s30
        %p395 = scmp.lt.s32.totalorder %s28, 1
        %s396 = scalar_select %p395, %s28, 1
        %p397 = scmp.lt.s32.totalorder %s394, 7
        %s398 = scalar_select %p397, %s394, 7
        %s399 = smul.addr %s396, 8
        %s400 = sadd.s32 %s398, %s399
        %s401 = smul.addr %s400, 8
        %s402 = scalar_lea.vmem %s1, %s401
        %s403 = smul.u32 4, %s30
        %s404 = smul.u32 4, %s29
        %s405 = smul.u32 %s29, 32
        %s406 = smul.u32 %s30, 32
        %p407 = scmp.eq.s32.totalorder %s30, 0
        // Predicated region
        $region57: #{tpu_custom_call.1} parent=55 // pred_check
          %p408 = pneg %p407
        $region58: #{tpu_custom_call.1} parent=55 // pred_check_branch
          %410 = sbr.rel (%p408) target = $region60
        $region59: #{tpu_custom_call.1} parent=55 // pred_region
          %v411 = vld [vmem:[%s392] sm:$0xff]
          %v412 = vld [vmem:[%s392 + $0x8] sm:$0xff]
          %v413 = vld [vmem:[%s392 + $0x10] sm:$0xff]
          %v414 = vld [vmem:[%s392 + $0x18] sm:$0xff]
          %415 = vadd.xlane.f32.xlu0 %v411
          %v416 = vpop.xlane.xlu0 %415
          %417 = vadd.xlane.f32.xlu0 %v412
          %v418 = vpop.xlane.xlu0 %417
          %419 = vadd.xlane.f32.xlu0 %v413
          %v420 = vpop.xlane.xlu0 %419
          %421 = vadd.xlane.f32.xlu0 %v414
          %v422 = vpop.xlane.xlu0 %421
          %v423 = vrcp.pop 128.0
          %v424 = vmul.f32 %v416, %v423
          %v425 = vmul.f32 %v418, %v423
          %v426 = vmul.f32 %v420, %v423
          %v427 = vmul.f32 %v422, %v423
          %v428 = vsub.f32 %v411, %v424
          %v429 = vsub.f32 %v412, %v425
          %v430 = vsub.f32 %v413, %v426
          %v431 = vsub.f32 %v414, %v427
          %v432 = vmul.f32 %v428, %v428
          %v433 = vmul.f32 %v429, %v429
          %v434 = vmul.f32 %v430, %v430
          %v435 = vmul.f32 %v431, %v431
          %436 = vadd.xlane.f32.xlu0 %v432
          %v437 = vpop.xlane.xlu0 %436
          %438 = vadd.xlane.f32.xlu0 %v433
          %v439 = vpop.xlane.xlu0 %438
          %440 = vadd.xlane.f32.xlu0 %v434
          %v441 = vpop.xlane.xlu0 %440
          %442 = vadd.xlane.f32.xlu0 %v435
          %v443 = vpop.xlane.xlu0 %442
          %v444 = vmul.f32 %v437, %v423
          %v445 = vmul.f32 %v439, %v423
          %v446 = vmul.f32 %v441, %v423
          %v447 = vmul.f32 %v443, %v423
          %v448 = vadd.f32 %v444, 1e-05
          %v449 = vadd.f32 %v445, 1e-05
          %v450 = vadd.f32 %v446, 1e-05
          %v451 = vadd.f32 %v447, 1e-05
          %v452 = vrsqrt.pop %v448
          %v453 = vrsqrt.pop %v449
          %v454 = vrsqrt.pop %v450
          %v455 = vrsqrt.pop %v451
          %v456 = vmul.f32 %v428, %v452
          %v457 = vmul.f32 %v429, %v453
          %v458 = vmul.f32 %v430, %v454
          %v459 = vmul.f32 %v431, %v455
          %v460 = vld [vmem:[%s2] sm:$0x1]
          %v462 = vlaneseq
          %v463 = vshrl.u32 %v462, 7
          %v464 = vsub.s32 0, %v463
          %v465 = vrot.slane %v460, %v464
          %v467 = vmul.f32 %v456, %v465
          %v468 = vmul.f32 %v457, %v465
          %v469 = vmul.f32 %v458, %v465
          %v470 = vmul.f32 %v459, %v465
          %v471 = vld [vmem:[%s3] sm:$0x1]
          %v473 = vlaneseq
          %v474 = vshrl.u32 %v473, 7
          %v475 = vsub.s32 0, %v474
          %v476 = vrot.slane %v471, %v475
          %v478 = vadd.f32 %v467, %v476
          %v479 = vadd.f32 %v468, %v476
          %v480 = vadd.f32 %v469, %v476
          %v481 = vadd.f32 %v470, %v476
          %v482 = vld [vmem:[%s4] sm:$0xff]
          %v483 = vld [vmem:[%s4 + $0x8] sm:$0xff]
          %v484 = vld [vmem:[%s4 + $0x10] sm:$0xff]
          %v485 = vld [vmem:[%s4 + $0x18] sm:$0xff]
          %v486 = vld [vmem:[%s4 + $0x20] sm:$0xff]
          %v487 = vld [vmem:[%s4 + $0x28] sm:$0xff]
          %v488 = vld [vmem:[%s4 + $0x30] sm:$0xff]
          %v489 = vld [vmem:[%s4 + $0x38] sm:$0xff]
          %v490 = vld [vmem:[%s4 + $0x40] sm:$0xff]
          %v491 = vld [vmem:[%s4 + $0x48] sm:$0xff]
          %v492 = vld [vmem:[%s4 + $0x50] sm:$0xff]
          %v493 = vld [vmem:[%s4 + $0x58] sm:$0xff]
          %v494 = vld [vmem:[%s4 + $0x60] sm:$0xff]
          %v495 = vld [vmem:[%s4 + $0x68] sm:$0xff]
          %v496 = vld [vmem:[%s4 + $0x70] sm:$0xff]
          %v497 = vld [vmem:[%s4 + $0x78] sm:$0xff]
          %498 = vmatprep.subr.mxu0 0.0
          %499 = vmatpush1.msra.mxu0 %v482
          %500 = vmatprep.subr.mxu0 0.0
          %501 = vmatpush1.msra.mxu0 %v483
          %502 = vmatprep.subr.mxu0 0.0
          %503 = vmatpush1.msra.mxu0 %v484
          %504 = vmatprep.subr.mxu0 0.0
          %505 = vmatpush1.msra.mxu0 %v485
          %506 = vmatprep.subr.mxu0 0.0
          %507 = vmatpush1.msra.mxu0 %v486
          %508 = vmatprep.subr.mxu0 0.0
          %509 = vmatpush1.msra.mxu0 %v487
          %510 = vmatprep.subr.mxu0 0.0
          %511 = vmatpush1.msra.mxu0 %v488
          %512 = vmatprep.subr.mxu0 0.0
          %513 = vmatpush1.msra.mxu0 %v489
          %514 = vmatprep.subr.mxu0 0.0
          %515 = vmatpush1.msra.mxu0 %v490
          %516 = vmatprep.subr.mxu0 0.0
          %517 = vmatpush1.msra.mxu0 %v491
          %518 = vmatprep.subr.mxu0 0.0
          %519 = vmatpush1.msra.mxu0 %v492
          %520 = vmatprep.subr.mxu0 0.0
          %521 = vmatpush1.msra.mxu0 %v493
          %522 = vmatprep.subr.mxu0 0.0
          %523 = vmatpush1.msra.mxu0 %v494
          %524 = vmatprep.subr.mxu0 0.0
          %525 = vmatpush1.msra.mxu0 %v495
          %526 = vmatprep.subr.mxu0 0.0
          %527 = vmatpush1.msra.mxu0 %v496
          %528 = vmatprep.subr.mxu0 0.0
          %529 = vmatpush1.msra.mxu0 %v497
          %530 = vmatprep.subr.mxu0 0.0
          %531 = vmatpush1.msra.mxu0 0.0
          %532 = vmatprep.subr.mxu0 0.0
          %533 = vmatpush1.msra.mxu0 0.0
          %534 = vmatprep.subr.mxu0 0.0
          %535 = vmatpush1.msra.mxu0 0.0
          %536 = vmatprep.subr.mxu0 0.0
          %537 = vmatpush1.msra.mxu0 0.0
          %538 = vmatprep.subr.mxu0 0.0
          %539 = vmatpush1.msra.mxu0 0.0
          %540 = vmatprep.subr.mxu0 0.0
          %541 = vmatpush1.msra.mxu0 0.0
          %542 = vmatprep.subr.mxu0 0.0
          %543 = vmatpush1.msra.mxu0 0.0
          %544 = vmatprep.subr.mxu0 0.0
          %545 = vmatpush1.msra.mxu0 0.0
          %546 = vmatprep.subr.mxu0 0.0
          %547 = vmatpush1.msra.mxu0 0.0
          %548 = vmatprep.subr.mxu0 0.0
          %549 = vmatpush1.msra.mxu0 0.0
          %550 = vmatprep.subr.mxu0 0.0
          %551 = vmatpush1.msra.mxu0 0.0
          %552 = vmatprep.subr.mxu0 0.0
          %553 = vmatpush1.msra.mxu0 0.0
          %554 = vmatprep.subr.mxu0 0.0
          %555 = vmatpush1.msra.mxu0 0.0
          %556 = vmatprep.subr.mxu0 0.0
          %557 = vmatpush1.msra.mxu0 0.0
          %558 = vmatprep.subr.mxu0 0.0
          %559 = vmatpush1.msra.mxu0 0.0
          %560 = vmatprep.subr.mxu0 0.0
          %561 = vmatpush1.msra.mxu0 0.0
          %562 = vmatprep.mubr.f32.mxu0 0.0
          %563 = vmatmul.mubr.f32.gmra.mrb[0].mxu0 %v478
          %v564 = vpop.f32.mrb[0].mxu0
          %v565 = vadd.f32 0.0, %v564
          %v566 = vpop.f32.mrb[0].mxu0
          %567 = vmatprep.mubr.f32.mxu0 0.0
          %568 = vmatmul.mubr.f32.gmra.mrb[0].mxu0 %v479
          %v569 = vpop.f32.mrb[0].mxu0
          %v570 = vadd.f32 0.0, %v569
          %v571 = vpop.f32.mrb[0].mxu0
          %572 = vmatprep.mubr.f32.mxu0 0.0
          %573 = vmatmul.mubr.f32.gmra.mrb[0].mxu0 %v480
          %v574 = vpop.f32.mrb[0].mxu0
          %v575 = vadd.f32 0.0, %v574
          %v576 = vpop.f32.mrb[0].mxu0
          %577 = vmatprep.mubr.f32.mxu0 0.0
          %578 = vmatmul.mubr.f32.gmra.mrb[0].mxu0 %v481
          %v579 = vpop.f32.mrb[0].mxu0
          %v580 = vadd.f32 0.0, %v579
          %v581 = vpop.f32.mrb[0].mxu0
          %582 = vdwg.mxu0
          %vm583 = vcmask 261120
          %584 = vst.msk [vmem:[#allocation2] sm:$0xff] %vm583, %v565
          %585 = vst.msk [vmem:[#allocation2 + $0x8] sm:$0xff] %vm583, %v570
          %586 = vst.msk [vmem:[#allocation2 + $0x10] sm:$0xff] %vm583, %v575
          %587 = vst.msk [vmem:[#allocation2 + $0x18] sm:$0xff] %vm583, %v580
          %s588 = scalar_lea.vmem %s4, 128
          %v589 = vld [vmem:[%s588] sm:$0xff]
          %v590 = vld [vmem:[%s588 + $0x8] sm:$0xff]
          %v591 = vld [vmem:[%s588 + $0x10] sm:$0xff]
          %v592 = vld [vmem:[%s588 + $0x18] sm:$0xff]
          %v593 = vld [vmem:[%s588 + $0x20] sm:$0xff]
          %v594 = vld [vmem:[%s588 + $0x28] sm:$0xff]
          %v595 = vld [vmem:[%s588 + $0x30] sm:$0xff]
          %v596 = vld [vmem:[%s588 + $0x38] sm:$0xff]
          %v597 = vld [vmem:[%s588 + $0x40] sm:$0xff]
          %v598 = vld [vmem:[%s588 + $0x48] sm:$0xff]
          %v599 = vld [vmem:[%s588 + $0x50] sm:$0xff]
          %v600 = vld [vmem:[%s588 + $0x58] sm:$0xff]
          %v601 = vld [vmem:[%s588 + $0x60] sm:$0xff]
          %v602 = vld [vmem:[%s588 + $0x68] sm:$0xff]
          %v603 = vld [vmem:[%s588 + $0x70] sm:$0xff]
          %v604 = vld [vmem:[%s588 + $0x78] sm:$0xff]
          %605 = vmatprep.subr.mxu0 0.0
          %606 = vmatpush1.msra.mxu0 %v589
          %607 = vmatprep.subr.mxu0 0.0
          %608 = vmatpush1.msra.mxu0 %v590
          %609 = vmatprep.subr.mxu0 0.0
          %610 = vmatpush1.msra.mxu0 %v591
          %611 = vmatprep.subr.mxu0 0.0
          %612 = vmatpush1.msra.mxu0 %v592
          %613 = vmatprep.subr.mxu0 0.0
          %614 = vmatpush1.msra.mxu0 %v593
          %615 = vmatprep.subr.mxu0 0.0
          %616 = vmatpush1.msra.mxu0 %v594
          %617 = vmatprep.subr.mxu0 0.0
          %618 = vmatpush1.msra.mxu0 %v595
          %619 = vmatprep.subr.mxu0 0.0
          %620 = vmatpush1.msra.mxu0 %v596
          %621 = vmatprep.subr.mxu0 0.0
          %622 = vmatpush1.msra.mxu0 %v597
          %623 = vmatprep.subr.mxu0 0.0
          %624 = vmatpush1.msra.mxu0 %v598
          %625 = vmatprep.subr.mxu0 0.0
          %626 = vmatpush1.msra.mxu0 %v599
          %627 = vmatprep.subr.mxu0 0.0
          %628 = vmatpush1.msra.mxu0 %v600
          %629 = vmatprep.subr.mxu0 0.0
          %630 = vmatpush1.msra.mxu0 %v601
          %631 = vmatprep.subr.mxu0 0.0
          %632 = vmatpush1.msra.mxu0 %v602
          %633 = vmatprep.subr.mxu0 0.0
          %634 = vmatpush1.msra.mxu0 %v603
          %635 = vmatprep.subr.mxu0 0.0
          %636 = vmatpush1.msra.mxu0 %v604
          %637 = vmatprep.subr.mxu0 0.0
          %638 = vmatpush1.msra.mxu0 0.0
          %639 = vmatprep.subr.mxu0 0.0
          %640 = vmatpush1.msra.mxu0 0.0
          %641 = vmatprep.subr.mxu0 0.0
          %642 = vmatpush1.msra.mxu0 0.0
          %643 = vmatprep.subr.mxu0 0.0
          %644 = vmatpush1.msra.mxu0 0.0
          %645 = vmatprep.subr.mxu0 0.0
          %646 = vmatpush1.msra.mxu0 0.0
          %647 = vmatprep.subr.mxu0 0.0
          %648 = vmatpush1.msra.mxu0 0.0
          %649 = vmatprep.subr.mxu0 0.0
          %650 = vmatpush1.msra.mxu0 0.0
          %651 = vmatprep.subr.mxu0 0.0
          %652 = vmatpush1.msra.mxu0 0.0
          %653 = vmatprep.subr.mxu0 0.0
          %654 = vmatpush1.msra.mxu0 0.0
          %655 = vmatprep.subr.mxu0 0.0
          %656 = vmatpush1.msra.mxu0 0.0
          %657 = vmatprep.subr.mxu0 0.0
          %658 = vmatpush1.msra.mxu0 0.0
          %659 = vmatprep.subr.mxu0 0.0
          %660 = vmatpush1.msra.mxu0 0.0
          %661 = vmatprep.subr.mxu0 0.0
          %662 = vmatpush1.msra.mxu0 0.0
          %663 = vmatprep.subr.mxu0 0.0
          %664 = vmatpush1.msra.mxu0 0.0
          %665 = vmatprep.subr.mxu0 0.0
          %666 = vmatpush1.msra.mxu0 0.0
          %667 = vmatprep.subr.mxu0 0.0
          %668 = vmatpush1.msra.mxu0 0.0
          %669 = vmatprep.mubr.f32.mxu0 0.0
          %670 = vmatmul.mubr.f32.gmra.mrb[0].mxu0 %v478
          %v671 = vpop.f32.mrb[0].mxu0
          %v672 = vadd.f32 0.0, %v671
          %v673 = vpop.f32.mrb[0].mxu0
          %674 = vmatprep.mubr.f32.mxu0 0.0
          %675 = vmatmul.mubr.f32.gmra.mrb[0].mxu0 %v479
          %v676 = vpop.f32.mrb[0].mxu0
          %v677 = vadd.f32 0.0, %v676
          %v678 = vpop.f32.mrb[0].mxu0
          %679 = vmatprep.mubr.f32.mxu0 0.0
          %680 = vmatmul.mubr.f32.gmra.mrb[0].mxu0 %v480
          %v681 = vpop.f32.mrb[0].mxu0
          %v682 = vadd.f32 0.0, %v681
          %v683 = vpop.f32.mrb[0].mxu0
          %684 = vmatprep.mubr.f32.mxu0 0.0
          %685 = vmatmul.mubr.f32.gmra.mrb[0].mxu0 %v481
          %v686 = vpop.f32.mrb[0].mxu0
          %v687 = vadd.f32 0.0, %v686
          %v688 = vpop.f32.mrb[0].mxu0
          %689 = vdwg.mxu0
          %s690 = scalar_lea.vmem [#allocation2], 32
          %691 = vst.msk [vmem:[%s690] sm:$0xff] %vm583, %v672
          %692 = vst.msk [vmem:[%s690 + $0x8] sm:$0xff] %vm583, %v677
          %693 = vst.msk [vmem:[%s690 + $0x10] sm:$0xff] %vm583, %v682
          %694 = vst.msk [vmem:[%s690 + $0x18] sm:$0xff] %vm583, %v687
          %s695 = scalar_lea.vmem %s4, 256
          %v696 = vld [vmem:[%s695] sm:$0xff]
          %v697 = vld [vmem:[%s695 + $0x8] sm:$0xff]
          %v698 = vld [vmem:[%s695 + $0x10] sm:$0xff]
          %v699 = vld [vmem:[%s695 + $0x18] sm:$0xff]
          %v700 = vld [vmem:[%s695 + $0x20] sm:$0xff]
          %v701 = vld [vmem:[%s695 + $0x28] sm:$0xff]
          %v702 = vld [vmem:[%s695 + $0x30] sm:$0xff]
          %v703 = vld [vmem:[%s695 + $0x38] sm:$0xff]
          %v704 = vld [vmem:[%s695 + $0x40] sm:$0xff]
          %v705 = vld [vmem:[%s695 + $0x48] sm:$0xff]
          %v706 = vld [vmem:[%s695 + $0x50] sm:$0xff]
          %v707 = vld [vmem:[%s695 + $0x58] sm:$0xff]
          %v708 = vld [vmem:[%s695 + $0x60] sm:$0xff]
          %v709 = vld [vmem:[%s695 + $0x68] sm:$0xff]
          %v710 = vld [vmem:[%s695 + $0x70] sm:$0xff]
          %v711 = vld [vmem:[%s695 + $0x78] sm:$0xff]
          %712 = vmatprep.subr.mxu0 0.0
          %713 = vmatpush1.msra.mxu0 %v696
          %714 = vmatprep.subr.mxu0 0.0
          %715 = vmatpush1.msra.mxu0 %v697
          %716 = vmatprep.subr.mxu0 0.0
          %717 = vmatpush1.msra.mxu0 %v698
          %718 = vmatprep.subr.mxu0 0.0
          %719 = vmatpush1.msra.mxu0 %v699
          %720 = vmatprep.subr.mxu0 0.0
          %721 = vmatpush1.msra.mxu0 %v700
          %722 = vmatprep.subr.mxu0 0.0
          %723 = vmatpush1.msra.mxu0 %v701
          %724 = vmatprep.subr.mxu0 0.0
          %725 = vmatpush1.msra.mxu0 %v702
          %726 = vmatprep.subr.mxu0 0.0
          %727 = vmatpush1.msra.mxu0 %v703
          %728 = vmatprep.subr.mxu0 0.0
          %729 = vmatpush1.msra.mxu0 %v704
          %730 = vmatprep.subr.mxu0 0.0
          %731 = vmatpush1.msra.mxu0 %v705
          %732 = vmatprep.subr.mxu0 0.0
          %733 = vmatpush1.msra.mxu0 %v706
          %734 = vmatprep.subr.mxu0 0.0
          %735 = vmatpush1.msra.mxu0 %v707
          %736 = vmatprep.subr.mxu0 0.0
          %737 = vmatpush1.msra.mxu0 %v708
          %738 = vmatprep.subr.mxu0 0.0
          %739 = vmatpush1.msra.mxu0 %v709
          %740 = vmatprep.subr.mxu0 0.0
          %741 = vmatpush1.msra.mxu0 %v710
          %742 = vmatprep.subr.mxu0 0.0
          %743 = vmatpush1.msra.mxu0 %v711
          %744 = vmatprep.subr.mxu0 0.0
          %745 = vmatpush1.msra.mxu0 0.0
          %746 = vmatprep.subr.mxu0 0.0
          %747 = vmatpush1.msra.mxu0 0.0
          %748 = vmatprep.subr.mxu0 0.0
          %749 = vmatpush1.msra.mxu0 0.0
          %750 = vmatprep.subr.mxu0 0.0
          %751 = vmatpush1.msra.mxu0 0.0
          %752 = vmatprep.subr.mxu0 0.0
          %753 = vmatpush1.msra.mxu0 0.0
          %754 = vmatprep.subr.mxu0 0.0
          %755 = vmatpush1.msra.mxu0 0.0
          %756 = vmatprep.subr.mxu0 0.0
          %757 = vmatpush1.msra.mxu0 0.0
          %758 = vmatprep.subr.mxu0 0.0
          %759 = vmatpush1.msra.mxu0 0.0
          %760 = vmatprep.subr.mxu0 0.0
          %761 = vmatpush1.msra.mxu0 0.0
          %762 = vmatprep.subr.mxu0 0.0
          %763 = vmatpush1.msra.mxu0 0.0
          %764 = vmatprep.subr.mxu0 0.0
          %765 = vmatpush1.msra.mxu0 0.0
          %766 = vmatprep.subr.mxu0 0.0
          %767 = vmatpush1.msra.mxu0 0.0
          %768 = vmatprep.subr.mxu0 0.0
          %769 = vmatpush1.msra.mxu0 0.0
          %770 = vmatprep.subr.mxu0 0.0
          %771 = vmatpush1.msra.mxu0 0.0
          %772 = vmatprep.subr.mxu0 0.0
          %773 = vmatpush1.msra.mxu0 0.0
          %774 = vmatprep.subr.mxu0 0.0
          %775 = vmatpush1.msra.mxu0 0.0
          %776 = vmatprep.mubr.f32.mxu0 0.0
          %777 = vmatmul.mubr.f32.gmra.mrb[0].mxu0 %v478
          %v778 = vpop.f32.mrb[0].mxu0
          %v779 = vadd.f32 0.0, %v778
          %v780 = vpop.f32.mrb[0].mxu0
          %781 = vmatprep.mubr.f32.mxu0 0.0
          %782 = vmatmul.mubr.f32.gmra.mrb[0].mxu0 %v479
          %v783 = vpop.f32.mrb[0].mxu0
          %v784 = vadd.f32 0.0, %v783
          %v785 = vpop.f32.mrb[0].mxu0
          %786 = vmatprep.mubr.f32.mxu0 0.0
          %787 = vmatmul.mubr.f32.gmra.mrb[0].mxu0 %v480
          %v788 = vpop.f32.mrb[0].mxu0
          %v789 = vadd.f32 0.0, %v788
          %v790 = vpop.f32.mrb[0].mxu0
          %791 = vmatprep.mubr.f32.mxu0 0.0
          %792 = vmatmul.mubr.f32.gmra.mrb[0].mxu0 %v481
          %v793 = vpop.f32.mrb[0].mxu0
          %v794 = vadd.f32 0.0, %v793
          %v795 = vpop.f32.mrb[0].mxu0
          %796 = vdwg.mxu0
          %s797 = scalar_lea.vmem [#allocation2], 64
          %798 = vst.msk [vmem:[%s797] sm:$0xff] %vm583, %v779
          %799 = vst.msk [vmem:[%s797 + $0x8] sm:$0xff] %vm583, %v784
          %800 = vst.msk [vmem:[%s797 + $0x10] sm:$0xff] %vm583, %v789
          %801 = vst.msk [vmem:[%s797 + $0x18] sm:$0xff] %vm583, %v794
          %s802 = scalar_lea.vmem %s4, 384
          %v803 = vld [vmem:[%s802] sm:$0xff]
          %v804 = vld [vmem:[%s802 + $0x8] sm:$0xff]
          %v805 = vld [vmem:[%s802 + $0x10] sm:$0xff]
          %v806 = vld [vmem:[%s802 + $0x18] sm:$0xff]
          %v807 = vld [vmem:[%s802 + $0x20] sm:$0xff]
          %v808 = vld [vmem:[%s802 + $0x28] sm:$0xff]
          %v809 = vld [vmem:[%s802 + $0x30] sm:$0xff]
          %v810 = vld [vmem:[%s802 + $0x38] sm:$0xff]
          %v811 = vld [vmem:[%s802 + $0x40] sm:$0xff]
          %v812 = vld [vmem:[%s802 + $0x48] sm:$0xff]
          %v813 = vld [vmem:[%s802 + $0x50] sm:$0xff]
          %v814 = vld [vmem:[%s802 + $0x58] sm:$0xff]
          %v815 = vld [vmem:[%s802 + $0x60] sm:$0xff]
          %v816 = vld [vmem:[%s802 + $0x68] sm:$0xff]
          %v817 = vld [vmem:[%s802 + $0x70] sm:$0xff]
          %v818 = vld [vmem:[%s802 + $0x78] sm:$0xff]
          %819 = vmatprep.subr.mxu0 0.0
          %820 = vmatpush1.msra.mxu0 %v803
          %821 = vmatprep.subr.mxu0 0.0
          %822 = vmatpush1.msra.mxu0 %v804
          %823 = vmatprep.subr.mxu0 0.0
          %824 = vmatpush1.msra.mxu0 %v805
          %825 = vmatprep.subr.mxu0 0.0
          %826 = vmatpush1.msra.mxu0 %v806
          %827 = vmatprep.subr.mxu0 0.0
          %828 = vmatpush1.msra.mxu0 %v807
          %829 = vmatprep.subr.mxu0 0.0
          %830 = vmatpush1.msra.mxu0 %v808
          %831 = vmatprep.subr.mxu0 0.0
          %832 = vmatpush1.msra.mxu0 %v809
          %833 = vmatprep.subr.mxu0 0.0
          %834 = vmatpush1.msra.mxu0 %v810
          %835 = vmatprep.subr.mxu0 0.0
          %836 = vmatpush1.msra.mxu0 %v811
          %837 = vmatprep.subr.mxu0 0.0
          %838 = vmatpush1.msra.mxu0 %v812
          %839 = vmatprep.subr.mxu0 0.0
          %840 = vmatpush1.msra.mxu0 %v813
          %841 = vmatprep.subr.mxu0 0.0
          %842 = vmatpush1.msra.mxu0 %v814
          %843 = vmatprep.subr.mxu0 0.0
          %844 = vmatpush1.msra.mxu0 %v815
          %845 = vmatprep.subr.mxu0 0.0
          %846 = vmatpush1.msra.mxu0 %v816
          %847 = vmatprep.subr.mxu0 0.0
          %848 = vmatpush1.msra.mxu0 %v817
          %849 = vmatprep.subr.mxu0 0.0
          %850 = vmatpush1.msra.mxu0 %v818
          %851 = vmatprep.subr.mxu0 0.0
          %852 = vmatpush1.msra.mxu0 0.0
          %853 = vmatprep.subr.mxu0 0.0
          %854 = vmatpush1.msra.mxu0 0.0
          %855 = vmatprep.subr.mxu0 0.0
          %856 = vmatpush1.msra.mxu0 0.0
          %857 = vmatprep.subr.mxu0 0.0
          %858 = vmatpush1.msra.mxu0 0.0
          %859 = vmatprep.subr.mxu0 0.0
          %860 = vmatpush1.msra.mxu0 0.0
          %861 = vmatprep.subr.mxu0 0.0
          %862 = vmatpush1.msra.mxu0 0.0
          %863 = vmatprep.subr.mxu0 0.0
          %864 = vmatpush1.msra.mxu0 0.0
          %865 = vmatprep.subr.mxu0 0.0
          %866 = vmatpush1.msra.mxu0 0.0
          %867 = vmatprep.subr.mxu0 0.0
          %868 = vmatpush1.msra.mxu0 0.0
          %869 = vmatprep.subr.mxu0 0.0
          %870 = vmatpush1.msra.mxu0 0.0
          %871 = vmatprep.subr.mxu0 0.0
          %872 = vmatpush1.msra.mxu0 0.0
          %873 = vmatprep.subr.mxu0 0.0
          %874 = vmatpush1.msra.mxu0 0.0
          %875 = vmatprep.subr.mxu0 0.0
          %876 = vmatpush1.msra.mxu0 0.0
          %877 = vmatprep.subr.mxu0 0.0
          %878 = vmatpush1.msra.mxu0 0.0
          %879 = vmatprep.subr.mxu0 0.0
          %880 = vmatpush1.msra.mxu0 0.0
          %881 = vmatprep.subr.mxu0 0.0
          %882 = vmatpush1.msra.mxu0 0.0
          %883 = vmatprep.mubr.f32.mxu0 0.0
          %884 = vmatmul.mubr.f32.gmra.mrb[0].mxu0 %v478
          %v885 = vpop.f32.mrb[0].mxu0
          %v886 = vadd.f32 0.0, %v885
          %v887 = vpop.f32.mrb[0].mxu0
          %888 = vmatprep.mubr.f32.mxu0 0.0
          %889 = vmatmul.mubr.f32.gmra.mrb[0].mxu0 %v479
          %v890 = vpop.f32.mrb[0].mxu0
          %v891 = vadd.f32 0.0, %v890
          %v892 = vpop.f32.mrb[0].mxu0
          %893 = vmatprep.mubr.f32.mxu0 0.0
          %894 = vmatmul.mubr.f32.gmra.mrb[0].mxu0 %v480
          %v895 = vpop.f32.mrb[0].mxu0
          %v896 = vadd.f32 0.0, %v895
          %v897 = vpop.f32.mrb[0].mxu0
          %898 = vmatprep.mubr.f32.mxu0 0.0
          %899 = vmatmul.mubr.f32.gmra.mrb[0].mxu0 %v481
          %v900 = vpop.f32.mrb[0].mxu0
          %v901 = vadd.f32 0.0, %v900
          %v902 = vpop.f32.mrb[0].mxu0
          %903 = vdwg.mxu0
          %s904 = scalar_lea.vmem [#allocation2], 96
          %905 = vst.msk [vmem:[%s904] sm:$0xff] %vm583, %v886
          %906 = vst.msk [vmem:[%s904 + $0x8] sm:$0xff] %vm583, %v891
          %907 = vst.msk [vmem:[%s904 + $0x10] sm:$0xff] %vm583, %v896
          %908 = vst.msk [vmem:[%s904 + $0x18] sm:$0xff] %vm583, %v901
          %vm909 = vcmask 7168
          %910 = vst.msk [vmem:[#allocation3] sm:$0xff] %vm909, -1e+30
          %911 = vst.msk [vmem:[#allocation3 + $0x8] sm:$0xff] %vm909, -1e+30
          %912 = vst.msk [vmem:[#allocation3 + $0x10] sm:$0xff] %vm909, -1e+30
          %913 = vst.msk [vmem:[#allocation3 + $0x18] sm:$0xff] %vm909, -1e+30
          %914 = vst.msk [vmem:[#allocation3 + $0x20] sm:$0xff] %vm909, -1e+30
          %915 = vst.msk [vmem:[#allocation3 + $0x28] sm:$0xff] %vm909, -1e+30
          %916 = vst.msk [vmem:[#allocation3 + $0x30] sm:$0xff] %vm909, -1e+30
          %917 = vst.msk [vmem:[#allocation3 + $0x38] sm:$0xff] %vm909, -1e+30
          %918 = vst.msk [vmem:[#allocation3 + $0x40] sm:$0xff] %vm909, -1e+30
          %919 = vst.msk [vmem:[#allocation3 + $0x48] sm:$0xff] %vm909, -1e+30
          %920 = vst.msk [vmem:[#allocation3 + $0x50] sm:$0xff] %vm909, -1e+30
          %921 = vst.msk [vmem:[#allocation3 + $0x58] sm:$0xff] %vm909, -1e+30
          %922 = vst.msk [vmem:[#allocation3 + $0x60] sm:$0xff] %vm909, -1e+30
          %923 = vst.msk [vmem:[#allocation3 + $0x68] sm:$0xff] %vm909, -1e+30
          %924 = vst.msk [vmem:[#allocation3 + $0x70] sm:$0xff] %vm909, -1e+30
          %925 = vst.msk [vmem:[#allocation3 + $0x78] sm:$0xff] %vm909, -1e+30
          %926 = vst.msk [vmem:[#allocation4] sm:$0xff] %vm909, 0.0
          %927 = vst.msk [vmem:[#allocation4 + $0x8] sm:$0xff] %vm909, 0.0
          %928 = vst.msk [vmem:[#allocation4 + $0x10] sm:$0xff] %vm909, 0.0
          %929 = vst.msk [vmem:[#allocation4 + $0x18] sm:$0xff] %vm909, 0.0
          %930 = vst.msk [vmem:[#allocation4 + $0x20] sm:$0xff] %vm909, 0.0
          %931 = vst.msk [vmem:[#allocation4 + $0x28] sm:$0xff] %vm909, 0.0
          %932 = vst.msk [vmem:[#allocation4 + $0x30] sm:$0xff] %vm909, 0.0
          %933 = vst.msk [vmem:[#allocation4 + $0x38] sm:$0xff] %vm909, 0.0
          %934 = vst.msk [vmem:[#allocation4 + $0x40] sm:$0xff] %vm909, 0.0
          %935 = vst.msk [vmem:[#allocation4 + $0x48] sm:$0xff] %vm909, 0.0
          %936 = vst.msk [vmem:[#allocation4 + $0x50] sm:$0xff] %vm909, 0.0
          %937 = vst.msk [vmem:[#allocation4 + $0x58] sm:$0xff] %vm909, 0.0
          %938 = vst.msk [vmem:[#allocation4 + $0x60] sm:$0xff] %vm909, 0.0
          %939 = vst.msk [vmem:[#allocation4 + $0x68] sm:$0xff] %vm909, 0.0
          %940 = vst.msk [vmem:[#allocation4 + $0x70] sm:$0xff] %vm909, 0.0
          %941 = vst.msk [vmem:[#allocation4 + $0x78] sm:$0xff] %vm909, 0.0
          %942 = vst.msk [vmem:[#allocation5] sm:$0xff] %vm583, 0.0
          %943 = vst.msk [vmem:[#allocation5 + $0x8] sm:$0xff] %vm583, 0.0
          %944 = vst.msk [vmem:[#allocation5 + $0x10] sm:$0xff] %vm583, 0.0
          %945 = vst.msk [vmem:[#allocation5 + $0x18] sm:$0xff] %vm583, 0.0
          %946 = vst.msk [vmem:[#allocation5 + $0x20] sm:$0xff] %vm583, 0.0
          %947 = vst.msk [vmem:[#allocation5 + $0x28] sm:$0xff] %vm583, 0.0
          %948 = vst.msk [vmem:[#allocation5 + $0x30] sm:$0xff] %vm583, 0.0
          %949 = vst.msk [vmem:[#allocation5 + $0x38] sm:$0xff] %vm583, 0.0
          %950 = vst.msk [vmem:[#allocation5 + $0x40] sm:$0xff] %vm583, 0.0
          %951 = vst.msk [vmem:[#allocation5 + $0x48] sm:$0xff] %vm583, 0.0
          %952 = vst.msk [vmem:[#allocation5 + $0x50] sm:$0xff] %vm583, 0.0
          %953 = vst.msk [vmem:[#allocation5 + $0x58] sm:$0xff] %vm583, 0.0
          %954 = vst.msk [vmem:[#allocation5 + $0x60] sm:$0xff] %vm583, 0.0
          %955 = vst.msk [vmem:[#allocation5 + $0x68] sm:$0xff] %vm583, 0.0
          %956 = vst.msk [vmem:[#allocation5 + $0x70] sm:$0xff] %vm583, 0.0
          %957 = vst.msk [vmem:[#allocation5 + $0x78] sm:$0xff] %vm583, 0.0
        $region60: #{tpu_custom_call.1} parent=55 // pred_fallthru
          _
        %s958 = sadd.s32 %s405, 32
        %p959 = scmp.lt.s32.totalorder %s406, %s958
        // Predicated region
        $region61: #{tpu_custom_call.1} parent=55 // pred_check
          %p960 = pneg %p959
        $region62: #{tpu_custom_call.1} parent=55 // pred_check_branch
          %962 = sbr.rel (%p960) target = $region64
        $region63: #{tpu_custom_call.1} parent=55 // pred_region
          %v963 = vld [vmem:[%s402] sm:$0xff]
          %v964 = vld [vmem:[%s402 + $0x8] sm:$0xff]
          %v965 = vld [vmem:[%s402 + $0x10] sm:$0xff]
          %v966 = vld [vmem:[%s402 + $0x18] sm:$0xff]
          %967 = vadd.xlane.f32.xlu0 %v963
          %v968 = vpop.xlane.xlu0 %967
          %969 = vadd.xlane.f32.xlu0 %v964
          %v970 = vpop.xlane.xlu0 %969
          %971 = vadd.xlane.f32.xlu0 %v965
          %v972 = vpop.xlane.xlu0 %971
          %973 = vadd.xlane.f32.xlu0 %v966
          %v974 = vpop.xlane.xlu0 %973
          %v975 = vrcp.pop 128.0
          %v976 = vmul.f32 %v968, %v975
          %v977 = vmul.f32 %v970, %v975
          %v978 = vmul.f32 %v972, %v975
          %v979 = vmul.f32 %v974, %v975
          %v980 = vsub.f32 %v963, %v976
          %v981 = vsub.f32 %v964, %v977
          %v982 = vsub.f32 %v965, %v978
          %v983 = vsub.f32 %v966, %v979
          %v984 = vmul.f32 %v980, %v980
          %v985 = vmul.f32 %v981, %v981
          %v986 = vmul.f32 %v982, %v982
          %v987 = vmul.f32 %v983, %v983
          %988 = vadd.xlane.f32.xlu0 %v984
          %v989 = vpop.xlane.xlu0 %988
          %990 = vadd.xlane.f32.xlu0 %v985
          %v991 = vpop.xlane.xlu0 %990
          %992 = vadd.xlane.f32.xlu0 %v986
          %v993 = vpop.xlane.xlu0 %992
          %994 = vadd.xlane.f32.xlu0 %v987
          %v995 = vpop.xlane.xlu0 %994
          %v996 = vmul.f32 %v989, %v975
          %v997 = vmul.f32 %v991, %v975
          %v998 = vmul.f32 %v993, %v975
          %v999 = vmul.f32 %v995, %v975
          %v1000 = vadd.f32 %v996, 1e-05
          %v1001 = vadd.f32 %v997, 1e-05
          %v1002 = vadd.f32 %v998, 1e-05
          %v1003 = vadd.f32 %v999, 1e-05
          %v1004 = vrsqrt.pop %v1000
          %v1005 = vrsqrt.pop %v1001
          %v1006 = vrsqrt.pop %v1002
          %v1007 = vrsqrt.pop %v1003
          %v1008 = vmul.f32 %v980, %v1004
          %v1009 = vmul.f32 %v981, %v1005
          %v1010 = vmul.f32 %v982, %v1006
          %v1011 = vmul.f32 %v983, %v1007
          %v1012 = vld [vmem:[%s2] sm:$0x1]
          %v1014 = vlaneseq
          %v1015 = vshrl.u32 %v1014, 7
          %v1016 = vsub.s32 0, %v1015
          %v1017 = vrot.slane %v1012, %v1016
          %v1019 = vmul.f32 %v1008, %v1017
          %v1020 = vmul.f32 %v1009, %v1017
          %v1021 = vmul.f32 %v1010, %v1017
          %v1022 = vmul.f32 %v1011, %v1017
          %v1023 = vld [vmem:[%s3] sm:$0x1]
          %v1025 = vlaneseq
          %v1026 = vshrl.u32 %v1025, 7
          %v1027 = vsub.s32 0, %v1026
          %v1028 = vrot.slane %v1023, %v1027
          %v1030 = vadd.f32 %v1019, %v1028
          %v1031 = vadd.f32 %v1020, %v1028
          %v1032 = vadd.f32 %v1021, %v1028
          %v1033 = vadd.f32 %v1022, %v1028
          %v1034 = vlaneseq
          %v1035 = vshrl.u32 %v1034, 7
          %v1036 = vadd.s32 %v1035, 8
          %v1037 = vadd.s32 %v1035, 16
          %v1038 = vadd.s32 %v1035, 24
          %v1039 = vstv %s405
          %v1040 = vadd.s32 %v1039, %v1035
          %v1041 = vadd.s32 %v1039, %v1036
          %v1042 = vadd.s32 %v1039, %v1037
          %v1043 = vadd.s32 %v1039, %v1038
          %v1044 = vlaneseq
          %v1045 = vand.u32 %v1044, 127
          %v1046 = vstv %s406
          %v1047 = vadd.s32 %v1046, %v1045
          %vm1048 = vcmp.gt.s32.totalorder %v1047, %v1040
          %vm1049 = vcmp.gt.s32.totalorder %v1047, %v1041
          %vm1050 = vcmp.gt.s32.totalorder %v1047, %v1042
          %vm1051 = vcmp.gt.s32.totalorder %v1047, %v1043
          %v1052 = vld [vmem:[%s5] sm:$0xff]
          %v1053 = vld [vmem:[%s5 + $0x8] sm:$0xff]
          %v1054 = vld [vmem:[%s5 + $0x10] sm:$0xff]
          %v1055 = vld [vmem:[%s5 + $0x18] sm:$0xff]
          %v1056 = vld [vmem:[%s5 + $0x20] sm:$0xff]
          %v1057 = vld [vmem:[%s5 + $0x28] sm:$0xff]
          %v1058 = vld [vmem:[%s5 + $0x30] sm:$0xff]
          %v1059 = vld [vmem:[%s5 + $0x38] sm:$0xff]
          %v1060 = vld [vmem:[%s5 + $0x40] sm:$0xff]
          %v1061 = vld [vmem:[%s5 + $0x48] sm:$0xff]
          %v1062 = vld [vmem:[%s5 + $0x50] sm:$0xff]
          %v1063 = vld [vmem:[%s5 + $0x58] sm:$0xff]
          %v1064 = vld [vmem:[%s5 + $0x60] sm:$0xff]
          %v1065 = vld [vmem:[%s5 + $0x68] sm:$0xff]
          %v1066 = vld [vmem:[%s5 + $0x70] sm:$0xff]
          %v1067 = vld [vmem:[%s5 + $0x78] sm:$0xff]
          %1068 = vmatprep.subr.mxu0 0.0
          %1069 = vmatpush1.msra.mxu0 %v1052
          %1070 = vmatprep.subr.mxu0 0.0
          %1071 = vmatpush1.msra.mxu0 %v1053
          %1072 = vmatprep.subr.mxu0 0.0
          %1073 = vmatpush1.msra.mxu0 %v1054
          %1074 = vmatprep.subr.mxu0 0.0
          %1075 = vmatpush1.msra.mxu0 %v1055
          %1076 = vmatprep.subr.mxu0 0.0
          %1077 = vmatpush1.msra.mxu0 %v1056
          %1078 = vmatprep.subr.mxu0 0.0
          %1079 = vmatpush1.msra.mxu0 %v1057
          %1080 = vmatprep.subr.mxu0 0.0
          %1081 = vmatpush1.msra.mxu0 %v1058
          %1082 = vmatprep.subr.mxu0 0.0
          %1083 = vmatpush1.msra.mxu0 %v1059
          %1084 = vmatprep.subr.mxu0 0.0
          %1085 = vmatpush1.msra.mxu0 %v1060
          %1086 = vmatprep.subr.mxu0 0.0
          %1087 = vmatpush1.msra.mxu0 %v1061
          %1088 = vmatprep.subr.mxu0 0.0
          %1089 = vmatpush1.msra.mxu0 %v1062
          %1090 = vmatprep.subr.mxu0 0.0
          %1091 = vmatpush1.msra.mxu0 %v1063
          %1092 = vmatprep.subr.mxu0 0.0
          %1093 = vmatpush1.msra.mxu0 %v1064
          %1094 = vmatprep.subr.mxu0 0.0
          %1095 = vmatpush1.msra.mxu0 %v1065
          %1096 = vmatprep.subr.mxu0 0.0
          %1097 = vmatpush1.msra.mxu0 %v1066
          %1098 = vmatprep.subr.mxu0 0.0
          %1099 = vmatpush1.msra.mxu0 %v1067
          %1100 = vmatprep.subr.mxu0 0.0
          %1101 = vmatpush1.msra.mxu0 0.0
          %1102 = vmatprep.subr.mxu0 0.0
          %1103 = vmatpush1.msra.mxu0 0.0
          %1104 = vmatprep.subr.mxu0 0.0
          %1105 = vmatpush1.msra.mxu0 0.0
          %1106 = vmatprep.subr.mxu0 0.0
          %1107 = vmatpush1.msra.mxu0 0.0
          %1108 = vmatprep.subr.mxu0 0.0
          %1109 = vmatpush1.msra.mxu0 0.0
          %1110 = vmatprep.subr.mxu0 0.0
          %1111 = vmatpush1.msra.mxu0 0.0
          %1112 = vmatprep.subr.mxu0 0.0
          %1113 = vmatpush1.msra.mxu0 0.0
          %1114 = vmatprep.subr.mxu0 0.0
          %1115 = vmatpush1.msra.mxu0 0.0
          %1116 = vmatprep.subr.mxu0 0.0
          %1117 = vmatpush1.msra.mxu0 0.0
          %1118 = vmatprep.subr.mxu0 0.0
          %1119 = vmatpush1.msra.mxu0 0.0
          %1120 = vmatprep.subr.mxu0 0.0
          %1121 = vmatpush1.msra.mxu0 0.0
          %1122 = vmatprep.subr.mxu0 0.0
          %1123 = vmatpush1.msra.mxu0 0.0
          %1124 = vmatprep.subr.mxu0 0.0
          %1125 = vmatpush1.msra.mxu0 0.0
          %1126 = vmatprep.subr.mxu0 0.0
          %1127 = vmatpush1.msra.mxu0 0.0
          %1128 = vmatprep.subr.mxu0 0.0
          %1129 = vmatpush1.msra.mxu0 0.0
          %1130 = vmatprep.subr.mxu0 0.0
          %1131 = vmatpush1.msra.mxu0 0.0
          %1132 = vmatprep.mubr.f32.mxu0 0.0
          %1133 = vmatmul.mubr.f32.gmra.mrb[0].mxu0 %v1030
          %v1134 = vpop.f32.mrb[0].mxu0
          %v1135 = vadd.f32 0.0, %v1134
          %v1136 = vpop.f32.mrb[0].mxu0
          %1137 = vmatprep.mubr.f32.mxu0 0.0
          %1138 = vmatmul.mubr.f32.gmra.mrb[0].mxu0 %v1031
          %v1139 = vpop.f32.mrb[0].mxu0
          %v1140 = vadd.f32 0.0, %v1139
          %v1141 = vpop.f32.mrb[0].mxu0
          %1142 = vmatprep.mubr.f32.mxu0 0.0
          %1143 = vmatmul.mubr.f32.gmra.mrb[0].mxu0 %v1032
          %v1144 = vpop.f32.mrb[0].mxu0
          %v1145 = vadd.f32 0.0, %v1144
          %v1146 = vpop.f32.mrb[0].mxu0
          %1147 = vmatprep.mubr.f32.mxu0 0.0
          %1148 = vmatmul.mubr.f32.gmra.mrb[0].mxu0 %v1033
          %v1149 = vpop.f32.mrb[0].mxu0
          %v1150 = vadd.f32 0.0, %v1149
          %v1151 = vpop.f32.mrb[0].mxu0
          %1152 = vdwg.mxu0
          %v1153 = vld [vmem:[%s6] sm:$0xff]
          %v1154 = vld [vmem:[%s6 + $0x8] sm:$0xff]
          %v1155 = vld [vmem:[%s6 + $0x10] sm:$0xff]
          %v1156 = vld [vmem:[%s6 + $0x18] sm:$0xff]
          %v1157 = vld [vmem:[%s6 + $0x20] sm:$0xff]
          %v1158 = vld [vmem:[%s6 + $0x28] sm:$0xff]
          %v1159 = vld [vmem:[%s6 + $0x30] sm:$0xff]
          %v1160 = vld [vmem:[%s6 + $0x38] sm:$0xff]
          %v1161 = vld [vmem:[%s6 + $0x40] sm:$0xff]
          %v1162 = vld [vmem:[%s6 + $0x48] sm:$0xff]
          %v1163 = vld [vmem:[%s6 + $0x50] sm:$0xff]
          %v1164 = vld [vmem:[%s6 + $0x58] sm:$0xff]
          %v1165 = vld [vmem:[%s6 + $0x60] sm:$0xff]
          %v1166 = vld [vmem:[%s6 + $0x68] sm:$0xff]
          %v1167 = vld [vmem:[%s6 + $0x70] sm:$0xff]
          %v1168 = vld [vmem:[%s6 + $0x78] sm:$0xff]
          %1169 = vmatprep.subr.mxu0 0.0
          %1170 = vmatpush1.msra.mxu0 %v1153
          %1171 = vmatprep.subr.mxu0 0.0
          %1172 = vmatpush1.msra.mxu0 %v1154
          %1173 = vmatprep.subr.mxu0 0.0
          %1174 = vmatpush1.msra.mxu0 %v1155
          %1175 = vmatprep.subr.mxu0 0.0
          %1176 = vmatpush1.msra.mxu0 %v1156
          %1177 = vmatprep.subr.mxu0 0.0
          %1178 = vmatpush1.msra.mxu0 %v1157
          %1179 = vmatprep.subr.mxu0 0.0
          %1180 = vmatpush1.msra.mxu0 %v1158
          %1181 = vmatprep.subr.mxu0 0.0
          %1182 = vmatpush1.msra.mxu0 %v1159
          %1183 = vmatprep.subr.mxu0 0.0
          %1184 = vmatpush1.msra.mxu0 %v1160
          %1185 = vmatprep.subr.mxu0 0.0
          %1186 = vmatpush1.msra.mxu0 %v1161
          %1187 = vmatprep.subr.mxu0 0.0
          %1188 = vmatpush1.msra.mxu0 %v1162
          %1189 = vmatprep.subr.mxu0 0.0
          %1190 = vmatpush1.msra.mxu0 %v1163
          %1191 = vmatprep.subr.mxu0 0.0
          %1192 = vmatpush1.msra.mxu0 %v1164
          %1193 = vmatprep.subr.mxu0 0.0
          %1194 = vmatpush1.msra.mxu0 %v1165
          %1195 = vmatprep.subr.mxu0 0.0
          %1196 = vmatpush1.msra.mxu0 %v1166
          %1197 = vmatprep.subr.mxu0 0.0
          %1198 = vmatpush1.msra.mxu0 %v1167
          %1199 = vmatprep.subr.mxu0 0.0
          %1200 = vmatpush1.msra.mxu0 %v1168
          %1201 = vmatprep.subr.mxu0 0.0
          %1202 = vmatpush1.msra.mxu0 0.0
          %1203 = vmatprep.subr.mxu0 0.0
          %1204 = vmatpush1.msra.mxu0 0.0
          %1205 = vmatprep.subr.mxu0 0.0
          %1206 = vmatpush1.msra.mxu0 0.0
          %1207 = vmatprep.subr.mxu0 0.0
          %1208 = vmatpush1.msra.mxu0 0.0
          %1209 = vmatprep.subr.mxu0 0.0
          %1210 = vmatpush1.msra.mxu0 0.0
          %1211 = vmatprep.subr.mxu0 0.0
          %1212 = vmatpush1.msra.mxu0 0.0
          %1213 = vmatprep.subr.mxu0 0.0
          %1214 = vmatpush1.msra.mxu0 0.0
          %1215 = vmatprep.subr.mxu0 0.0
          %1216 = vmatpush1.msra.mxu0 0.0
          %1217 = vmatprep.subr.mxu0 0.0
          %1218 = vmatpush1.msra.mxu0 0.0
          %1219 = vmatprep.subr.mxu0 0.0
          %1220 = vmatpush1.msra.mxu0 0.0
          %1221 = vmatprep.subr.mxu0 0.0
          %1222 = vmatpush1.msra.mxu0 0.0
          %1223 = vmatprep.subr.mxu0 0.0
          %1224 = vmatpush1.msra.mxu0 0.0
          %1225 = vmatprep.subr.mxu0 0.0
          %1226 = vmatpush1.msra.mxu0 0.0
          %1227 = vmatprep.subr.mxu0 0.0
          %1228 = vmatpush1.msra.mxu0 0.0
          %1229 = vmatprep.subr.mxu0 0.0
          %1230 = vmatpush1.msra.mxu0 0.0
          %1231 = vmatprep.subr.mxu0 0.0
          %1232 = vmatpush1.msra.mxu0 0.0
          %1233 = vmatprep.mubr.f32.mxu0 0.0
          %1234 = vmatmul.mubr.f32.gmra.mrb[0].mxu0 %v1030
          %v1235 = vpop.f32.mrb[0].mxu0
          %v1236 = vadd.f32 0.0, %v1235
          %v1237 = vpop.f32.mrb[0].mxu0
          %1238 = vmatprep.mubr.f32.mxu0 0.0
          %1239 = vmatmul.mubr.f32.gmra.mrb[0].mxu0 %v1031
          %v1240 = vpop.f32.mrb[0].mxu0
          %v1241 = vadd.f32 0.0, %v1240
          %v1242 = vpop.f32.mrb[0].mxu0
          %1243 = vmatprep.mubr.f32.mxu0 0.0
          %1244 = vmatmul.mubr.f32.gmra.mrb[0].mxu0 %v1032
          %v1245 = vpop.f32.mrb[0].mxu0
          %v1246 = vadd.f32 0.0, %v1245
          %v1247 = vpop.f32.mrb[0].mxu0
          %1248 = vmatprep.mubr.f32.mxu0 0.0
          %1249 = vmatmul.mubr.f32.gmra.mrb[0].mxu0 %v1033
          %v1250 = vpop.f32.mrb[0].mxu0
          %v1251 = vadd.f32 0.0, %v1250
          %v1252 = vpop.f32.mrb[0].mxu0
          %1253 = vdwg.mxu0
          %v1254 = vld [vmem:[#allocation2] sm:$0xff]
          %v1255 = vld [vmem:[#allocation2 + $0x8] sm:$0xff]
          %v1256 = vld [vmem:[#allocation2 + $0x10] sm:$0xff]
          %v1257 = vld [vmem:[#allocation2 + $0x18] sm:$0xff]
          %vm1258 = vcmask 261120
          %v1260 = vsel %vm1258, %v1254, 0
          %v1263 = vsel %vm1258, %v1255, 0
          %v1266 = vsel %vm1258, %v1256, 0
          %v1269 = vsel %vm1258, %v1257, 0
          %v1272 = vsel %vm1258, %v1135, 0
          %v1275 = vsel %vm1258, %v1140, 0
          %v1278 = vsel %vm1258, %v1145, 0
          %v1281 = vsel %vm1258, %v1150, 0
          %1283 = vmatprep.subr.mxu0 0.0
          %1284 = vmatpush1.xpose.msra.mxu0 %v1272
          %1285 = vmatprep.subr.mxu0 0.0
          %1286 = vmatpush1.xpose.msra.mxu0 %v1275
          %1287 = vmatprep.subr.mxu0 0.0
          %1288 = vmatpush1.xpose.msra.mxu0 %v1278
          %1289 = vmatprep.subr.mxu0 0.0
          %1290 = vmatpush1.xpose.msra.mxu0 %v1281
          %1291 = vmatprep.subr.mxu0 0.0
          %1292 = vmatpush1.xpose.msra.mxu0 0.0
          %1293 = vmatprep.subr.mxu0 0.0
          %1294 = vmatpush1.xpose.msra.mxu0 0.0
          %1295 = vmatprep.subr.mxu0 0.0
          %1296 = vmatpush1.xpose.msra.mxu0 0.0
          %1297 = vmatprep.subr.mxu0 0.0
          %1298 = vmatpush1.xpose.msra.mxu0 0.0
          %1299 = vmatprep.subr.mxu0 0.0
          %1300 = vmatpush1.xpose.msra.mxu0 0.0
          %1301 = vmatprep.subr.mxu0 0.0
          %1302 = vmatpush1.xpose.msra.mxu0 0.0
          %1303 = vmatprep.subr.mxu0 0.0
          %1304 = vmatpush1.xpose.msra.mxu0 0.0
          %1305 = vmatprep.subr.mxu0 0.0
          %1306 = vmatpush1.xpose.msra.mxu0 0.0
          %1307 = vmatprep.subr.mxu0 0.0
          %1308 = vmatpush1.xpose.msra.mxu0 0.0
          %1309 = vmatprep.subr.mxu0 0.0
          %1310 = vmatpush1.xpose.msra.mxu0 0.0
          %1311 = vmatprep.subr.mxu0 0.0
          %1312 = vmatpush1.xpose.msra.mxu0 0.0
          %1313 = vmatprep.subr.mxu0 0.0
          %1314 = vmatpush1.xpose.msra.mxu0 0.0
          %1315 = vmatprep.subr.mxu0 0.0
          %1316 = vmatpush1.xpose.msra.mxu0 0.0
          %1317 = vmatprep.subr.mxu0 0.0
          %1318 = vmatpush1.xpose.msra.mxu0 0.0
          %1319 = vmatprep.subr.mxu0 0.0
          %1320 = vmatpush1.xpose.msra.mxu0 0.0
          %1321 = vmatprep.subr.mxu0 0.0
          %1322 = vmatpush1.xpose.msra.mxu0 0.0
          %1323 = vmatprep.subr.mxu0 0.0
          %1324 = vmatpush1.xpose.msra.mxu0 0.0
          %1325 = vmatprep.subr.mxu0 0.0
          %1326 = vmatpush1.xpose.msra.mxu0 0.0
          %1327 = vmatprep.subr.mxu0 0.0
          %1328 = vmatpush1.xpose.msra.mxu0 0.0
          %1329 = vmatprep.subr.mxu0 0.0
          %1330 = vmatpush1.xpose.msra.mxu0 0.0
          %1331 = vmatprep.subr.mxu0 0.0
          %1332 = vmatpush1.xpose.msra.mxu0 0.0
          %1333 = vmatprep.subr.mxu0 0.0
          %1334 = vmatpush1.xpose.msra.mxu0 0.0
          %1335 = vmatprep.subr.mxu0 0.0
          %1336 = vmatpush1.xpose.msra.mxu0 0.0
          %1337 = vmatprep.subr.mxu0 0.0
          %1338 = vmatpush1.xpose.msra.mxu0 0.0
          %1339 = vmatprep.subr.mxu0 0.0
          %1340 = vmatpush1.xpose.msra.mxu0 0.0
          %1341 = vmatprep.subr.mxu0 0.0
          %1342 = vmatpush1.xpose.msra.mxu0 0.0
          %1343 = vmatprep.subr.mxu0 0.0
          %1344 = vmatpush1.xpose.msra.mxu0 0.0
          %1345 = vmatprep.subr.mxu0 0.0
          %1346 = vmatpush1.xpose.msra.mxu0 0.0
          %1347 = vmatprep.mubr.f32.mxu0 0.0
          %1348 = vmatmul.mubr.f32.gmra.mrb[0].mxu0 %v1260
          %v1349 = vpop.f32.mrb[0].mxu0
          %v1350 = vadd.f32 0.0, %v1349
          %v1351 = vpop.f32.mrb[0].mxu0
          %1352 = vmatprep.mubr.f32.mxu0 0.0
          %1353 = vmatmul.mubr.f32.gmra.mrb[0].mxu0 %v1263
          %v1354 = vpop.f32.mrb[0].mxu0
          %v1355 = vadd.f32 0.0, %v1354
          %v1356 = vpop.f32.mrb[0].mxu0
          %1357 = vmatprep.mubr.f32.mxu0 0.0
          %1358 = vmatmul.mubr.f32.gmra.mrb[0].mxu0 %v1266
          %v1359 = vpop.f32.mrb[0].mxu0
          %v1360 = vadd.f32 0.0, %v1359
          %v1361 = vpop.f32.mrb[0].mxu0
          %1362 = vmatprep.mubr.f32.mxu0 0.0
          %1363 = vmatmul.mubr.f32.gmra.mrb[0].mxu0 %v1269
          %v1364 = vpop.f32.mrb[0].mxu0
          %v1365 = vadd.f32 0.0, %v1364
          %v1366 = vpop.f32.mrb[0].mxu0
          %1367 = vdwg.mxu0
          %v1368 = vmul.f32 %v1350, 0.17677669
          %v1369 = vmul.f32 %v1355, 0.17677669
          %v1370 = vmul.f32 %v1360, 0.17677669
          %v1371 = vmul.f32 %v1365, 0.17677669
          %v1372 = vsel %vm1048, -1e+30, %v1368
          %v1373 = vsel %vm1049, -1e+30, %v1369
          %v1374 = vsel %vm1050, -1e+30, %v1370
          %v1375 = vsel %vm1051, -1e+30, %v1371
          %v1376 = vld [vmem:[#allocation3] sm:$0xff]
          %v1377 = vld [vmem:[#allocation3 + $0x8] sm:$0xff]
          %v1378 = vld [vmem:[#allocation3 + $0x10] sm:$0xff]
          %v1379 = vld [vmem:[#allocation3 + $0x18] sm:$0xff]
          %v1380 = vsel %vm1258, %v1372, -inf
          %1381 = vmax.xlane.f32.xlu0 %v1380
          %v1382 = vpop.xlane.xlu0 %1381
          %v1383 = vsel %vm1258, %v1373, -inf
          %1384 = vmax.xlane.f32.xlu0 %v1383
          %v1385 = vpop.xlane.xlu0 %1384
          %v1386 = vsel %vm1258, %v1374, -inf
          %1387 = vmax.xlane.f32.xlu0 %v1386
          %v1388 = vpop.xlane.xlu0 %1387
          %v1389 = vsel %vm1258, %v1375, -inf
          %1390 = vmax.xlane.f32.xlu0 %v1389
          %v1391 = vpop.xlane.xlu0 %1390
          %v1392 = vmax.f32 %v1376, %v1382
          %v1393 = vmax.f32 %v1377, %v1385
          %v1394 = vmax.f32 %v1378, %v1388
          %v1395 = vmax.f32 %v1379, %v1391
          %v1396 = vsub.f32 %v1376, %v1392
          %v1397 = vsub.f32 %v1377, %v1393
          %v1398 = vsub.f32 %v1378, %v1394
          %v1399 = vsub.f32 %v1379, %v1395
          %v1400 = vmul.f32 %v1396, 1.442695
          %v1401 = vpow.pop %v1400
          %v1402 = vmul.f32 %v1397, 1.442695
          %v1403 = vpow.pop %v1402
          %v1404 = vmul.f32 %v1398, 1.442695
          %v1405 = vpow.pop %v1404
          %v1406 = vmul.f32 %v1399, 1.442695
          %v1407 = vpow.pop %v1406
          %1409 = vset.pattern.permute.xlu0 0
          %1410 = vperm.xlu0 %1409, %v1392
          %v1411 = vpop.permute.xlu0 %1410
          %1414 = vset.pattern.permute.xlu0 0
          %1415 = vperm.xlu0 %1414, %v1393
          %v1416 = vpop.permute.xlu0 %1415
          %1419 = vset.pattern.permute.xlu0 0
          %1420 = vperm.xlu0 %1419, %v1394
          %v1421 = vpop.permute.xlu0 %1420
          %1424 = vset.pattern.permute.xlu0 0
          %1425 = vperm.xlu0 %1424, %v1395
          %v1426 = vpop.permute.xlu0 %1425
          %v1428 = vsub.f32 %v1372, %v1411
          %v1429 = vsub.f32 %v1373, %v1416
          %v1430 = vsub.f32 %v1374, %v1421
          %v1431 = vsub.f32 %v1375, %v1426
          %v1432 = vmul.f32 %v1428, 1.442695
          %v1433 = vpow.pop %v1432
          %v1434 = vmul.f32 %v1429, 1.442695
          %v1435 = vpow.pop %v1434
          %v1436 = vmul.f32 %v1430, 1.442695
          %v1437 = vpow.pop %v1436
          %v1438 = vmul.f32 %v1431, 1.442695
          %v1439 = vpow.pop %v1438
          %v1440 = vld [vmem:[#allocation4] sm:$0xff]
          %v1441 = vld [vmem:[#allocation4 + $0x8] sm:$0xff]
          %v1442 = vld [vmem:[#allocation4 + $0x10] sm:$0xff]
          %v1443 = vld [vmem:[#allocation4 + $0x18] sm:$0xff]
          %v1444 = vmul.f32 %v1401, %v1440
          %v1445 = vmul.f32 %v1403, %v1441
          %v1446 = vmul.f32 %v1405, %v1442
          %v1447 = vmul.f32 %v1407, %v1443
          %v1448 = vsel %vm1258, %v1433, 0.0
          %1449 = vadd.xlane.f32.xlu0 %v1448
          %v1450 = vpop.xlane.xlu0 %1449
          %v1451 = vsel %vm1258, %v1435, 0.0
          %1452 = vadd.xlane.f32.xlu0 %v1451
          %v1453 = vpop.xlane.xlu0 %1452
          %v1454 = vsel %vm1258, %v1437, 0.0
          %1455 = vadd.xlane.f32.xlu0 %v1454
          %v1456 = vpop.xlane.xlu0 %1455
          %v1457 = vsel %vm1258, %v1439, 0.0
          %1458 = vadd.xlane.f32.xlu0 %v1457
          %v1459 = vpop.xlane.xlu0 %1458
          %v1460 = vadd.f32 %v1444, %v1450
          %v1461 = vadd.f32 %v1445, %v1453
          %v1462 = vadd.f32 %v1446, %v1456
          %v1463 = vadd.f32 %v1447, %v1459
          %vm1464 = vcmask 7168
          %1465 = vst.msk [vmem:[#allocation4] sm:$0xff] %vm1464, %v1460
          %1466 = vst.msk [vmem:[#allocation4 + $0x8] sm:$0xff] %vm1464, %v1461
          %1467 = vst.msk [vmem:[#allocation4 + $0x10] sm:$0xff] %vm1464, %v1462
          %1468 = vst.msk [vmem:[#allocation4 + $0x18] sm:$0xff] %vm1464, %v1463
          %v1469 = vld [vmem:[#allocation5] sm:$0xff]
          %v1470 = vld [vmem:[#allocation5 + $0x8] sm:$0xff]
          %v1471 = vld [vmem:[#allocation5 + $0x10] sm:$0xff]
          %v1472 = vld [vmem:[#allocation5 + $0x18] sm:$0xff]
          %1474 = vset.pattern.permute.xlu0 0
          %1475 = vperm.xlu0 %1474, %v1401
          %v1476 = vpop.permute.xlu0 %1475
          %1479 = vset.pattern.permute.xlu0 0
          %1480 = vperm.xlu0 %1479, %v1403
          %v1481 = vpop.permute.xlu0 %1480
          %1484 = vset.pattern.permute.xlu0 0
          %1485 = vperm.xlu0 %1484, %v1405
          %v1486 = vpop.permute.xlu0 %1485
          %1489 = vset.pattern.permute.xlu0 0
          %1490 = vperm.xlu0 %1489, %v1407
          %v1491 = vpop.permute.xlu0 %1490
          %v1493 = vmul.f32 %v1476, %v1469
          %v1494 = vmul.f32 %v1481, %v1470
          %v1495 = vmul.f32 %v1486, %v1471
          %v1496 = vmul.f32 %v1491, %v1472
          %v1498 = vsel %vm1258, %v1433, 0
          %v1501 = vsel %vm1258, %v1435, 0
          %v1504 = vsel %vm1258, %v1437, 0
          %v1507 = vsel %vm1258, %v1439, 0
          %1509 = vmatprep.subr.mxu0 0.0
          %1510 = vmatpush1.msra.mxu0 %v1236
          %1511 = vmatprep.subr.mxu0 0.0
          %1512 = vmatpush1.msra.mxu0 %v1241
          %1513 = vmatprep.subr.mxu0 0.0
          %1514 = vmatpush1.msra.mxu0 %v1246
          %1515 = vmatprep.subr.mxu0 0.0
          %1516 = vmatpush1.msra.mxu0 %v1251
          %1517 = vmatprep.subr.mxu0 0.0
          %1518 = vmatpush1.msra.mxu0 0.0
          %1519 = vmatprep.subr.mxu0 0.0
          %1520 = vmatpush1.msra.mxu0 0.0
          %1521 = vmatprep.subr.mxu0 0.0
          %1522 = vmatpush1.msra.mxu0 0.0
          %1523 = vmatprep.subr.mxu0 0.0
          %1524 = vmatpush1.msra.mxu0 0.0
          %1525 = vmatprep.subr.mxu0 0.0
          %1526 = vmatpush1.msra.mxu0 0.0
          %1527 = vmatprep.subr.mxu0 0.0
          %1528 = vmatpush1.msra.mxu0 0.0
          %1529 = vmatprep.subr.mxu0 0.0
          %1530 = vmatpush1.msra.mxu0 0.0
          %1531 = vmatprep.subr.mxu0 0.0
          %1532 = vmatpush1.msra.mxu0 0.0
          %1533 = vmatprep.subr.mxu0 0.0
          %1534 = vmatpush1.msra.mxu0 0.0
          %1535 = vmatprep.subr.mxu0 0.0
          %1536 = vmatpush1.msra.mxu0 0.0
          %1537 = vmatprep.subr.mxu0 0.0
          %1538 = vmatpush1.msra.mxu0 0.0
          %1539 = vmatprep.subr.mxu0 0.0
          %1540 = vmatpush1.msra.mxu0 0.0
          %1541 = vmatprep.subr.mxu0 0.0
          %1542 = vmatpush1.msra.mxu0 0.0
          %1543 = vmatprep.subr.mxu0 0.0
          %1544 = vmatpush1.msra.mxu0 0.0
          %1545 = vmatprep.subr.mxu0 0.0
          %1546 = vmatpush1.msra.mxu0 0.0
          %1547 = vmatprep.subr.mxu0 0.0
          %1548 = vmatpush1.msra.mxu0 0.0
          %1549 = vmatprep.subr.mxu0 0.0
          %1550 = vmatpush1.msra.mxu0 0.0
          %1551 = vmatprep.subr.mxu0 0.0
          %1552 = vmatpush1.msra.mxu0 0.0
          %1553 = vmatprep.subr.mxu0 0.0
          %1554 = vmatpush1.msra.mxu0 0.0
          %1555 = vmatprep.subr.mxu0 0.0
          %1556 = vmatpush1.msra.mxu0 0.0
          %1557 = vmatprep.subr.mxu0 0.0
          %1558 = vmatpush1.msra.mxu0 0.0
          %1559 = vmatprep.subr.mxu0 0.0
          %1560 = vmatpush1.msra.mxu0 0.0
          %1561 = vmatprep.subr.mxu0 0.0
          %1562 = vmatpush1.msra.mxu0 0.0
          %1563 = vmatprep.subr.mxu0 0.0
          %1564 = vmatpush1.msra.mxu0 0.0
          %1565 = vmatprep.subr.mxu0 0.0
          %1566 = vmatpush1.msra.mxu0 0.0
          %1567 = vmatprep.subr.mxu0 0.0
          %1568 = vmatpush1.msra.mxu0 0.0
          %1569 = vmatprep.subr.mxu0 0.0
          %1570 = vmatpush1.msra.mxu0 0.0
          %1571 = vmatprep.subr.mxu0 0.0
          %1572 = vmatpush1.msra.mxu0 0.0
          %1573 = vmatprep.mubr.f32.mxu0 0.0
          %1574 = vmatmul.mubr.f32.gmra.mrb[0].mxu0 %v1498
          %v1575 = vpop.f32.mrb[0].mxu0
          %v1576 = vadd.f32 0.0, %v1575
          %v1577 = vpop.f32.mrb[0].mxu0
          %1578 = vmatprep.mubr.f32.mxu0 0.0
          %1579 = vmatmul.mubr.f32.gmra.mrb[0].mxu0 %v1501
          %v1580 = vpop.f32.mrb[0].mxu0
          %v1581 = vadd.f32 0.0, %v1580
          %v1582 = vpop.f32.mrb[0].mxu0
          %1583 = vmatprep.mubr.f32.mxu0 0.0
          %1584 = vmatmul.mubr.f32.gmra.mrb[0].mxu0 %v1504
          %v1585 = vpop.f32.mrb[0].mxu0
          %v1586 = vadd.f32 0.0, %v1585
          %v1587 = vpop.f32.mrb[0].mxu0
          %1588 = vmatprep.mubr.f32.mxu0 0.0
          %1589 = vmatmul.mubr.f32.gmra.mrb[0].mxu0 %v1507
          %v1590 = vpop.f32.mrb[0].mxu0
          %v1591 = vadd.f32 0.0, %v1590
          %v1592 = vpop.f32.mrb[0].mxu0
          %1593 = vdwg.mxu0
          %v1594 = vadd.f32 %v1493, %v1576
          %v1595 = vadd.f32 %v1494, %v1581
          %v1596 = vadd.f32 %v1495, %v1586
          %v1597 = vadd.f32 %v1496, %v1591
          %1598 = vst.msk [vmem:[#allocation5] sm:$0xff] %vm1258, %v1594
          %1599 = vst.msk [vmem:[#allocation5 + $0x8] sm:$0xff] %vm1258, %v1595
          %1600 = vst.msk [vmem:[#allocation5 + $0x10] sm:$0xff] %vm1258, %v1596
          %1601 = vst.msk [vmem:[#allocation5 + $0x18] sm:$0xff] %vm1258, %v1597
          %1602 = vst.msk [vmem:[#allocation3] sm:$0xff] %vm1464, %v1392
          %1603 = vst.msk [vmem:[#allocation3 + $0x8] sm:$0xff] %vm1464, %v1393
          %1604 = vst.msk [vmem:[#allocation3 + $0x10] sm:$0xff] %vm1464, %v1394
          %1605 = vst.msk [vmem:[#allocation3 + $0x18] sm:$0xff] %vm1464, %v1395
          %s1606 = scalar_lea.vmem %s5, 128
          %v1607 = vld [vmem:[%s1606] sm:$0xff]
          %v1608 = vld [vmem:[%s1606 + $0x8] sm:$0xff]
          %v1609 = vld [vmem:[%s1606 + $0x10] sm:$0xff]
          %v1610 = vld [vmem:[%s1606 + $0x18] sm:$0xff]
          %v1611 = vld [vmem:[%s1606 + $0x20] sm:$0xff]
          %v1612 = vld [vmem:[%s1606 + $0x28] sm:$0xff]
          %v1613 = vld [vmem:[%s1606 + $0x30] sm:$0xff]
          %v1614 = vld [vmem:[%s1606 + $0x38] sm:$0xff]
          %v1615 = vld [vmem:[%s1606 + $0x40] sm:$0xff]
          %v1616 = vld [vmem:[%s1606 + $0x48] sm:$0xff]
          %v1617 = vld [vmem:[%s1606 + $0x50] sm:$0xff]
          %v1618 = vld [vmem:[%s1606 + $0x58] sm:$0xff]
          %v1619 = vld [vmem:[%s1606 + $0x60] sm:$0xff]
          %v1620 = vld [vmem:[%s1606 + $0x68] sm:$0xff]
          %v1621 = vld [vmem:[%s1606 + $0x70] sm:$0xff]
          %v1622 = vld [vmem:[%s1606 + $0x78] sm:$0xff]
          %1623 = vmatprep.subr.mxu0 0.0
          %1624 = vmatpush1.msra.mxu0 %v1607
          %1625 = vmatprep.subr.mxu0 0.0
          %1626 = vmatpush1.msra.mxu0 %v1608
          %1627 = vmatprep.subr.mxu0 0.0
          %1628 = vmatpush1.msra.mxu0 %v1609
          %1629 = vmatprep.subr.mxu0 0.0
          %1630 = vmatpush1.msra.mxu0 %v1610
          %1631 = vmatprep.subr.mxu0 0.0
          %1632 = vmatpush1.msra.mxu0 %v1611
          %1633 = vmatprep.subr.mxu0 0.0
          %1634 = vmatpush1.msra.mxu0 %v1612
          %1635 = vmatprep.subr.mxu0 0.0
          %1636 = vmatpush1.msra.mxu0 %v1613
          %1637 = vmatprep.subr.mxu0 0.0
          %1638 = vmatpush1.msra.mxu0 %v1614
          %1639 = vmatprep.subr.mxu0 0.0
          %1640 = vmatpush1.msra.mxu0 %v1615
          %1641 = vmatprep.subr.mxu0 0.0
          %1642 = vmatpush1.msra.mxu0 %v1616
          %1643 = vmatprep.subr.mxu0 0.0
          %1644 = vmatpush1.msra.mxu0 %v1617
          %1645 = vmatprep.subr.mxu0 0.0
          %1646 = vmatpush1.msra.mxu0 %v1618
          %1647 = vmatprep.subr.mxu0 0.0
          %1648 = vmatpush1.msra.mxu0 %v1619
          %1649 = vmatprep.subr.mxu0 0.0
          %1650 = vmatpush1.msra.mxu0 %v1620
          %1651 = vmatprep.subr.mxu0 0.0
          %1652 = vmatpush1.msra.mxu0 %v1621
          %1653 = vmatprep.subr.mxu0 0.0
          %1654 = vmatpush1.msra.mxu0 %v1622
          %1655 = vmatprep.subr.mxu0 0.0
          %1656 = vmatpush1.msra.mxu0 0.0
          %1657 = vmatprep.subr.mxu0 0.0
          %1658 = vmatpush1.msra.mxu0 0.0
          %1659 = vmatprep.subr.mxu0 0.0
          %1660 = vmatpush1.msra.mxu0 0.0
          %1661 = vmatprep.subr.mxu0 0.0
          %1662 = vmatpush1.msra.mxu0 0.0
          %1663 = vmatprep.subr.mxu0 0.0
          %1664 = vmatpush1.msra.mxu0 0.0
          %1665 = vmatprep.subr.mxu0 0.0
          %1666 = vmatpush1.msra.mxu0 0.0
          %1667 = vmatprep.subr.mxu0 0.0
          %1668 = vmatpush1.msra.mxu0 0.0
          %1669 = vmatprep.subr.mxu0 0.0
          %1670 = vmatpush1.msra.mxu0 0.0
          %1671 = vmatprep.subr.mxu0 0.0
          %1672 = vmatpush1.msra.mxu0 0.0
          %1673 = vmatprep.subr.mxu0 0.0
          %1674 = vmatpush1.msra.mxu0 0.0
          %1675 = vmatprep.subr.mxu0 0.0
          %1676 = vmatpush1.msra.mxu0 0.0
          %1677 = vmatprep.subr.mxu0 0.0
          %1678 = vmatpush1.msra.mxu0 0.0
          %1679 = vmatprep.subr.mxu0 0.0
          %1680 = vmatpush1.msra.mxu0 0.0
          %1681 = vmatprep.subr.mxu0 0.0
          %1682 = vmatpush1.msra.mxu0 0.0
          %1683 = vmatprep.subr.mxu0 0.0
          %1684 = vmatpush1.msra.mxu0 0.0
          %1685 = vmatprep.subr.mxu0 0.0
          %1686 = vmatpush1.msra.mxu0 0.0
          %1687 = vmatprep.mubr.f32.mxu0 0.0
          %1688 = vmatmul.mubr.f32.gmra.mrb[0].mxu0 %v1030
          %v1689 = vpop.f32.mrb[0].mxu0
          %v1690 = vadd.f32 0.0, %v1689
          %v1691 = vpop.f32.mrb[0].mxu0
          %1692 = vmatprep.mubr.f32.mxu0 0.0
          %1693 = vmatmul.mubr.f32.gmra.mrb[0].mxu0 %v1031
          %v1694 = vpop.f32.mrb[0].mxu0
          %v1695 = vadd.f32 0.0, %v1694
          %v1696 = vpop.f32.mrb[0].mxu0
          %1697 = vmatprep.mubr.f32.mxu0 0.0
          %1698 = vmatmul.mubr.f32.gmra.mrb[0].mxu0 %v1032
          %v1699 = vpop.f32.mrb[0].mxu0
          %v1700 = vadd.f32 0.0, %v1699
          %v1701 = vpop.f32.mrb[0].mxu0
          %1702 = vmatprep.mubr.f32.mxu0 0.0
          %1703 = vmatmul.mubr.f32.gmra.mrb[0].mxu0 %v1033
          %v1704 = vpop.f32.mrb[0].mxu0
          %v1705 = vadd.f32 0.0, %v1704
          %v1706 = vpop.f32.mrb[0].mxu0
          %1707 = vdwg.mxu0
          %s1708 = scalar_lea.vmem %s6, 128
          %v1709 = vld [vmem:[%s1708] sm:$0xff]
          %v1710 = vld [vmem:[%s1708 + $0x8] sm:$0xff]
          %v1711 = vld [vmem:[%s1708 + $0x10] sm:$0xff]
          %v1712 = vld [vmem:[%s1708 + $0x18] sm:$0xff]
          %v1713 = vld [vmem:[%s1708 + $0x20] sm:$0xff]
          %v1714 = vld [vmem:[%s1708 + $0x28] sm:$0xff]
          %v1715 = vld [vmem:[%s1708 + $0x30] sm:$0xff]
          %v1716 = vld [vmem:[%s1708 + $0x38] sm:$0xff]
          %v1717 = vld [vmem:[%s1708 + $0x40] sm:$0xff]
          %v1718 = vld [vmem:[%s1708 + $0x48] sm:$0xff]
          %v1719 = vld [vmem:[%s1708 + $0x50] sm:$0xff]
          %v1720 = vld [vmem:[%s1708 + $0x58] sm:$0xff]
          %v1721 = vld [vmem:[%s1708 + $0x60] sm:$0xff]
          %v1722 = vld [vmem:[%s1708 + $0x68] sm:$0xff]
          %v1723 = vld [vmem:[%s1708 + $0x70] sm:$0xff]
          %v1724 = vld [vmem:[%s1708 + $0x78] sm:$0xff]
          %1725 = vmatprep.subr.mxu0 0.0
          %1726 = vmatpush1.msra.mxu0 %v1709
          %1727 = vmatprep.subr.mxu0 0.0
          %1728 = vmatpush1.msra.mxu0 %v1710
          %1729 = vmatprep.subr.mxu0 0.0
          %1730 = vmatpush1.msra.mxu0 %v1711
          %1731 = vmatprep.subr.mxu0 0.0
          %1732 = vmatpush1.msra.mxu0 %v1712
          %1733 = vmatprep.subr.mxu0 0.0
          %1734 = vmatpush1.msra.mxu0 %v1713
          %1735 = vmatprep.subr.mxu0 0.0
          %1736 = vmatpush1.msra.mxu0 %v1714
          %1737 = vmatprep.subr.mxu0 0.0
          %1738 = vmatpush1.msra.mxu0 %v1715
          %1739 = vmatprep.subr.mxu0 0.0
          %1740 = vmatpush1.msra.mxu0 %v1716
          %1741 = vmatprep.subr.mxu0 0.0
          %1742 = vmatpush1.msra.mxu0 %v1717
          %1743 = vmatprep.subr.mxu0 0.0
          %1744 = vmatpush1.msra.mxu0 %v1718
          %1745 = vmatprep.subr.mxu0 0.0
          %1746 = vmatpush1.msra.mxu0 %v1719
          %1747 = vmatprep.subr.mxu0 0.0
          %1748 = vmatpush1.msra.mxu0 %v1720
          %1749 = vmatprep.subr.mxu0 0.0
          %1750 = vmatpush1.msra.mxu0 %v1721
          %1751 = vmatprep.subr.mxu0 0.0
          %1752 = vmatpush1.msra.mxu0 %v1722
          %1753 = vmatprep.subr.mxu0 0.0
          %1754 = vmatpush1.msra.mxu0 %v1723
          %1755 = vmatprep.subr.mxu0 0.0
          %1756 = vmatpush1.msra.mxu0 %v1724
          %1757 = vmatprep.subr.mxu0 0.0
          %1758 = vmatpush1.msra.mxu0 0.0
          %1759 = vmatprep.subr.mxu0 0.0
          %1760 = vmatpush1.msra.mxu0 0.0
          %1761 = vmatprep.subr.mxu0 0.0
          %1762 = vmatpush1.msra.mxu0 0.0
          %1763 = vmatprep.subr.mxu0 0.0
          %1764 = vmatpush1.msra.mxu0 0.0
          %1765 = vmatprep.subr.mxu0 0.0
          %1766 = vmatpush1.msra.mxu0 0.0
          %1767 = vmatprep.subr.mxu0 0.0
          %1768 = vmatpush1.msra.mxu0 0.0
          %1769 = vmatprep.subr.mxu0 0.0
          %1770 = vmatpush1.msra.mxu0 0.0
          %1771 = vmatprep.subr.mxu0 0.0
          %1772 = vmatpush1.msra.mxu0 0.0
          %1773 = vmatprep.subr.mxu0 0.0
          %1774 = vmatpush1.msra.mxu0 0.0
          %1775 = vmatprep.subr.mxu0 0.0
          %1776 = vmatpush1.msra.mxu0 0.0
          %1777 = vmatprep.subr.mxu0 0.0
          %1778 = vmatpush1.msra.mxu0 0.0
          %1779 = vmatprep.subr.mxu0 0.0
          %1780 = vmatpush1.msra.mxu0 0.0
          %1781 = vmatprep.subr.mxu0 0.0
          %1782 = vmatpush1.msra.mxu0 0.0
          %1783 = vmatprep.subr.mxu0 0.0
          %1784 = vmatpush1.msra.mxu0 0.0
          %1785 = vmatprep.subr.mxu0 0.0
          %1786 = vmatpush1.msra.mxu0 0.0
          %1787 = vmatprep.subr.mxu0 0.0
          %1788 = vmatpush1.msra.mxu0 0.0
          %1789 = vmatprep.mubr.f32.mxu0 0.0
          %1790 = vmatmul.mubr.f32.gmra.mrb[0].mxu0 %v1030
          %v1791 = vpop.f32.mrb[0].mxu0
          %v1792 = vadd.f32 0.0, %v1791
          %v1793 = vpop.f32.mrb[0].mxu0
          %1794 = vmatprep.mubr.f32.mxu0 0.0
          %1795 = vmatmul.mubr.f32.gmra.mrb[0].mxu0 %v1031
          %v1796 = vpop.f32.mrb[0].mxu0
          %v1797 = vadd.f32 0.0, %v1796
          %v1798 = vpop.f32.mrb[0].mxu0
          %1799 = vmatprep.mubr.f32.mxu0 0.0
          %1800 = vmatmul.mubr.f32.gmra.mrb[0].mxu0 %v1032
          %v1801 = vpop.f32.mrb[0].mxu0
          %v1802 = vadd.f32 0.0, %v1801
          %v1803 = vpop.f32.mrb[0].mxu0
          %1804 = vmatprep.mubr.f32.mxu0 0.0
          %1805 = vmatmul.mubr.f32.gmra.mrb[0].mxu0 %v1033
          %v1806 = vpop.f32.mrb[0].mxu0
          %v1807 = vadd.f32 0.0, %v1806
          %v1808 = vpop.f32.mrb[0].mxu0
          %1809 = vdwg.mxu0
          %s1810 = scalar_lea.vmem [#allocation2], 32
          %v1811 = vld [vmem:[%s1810] sm:$0xff]
          %v1812 = vld [vmem:[%s1810 + $0x8] sm:$0xff]
          %v1813 = vld [vmem:[%s1810 + $0x10] sm:$0xff]
          %v1814 = vld [vmem:[%s1810 + $0x18] sm:$0xff]
          %v1816 = vsel %vm1258, %v1811, 0
          %v1819 = vsel %vm1258, %v1812, 0
          %v1822 = vsel %vm1258, %v1813, 0
          %v1825 = vsel %vm1258, %v1814, 0
          %v1828 = vsel %vm1258, %v1690, 0
          %v1831 = vsel %vm1258, %v1695, 0
          %v1834 = vsel %vm1258, %v1700, 0
          %v1837 = vsel %vm1258, %v1705, 0
          %1839 = vmatprep.subr.mxu0 0.0
          %1840 = vmatpush1.xpose.msra.mxu0 %v1828
          %1841 = vmatprep.subr.mxu0 0.0
          %1842 = vmatpush1.xpose.msra.mxu0 %v1831
          %1843 = vmatprep.subr.mxu0 0.0
          %1844 = vmatpush1.xpose.msra.mxu0 %v1834
          %1845 = vmatprep.subr.mxu0 0.0
          %1846 = vmatpush1.xpose.msra.mxu0 %v1837
          %1847 = vmatprep.subr.mxu0 0.0
          %1848 = vmatpush1.xpose.msra.mxu0 0.0
          %1849 = vmatprep.subr.mxu0 0.0
          %1850 = vmatpush1.xpose.msra.mxu0 0.0
          %1851 = vmatprep.subr.mxu0 0.0
          %1852 = vmatpush1.xpose.msra.mxu0 0.0
          %1853 = vmatprep.subr.mxu0 0.0
          %1854 = vmatpush1.xpose.msra.mxu0 0.0
          %1855 = vmatprep.subr.mxu0 0.0
          %1856 = vmatpush1.xpose.msra.mxu0 0.0
          %1857 = vmatprep.subr.mxu0 0.0
          %1858 = vmatpush1.xpose.msra.mxu0 0.0
          %1859 = vmatprep.subr.mxu0 0.0
          %1860 = vmatpush1.xpose.msra.mxu0 0.0
          %1861 = vmatprep.subr.mxu0 0.0
          %1862 = vmatpush1.xpose.msra.mxu0 0.0
          %1863 = vmatprep.subr.mxu0 0.0
          %1864 = vmatpush1.xpose.msra.mxu0 0.0
          %1865 = vmatprep.subr.mxu0 0.0
          %1866 = vmatpush1.xpose.msra.mxu0 0.0
          %1867 = vmatprep.subr.mxu0 0.0
          %1868 = vmatpush1.xpose.msra.mxu0 0.0
          %1869 = vmatprep.subr.mxu0 0.0
          %1870 = vmatpush1.xpose.msra.mxu0 0.0
          %1871 = vmatprep.subr.mxu0 0.0
          %1872 = vmatpush1.xpose.msra.mxu0 0.0
          %1873 = vmatprep.subr.mxu0 0.0
          %1874 = vmatpush1.xpose.msra.mxu0 0.0
          %1875 = vmatprep.subr.mxu0 0.0
          %1876 = vmatpush1.xpose.msra.mxu0 0.0
          %1877 = vmatprep.subr.mxu0 0.0
          %1878 = vmatpush1.xpose.msra.mxu0 0.0
          %1879 = vmatprep.subr.mxu0 0.0
          %1880 = vmatpush1.xpose.msra.mxu0 0.0
          %1881 = vmatprep.subr.mxu0 0.0
          %1882 = vmatpush1.xpose.msra.mxu0 0.0
          %1883 = vmatprep.subr.mxu0 0.0
          %1884 = vmatpush1.xpose.msra.mxu0 0.0
          %1885 = vmatprep.subr.mxu0 0.0
          %1886 = vmatpush1.xpose.msra.mxu0 0.0
          %1887 = vmatprep.subr.mxu0 0.0
          %1888 = vmatpush1.xpose.msra.mxu0 0.0
          %1889 = vmatprep.subr.mxu0 0.0
          %1890 = vmatpush1.xpose.msra.mxu0 0.0
          %1891 = vmatprep.subr.mxu0 0.0
          %1892 = vmatpush1.xpose.msra.mxu0 0.0
          %1893 = vmatprep.subr.mxu0 0.0
          %1894 = vmatpush1.xpose.msra.mxu0 0.0
          %1895 = vmatprep.subr.mxu0 0.0
          %1896 = vmatpush1.xpose.msra.mxu0 0.0
          %1897 = vmatprep.subr.mxu0 0.0
          %1898 = vmatpush1.xpose.msra.mxu0 0.0
          %1899 = vmatprep.subr.mxu0 0.0
          %1900 = vmatpush1.xpose.msra.mxu0 0.0
          %1901 = vmatprep.subr.mxu0 0.0
          %1902 = vmatpush1.xpose.msra.mxu0 0.0
          %1903 = vmatprep.mubr.f32.mxu0 0.0
          %1904 = vmatmul.mubr.f32.gmra.mrb[0].mxu0 %v1816
          %v1905 = vpop.f32.mrb[0].mxu0
          %v1906 = vadd.f32 0.0, %v1905
          %v1907 = vpop.f32.mrb[0].mxu0
          %1908 = vmatprep.mubr.f32.mxu0 0.0
          %1909 = vmatmul.mubr.f32.gmra.mrb[0].mxu0 %v1819
          %v1910 = vpop.f32.mrb[0].mxu0
          %v1911 = vadd.f32 0.0, %v1910
          %v1912 = vpop.f32.mrb[0].mxu0
          %1913 = vmatprep.mubr.f32.mxu0 0.0
          %1914 = vmatmul.mubr.f32.gmra.mrb[0].mxu0 %v1822
          %v1915 = vpop.f32.mrb[0].mxu0
          %v1916 = vadd.f32 0.0, %v1915
          %v1917 = vpop.f32.mrb[0].mxu0
          %1918 = vmatprep.mubr.f32.mxu0 0.0
          %1919 = vmatmul.mubr.f32.gmra.mrb[0].mxu0 %v1825
          %v1920 = vpop.f32.mrb[0].mxu0
          %v1921 = vadd.f32 0.0, %v1920
          %v1922 = vpop.f32.mrb[0].mxu0
          %1923 = vdwg.mxu0
          %v1924 = vmul.f32 %v1906, 0.17677669
          %v1925 = vmul.f32 %v1911, 0.17677669
          %v1926 = vmul.f32 %v1916, 0.17677669
          %v1927 = vmul.f32 %v1921, 0.17677669
          %v1928 = vsel %vm1048, -1e+30, %v1924
          %v1929 = vsel %vm1049, -1e+30, %v1925
          %v1930 = vsel %vm1050, -1e+30, %v1926
          %v1931 = vsel %vm1051, -1e+30, %v1927
          %s1932 = scalar_lea.vmem [#allocation3], 32
          %v1933 = vld [vmem:[%s1932] sm:$0xff]
          %v1934 = vld [vmem:[%s1932 + $0x8] sm:$0xff]
          %v1935 = vld [vmem:[%s1932 + $0x10] sm:$0xff]
          %v1936 = vld [vmem:[%s1932 + $0x18] sm:$0xff]
          %v1937 = vsel %vm1258, %v1928, -inf
          %1938 = vmax.xlane.f32.xlu0 %v1937
          %v1939 = vpop.xlane.xlu0 %1938
          %v1940 = vsel %vm1258, %v1929, -inf
          %1941 = vmax.xlane.f32.xlu0 %v1940
          %v1942 = vpop.xlane.xlu0 %1941
          %v1943 = vsel %vm1258, %v1930, -inf
          %1944 = vmax.xlane.f32.xlu0 %v1943
          %v1945 = vpop.xlane.xlu0 %1944
          %v1946 = vsel %vm1258, %v1931, -inf
          %1947 = vmax.xlane.f32.xlu0 %v1946
          %v1948 = vpop.xlane.xlu0 %1947
          %v1949 = vmax.f32 %v1933, %v1939
          %v1950 = vmax.f32 %v1934, %v1942
          %v1951 = vmax.f32 %v1935, %v1945
          %v1952 = vmax.f32 %v1936, %v1948
          %v1953 = vsub.f32 %v1933, %v1949
          %v1954 = vsub.f32 %v1934, %v1950
          %v1955 = vsub.f32 %v1935, %v1951
          %v1956 = vsub.f32 %v1936, %v1952
          %v1957 = vmul.f32 %v1953, 1.442695
          %v1958 = vpow.pop %v1957
          %v1959 = vmul.f32 %v1954, 1.442695
          %v1960 = vpow.pop %v1959
          %v1961 = vmul.f32 %v1955, 1.442695
          %v1962 = vpow.pop %v1961
          %v1963 = vmul.f32 %v1956, 1.442695
          %v1964 = vpow.pop %v1963
          %1966 = vset.pattern.permute.xlu0 0
          %1967 = vperm.xlu0 %1966, %v1949
          %v1968 = vpop.permute.xlu0 %1967
          %1971 = vset.pattern.permute.xlu0 0
          %1972 = vperm.xlu0 %1971, %v1950
          %v1973 = vpop.permute.xlu0 %1972
          %1976 = vset.pattern.permute.xlu0 0
          %1977 = vperm.xlu0 %1976, %v1951
          %v1978 = vpop.permute.xlu0 %1977
          %1981 = vset.pattern.permute.xlu0 0
          %1982 = vperm.xlu0 %1981, %v1952
          %v1983 = vpop.permute.xlu0 %1982
          %v1985 = vsub.f32 %v1928, %v1968
          %v1986 = vsub.f32 %v1929, %v1973
          %v1987 = vsub.f32 %v1930, %v1978
          %v1988 = vsub.f32 %v1931, %v1983
          %v1989 = vmul.f32 %v1985, 1.442695
          %v1990 = vpow.pop %v1989
          %v1991 = vmul.f32 %v1986, 1.442695
          %v1992 = vpow.pop %v1991
          %v1993 = vmul.f32 %v1987, 1.442695
          %v1994 = vpow.pop %v1993
          %v1995 = vmul.f32 %v1988, 1.442695
          %v1996 = vpow.pop %v1995
          %s1997 = scalar_lea.vmem [#allocation4], 32
          %v1998 = vld [vmem:[%s1997] sm:$0xff]
          %v1999 = vld [vmem:[%s1997 + $0x8] sm:$0xff]
          %v2000 = vld [vmem:[%s1997 + $0x10] sm:$0xff]
          %v2001 = vld [vmem:[%s1997 + $0x18] sm:$0xff]
          %v2002 = vmul.f32 %v1958, %v1998
          %v2003 = vmul.f32 %v1960, %v1999
          %v2004 = vmul.f32 %v1962, %v2000
          %v2005 = vmul.f32 %v1964, %v2001
          %v2006 = vsel %vm1258, %v1990, 0.0
          %2007 = vadd.xlane.f32.xlu0 %v2006
          %v2008 = vpop.xlane.xlu0 %2007
          %v2009 = vsel %vm1258, %v1992, 0.0
          %2010 = vadd.xlane.f32.xlu0 %v2009
          %v2011 = vpop.xlane.xlu0 %2010
          %v2012 = vsel %vm1258, %v1994, 0.0
          %2013 = vadd.xlane.f32.xlu0 %v2012
          %v2014 = vpop.xlane.xlu0 %2013
          %v2015 = vsel %vm1258, %v1996, 0.0
          %2016 = vadd.xlane.f32.xlu0 %v2015
          %v2017 = vpop.xlane.xlu0 %2016
          %v2018 = vadd.f32 %v2002, %v2008
          %v2019 = vadd.f32 %v2003, %v2011
          %v2020 = vadd.f32 %v2004, %v2014
          %v2021 = vadd.f32 %v2005, %v2017
          %2022 = vst.msk [vmem:[%s1997] sm:$0xff] %vm1464, %v2018
          %2023 = vst.msk [vmem:[%s1997 + $0x8] sm:$0xff] %vm1464, %v2019
          %2024 = vst.msk [vmem:[%s1997 + $0x10] sm:$0xff] %vm1464, %v2020
          %2025 = vst.msk [vmem:[%s1997 + $0x18] sm:$0xff] %vm1464, %v2021
          %s2026 = scalar_lea.vmem [#allocation5], 32
          %v2027 = vld [vmem:[%s2026] sm:$0xff]
          %v2028 = vld [vmem:[%s2026 + $0x8] sm:$0xff]
          %v2029 = vld [vmem:[%s2026 + $0x10] sm:$0xff]
          %v2030 = vld [vmem:[%s2026 + $0x18] sm:$0xff]
          %2032 = vset.pattern.permute.xlu0 0
          %2033 = vperm.xlu0 %2032, %v1958
          %v2034 = vpop.permute.xlu0 %2033
          %2037 = vset.pattern.permute.xlu0 0
          %2038 = vperm.xlu0 %2037, %v1960
          %v2039 = vpop.permute.xlu0 %2038
          %2042 = vset.pattern.permute.xlu0 0
          %2043 = vperm.xlu0 %2042, %v1962
          %v2044 = vpop.permute.xlu0 %2043
          %2047 = vset.pattern.permute.xlu0 0
          %2048 = vperm.xlu0 %2047, %v1964
          %v2049 = vpop.permute.xlu0 %2048
          %v2051 = vmul.f32 %v2034, %v2027
          %v2052 = vmul.f32 %v2039, %v2028
          %v2053 = vmul.f32 %v2044, %v2029
          %v2054 = vmul.f32 %v2049, %v2030
          %v2056 = vsel %vm1258, %v1990, 0
          %v2059 = vsel %vm1258, %v1992, 0
          %v2062 = vsel %vm1258, %v1994, 0
          %v2065 = vsel %vm1258, %v1996, 0
          %2067 = vmatprep.subr.mxu0 0.0
          %2068 = vmatpush1.msra.mxu0 %v1792
          %2069 = vmatprep.subr.mxu0 0.0
          %2070 = vmatpush1.msra.mxu0 %v1797
          %2071 = vmatprep.subr.mxu0 0.0
          %2072 = vmatpush1.msra.mxu0 %v1802
          %2073 = vmatprep.subr.mxu0 0.0
          %2074 = vmatpush1.msra.mxu0 %v1807
          %2075 = vmatprep.subr.mxu0 0.0
          %2076 = vmatpush1.msra.mxu0 0.0
          %2077 = vmatprep.subr.mxu0 0.0
          %2078 = vmatpush1.msra.mxu0 0.0
          %2079 = vmatprep.subr.mxu0 0.0
          %2080 = vmatpush1.msra.mxu0 0.0
          %2081 = vmatprep.subr.mxu0 0.0
          %2082 = vmatpush1.msra.mxu0 0.0
          %2083 = vmatprep.subr.mxu0 0.0
          %2084 = vmatpush1.msra.mxu0 0.0
          %2085 = vmatprep.subr.mxu0 0.0
          %2086 = vmatpush1.msra.mxu0 0.0
          %2087 = vmatprep.subr.mxu0 0.0
          %2088 = vmatpush1.msra.mxu0 0.0
          %2089 = vmatprep.subr.mxu0 0.0
          %2090 = vmatpush1.msra.mxu0 0.0
          %2091 = vmatprep.subr.mxu0 0.0
          %2092 = vmatpush1.msra.mxu0 0.0
          %2093 = vmatprep.subr.mxu0 0.0
          %2094 = vmatpush1.msra.mxu0 0.0
          %2095 = vmatprep.subr.mxu0 0.0
          %2096 = vmatpush1.msra.mxu0 0.0
          %2097 = vmatprep.subr.mxu0 0.0
          %2098 = vmatpush1.msra.mxu0 0.0
          %2099 = vmatprep.subr.mxu0 0.0
          %2100 = vmatpush1.msra.mxu0 0.0
          %2101 = vmatprep.subr.mxu0 0.0
          %2102 = vmatpush1.msra.mxu0 0.0
          %2103 = vmatprep.subr.mxu0 0.0
          %2104 = vmatpush1.msra.mxu0 0.0
          %2105 = vmatprep.subr.mxu0 0.0
          %2106 = vmatpush1.msra.mxu0 0.0
          %2107 = vmatprep.subr.mxu0 0.0
          %2108 = vmatpush1.msra.mxu0 0.0
          %2109 = vmatprep.subr.mxu0 0.0
          %2110 = vmatpush1.msra.mxu0 0.0
          %2111 = vmatprep.subr.mxu0 0.0
          %2112 = vmatpush1.msra.mxu0 0.0
          %2113 = vmatprep.subr.mxu0 0.0
          %2114 = vmatpush1.msra.mxu0 0.0
          %2115 = vmatprep.subr.mxu0 0.0
          %2116 = vmatpush1.msra.mxu0 0.0
          %2117 = vmatprep.subr.mxu0 0.0
          %2118 = vmatpush1.msra.mxu0 0.0
          %2119 = vmatprep.subr.mxu0 0.0
          %2120 = vmatpush1.msra.mxu0 0.0
          %2121 = vmatprep.subr.mxu0 0.0
          %2122 = vmatpush1.msra.mxu0 0.0
          %2123 = vmatprep.subr.mxu0 0.0
          %2124 = vmatpush1.msra.mxu0 0.0
          %2125 = vmatprep.subr.mxu0 0.0
          %2126 = vmatpush1.msra.mxu0 0.0
          %2127 = vmatprep.subr.mxu0 0.0
          %2128 = vmatpush1.msra.mxu0 0.0
          %2129 = vmatprep.subr.mxu0 0.0
          %2130 = vmatpush1.msra.mxu0 0.0
          %2131 = vmatprep.mubr.f32.mxu0 0.0
          %2132 = vmatmul.mubr.f32.gmra.mrb[0].mxu0 %v2056
          %v2133 = vpop.f32.mrb[0].mxu0
          %v2134 = vadd.f32 0.0, %v2133
          %v2135 = vpop.f32.mrb[0].mxu0
          %2136 = vmatprep.mubr.f32.mxu0 0.0
          %2137 = vmatmul.mubr.f32.gmra.mrb[0].mxu0 %v2059
          %v2138 = vpop.f32.mrb[0].mxu0
          %v2139 = vadd.f32 0.0, %v2138
          %v2140 = vpop.f32.mrb[0].mxu0
          %2141 = vmatprep.mubr.f32.mxu0 0.0
          %2142 = vmatmul.mubr.f32.gmra.mrb[0].mxu0 %v2062
          %v2143 = vpop.f32.mrb[0].mxu0
          %v2144 = vadd.f32 0.0, %v2143
          %v2145 = vpop.f32.mrb[0].mxu0
          %2146 = vmatprep.mubr.f32.mxu0 0.0
          %2147 = vmatmul.mubr.f32.gmra.mrb[0].mxu0 %v2065
          %v2148 = vpop.f32.mrb[0].mxu0
          %v2149 = vadd.f32 0.0, %v2148
          %v2150 = vpop.f32.mrb[0].mxu0
          %2151 = vdwg.mxu0
          %v2152 = vadd.f32 %v2051, %v2134
          %v2153 = vadd.f32 %v2052, %v2139
          %v2154 = vadd.f32 %v2053, %v2144
          %v2155 = vadd.f32 %v2054, %v2149
          %2156 = vst.msk [vmem:[%s2026] sm:$0xff] %vm1258, %v2152
          %2157 = vst.msk [vmem:[%s2026 + $0x8] sm:$0xff] %vm1258, %v2153
          %2158 = vst.msk [vmem:[%s2026 + $0x10] sm:$0xff] %vm1258, %v2154
          %2159 = vst.msk [vmem:[%s2026 + $0x18] sm:$0xff] %vm1258, %v2155
          %2160 = vst.msk [vmem:[%s1932] sm:$0xff] %vm1464, %v1949
          %2161 = vst.msk [vmem:[%s1932 + $0x8] sm:$0xff] %vm1464, %v1950
          %2162 = vst.msk [vmem:[%s1932 + $0x10] sm:$0xff] %vm1464, %v1951
          %2163 = vst.msk [vmem:[%s1932 + $0x18] sm:$0xff] %vm1464, %v1952
          %s2164 = scalar_lea.vmem %s5, 256
          %v2165 = vld [vmem:[%s2164] sm:$0xff]
          %v2166 = vld [vmem:[%s2164 + $0x8] sm:$0xff]
          %v2167 = vld [vmem:[%s2164 + $0x10] sm:$0xff]
          %v2168 = vld [vmem:[%s2164 + $0x18] sm:$0xff]
          %v2169 = vld [vmem:[%s2164 + $0x20] sm:$0xff]
          %v2170 = vld [vmem:[%s2164 + $0x28] sm:$0xff]
          %v2171 = vld [vmem:[%s2164 + $0x30] sm:$0xff]
          %v2172 = vld [vmem:[%s2164 + $0x38] sm:$0xff]
          %v2173 = vld [vmem:[%s2164 + $0x40] sm:$0xff]
          %v2174 = vld [vmem:[%s2164 + $0x48] sm:$0xff]
          %v2175 = vld [vmem:[%s2164 + $0x50] sm:$0xff]
          %v2176 = vld [vmem:[%s2164 + $0x58] sm:$0xff]
          %v2177 = vld [vmem:[%s2164 + $0x60] sm:$0xff]
          %v2178 = vld [vmem:[%s2164 + $0x68] sm:$0xff]
          %v2179 = vld [vmem:[%s2164 + $0x70] sm:$0xff]
          %v2180 = vld [vmem:[%s2164 + $0x78] sm:$0xff]
          %2181 = vmatprep.subr.mxu0 0.0
          %2182 = vmatpush1.msra.mxu0 %v2165
          %2183 = vmatprep.subr.mxu0 0.0
          %2184 = vmatpush1.msra.mxu0 %v2166
          %2185 = vmatprep.subr.mxu0 0.0
          %2186 = vmatpush1.msra.mxu0 %v2167
          %2187 = vmatprep.subr.mxu0 0.0
          %2188 = vmatpush1.msra.mxu0 %v2168
          %2189 = vmatprep.subr.mxu0 0.0
          %2190 = vmatpush1.msra.mxu0 %v2169
          %2191 = vmatprep.subr.mxu0 0.0
          %2192 = vmatpush1.msra.mxu0 %v2170
          %2193 = vmatprep.subr.mxu0 0.0
          %2194 = vmatpush1.msra.mxu0 %v2171
          %2195 = vmatprep.subr.mxu0 0.0
          %2196 = vmatpush1.msra.mxu0 %v2172
          %2197 = vmatprep.subr.mxu0 0.0
          %2198 = vmatpush1.msra.mxu0 %v2173
          %2199 = vmatprep.subr.mxu0 0.0
          %2200 = vmatpush1.msra.mxu0 %v2174
          %2201 = vmatprep.subr.mxu0 0.0
          %2202 = vmatpush1.msra.mxu0 %v2175
          %2203 = vmatprep.subr.mxu0 0.0
          %2204 = vmatpush1.msra.mxu0 %v2176
          %2205 = vmatprep.subr.mxu0 0.0
          %2206 = vmatpush1.msra.mxu0 %v2177
          %2207 = vmatprep.subr.mxu0 0.0
          %2208 = vmatpush1.msra.mxu0 %v2178
          %2209 = vmatprep.subr.mxu0 0.0
          %2210 = vmatpush1.msra.mxu0 %v2179
          %2211 = vmatprep.subr.mxu0 0.0
          %2212 = vmatpush1.msra.mxu0 %v2180
          %2213 = vmatprep.subr.mxu0 0.0
          %2214 = vmatpush1.msra.mxu0 0.0
          %2215 = vmatprep.subr.mxu0 0.0
          %2216 = vmatpush1.msra.mxu0 0.0
          %2217 = vmatprep.subr.mxu0 0.0
          %2218 = vmatpush1.msra.mxu0 0.0
          %2219 = vmatprep.subr.mxu0 0.0
          %2220 = vmatpush1.msra.mxu0 0.0
          %2221 = vmatprep.subr.mxu0 0.0
          %2222 = vmatpush1.msra.mxu0 0.0
          %2223 = vmatprep.subr.mxu0 0.0
          %2224 = vmatpush1.msra.mxu0 0.0
          %2225 = vmatprep.subr.mxu0 0.0
          %2226 = vmatpush1.msra.mxu0 0.0
          %2227 = vmatprep.subr.mxu0 0.0
          %2228 = vmatpush1.msra.mxu0 0.0
          %2229 = vmatprep.subr.mxu0 0.0
          %2230 = vmatpush1.msra.mxu0 0.0
          %2231 = vmatprep.subr.mxu0 0.0
          %2232 = vmatpush1.msra.mxu0 0.0
          %2233 = vmatprep.subr.mxu0 0.0
          %2234 = vmatpush1.msra.mxu0 0.0
          %2235 = vmatprep.subr.mxu0 0.0
          %2236 = vmatpush1.msra.mxu0 0.0
          %2237 = vmatprep.subr.mxu0 0.0
          %2238 = vmatpush1.msra.mxu0 0.0
          %2239 = vmatprep.subr.mxu0 0.0
          %2240 = vmatpush1.msra.mxu0 0.0
          %2241 = vmatprep.subr.mxu0 0.0
          %2242 = vmatpush1.msra.mxu0 0.0
          %2243 = vmatprep.subr.mxu0 0.0
          %2244 = vmatpush1.msra.mxu0 0.0
          %2245 = vmatprep.mubr.f32.mxu0 0.0
          %2246 = vmatmul.mubr.f32.gmra.mrb[0].mxu0 %v1030
          %v2247 = vpop.f32.mrb[0].mxu0
          %v2248 = vadd.f32 0.0, %v2247
          %v2249 = vpop.f32.mrb[0].mxu0
          %2250 = vmatprep.mubr.f32.mxu0 0.0
          %2251 = vmatmul.mubr.f32.gmra.mrb[0].mxu0 %v1031
          %v2252 = vpop.f32.mrb[0].mxu0
          %v2253 = vadd.f32 0.0, %v2252
          %v2254 = vpop.f32.mrb[0].mxu0
          %2255 = vmatprep.mubr.f32.mxu0 0.0
          %2256 = vmatmul.mubr.f32.gmra.mrb[0].mxu0 %v1032
          %v2257 = vpop.f32.mrb[0].mxu0
          %v2258 = vadd.f32 0.0, %v2257
          %v2259 = vpop.f32.mrb[0].mxu0
          %2260 = vmatprep.mubr.f32.mxu0 0.0
          %2261 = vmatmul.mubr.f32.gmra.mrb[0].mxu0 %v1033
          %v2262 = vpop.f32.mrb[0].mxu0
          %v2263 = vadd.f32 0.0, %v2262
          %v2264 = vpop.f32.mrb[0].mxu0
          %2265 = vdwg.mxu0
          %s2266 = scalar_lea.vmem %s6, 256
          %v2267 = vld [vmem:[%s2266] sm:$0xff]
          %v2268 = vld [vmem:[%s2266 + $0x8] sm:$0xff]
          %v2269 = vld [vmem:[%s2266 + $0x10] sm:$0xff]
          %v2270 = vld [vmem:[%s2266 + $0x18] sm:$0xff]
          %v2271 = vld [vmem:[%s2266 + $0x20] sm:$0xff]
          %v2272 = vld [vmem:[%s2266 + $0x28] sm:$0xff]
          %v2273 = vld [vmem:[%s2266 + $0x30] sm:$0xff]
          %v2274 = vld [vmem:[%s2266 + $0x38] sm:$0xff]
          %v2275 = vld [vmem:[%s2266 + $0x40] sm:$0xff]
          %v2276 = vld [vmem:[%s2266 + $0x48] sm:$0xff]
          %v2277 = vld [vmem:[%s2266 + $0x50] sm:$0xff]
          %v2278 = vld [vmem:[%s2266 + $0x58] sm:$0xff]
          %v2279 = vld [vmem:[%s2266 + $0x60] sm:$0xff]
          %v2280 = vld [vmem:[%s2266 + $0x68] sm:$0xff]
          %v2281 = vld [vmem:[%s2266 + $0x70] sm:$0xff]
          %v2282 = vld [vmem:[%s2266 + $0x78] sm:$0xff]
          %2283 = vmatprep.subr.mxu0 0.0
          %2284 = vmatpush1.msra.mxu0 %v2267
          %2285 = vmatprep.subr.mxu0 0.0
          %2286 = vmatpush1.msra.mxu0 %v2268
          %2287 = vmatprep.subr.mxu0 0.0
          %2288 = vmatpush1.msra.mxu0 %v2269
          %2289 = vmatprep.subr.mxu0 0.0
          %2290 = vmatpush1.msra.mxu0 %v2270
          %2291 = vmatprep.subr.mxu0 0.0
          %2292 = vmatpush1.msra.mxu0 %v2271
          %2293 = vmatprep.subr.mxu0 0.0
          %2294 = vmatpush1.msra.mxu0 %v2272
          %2295 = vmatprep.subr.mxu0 0.0
          %2296 = vmatpush1.msra.mxu0 %v2273
          %2297 = vmatprep.subr.mxu0 0.0
          %2298 = vmatpush1.msra.mxu0 %v2274
          %2299 = vmatprep.subr.mxu0 0.0
          %2300 = vmatpush1.msra.mxu0 %v2275
          %2301 = vmatprep.subr.mxu0 0.0
          %2302 = vmatpush1.msra.mxu0 %v2276
          %2303 = vmatprep.subr.mxu0 0.0
          %2304 = vmatpush1.msra.mxu0 %v2277
          %2305 = vmatprep.subr.mxu0 0.0
          %2306 = vmatpush1.msra.mxu0 %v2278
          %2307 = vmatprep.subr.mxu0 0.0
          %2308 = vmatpush1.msra.mxu0 %v2279
          %2309 = vmatprep.subr.mxu0 0.0
          %2310 = vmatpush1.msra.mxu0 %v2280
          %2311 = vmatprep.subr.mxu0 0.0
          %2312 = vmatpush1.msra.mxu0 %v2281
          %2313 = vmatprep.subr.mxu0 0.0
          %2314 = vmatpush1.msra.mxu0 %v2282
          %2315 = vmatprep.subr.mxu0 0.0
          %2316 = vmatpush1.msra.mxu0 0.0
          %2317 = vmatprep.subr.mxu0 0.0
          %2318 = vmatpush1.msra.mxu0 0.0
          %2319 = vmatprep.subr.mxu0 0.0
          %2320 = vmatpush1.msra.mxu0 0.0
          %2321 = vmatprep.subr.mxu0 0.0
          %2322 = vmatpush1.msra.mxu0 0.0
          %2323 = vmatprep.subr.mxu0 0.0
          %2324 = vmatpush1.msra.mxu0 0.0
          %2325 = vmatprep.subr.mxu0 0.0
          %2326 = vmatpush1.msra.mxu0 0.0
          %2327 = vmatprep.subr.mxu0 0.0
          %2328 = vmatpush1.msra.mxu0 0.0
          %2329 = vmatprep.subr.mxu0 0.0
          %2330 = vmatpush1.msra.mxu0 0.0
          %2331 = vmatprep.subr.mxu0 0.0
          %2332 = vmatpush1.msra.mxu0 0.0
          %2333 = vmatprep.subr.mxu0 0.0
          %2334 = vmatpush1.msra.mxu0 0.0
          %2335 = vmatprep.subr.mxu0 0.0
          %2336 = vmatpush1.msra.mxu0 0.0
          %2337 = vmatprep.subr.mxu0 0.0
          %2338 = vmatpush1.msra.mxu0 0.0
          %2339 = vmatprep.subr.mxu0 0.0
          %2340 = vmatpush1.msra.mxu0 0.0
          %2341 = vmatprep.subr.mxu0 0.0
          %2342 = vmatpush1.msra.mxu0 0.0
          %2343 = vmatprep.subr.mxu0 0.0
          %2344 = vmatpush1.msra.mxu0 0.0
          %2345 = vmatprep.subr.mxu0 0.0
          %2346 = vmatpush1.msra.mxu0 0.0
          %2347 = vmatprep.mubr.f32.mxu0 0.0
          %2348 = vmatmul.mubr.f32.gmra.mrb[0].mxu0 %v1030
          %v2349 = vpop.f32.mrb[0].mxu0
          %v2350 = vadd.f32 0.0, %v2349
          %v2351 = vpop.f32.mrb[0].mxu0
          %2352 = vmatprep.mubr.f32.mxu0 0.0
          %2353 = vmatmul.mubr.f32.gmra.mrb[0].mxu0 %v1031
          %v2354 = vpop.f32.mrb[0].mxu0
          %v2355 = vadd.f32 0.0, %v2354
          %v2356 = vpop.f32.mrb[0].mxu0
          %2357 = vmatprep.mubr.f32.mxu0 0.0
          %2358 = vmatmul.mubr.f32.gmra.mrb[0].mxu0 %v1032
          %v2359 = vpop.f32.mrb[0].mxu0
          %v2360 = vadd.f32 0.0, %v2359
          %v2361 = vpop.f32.mrb[0].mxu0
          %2362 = vmatprep.mubr.f32.mxu0 0.0
          %2363 = vmatmul.mubr.f32.gmra.mrb[0].mxu0 %v1033
          %v2364 = vpop.f32.mrb[0].mxu0
          %v2365 = vadd.f32 0.0, %v2364
          %v2366 = vpop.f32.mrb[0].mxu0
          %2367 = vdwg.mxu0
          %s2368 = scalar_lea.vmem [#allocation2], 64
          %v2369 = vld [vmem:[%s2368] sm:$0xff]
          %v2370 = vld [vmem:[%s2368 + $0x8] sm:$0xff]
          %v2371 = vld [vmem:[%s2368 + $0x10] sm:$0xff]
          %v2372 = vld [vmem:[%s2368 + $0x18] sm:$0xff]
          %v2374 = vsel %vm1258, %v2369, 0
          %v2377 = vsel %vm1258, %v2370, 0
          %v2380 = vsel %vm1258, %v2371, 0
          %v2383 = vsel %vm1258, %v2372, 0
          %v2386 = vsel %vm1258, %v2248, 0
          %v2389 = vsel %vm1258, %v2253, 0
          %v2392 = vsel %vm1258, %v2258, 0
          %v2395 = vsel %vm1258, %v2263, 0
          %2397 = vmatprep.subr.mxu0 0.0
          %2398 = vmatpush1.xpose.msra.mxu0 %v2386
          %2399 = vmatprep.subr.mxu0 0.0
          %2400 = vmatpush1.xpose.msra.mxu0 %v2389
          %2401 = vmatprep.subr.mxu0 0.0
          %2402 = vmatpush1.xpose.msra.mxu0 %v2392
          %2403 = vmatprep.subr.mxu0 0.0
          %2404 = vmatpush1.xpose.msra.mxu0 %v2395
          %2405 = vmatprep.subr.mxu0 0.0
          %2406 = vmatpush1.xpose.msra.mxu0 0.0
          %2407 = vmatprep.subr.mxu0 0.0
          %2408 = vmatpush1.xpose.msra.mxu0 0.0
          %2409 = vmatprep.subr.mxu0 0.0
          %2410 = vmatpush1.xpose.msra.mxu0 0.0
          %2411 = vmatprep.subr.mxu0 0.0
          %2412 = vmatpush1.xpose.msra.mxu0 0.0
          %2413 = vmatprep.subr.mxu0 0.0
          %2414 = vmatpush1.xpose.msra.mxu0 0.0
          %2415 = vmatprep.subr.mxu0 0.0
          %2416 = vmatpush1.xpose.msra.mxu0 0.0
          %2417 = vmatprep.subr.mxu0 0.0
          %2418 = vmatpush1.xpose.msra.mxu0 0.0
          %2419 = vmatprep.subr.mxu0 0.0
          %2420 = vmatpush1.xpose.msra.mxu0 0.0
          %2421 = vmatprep.subr.mxu0 0.0
          %2422 = vmatpush1.xpose.msra.mxu0 0.0
          %2423 = vmatprep.subr.mxu0 0.0
          %2424 = vmatpush1.xpose.msra.mxu0 0.0
          %2425 = vmatprep.subr.mxu0 0.0
          %2426 = vmatpush1.xpose.msra.mxu0 0.0
          %2427 = vmatprep.subr.mxu0 0.0
          %2428 = vmatpush1.xpose.msra.mxu0 0.0
          %2429 = vmatprep.subr.mxu0 0.0
          %2430 = vmatpush1.xpose.msra.mxu0 0.0
          %2431 = vmatprep.subr.mxu0 0.0
          %2432 = vmatpush1.xpose.msra.mxu0 0.0
          %2433 = vmatprep.subr.mxu0 0.0
          %2434 = vmatpush1.xpose.msra.mxu0 0.0
          %2435 = vmatprep.subr.mxu0 0.0
          %2436 = vmatpush1.xpose.msra.mxu0 0.0
          %2437 = vmatprep.subr.mxu0 0.0
          %2438 = vmatpush1.xpose.msra.mxu0 0.0
          %2439 = vmatprep.subr.mxu0 0.0
          %2440 = vmatpush1.xpose.msra.mxu0 0.0
          %2441 = vmatprep.subr.mxu0 0.0
          %2442 = vmatpush1.xpose.msra.mxu0 0.0
          %2443 = vmatprep.subr.mxu0 0.0
          %2444 = vmatpush1.xpose.msra.mxu0 0.0
          %2445 = vmatprep.subr.mxu0 0.0
          %2446 = vmatpush1.xpose.msra.mxu0 0.0
          %2447 = vmatprep.subr.mxu0 0.0
          %2448 = vmatpush1.xpose.msra.mxu0 0.0
          %2449 = vmatprep.subr.mxu0 0.0
          %2450 = vmatpush1.xpose.msra.mxu0 0.0
          %2451 = vmatprep.subr.mxu0 0.0
          %2452 = vmatpush1.xpose.msra.mxu0 0.0
          %2453 = vmatprep.subr.mxu0 0.0
          %2454 = vmatpush1.xpose.msra.mxu0 0.0
          %2455 = vmatprep.subr.mxu0 0.0
          %2456 = vmatpush1.xpose.msra.mxu0 0.0
          %2457 = vmatprep.subr.mxu0 0.0
          %2458 = vmatpush1.xpose.msra.mxu0 0.0
          %2459 = vmatprep.subr.mxu0 0.0
          %2460 = vmatpush1.xpose.msra.mxu0 0.0
          %2461 = vmatprep.mubr.f32.mxu0 0.0
          %2462 = vmatmul.mubr.f32.gmra.mrb[0].mxu0 %v2374
          %v2463 = vpop.f32.mrb[0].mxu0
          %v2464 = vadd.f32 0.0, %v2463
          %v2465 = vpop.f32.mrb[0].mxu0
          %2466 = vmatprep.mubr.f32.mxu0 0.0
          %2467 = vmatmul.mubr.f32.gmra.mrb[0].mxu0 %v2377
          %v2468 = vpop.f32.mrb[0].mxu0
          %v2469 = vadd.f32 0.0, %v2468
          %v2470 = vpop.f32.mrb[0].mxu0
          %2471 = vmatprep.mubr.f32.mxu0 0.0
          %2472 = vmatmul.mubr.f32.gmra.mrb[0].mxu0 %v2380
          %v2473 = vpop.f32.mrb[0].mxu0
          %v2474 = vadd.f32 0.0, %v2473
          %v2475 = vpop.f32.mrb[0].mxu0
          %2476 = vmatprep.mubr.f32.mxu0 0.0
          %2477 = vmatmul.mubr.f32.gmra.mrb[0].mxu0 %v2383
          %v2478 = vpop.f32.mrb[0].mxu0
          %v2479 = vadd.f32 0.0, %v2478
          %v2480 = vpop.f32.mrb[0].mxu0
          %2481 = vdwg.mxu0
          %v2482 = vmul.f32 %v2464, 0.17677669
          %v2483 = vmul.f32 %v2469, 0.17677669
          %v2484 = vmul.f32 %v2474, 0.17677669
          %v2485 = vmul.f32 %v2479, 0.17677669
          %v2486 = vsel %vm1048, -1e+30, %v2482
          %v2487 = vsel %vm1049, -1e+30, %v2483
          %v2488 = vsel %vm1050, -1e+30, %v2484
          %v2489 = vsel %vm1051, -1e+30, %v2485
          %s2490 = scalar_lea.vmem [#allocation3], 64
          %v2491 = vld [vmem:[%s2490] sm:$0xff]
          %v2492 = vld [vmem:[%s2490 + $0x8] sm:$0xff]
          %v2493 = vld [vmem:[%s2490 + $0x10] sm:$0xff]
          %v2494 = vld [vmem:[%s2490 + $0x18] sm:$0xff]
          %v2495 = vsel %vm1258, %v2486, -inf
          %2496 = vmax.xlane.f32.xlu0 %v2495
          %v2497 = vpop.xlane.xlu0 %2496
          %v2498 = vsel %vm1258, %v2487, -inf
          %2499 = vmax.xlane.f32.xlu0 %v2498
          %v2500 = vpop.xlane.xlu0 %2499
          %v2501 = vsel %vm1258, %v2488, -inf
          %2502 = vmax.xlane.f32.xlu0 %v2501
          %v2503 = vpop.xlane.xlu0 %2502
          %v2504 = vsel %vm1258, %v2489, -inf
          %2505 = vmax.xlane.f32.xlu0 %v2504
          %v2506 = vpop.xlane.xlu0 %2505
          %v2507 = vmax.f32 %v2491, %v2497
          %v2508 = vmax.f32 %v2492, %v2500
          %v2509 = vmax.f32 %v2493, %v2503
          %v2510 = vmax.f32 %v2494, %v2506
          %v2511 = vsub.f32 %v2491, %v2507
          %v2512 = vsub.f32 %v2492, %v2508
          %v2513 = vsub.f32 %v2493, %v2509
          %v2514 = vsub.f32 %v2494, %v2510
          %v2515 = vmul.f32 %v2511, 1.442695
          %v2516 = vpow.pop %v2515
          %v2517 = vmul.f32 %v2512, 1.442695
          %v2518 = vpow.pop %v2517
          %v2519 = vmul.f32 %v2513, 1.442695
          %v2520 = vpow.pop %v2519
          %v2521 = vmul.f32 %v2514, 1.442695
          %v2522 = vpow.pop %v2521
          %2524 = vset.pattern.permute.xlu0 0
          %2525 = vperm.xlu0 %2524, %v2507
          %v2526 = vpop.permute.xlu0 %2525
          %2529 = vset.pattern.permute.xlu0 0
          %2530 = vperm.xlu0 %2529, %v2508
          %v2531 = vpop.permute.xlu0 %2530
          %2534 = vset.pattern.permute.xlu0 0
          %2535 = vperm.xlu0 %2534, %v2509
          %v2536 = vpop.permute.xlu0 %2535
          %2539 = vset.pattern.permute.xlu0 0
          %2540 = vperm.xlu0 %2539, %v2510
          %v2541 = vpop.permute.xlu0 %2540
          %v2543 = vsub.f32 %v2486, %v2526
          %v2544 = vsub.f32 %v2487, %v2531
          %v2545 = vsub.f32 %v2488, %v2536
          %v2546 = vsub.f32 %v2489, %v2541
          %v2547 = vmul.f32 %v2543, 1.442695
          %v2548 = vpow.pop %v2547
          %v2549 = vmul.f32 %v2544, 1.442695
          %v2550 = vpow.pop %v2549
          %v2551 = vmul.f32 %v2545, 1.442695
          %v2552 = vpow.pop %v2551
          %v2553 = vmul.f32 %v2546, 1.442695
          %v2554 = vpow.pop %v2553
          %s2555 = scalar_lea.vmem [#allocation4], 64
          %v2556 = vld [vmem:[%s2555] sm:$0xff]
          %v2557 = vld [vmem:[%s2555 + $0x8] sm:$0xff]
          %v2558 = vld [vmem:[%s2555 + $0x10] sm:$0xff]
          %v2559 = vld [vmem:[%s2555 + $0x18] sm:$0xff]
          %v2560 = vmul.f32 %v2516, %v2556
          %v2561 = vmul.f32 %v2518, %v2557
          %v2562 = vmul.f32 %v2520, %v2558
          %v2563 = vmul.f32 %v2522, %v2559
          %v2564 = vsel %vm1258, %v2548, 0.0
          %2565 = vadd.xlane.f32.xlu0 %v2564
          %v2566 = vpop.xlane.xlu0 %2565
          %v2567 = vsel %vm1258, %v2550, 0.0
          %2568 = vadd.xlane.f32.xlu0 %v2567
          %v2569 = vpop.xlane.xlu0 %2568
          %v2570 = vsel %vm1258, %v2552, 0.0
          %2571 = vadd.xlane.f32.xlu0 %v2570
          %v2572 = vpop.xlane.xlu0 %2571
          %v2573 = vsel %vm1258, %v2554, 0.0
          %2574 = vadd.xlane.f32.xlu0 %v2573
          %v2575 = vpop.xlane.xlu0 %2574
          %v2576 = vadd.f32 %v2560, %v2566
          %v2577 = vadd.f32 %v2561, %v2569
          %v2578 = vadd.f32 %v2562, %v2572
          %v2579 = vadd.f32 %v2563, %v2575
          %2580 = vst.msk [vmem:[%s2555] sm:$0xff] %vm1464, %v2576
          %2581 = vst.msk [vmem:[%s2555 + $0x8] sm:$0xff] %vm1464, %v2577
          %2582 = vst.msk [vmem:[%s2555 + $0x10] sm:$0xff] %vm1464, %v2578
          %2583 = vst.msk [vmem:[%s2555 + $0x18] sm:$0xff] %vm1464, %v2579
          %s2584 = scalar_lea.vmem [#allocation5], 64
          %v2585 = vld [vmem:[%s2584] sm:$0xff]
          %v2586 = vld [vmem:[%s2584 + $0x8] sm:$0xff]
          %v2587 = vld [vmem:[%s2584 + $0x10] sm:$0xff]
          %v2588 = vld [vmem:[%s2584 + $0x18] sm:$0xff]
          %2590 = vset.pattern.permute.xlu0 0
          %2591 = vperm.xlu0 %2590, %v2516
          %v2592 = vpop.permute.xlu0 %2591
          %2595 = vset.pattern.permute.xlu0 0
          %2596 = vperm.xlu0 %2595, %v2518
          %v2597 = vpop.permute.xlu0 %2596
          %2600 = vset.pattern.permute.xlu0 0
          %2601 = vperm.xlu0 %2600, %v2520
          %v2602 = vpop.permute.xlu0 %2601
          %2605 = vset.pattern.permute.xlu0 0
          %2606 = vperm.xlu0 %2605, %v2522
          %v2607 = vpop.permute.xlu0 %2606
          %v2609 = vmul.f32 %v2592, %v2585
          %v2610 = vmul.f32 %v2597, %v2586
          %v2611 = vmul.f32 %v2602, %v2587
          %v2612 = vmul.f32 %v2607, %v2588
          %v2614 = vsel %vm1258, %v2548, 0
          %v2617 = vsel %vm1258, %v2550, 0
          %v2620 = vsel %vm1258, %v2552, 0
          %v2623 = vsel %vm1258, %v2554, 0
          %2625 = vmatprep.subr.mxu0 0.0
          %2626 = vmatpush1.msra.mxu0 %v2350
          %2627 = vmatprep.subr.mxu0 0.0
          %2628 = vmatpush1.msra.mxu0 %v2355
          %2629 = vmatprep.subr.mxu0 0.0
          %2630 = vmatpush1.msra.mxu0 %v2360
          %2631 = vmatprep.subr.mxu0 0.0
          %2632 = vmatpush1.msra.mxu0 %v2365
          %2633 = vmatprep.subr.mxu0 0.0
          %2634 = vmatpush1.msra.mxu0 0.0
          %2635 = vmatprep.subr.mxu0 0.0
          %2636 = vmatpush1.msra.mxu0 0.0
          %2637 = vmatprep.subr.mxu0 0.0
          %2638 = vmatpush1.msra.mxu0 0.0
          %2639 = vmatprep.subr.mxu0 0.0
          %2640 = vmatpush1.msra.mxu0 0.0
          %2641 = vmatprep.subr.mxu0 0.0
          %2642 = vmatpush1.msra.mxu0 0.0
          %2643 = vmatprep.subr.mxu0 0.0
          %2644 = vmatpush1.msra.mxu0 0.0
          %2645 = vmatprep.subr.mxu0 0.0
          %2646 = vmatpush1.msra.mxu0 0.0
          %2647 = vmatprep.subr.mxu0 0.0
          %2648 = vmatpush1.msra.mxu0 0.0
          %2649 = vmatprep.subr.mxu0 0.0
          %2650 = vmatpush1.msra.mxu0 0.0
          %2651 = vmatprep.subr.mxu0 0.0
          %2652 = vmatpush1.msra.mxu0 0.0
          %2653 = vmatprep.subr.mxu0 0.0
          %2654 = vmatpush1.msra.mxu0 0.0
          %2655 = vmatprep.subr.mxu0 0.0
          %2656 = vmatpush1.msra.mxu0 0.0
          %2657 = vmatprep.subr.mxu0 0.0
          %2658 = vmatpush1.msra.mxu0 0.0
          %2659 = vmatprep.subr.mxu0 0.0
          %2660 = vmatpush1.msra.mxu0 0.0
          %2661 = vmatprep.subr.mxu0 0.0
          %2662 = vmatpush1.msra.mxu0 0.0
          %2663 = vmatprep.subr.mxu0 0.0
          %2664 = vmatpush1.msra.mxu0 0.0
          %2665 = vmatprep.subr.mxu0 0.0
          %2666 = vmatpush1.msra.mxu0 0.0
          %2667 = vmatprep.subr.mxu0 0.0
          %2668 = vmatpush1.msra.mxu0 0.0
          %2669 = vmatprep.subr.mxu0 0.0
          %2670 = vmatpush1.msra.mxu0 0.0
          %2671 = vmatprep.subr.mxu0 0.0
          %2672 = vmatpush1.msra.mxu0 0.0
          %2673 = vmatprep.subr.mxu0 0.0
          %2674 = vmatpush1.msra.mxu0 0.0
          %2675 = vmatprep.subr.mxu0 0.0
          %2676 = vmatpush1.msra.mxu0 0.0
          %2677 = vmatprep.subr.mxu0 0.0
          %2678 = vmatpush1.msra.mxu0 0.0
          %2679 = vmatprep.subr.mxu0 0.0
          %2680 = vmatpush1.msra.mxu0 0.0
          %2681 = vmatprep.subr.mxu0 0.0
          %2682 = vmatpush1.msra.mxu0 0.0
          %2683 = vmatprep.subr.mxu0 0.0
          %2684 = vmatpush1.msra.mxu0 0.0
          %2685 = vmatprep.subr.mxu0 0.0
          %2686 = vmatpush1.msra.mxu0 0.0
          %2687 = vmatprep.subr.mxu0 0.0
          %2688 = vmatpush1.msra.mxu0 0.0
          %2689 = vmatprep.mubr.f32.mxu0 0.0
          %2690 = vmatmul.mubr.f32.gmra.mrb[0].mxu0 %v2614
          %v2691 = vpop.f32.mrb[0].mxu0
          %v2692 = vadd.f32 0.0, %v2691
          %v2693 = vpop.f32.mrb[0].mxu0
          %2694 = vmatprep.mubr.f32.mxu0 0.0
          %2695 = vmatmul.mubr.f32.gmra.mrb[0].mxu0 %v2617
          %v2696 = vpop.f32.mrb[0].mxu0
          %v2697 = vadd.f32 0.0, %v2696
          %v2698 = vpop.f32.mrb[0].mxu0
          %2699 = vmatprep.mubr.f32.mxu0 0.0
          %2700 = vmatmul.mubr.f32.gmra.mrb[0].mxu0 %v2620
          %v2701 = vpop.f32.mrb[0].mxu0
          %v2702 = vadd.f32 0.0, %v2701
          %v2703 = vpop.f32.mrb[0].mxu0
          %2704 = vmatprep.mubr.f32.mxu0 0.0
          %2705 = vmatmul.mubr.f32.gmra.mrb[0].mxu0 %v2623
          %v2706 = vpop.f32.mrb[0].mxu0
          %v2707 = vadd.f32 0.0, %v2706
          %v2708 = vpop.f32.mrb[0].mxu0
          %2709 = vdwg.mxu0
          %v2710 = vadd.f32 %v2609, %v2692
          %v2711 = vadd.f32 %v2610, %v2697
          %v2712 = vadd.f32 %v2611, %v2702
          %v2713 = vadd.f32 %v2612, %v2707
          %2714 = vst.msk [vmem:[%s2584] sm:$0xff] %vm1258, %v2710
          %2715 = vst.msk [vmem:[%s2584 + $0x8] sm:$0xff] %vm1258, %v2711
          %2716 = vst.msk [vmem:[%s2584 + $0x10] sm:$0xff] %vm1258, %v2712
          %2717 = vst.msk [vmem:[%s2584 + $0x18] sm:$0xff] %vm1258, %v2713
          %2718 = vst.msk [vmem:[%s2490] sm:$0xff] %vm1464, %v2507
          %2719 = vst.msk [vmem:[%s2490 + $0x8] sm:$0xff] %vm1464, %v2508
          %2720 = vst.msk [vmem:[%s2490 + $0x10] sm:$0xff] %vm1464, %v2509
          %2721 = vst.msk [vmem:[%s2490 + $0x18] sm:$0xff] %vm1464, %v2510
          %s2722 = scalar_lea.vmem %s5, 384
          %v2723 = vld [vmem:[%s2722] sm:$0xff]
          %v2724 = vld [vmem:[%s2722 + $0x8] sm:$0xff]
          %v2725 = vld [vmem:[%s2722 + $0x10] sm:$0xff]
          %v2726 = vld [vmem:[%s2722 + $0x18] sm:$0xff]
          %v2727 = vld [vmem:[%s2722 + $0x20] sm:$0xff]
          %v2728 = vld [vmem:[%s2722 + $0x28] sm:$0xff]
          %v2729 = vld [vmem:[%s2722 + $0x30] sm:$0xff]
          %v2730 = vld [vmem:[%s2722 + $0x38] sm:$0xff]
          %v2731 = vld [vmem:[%s2722 + $0x40] sm:$0xff]
          %v2732 = vld [vmem:[%s2722 + $0x48] sm:$0xff]
          %v2733 = vld [vmem:[%s2722 + $0x50] sm:$0xff]
          %v2734 = vld [vmem:[%s2722 + $0x58] sm:$0xff]
          %v2735 = vld [vmem:[%s2722 + $0x60] sm:$0xff]
          %v2736 = vld [vmem:[%s2722 + $0x68] sm:$0xff]
          %v2737 = vld [vmem:[%s2722 + $0x70] sm:$0xff]
          %v2738 = vld [vmem:[%s2722 + $0x78] sm:$0xff]
          %2739 = vmatprep.subr.mxu0 0.0
          %2740 = vmatpush1.msra.mxu0 %v2723
          %2741 = vmatprep.subr.mxu0 0.0
          %2742 = vmatpush1.msra.mxu0 %v2724
          %2743 = vmatprep.subr.mxu0 0.0
          %2744 = vmatpush1.msra.mxu0 %v2725
          %2745 = vmatprep.subr.mxu0 0.0
          %2746 = vmatpush1.msra.mxu0 %v2726
          %2747 = vmatprep.subr.mxu0 0.0
          %2748 = vmatpush1.msra.mxu0 %v2727
          %2749 = vmatprep.subr.mxu0 0.0
          %2750 = vmatpush1.msra.mxu0 %v2728
          %2751 = vmatprep.subr.mxu0 0.0
          %2752 = vmatpush1.msra.mxu0 %v2729
          %2753 = vmatprep.subr.mxu0 0.0
          %2754 = vmatpush1.msra.mxu0 %v2730
          %2755 = vmatprep.subr.mxu0 0.0
          %2756 = vmatpush1.msra.mxu0 %v2731
          %2757 = vmatprep.subr.mxu0 0.0
          %2758 = vmatpush1.msra.mxu0 %v2732
          %2759 = vmatprep.subr.mxu0 0.0
          %2760 = vmatpush1.msra.mxu0 %v2733
          %2761 = vmatprep.subr.mxu0 0.0
          %2762 = vmatpush1.msra.mxu0 %v2734
          %2763 = vmatprep.subr.mxu0 0.0
          %2764 = vmatpush1.msra.mxu0 %v2735
          %2765 = vmatprep.subr.mxu0 0.0
          %2766 = vmatpush1.msra.mxu0 %v2736
          %2767 = vmatprep.subr.mxu0 0.0
          %2768 = vmatpush1.msra.mxu0 %v2737
          %2769 = vmatprep.subr.mxu0 0.0
          %2770 = vmatpush1.msra.mxu0 %v2738
          %2771 = vmatprep.subr.mxu0 0.0
          %2772 = vmatpush1.msra.mxu0 0.0
          %2773 = vmatprep.subr.mxu0 0.0
          %2774 = vmatpush1.msra.mxu0 0.0
          %2775 = vmatprep.subr.mxu0 0.0
          %2776 = vmatpush1.msra.mxu0 0.0
          %2777 = vmatprep.subr.mxu0 0.0
          %2778 = vmatpush1.msra.mxu0 0.0
          %2779 = vmatprep.subr.mxu0 0.0
          %2780 = vmatpush1.msra.mxu0 0.0
          %2781 = vmatprep.subr.mxu0 0.0
          %2782 = vmatpush1.msra.mxu0 0.0
          %2783 = vmatprep.subr.mxu0 0.0
          %2784 = vmatpush1.msra.mxu0 0.0
          %2785 = vmatprep.subr.mxu0 0.0
          %2786 = vmatpush1.msra.mxu0 0.0
          %2787 = vmatprep.subr.mxu0 0.0
          %2788 = vmatpush1.msra.mxu0 0.0
          %2789 = vmatprep.subr.mxu0 0.0
          %2790 = vmatpush1.msra.mxu0 0.0
          %2791 = vmatprep.subr.mxu0 0.0
          %2792 = vmatpush1.msra.mxu0 0.0
          %2793 = vmatprep.subr.mxu0 0.0
          %2794 = vmatpush1.msra.mxu0 0.0
          %2795 = vmatprep.subr.mxu0 0.0
          %2796 = vmatpush1.msra.mxu0 0.0
          %2797 = vmatprep.subr.mxu0 0.0
          %2798 = vmatpush1.msra.mxu0 0.0
          %2799 = vmatprep.subr.mxu0 0.0
          %2800 = vmatpush1.msra.mxu0 0.0
          %2801 = vmatprep.subr.mxu0 0.0
          %2802 = vmatpush1.msra.mxu0 0.0
          %2803 = vmatprep.mubr.f32.mxu0 0.0
          %2804 = vmatmul.mubr.f32.gmra.mrb[0].mxu0 %v1030
          %v2805 = vpop.f32.mrb[0].mxu0
          %v2806 = vadd.f32 0.0, %v2805
          %v2807 = vpop.f32.mrb[0].mxu0
          %2808 = vmatprep.mubr.f32.mxu0 0.0
          %2809 = vmatmul.mubr.f32.gmra.mrb[0].mxu0 %v1031
          %v2810 = vpop.f32.mrb[0].mxu0
          %v2811 = vadd.f32 0.0, %v2810
          %v2812 = vpop.f32.mrb[0].mxu0
          %2813 = vmatprep.mubr.f32.mxu0 0.0
          %2814 = vmatmul.mubr.f32.gmra.mrb[0].mxu0 %v1032
          %v2815 = vpop.f32.mrb[0].mxu0
          %v2816 = vadd.f32 0.0, %v2815
          %v2817 = vpop.f32.mrb[0].mxu0
          %2818 = vmatprep.mubr.f32.mxu0 0.0
          %2819 = vmatmul.mubr.f32.gmra.mrb[0].mxu0 %v1033
          %v2820 = vpop.f32.mrb[0].mxu0
          %v2821 = vadd.f32 0.0, %v2820
          %v2822 = vpop.f32.mrb[0].mxu0
          %2823 = vdwg.mxu0
          %s2824 = scalar_lea.vmem %s6, 384
          %v2825 = vld [vmem:[%s2824] sm:$0xff]
          %v2826 = vld [vmem:[%s2824 + $0x8] sm:$0xff]
          %v2827 = vld [vmem:[%s2824 + $0x10] sm:$0xff]
          %v2828 = vld [vmem:[%s2824 + $0x18] sm:$0xff]
          %v2829 = vld [vmem:[%s2824 + $0x20] sm:$0xff]
          %v2830 = vld [vmem:[%s2824 + $0x28] sm:$0xff]
          %v2831 = vld [vmem:[%s2824 + $0x30] sm:$0xff]
          %v2832 = vld [vmem:[%s2824 + $0x38] sm:$0xff]
          %v2833 = vld [vmem:[%s2824 + $0x40] sm:$0xff]
          %v2834 = vld [vmem:[%s2824 + $0x48] sm:$0xff]
          %v2835 = vld [vmem:[%s2824 + $0x50] sm:$0xff]
          %v2836 = vld [vmem:[%s2824 + $0x58] sm:$0xff]
          %v2837 = vld [vmem:[%s2824 + $0x60] sm:$0xff]
          %v2838 = vld [vmem:[%s2824 + $0x68] sm:$0xff]
          %v2839 = vld [vmem:[%s2824 + $0x70] sm:$0xff]
          %v2840 = vld [vmem:[%s2824 + $0x78] sm:$0xff]
          %2841 = vmatprep.subr.mxu0 0.0
          %2842 = vmatpush1.msra.mxu0 %v2825
          %2843 = vmatprep.subr.mxu0 0.0
          %2844 = vmatpush1.msra.mxu0 %v2826
          %2845 = vmatprep.subr.mxu0 0.0
          %2846 = vmatpush1.msra.mxu0 %v2827
          %2847 = vmatprep.subr.mxu0 0.0
          %2848 = vmatpush1.msra.mxu0 %v2828
          %2849 = vmatprep.subr.mxu0 0.0
          %2850 = vmatpush1.msra.mxu0 %v2829
          %2851 = vmatprep.subr.mxu0 0.0
          %2852 = vmatpush1.msra.mxu0 %v2830
          %2853 = vmatprep.subr.mxu0 0.0
          %2854 = vmatpush1.msra.mxu0 %v2831
          %2855 = vmatprep.subr.mxu0 0.0
          %2856 = vmatpush1.msra.mxu0 %v2832
          %2857 = vmatprep.subr.mxu0 0.0
          %2858 = vmatpush1.msra.mxu0 %v2833
          %2859 = vmatprep.subr.mxu0 0.0
          %2860 = vmatpush1.msra.mxu0 %v2834
          %2861 = vmatprep.subr.mxu0 0.0
          %2862 = vmatpush1.msra.mxu0 %v2835
          %2863 = vmatprep.subr.mxu0 0.0
          %2864 = vmatpush1.msra.mxu0 %v2836
          %2865 = vmatprep.subr.mxu0 0.0
          %2866 = vmatpush1.msra.mxu0 %v2837
          %2867 = vmatprep.subr.mxu0 0.0
          %2868 = vmatpush1.msra.mxu0 %v2838
          %2869 = vmatprep.subr.mxu0 0.0
          %2870 = vmatpush1.msra.mxu0 %v2839
          %2871 = vmatprep.subr.mxu0 0.0
          %2872 = vmatpush1.msra.mxu0 %v2840
          %2873 = vmatprep.subr.mxu0 0.0
          %2874 = vmatpush1.msra.mxu0 0.0
          %2875 = vmatprep.subr.mxu0 0.0
          %2876 = vmatpush1.msra.mxu0 0.0
          %2877 = vmatprep.subr.mxu0 0.0
          %2878 = vmatpush1.msra.mxu0 0.0
          %2879 = vmatprep.subr.mxu0 0.0
          %2880 = vmatpush1.msra.mxu0 0.0
          %2881 = vmatprep.subr.mxu0 0.0
          %2882 = vmatpush1.msra.mxu0 0.0
          %2883 = vmatprep.subr.mxu0 0.0
          %2884 = vmatpush1.msra.mxu0 0.0
          %2885 = vmatprep.subr.mxu0 0.0
          %2886 = vmatpush1.msra.mxu0 0.0
          %2887 = vmatprep.subr.mxu0 0.0
          %2888 = vmatpush1.msra.mxu0 0.0
          %2889 = vmatprep.subr.mxu0 0.0
          %2890 = vmatpush1.msra.mxu0 0.0
          %2891 = vmatprep.subr.mxu0 0.0
          %2892 = vmatpush1.msra.mxu0 0.0
          %2893 = vmatprep.subr.mxu0 0.0
          %2894 = vmatpush1.msra.mxu0 0.0
          %2895 = vmatprep.subr.mxu0 0.0
          %2896 = vmatpush1.msra.mxu0 0.0
          %2897 = vmatprep.subr.mxu0 0.0
          %2898 = vmatpush1.msra.mxu0 0.0
          %2899 = vmatprep.subr.mxu0 0.0
          %2900 = vmatpush1.msra.mxu0 0.0
          %2901 = vmatprep.subr.mxu0 0.0
          %2902 = vmatpush1.msra.mxu0 0.0
          %2903 = vmatprep.subr.mxu0 0.0
          %2904 = vmatpush1.msra.mxu0 0.0
          %2905 = vmatprep.mubr.f32.mxu0 0.0
          %2906 = vmatmul.mubr.f32.gmra.mrb[0].mxu0 %v1030
          %v2907 = vpop.f32.mrb[0].mxu0
          %v2908 = vadd.f32 0.0, %v2907
          %v2909 = vpop.f32.mrb[0].mxu0
          %2910 = vmatprep.mubr.f32.mxu0 0.0
          %2911 = vmatmul.mubr.f32.gmra.mrb[0].mxu0 %v1031
          %v2912 = vpop.f32.mrb[0].mxu0
          %v2913 = vadd.f32 0.0, %v2912
          %v2914 = vpop.f32.mrb[0].mxu0
          %2915 = vmatprep.mubr.f32.mxu0 0.0
          %2916 = vmatmul.mubr.f32.gmra.mrb[0].mxu0 %v1032
          %v2917 = vpop.f32.mrb[0].mxu0
          %v2918 = vadd.f32 0.0, %v2917
          %v2919 = vpop.f32.mrb[0].mxu0
          %2920 = vmatprep.mubr.f32.mxu0 0.0
          %2921 = vmatmul.mubr.f32.gmra.mrb[0].mxu0 %v1033
          %v2922 = vpop.f32.mrb[0].mxu0
          %v2923 = vadd.f32 0.0, %v2922
          %v2924 = vpop.f32.mrb[0].mxu0
          %2925 = vdwg.mxu0
          %s2926 = scalar_lea.vmem [#allocation2], 96
          %v2927 = vld [vmem:[%s2926] sm:$0xff]
          %v2928 = vld [vmem:[%s2926 + $0x8] sm:$0xff]
          %v2929 = vld [vmem:[%s2926 + $0x10] sm:$0xff]
          %v2930 = vld [vmem:[%s2926 + $0x18] sm:$0xff]
          %v2932 = vsel %vm1258, %v2927, 0
          %v2935 = vsel %vm1258, %v2928, 0
          %v2938 = vsel %vm1258, %v2929, 0
          %v2941 = vsel %vm1258, %v2930, 0
          %v2944 = vsel %vm1258, %v2806, 0
          %v2947 = vsel %vm1258, %v2811, 0
          %v2950 = vsel %vm1258, %v2816, 0
          %v2953 = vsel %vm1258, %v2821, 0
          %2955 = vmatprep.subr.mxu0 0.0
          %2956 = vmatpush1.xpose.msra.mxu0 %v2944
          %2957 = vmatprep.subr.mxu0 0.0
          %2958 = vmatpush1.xpose.msra.mxu0 %v2947
          %2959 = vmatprep.subr.mxu0 0.0
          %2960 = vmatpush1.xpose.msra.mxu0 %v2950
          %2961 = vmatprep.subr.mxu0 0.0
          %2962 = vmatpush1.xpose.msra.mxu0 %v2953
          %2963 = vmatprep.subr.mxu0 0.0
          %2964 = vmatpush1.xpose.msra.mxu0 0.0
          %2965 = vmatprep.subr.mxu0 0.0
          %2966 = vmatpush1.xpose.msra.mxu0 0.0
          %2967 = vmatprep.subr.mxu0 0.0
          %2968 = vmatpush1.xpose.msra.mxu0 0.0
          %2969 = vmatprep.subr.mxu0 0.0
          %2970 = vmatpush1.xpose.msra.mxu0 0.0
          %2971 = vmatprep.subr.mxu0 0.0
          %2972 = vmatpush1.xpose.msra.mxu0 0.0
          %2973 = vmatprep.subr.mxu0 0.0
          %2974 = vmatpush1.xpose.msra.mxu0 0.0
          %2975 = vmatprep.subr.mxu0 0.0
          %2976 = vmatpush1.xpose.msra.mxu0 0.0
          %2977 = vmatprep.subr.mxu0 0.0
          %2978 = vmatpush1.xpose.msra.mxu0 0.0
          %2979 = vmatprep.subr.mxu0 0.0
          %2980 = vmatpush1.xpose.msra.mxu0 0.0
          %2981 = vmatprep.subr.mxu0 0.0
          %2982 = vmatpush1.xpose.msra.mxu0 0.0
          %2983 = vmatprep.subr.mxu0 0.0
          %2984 = vmatpush1.xpose.msra.mxu0 0.0
          %2985 = vmatprep.subr.mxu0 0.0
          %2986 = vmatpush1.xpose.msra.mxu0 0.0
          %2987 = vmatprep.subr.mxu0 0.0
          %2988 = vmatpush1.xpose.msra.mxu0 0.0
          %2989 = vmatprep.subr.mxu0 0.0
          %2990 = vmatpush1.xpose.msra.mxu0 0.0
          %2991 = vmatprep.subr.mxu0 0.0
          %2992 = vmatpush1.xpose.msra.mxu0 0.0
          %2993 = vmatprep.subr.mxu0 0.0
          %2994 = vmatpush1.xpose.msra.mxu0 0.0
          %2995 = vmatprep.subr.mxu0 0.0
          %2996 = vmatpush1.xpose.msra.mxu0 0.0
          %2997 = vmatprep.subr.mxu0 0.0
          %2998 = vmatpush1.xpose.msra.mxu0 0.0
          %2999 = vmatprep.subr.mxu0 0.0
          %3000 = vmatpush1.xpose.msra.mxu0 0.0
          %3001 = vmatprep.subr.mxu0 0.0
          %3002 = vmatpush1.xpose.msra.mxu0 0.0
          %3003 = vmatprep.subr.mxu0 0.0
          %3004 = vmatpush1.xpose.msra.mxu0 0.0
          %3005 = vmatprep.subr.mxu0 0.0
          %3006 = vmatpush1.xpose.msra.mxu0 0.0
          %3007 = vmatprep.subr.mxu0 0.0
          %3008 = vmatpush1.xpose.msra.mxu0 0.0
          %3009 = vmatprep.subr.mxu0 0.0
          %3010 = vmatpush1.xpose.msra.mxu0 0.0
          %3011 = vmatprep.subr.mxu0 0.0
          %3012 = vmatpush1.xpose.msra.mxu0 0.0
          %3013 = vmatprep.subr.mxu0 0.0
          %3014 = vmatpush1.xpose.msra.mxu0 0.0
          %3015 = vmatprep.subr.mxu0 0.0
          %3016 = vmatpush1.xpose.msra.mxu0 0.0
          %3017 = vmatprep.subr.mxu0 0.0
          %3018 = vmatpush1.xpose.msra.mxu0 0.0
          %3019 = vmatprep.mubr.f32.mxu0 0.0
          %3020 = vmatmul.mubr.f32.gmra.mrb[0].mxu0 %v2932
          %v3021 = vpop.f32.mrb[0].mxu0
          %v3022 = vadd.f32 0.0, %v3021
          %v3023 = vpop.f32.mrb[0].mxu0
          %3024 = vmatprep.mubr.f32.mxu0 0.0
          %3025 = vmatmul.mubr.f32.gmra.mrb[0].mxu0 %v2935
          %v3026 = vpop.f32.mrb[0].mxu0
          %v3027 = vadd.f32 0.0, %v3026
          %v3028 = vpop.f32.mrb[0].mxu0
          %3029 = vmatprep.mubr.f32.mxu0 0.0
          %3030 = vmatmul.mubr.f32.gmra.mrb[0].mxu0 %v2938
          %v3031 = vpop.f32.mrb[0].mxu0
          %v3032 = vadd.f32 0.0, %v3031
          %v3033 = vpop.f32.mrb[0].mxu0
          %3034 = vmatprep.mubr.f32.mxu0 0.0
          %3035 = vmatmul.mubr.f32.gmra.mrb[0].mxu0 %v2941
          %v3036 = vpop.f32.mrb[0].mxu0
          %v3037 = vadd.f32 0.0, %v3036
          %v3038 = vpop.f32.mrb[0].mxu0
          %3039 = vdwg.mxu0
          %v3040 = vmul.f32 %v3022, 0.17677669
          %v3041 = vmul.f32 %v3027, 0.17677669
          %v3042 = vmul.f32 %v3032, 0.17677669
          %v3043 = vmul.f32 %v3037, 0.17677669
          %v3044 = vsel %vm1048, -1e+30, %v3040
          %v3045 = vsel %vm1049, -1e+30, %v3041
          %v3046 = vsel %vm1050, -1e+30, %v3042
          %v3047 = vsel %vm1051, -1e+30, %v3043
          %s3048 = scalar_lea.vmem [#allocation3], 96
          %v3049 = vld [vmem:[%s3048] sm:$0xff]
          %v3050 = vld [vmem:[%s3048 + $0x8] sm:$0xff]
          %v3051 = vld [vmem:[%s3048 + $0x10] sm:$0xff]
          %v3052 = vld [vmem:[%s3048 + $0x18] sm:$0xff]
          %v3053 = vsel %vm1258, %v3044, -inf
          %3054 = vmax.xlane.f32.xlu0 %v3053
          %v3055 = vpop.xlane.xlu0 %3054
          %v3056 = vsel %vm1258, %v3045, -inf
          %3057 = vmax.xlane.f32.xlu0 %v3056
          %v3058 = vpop.xlane.xlu0 %3057
          %v3059 = vsel %vm1258, %v3046, -inf
          %3060 = vmax.xlane.f32.xlu0 %v3059
          %v3061 = vpop.xlane.xlu0 %3060
          %v3062 = vsel %vm1258, %v3047, -inf
          %3063 = vmax.xlane.f32.xlu0 %v3062
          %v3064 = vpop.xlane.xlu0 %3063
          %v3065 = vmax.f32 %v3049, %v3055
          %v3066 = vmax.f32 %v3050, %v3058
          %v3067 = vmax.f32 %v3051, %v3061
          %v3068 = vmax.f32 %v3052, %v3064
          %v3069 = vsub.f32 %v3049, %v3065
          %v3070 = vsub.f32 %v3050, %v3066
          %v3071 = vsub.f32 %v3051, %v3067
          %v3072 = vsub.f32 %v3052, %v3068
          %v3073 = vmul.f32 %v3069, 1.442695
          %v3074 = vpow.pop %v3073
          %v3075 = vmul.f32 %v3070, 1.442695
          %v3076 = vpow.pop %v3075
          %v3077 = vmul.f32 %v3071, 1.442695
          %v3078 = vpow.pop %v3077
          %v3079 = vmul.f32 %v3072, 1.442695
          %v3080 = vpow.pop %v3079
          %3082 = vset.pattern.permute.xlu0 0
          %3083 = vperm.xlu0 %3082, %v3065
          %v3084 = vpop.permute.xlu0 %3083
          %3087 = vset.pattern.permute.xlu0 0
          %3088 = vperm.xlu0 %3087, %v3066
          %v3089 = vpop.permute.xlu0 %3088
          %3092 = vset.pattern.permute.xlu0 0
          %3093 = vperm.xlu0 %3092, %v3067
          %v3094 = vpop.permute.xlu0 %3093
          %3097 = vset.pattern.permute.xlu0 0
          %3098 = vperm.xlu0 %3097, %v3068
          %v3099 = vpop.permute.xlu0 %3098
          %v3101 = vsub.f32 %v3044, %v3084
          %v3102 = vsub.f32 %v3045, %v3089
          %v3103 = vsub.f32 %v3046, %v3094
          %v3104 = vsub.f32 %v3047, %v3099
          %v3105 = vmul.f32 %v3101, 1.442695
          %v3106 = vpow.pop %v3105
          %v3107 = vmul.f32 %v3102, 1.442695
          %v3108 = vpow.pop %v3107
          %v3109 = vmul.f32 %v3103, 1.442695
          %v3110 = vpow.pop %v3109
          %v3111 = vmul.f32 %v3104, 1.442695
          %v3112 = vpow.pop %v3111
          %s3113 = scalar_lea.vmem [#allocation4], 96
          %v3114 = vld [vmem:[%s3113] sm:$0xff]
          %v3115 = vld [vmem:[%s3113 + $0x8] sm:$0xff]
          %v3116 = vld [vmem:[%s3113 + $0x10] sm:$0xff]
          %v3117 = vld [vmem:[%s3113 + $0x18] sm:$0xff]
          %v3118 = vmul.f32 %v3074, %v3114
          %v3119 = vmul.f32 %v3076, %v3115
          %v3120 = vmul.f32 %v3078, %v3116
          %v3121 = vmul.f32 %v3080, %v3117
          %v3122 = vsel %vm1258, %v3106, 0.0
          %3123 = vadd.xlane.f32.xlu0 %v3122
          %v3124 = vpop.xlane.xlu0 %3123
          %v3125 = vsel %vm1258, %v3108, 0.0
          %3126 = vadd.xlane.f32.xlu0 %v3125
          %v3127 = vpop.xlane.xlu0 %3126
          %v3128 = vsel %vm1258, %v3110, 0.0
          %3129 = vadd.xlane.f32.xlu0 %v3128
          %v3130 = vpop.xlane.xlu0 %3129
          %v3131 = vsel %vm1258, %v3112, 0.0
          %3132 = vadd.xlane.f32.xlu0 %v3131
          %v3133 = vpop.xlane.xlu0 %3132
          %v3134 = vadd.f32 %v3118, %v3124
          %v3135 = vadd.f32 %v3119, %v3127
          %v3136 = vadd.f32 %v3120, %v3130
          %v3137 = vadd.f32 %v3121, %v3133
          %3138 = vst.msk [vmem:[%s3113] sm:$0xff] %vm1464, %v3134
          %3139 = vst.msk [vmem:[%s3113 + $0x8] sm:$0xff] %vm1464, %v3135
          %3140 = vst.msk [vmem:[%s3113 + $0x10] sm:$0xff] %vm1464, %v3136
          %3141 = vst.msk [vmem:[%s3113 + $0x18] sm:$0xff] %vm1464, %v3137
          %s3142 = scalar_lea.vmem [#allocation5], 96
          %v3143 = vld [vmem:[%s3142] sm:$0xff]
          %v3144 = vld [vmem:[%s3142 + $0x8] sm:$0xff]
          %v3145 = vld [vmem:[%s3142 + $0x10] sm:$0xff]
          %v3146 = vld [vmem:[%s3142 + $0x18] sm:$0xff]
          %3148 = vset.pattern.permute.xlu0 0
          %3149 = vperm.xlu0 %3148, %v3074
          %v3150 = vpop.permute.xlu0 %3149
          %3153 = vset.pattern.permute.xlu0 0
          %3154 = vperm.xlu0 %3153, %v3076
          %v3155 = vpop.permute.xlu0 %3154
          %3158 = vset.pattern.permute.xlu0 0
          %3159 = vperm.xlu0 %3158, %v3078
          %v3160 = vpop.permute.xlu0 %3159
          %3163 = vset.pattern.permute.xlu0 0
          %3164 = vperm.xlu0 %3163, %v3080
          %v3165 = vpop.permute.xlu0 %3164
          %v3167 = vmul.f32 %v3150, %v3143
          %v3168 = vmul.f32 %v3155, %v3144
          %v3169 = vmul.f32 %v3160, %v3145
          %v3170 = vmul.f32 %v3165, %v3146
          %v3172 = vsel %vm1258, %v3106, 0
          %v3175 = vsel %vm1258, %v3108, 0
          %v3178 = vsel %vm1258, %v3110, 0
          %v3181 = vsel %vm1258, %v3112, 0
          %3183 = vmatprep.subr.mxu0 0.0
          %3184 = vmatpush1.msra.mxu0 %v2908
          %3185 = vmatprep.subr.mxu0 0.0
          %3186 = vmatpush1.msra.mxu0 %v2913
          %3187 = vmatprep.subr.mxu0 0.0
          %3188 = vmatpush1.msra.mxu0 %v2918
          %3189 = vmatprep.subr.mxu0 0.0
          %3190 = vmatpush1.msra.mxu0 %v2923
          %3191 = vmatprep.subr.mxu0 0.0
          %3192 = vmatpush1.msra.mxu0 0.0
          %3193 = vmatprep.subr.mxu0 0.0
          %3194 = vmatpush1.msra.mxu0 0.0
          %3195 = vmatprep.subr.mxu0 0.0
          %3196 = vmatpush1.msra.mxu0 0.0
          %3197 = vmatprep.subr.mxu0 0.0
          %3198 = vmatpush1.msra.mxu0 0.0
          %3199 = vmatprep.subr.mxu0 0.0
          %3200 = vmatpush1.msra.mxu0 0.0
          %3201 = vmatprep.subr.mxu0 0.0
          %3202 = vmatpush1.msra.mxu0 0.0
          %3203 = vmatprep.subr.mxu0 0.0
          %3204 = vmatpush1.msra.mxu0 0.0
          %3205 = vmatprep.subr.mxu0 0.0
          %3206 = vmatpush1.msra.mxu0 0.0
          %3207 = vmatprep.subr.mxu0 0.0
          %3208 = vmatpush1.msra.mxu0 0.0
          %3209 = vmatprep.subr.mxu0 0.0
          %3210 = vmatpush1.msra.mxu0 0.0
          %3211 = vmatprep.subr.mxu0 0.0
          %3212 = vmatpush1.msra.mxu0 0.0
          %3213 = vmatprep.subr.mxu0 0.0
          %3214 = vmatpush1.msra.mxu0 0.0
          %3215 = vmatprep.subr.mxu0 0.0
          %3216 = vmatpush1.msra.mxu0 0.0
          %3217 = vmatprep.subr.mxu0 0.0
          %3218 = vmatpush1.msra.mxu0 0.0
          %3219 = vmatprep.subr.mxu0 0.0
          %3220 = vmatpush1.msra.mxu0 0.0
          %3221 = vmatprep.subr.mxu0 0.0
          %3222 = vmatpush1.msra.mxu0 0.0
          %3223 = vmatprep.subr.mxu0 0.0
          %3224 = vmatpush1.msra.mxu0 0.0
          %3225 = vmatprep.subr.mxu0 0.0
          %3226 = vmatpush1.msra.mxu0 0.0
          %3227 = vmatprep.subr.mxu0 0.0
          %3228 = vmatpush1.msra.mxu0 0.0
          %3229 = vmatprep.subr.mxu0 0.0
          %3230 = vmatpush1.msra.mxu0 0.0
          %3231 = vmatprep.subr.mxu0 0.0
          %3232 = vmatpush1.msra.mxu0 0.0
          %3233 = vmatprep.subr.mxu0 0.0
          %3234 = vmatpush1.msra.mxu0 0.0
          %3235 = vmatprep.subr.mxu0 0.0
          %3236 = vmatpush1.msra.mxu0 0.0
          %3237 = vmatprep.subr.mxu0 0.0
          %3238 = vmatpush1.msra.mxu0 0.0
          %3239 = vmatprep.subr.mxu0 0.0
          %3240 = vmatpush1.msra.mxu0 0.0
          %3241 = vmatprep.subr.mxu0 0.0
          %3242 = vmatpush1.msra.mxu0 0.0
          %3243 = vmatprep.subr.mxu0 0.0
          %3244 = vmatpush1.msra.mxu0 0.0
          %3245 = vmatprep.subr.mxu0 0.0
          %3246 = vmatpush1.msra.mxu0 0.0
          %3247 = vmatprep.mubr.f32.mxu0 0.0
          %3248 = vmatmul.mubr.f32.gmra.mrb[0].mxu0 %v3172
          %v3249 = vpop.f32.mrb[0].mxu0
          %v3250 = vadd.f32 0.0, %v3249
          %v3251 = vpop.f32.mrb[0].mxu0
          %3252 = vmatprep.mubr.f32.mxu0 0.0
          %3253 = vmatmul.mubr.f32.gmra.mrb[0].mxu0 %v3175
          %v3254 = vpop.f32.mrb[0].mxu0
          %v3255 = vadd.f32 0.0, %v3254
          %v3256 = vpop.f32.mrb[0].mxu0
          %3257 = vmatprep.mubr.f32.mxu0 0.0
          %3258 = vmatmul.mubr.f32.gmra.mrb[0].mxu0 %v3178
          %v3259 = vpop.f32.mrb[0].mxu0
          %v3260 = vadd.f32 0.0, %v3259
          %v3261 = vpop.f32.mrb[0].mxu0
          %3262 = vmatprep.mubr.f32.mxu0 0.0
          %3263 = vmatmul.mubr.f32.gmra.mrb[0].mxu0 %v3181
          %v3264 = vpop.f32.mrb[0].mxu0
          %v3265 = vadd.f32 0.0, %v3264
          %v3266 = vpop.f32.mrb[0].mxu0
          %3267 = vdwg.mxu0
          %v3268 = vadd.f32 %v3167, %v3250
          %v3269 = vadd.f32 %v3168, %v3255
          %v3270 = vadd.f32 %v3169, %v3260
          %v3271 = vadd.f32 %v3170, %v3265
          %3272 = vst.msk [vmem:[%s3142] sm:$0xff] %vm1258, %v3268
          %3273 = vst.msk [vmem:[%s3142 + $0x8] sm:$0xff] %vm1258, %v3269
          %3274 = vst.msk [vmem:[%s3142 + $0x10] sm:$0xff] %vm1258, %v3270
          %3275 = vst.msk [vmem:[%s3142 + $0x18] sm:$0xff] %vm1258, %v3271
          %3276 = vst.msk [vmem:[%s3048] sm:$0xff] %vm1464, %v3065
          %3277 = vst.msk [vmem:[%s3048 + $0x8] sm:$0xff] %vm1464, %v3066
          %3278 = vst.msk [vmem:[%s3048 + $0x10] sm:$0xff] %vm1464, %v3067
          %3279 = vst.msk [vmem:[%s3048 + $0x18] sm:$0xff] %vm1464, %v3068
        $region64: #{tpu_custom_call.1} parent=55 // pred_fallthru
          _
        %p3280 = scmp.eq.s32.totalorder %s30, 1
        // Predicated region
        $region65: #{tpu_custom_call.1} parent=55 // pred_check
          %p3281 = pneg %p3280
        $region66: #{tpu_custom_call.1} parent=55 // pred_check_branch
          %3283 = sbr.rel (%p3281) target = $region68
        $region67: #{tpu_custom_call.1} parent=55 // pred_region
          %v3284 = vld [vmem:[#allocation4] sm:$0xff]
          %v3285 = vld [vmem:[#allocation4 + $0x8] sm:$0xff]
          %v3286 = vld [vmem:[#allocation4 + $0x10] sm:$0xff]
          %v3287 = vld [vmem:[#allocation4 + $0x18] sm:$0xff]
          %v3288 = vrcp.pop %v3284
          %v3289 = vrcp.pop %v3285
          %v3290 = vrcp.pop %v3286
          %v3291 = vrcp.pop %v3287
          %v3292 = vld [vmem:[#allocation5] sm:$0xff]
          %v3293 = vld [vmem:[#allocation5 + $0x8] sm:$0xff]
          %v3294 = vld [vmem:[#allocation5 + $0x10] sm:$0xff]
          %v3295 = vld [vmem:[#allocation5 + $0x18] sm:$0xff]
          %3297 = vset.pattern.permute.xlu0 0
          %3298 = vperm.xlu0 %3297, %v3288
          %v3299 = vpop.permute.xlu0 %3298
          %3302 = vset.pattern.permute.xlu0 0
          %3303 = vperm.xlu0 %3302, %v3289
          %v3304 = vpop.permute.xlu0 %3303
          %3307 = vset.pattern.permute.xlu0 0
          %3308 = vperm.xlu0 %3307, %v3290
          %v3309 = vpop.permute.xlu0 %3308
          %3312 = vset.pattern.permute.xlu0 0
          %3313 = vperm.xlu0 %3312, %v3291
          %v3314 = vpop.permute.xlu0 %3313
          %v3316 = vmul.f32 %v3292, %v3299
          %v3317 = vmul.f32 %v3293, %v3304
          %v3318 = vmul.f32 %v3294, %v3309
          %v3319 = vmul.f32 %v3295, %v3314
          %s3320 = scalar_lea.vmem [#allocation4], 32
          %v3321 = vld [vmem:[%s3320] sm:$0xff]
          %v3322 = vld [vmem:[%s3320 + $0x8] sm:$0xff]
          %v3323 = vld [vmem:[%s3320 + $0x10] sm:$0xff]
          %v3324 = vld [vmem:[%s3320 + $0x18] sm:$0xff]
          %v3325 = vrcp.pop %v3321
          %v3326 = vrcp.pop %v3322
          %v3327 = vrcp.pop %v3323
          %v3328 = vrcp.pop %v3324
          %s3329 = scalar_lea.vmem [#allocation5], 32
          %v3330 = vld [vmem:[%s3329] sm:$0xff]
          %v3331 = vld [vmem:[%s3329 + $0x8] sm:$0xff]
          %v3332 = vld [vmem:[%s3329 + $0x10] sm:$0xff]
          %v3333 = vld [vmem:[%s3329 + $0x18] sm:$0xff]
          %3335 = vset.pattern.permute.xlu0 0
          %3336 = vperm.xlu0 %3335, %v3325
          %v3337 = vpop.permute.xlu0 %3336
          %3340 = vset.pattern.permute.xlu0 0
          %3341 = vperm.xlu0 %3340, %v3326
          %v3342 = vpop.permute.xlu0 %3341
          %3345 = vset.pattern.permute.xlu0 0
          %3346 = vperm.xlu0 %3345, %v3327
          %v3347 = vpop.permute.xlu0 %3346
          %3350 = vset.pattern.permute.xlu0 0
          %3351 = vperm.xlu0 %3350, %v3328
          %v3352 = vpop.permute.xlu0 %3351
          %v3354 = vmul.f32 %v3330, %v3337
          %v3355 = vmul.f32 %v3331, %v3342
          %v3356 = vmul.f32 %v3332, %v3347
          %v3357 = vmul.f32 %v3333, %v3352
          %s3358 = scalar_lea.vmem [#allocation4], 64
          %v3359 = vld [vmem:[%s3358] sm:$0xff]
          %v3360 = vld [vmem:[%s3358 + $0x8] sm:$0xff]
          %v3361 = vld [vmem:[%s3358 + $0x10] sm:$0xff]
          %v3362 = vld [vmem:[%s3358 + $0x18] sm:$0xff]
          %v3363 = vrcp.pop %v3359
          %v3364 = vrcp.pop %v3360
          %v3365 = vrcp.pop %v3361
          %v3366 = vrcp.pop %v3362
          %s3367 = scalar_lea.vmem [#allocation5], 64
          %v3368 = vld [vmem:[%s3367] sm:$0xff]
          %v3369 = vld [vmem:[%s3367 + $0x8] sm:$0xff]
          %v3370 = vld [vmem:[%s3367 + $0x10] sm:$0xff]
          %v3371 = vld [vmem:[%s3367 + $0x18] sm:$0xff]
          %3373 = vset.pattern.permute.xlu0 0
          %3374 = vperm.xlu0 %3373, %v3363
          %v3375 = vpop.permute.xlu0 %3374
          %3378 = vset.pattern.permute.xlu0 0
          %3379 = vperm.xlu0 %3378, %v3364
          %v3380 = vpop.permute.xlu0 %3379
          %3383 = vset.pattern.permute.xlu0 0
          %3384 = vperm.xlu0 %3383, %v3365
          %v3385 = vpop.permute.xlu0 %3384
          %3388 = vset.pattern.permute.xlu0 0
          %3389 = vperm.xlu0 %3388, %v3366
          %v3390 = vpop.permute.xlu0 %3389
          %v3392 = vmul.f32 %v3368, %v3375
          %v3393 = vmul.f32 %v3369, %v3380
          %v3394 = vmul.f32 %v3370, %v3385
          %v3395 = vmul.f32 %v3371, %v3390
          %s3396 = scalar_lea.vmem [#allocation4], 96
          %v3397 = vld [vmem:[%s3396] sm:$0xff]
          %v3398 = vld [vmem:[%s3396 + $0x8] sm:$0xff]
          %v3399 = vld [vmem:[%s3396 + $0x10] sm:$0xff]
          %v3400 = vld [vmem:[%s3396 + $0x18] sm:$0xff]
          %v3401 = vrcp.pop %v3397
          %v3402 = vrcp.pop %v3398
          %v3403 = vrcp.pop %v3399
          %v3404 = vrcp.pop %v3400
          %s3405 = scalar_lea.vmem [#allocation5], 96
          %v3406 = vld [vmem:[%s3405] sm:$0xff]
          %v3407 = vld [vmem:[%s3405 + $0x8] sm:$0xff]
          %v3408 = vld [vmem:[%s3405 + $0x10] sm:$0xff]
          %v3409 = vld [vmem:[%s3405 + $0x18] sm:$0xff]
          %3411 = vset.pattern.permute.xlu0 0
          %3412 = vperm.xlu0 %3411, %v3401
          %v3413 = vpop.permute.xlu0 %3412
          %3416 = vset.pattern.permute.xlu0 0
          %3417 = vperm.xlu0 %3416, %v3402
          %v3418 = vpop.permute.xlu0 %3417
          %3421 = vset.pattern.permute.xlu0 0
          %3422 = vperm.xlu0 %3421, %v3403
          %v3423 = vpop.permute.xlu0 %3422
          %3426 = vset.pattern.permute.xlu0 0
          %3427 = vperm.xlu0 %3426, %v3404
          %v3428 = vpop.permute.xlu0 %3427
          %v3430 = vmul.f32 %v3406, %v3413
          %v3431 = vmul.f32 %v3407, %v3418
          %v3432 = vmul.f32 %v3408, %v3423
          %v3433 = vmul.f32 %v3409, %v3428
          %3438 = vrot.lane.b32.xlu0 %v3354, 32
          %v3439 = vpop.permute.xlu0 %3438
          %3440 = vrot.lane.b32.xlu0 %v3355, 32
          %v3441 = vpop.permute.xlu0 %3440
          %3442 = vrot.lane.b32.xlu0 %v3356, 32
          %v3443 = vpop.permute.xlu0 %3442
          %3444 = vrot.lane.b32.xlu0 %v3357, 32
          %v3445 = vpop.permute.xlu0 %3444
          %3454 = vrot.lane.b32.xlu0 %v3392, 64
          %v3455 = vpop.permute.xlu0 %3454
          %3456 = vrot.lane.b32.xlu0 %v3393, 64
          %v3457 = vpop.permute.xlu0 %3456
          %3458 = vrot.lane.b32.xlu0 %v3394, 64
          %v3459 = vpop.permute.xlu0 %3458
          %3460 = vrot.lane.b32.xlu0 %v3395, 64
          %v3461 = vpop.permute.xlu0 %3460
          %3470 = vrot.lane.b32.xlu0 %v3430, 96
          %v3471 = vpop.permute.xlu0 %3470
          %3472 = vrot.lane.b32.xlu0 %v3431, 96
          %v3473 = vpop.permute.xlu0 %3472
          %3474 = vrot.lane.b32.xlu0 %v3432, 96
          %v3475 = vpop.permute.xlu0 %3474
          %3476 = vrot.lane.b32.xlu0 %v3433, 96
          %v3477 = vpop.permute.xlu0 %3476
          %vm3482 = vcmask 261120
          %v3483 = vsel %vm3482, %v3316, %v3439
          %v3484 = vsel %vm3482, %v3317, %v3441
          %v3485 = vsel %vm3482, %v3318, %v3443
          %v3486 = vsel %vm3482, %v3319, %v3445
          %vm3487 = vcmask 523264
          %v3488 = vsel %vm3487, %v3483, %v3455
          %v3489 = vsel %vm3487, %v3484, %v3457
          %v3490 = vsel %vm3487, %v3485, %v3459
          %v3491 = vsel %vm3487, %v3486, %v3461
          %vm3492 = vcmask 785408
          %v3493 = vsel %vm3492, %v3488, %v3471
          %v3494 = vsel %vm3492, %v3489, %v3473
          %v3495 = vsel %vm3492, %v3490, %v3475
          %v3496 = vsel %vm3492, %v3491, %v3477
          %v3497 = vld [vmem:[%s7] sm:$0xff]
          %v3498 = vld [vmem:[%s7 + $0x8] sm:$0xff]
          %v3499 = vld [vmem:[%s7 + $0x10] sm:$0xff]
          %v3500 = vld [vmem:[%s7 + $0x18] sm:$0xff]
          %v3501 = vld [vmem:[%s7 + $0x20] sm:$0xff]
          %v3502 = vld [vmem:[%s7 + $0x28] sm:$0xff]
          %v3503 = vld [vmem:[%s7 + $0x30] sm:$0xff]
          %v3504 = vld [vmem:[%s7 + $0x38] sm:$0xff]
          %v3505 = vld [vmem:[%s7 + $0x40] sm:$0xff]
          %v3506 = vld [vmem:[%s7 + $0x48] sm:$0xff]
          %v3507 = vld [vmem:[%s7 + $0x50] sm:$0xff]
          %v3508 = vld [vmem:[%s7 + $0x58] sm:$0xff]
          %v3509 = vld [vmem:[%s7 + $0x60] sm:$0xff]
          %v3510 = vld [vmem:[%s7 + $0x68] sm:$0xff]
          %v3511 = vld [vmem:[%s7 + $0x70] sm:$0xff]
          %v3512 = vld [vmem:[%s7 + $0x78] sm:$0xff]
          %v3513 = vld [vmem:[%s8] sm:$0x1]
          %v3515 = vlaneseq
          %v3516 = vshrl.u32 %v3515, 7
          %v3517 = vsub.s32 0, %v3516
          %v3518 = vrot.slane %v3513, %v3517
          %3520 = vmatprep.subr.mxu0 0.0
          %3521 = vmatpush1.msra.mxu0 %v3497
          %3522 = vmatprep.subr.mxu0 0.0
          %3523 = vmatpush1.msra.mxu0 %v3498
          %3524 = vmatprep.subr.mxu0 0.0
          %3525 = vmatpush1.msra.mxu0 %v3499
          %3526 = vmatprep.subr.mxu0 0.0
          %3527 = vmatpush1.msra.mxu0 %v3500
          %3528 = vmatprep.subr.mxu0 0.0
          %3529 = vmatpush1.msra.mxu0 %v3501
          %3530 = vmatprep.subr.mxu0 0.0
          %3531 = vmatpush1.msra.mxu0 %v3502
          %3532 = vmatprep.subr.mxu0 0.0
          %3533 = vmatpush1.msra.mxu0 %v3503
          %3534 = vmatprep.subr.mxu0 0.0
          %3535 = vmatpush1.msra.mxu0 %v3504
          %3536 = vmatprep.subr.mxu0 0.0
          %3537 = vmatpush1.msra.mxu0 %v3505
          %3538 = vmatprep.subr.mxu0 0.0
          %3539 = vmatpush1.msra.mxu0 %v3506
          %3540 = vmatprep.subr.mxu0 0.0
          %3541 = vmatpush1.msra.mxu0 %v3507
          %3542 = vmatprep.subr.mxu0 0.0
          %3543 = vmatpush1.msra.mxu0 %v3508
          %3544 = vmatprep.subr.mxu0 0.0
          %3545 = vmatpush1.msra.mxu0 %v3509
          %3546 = vmatprep.subr.mxu0 0.0
          %3547 = vmatpush1.msra.mxu0 %v3510
          %3548 = vmatprep.subr.mxu0 0.0
          %3549 = vmatpush1.msra.mxu0 %v3511
          %3550 = vmatprep.subr.mxu0 0.0
          %3551 = vmatpush1.msra.mxu0 %v3512
          %3552 = vmatprep.subr.mxu0 0.0
          %3553 = vmatpush1.msra.mxu0 0.0
          %3554 = vmatprep.subr.mxu0 0.0
          %3555 = vmatpush1.msra.mxu0 0.0
          %3556 = vmatprep.subr.mxu0 0.0
          %3557 = vmatpush1.msra.mxu0 0.0
          %3558 = vmatprep.subr.mxu0 0.0
          %3559 = vmatpush1.msra.mxu0 0.0
          %3560 = vmatprep.subr.mxu0 0.0
          %3561 = vmatpush1.msra.mxu0 0.0
          %3562 = vmatprep.subr.mxu0 0.0
          %3563 = vmatpush1.msra.mxu0 0.0
          %3564 = vmatprep.subr.mxu0 0.0
          %3565 = vmatpush1.msra.mxu0 0.0
          %3566 = vmatprep.subr.mxu0 0.0
          %3567 = vmatpush1.msra.mxu0 0.0
          %3568 = vmatprep.subr.mxu0 0.0
          %3569 = vmatpush1.msra.mxu0 0.0
          %3570 = vmatprep.subr.mxu0 0.0
          %3571 = vmatpush1.msra.mxu0 0.0
          %3572 = vmatprep.subr.mxu0 0.0
          %3573 = vmatpush1.msra.mxu0 0.0
          %3574 = vmatprep.subr.mxu0 0.0
          %3575 = vmatpush1.msra.mxu0 0.0
          %3576 = vmatprep.subr.mxu0 0.0
          %3577 = vmatpush1.msra.mxu0 0.0
          %3578 = vmatprep.subr.mxu0 0.0
          %3579 = vmatpush1.msra.mxu0 0.0
          %3580 = vmatprep.subr.mxu0 0.0
          %3581 = vmatpush1.msra.mxu0 0.0
          %3582 = vmatprep.subr.mxu0 0.0
          %3583 = vmatpush1.msra.mxu0 0.0
          %3584 = vmatprep.mubr.f32.mxu0 0.0
          %3585 = vmatmul.mubr.f32.gmra.mrb[0].mxu0 %v3493
          %v3586 = vpop.f32.mrb[0].mxu0
          %v3587 = vadd.f32 %v3518, %v3586
          %v3588 = vpop.f32.mrb[0].mxu0
          %3589 = vmatprep.mubr.f32.mxu0 0.0
          %3590 = vmatmul.mubr.f32.gmra.mrb[0].mxu0 %v3494
          %v3591 = vpop.f32.mrb[0].mxu0
          %v3592 = vadd.f32 %v3518, %v3591
          %v3593 = vpop.f32.mrb[0].mxu0
          %3594 = vmatprep.mubr.f32.mxu0 0.0
          %3595 = vmatmul.mubr.f32.gmra.mrb[0].mxu0 %v3495
          %v3596 = vpop.f32.mrb[0].mxu0
          %v3597 = vadd.f32 %v3518, %v3596
          %v3598 = vpop.f32.mrb[0].mxu0
          %3599 = vmatprep.mubr.f32.mxu0 0.0
          %3600 = vmatmul.mubr.f32.gmra.mrb[0].mxu0 %v3496
          %v3601 = vpop.f32.mrb[0].mxu0
          %v3602 = vadd.f32 %v3518, %v3601
          %v3603 = vpop.f32.mrb[0].mxu0
          %3604 = vdwg.mxu0
          %v3605 = vld [vmem:[%s392] sm:$0xff]
          %v3606 = vld [vmem:[%s392 + $0x8] sm:$0xff]
          %v3607 = vld [vmem:[%s392 + $0x10] sm:$0xff]
          %v3608 = vld [vmem:[%s392 + $0x18] sm:$0xff]
          %v3609 = vadd.f32 %v3587, %v3605
          %v3610 = vadd.f32 %v3592, %v3606
          %v3611 = vadd.f32 %v3597, %v3607
          %v3612 = vadd.f32 %v3602, %v3608
          %3613 = vst [vmem:[%s383] sm:$0xff] %v3609
          %3614 = vst [vmem:[%s383 + $0x8] sm:$0xff] %v3610
          %3615 = vst [vmem:[%s383 + $0x10] sm:$0xff] %v3611
          %3616 = vst [vmem:[%s383 + $0x18] sm:$0xff] %v3612
        $region68: #{tpu_custom_call.1} parent=55 // pred_fallthru
          _
        %s3617 = sand.u32 %s255, 1
        %s3618 = scalar_lea.sflag [#allocation7], %s3617
        %s3619 = sand.u32 %s255, 1
        %s3620 = smul.addr %s3619, 32
        %s3621 = scalar_lea.vmem [#allocation6], %s3620
        // Predicated region
        $region69: #{tpu_custom_call.1} parent=55 // pred_check
          %p3622 = pneg %p265
        $region70: #{tpu_custom_call.1} parent=55 // pred_check_branch
          %3624 = sbr.rel (%p3622) target = $region72
        $region71: #{tpu_custom_call.1} parent=55 // pred_region
          %s3625 = smul.u32 4, %s29
          %s3627 = ssub.s32 512, 512
          %3628 = vsyncadd %s3618, %s3627
          %s3629 = smul.addr %s28, 8
          %s3630 = sadd.s32 %s3625, %s3629
          %s3631 = smul.addr %s3630, 128
          %s3632 = scalar_lea.hbm %s9, %s3631
          %s3633 = sshll.u32 %s3621, 4
          %s3634 = int_to_ptr.vmem [resolvable:$true] %s3633
          %3639 = dma.vmem_to_hbm [thread:$0]  %s3634, 512, %s3632, %s3618, 128, 128, 8
        $region72: #{tpu_custom_call.1} parent=55 // pred_fallthru
          _
      $region56: #{tpu_custom_call.1} parent=5 // pred_fallthru
        _
      %p3640 = scmp.le.s32.totalorder 2, %s18
      // Predicated region
      $region73: #{tpu_custom_call.1} parent=5 // pred_check
        %p3641 = pneg %p3640
      $region74: #{tpu_custom_call.1} parent=5 // pred_check_branch
        %3643 = sbr.rel (%p3641) target = $region76
      $region75: #{tpu_custom_call.1} parent=5 // pred_region
        %s3644 = ssub.s32 %s18, 2
        // Predicated region
        $region77: #{tpu_custom_call.1} parent=75 // pred_check
          %p3645 = pneg %p271
        $region78: #{tpu_custom_call.1} parent=75 // pred_check_branch
          %3647 = sbr.rel (%p3645) target = $region80
        $region79: #{tpu_custom_call.1} parent=75 // pred_region
          %s3648 = sand.u32 %s256, 1
          %s3649 = scalar_lea.sflag [#allocation7], %s3648
          %s3650 = sand.u32 %s256, 1
          %s3651 = smul.addr %s3650, 32
          %s3652 = scalar_lea.vmem [#allocation6], %s3651
          %3653 = dma.done %s3649, 512
        $region80: #{tpu_custom_call.1} parent=75 // pred_fallthru
          _
      $region76: #{tpu_custom_call.1} parent=5 // pred_fallthru
        _
    $region6: #{tpu_custom_call.1} parent=1 // loop_footer
      %s22 = sadd.s32 1, %s18
    $region7: #{tpu_custom_call.1} parent=1 // loop_footer_branch
      %17 = sbr.rel target = $region3
    $region8: #{tpu_custom_call.1} parent=1 // loop_exit
      _
    %3654 = vsyncpa [#allocation7], 1
    %s3655 = scalar_lea.sflag [#allocation7], 1
    %3656 = vsyncpa %s3655, 1

</llo_original>
